<compile_context>
chip_gen: v7x
topology: tpu7x:2x2x1
jax: 0.10.0
libtpu: 0.0.40
codegen_flags: <defaults>
</compile_context>

<pallas_src>
import math

import jax
import jax.numpy as jnp
from jax.experimental import pallas as pl
from jax.experimental.pallas import tpu as pltpu

# ----------------- small stand-in config (ViT-B/16 + BERT-base shrunk) -------
BATCH = 2
IMG_C, IMG_HW, PATCH = 3, 16, 8
N_PATCH = (IMG_HW // PATCH) ** 2                        # 4 patches
VIT_SEQ = N_PATCH + 1                                   # + CLS token
VIT_DIM, VIT_HEADS, VIT_MLP, VIT_LAYERS = 256, 2, 512, 2   # dh = 128 (lane aligned)
TXT_SEQ, VOCAB, MAX_POS = 8, 100, 16
BERT_DIM, BERT_HEADS, BERT_FFN, BERT_LAYERS = 256, 2, 512, 2
EMBED_DIM = 256                                         # stand-in for 512
CPP = IMG_C * PATCH * PATCH

# Scoped VMEM budget: fits v5e/v6e/v7x (v7x physical is 64 MiB -> leave headroom).
# TODO(synk): at real ViT-B/BERT-base dims re-budget per generation (bf16 weights
# double-buffered across the layer grid ~= 2 x 14 MiB + activations).
VMEM_LIMIT_BYTES = 48 * 1024 * 1024

_VMEM = pl.BlockSpec(memory_space=pltpu.MemorySpace.VMEM)


# ------------------------------ in-kernel helpers -----------------------------
def _mm(a, w_bf16):
    """MXU matmul: bf16 operands (weights pre-cast at init), fp32 accumulation."""
    return jnp.dot(a.astype(jnp.bfloat16), w_bf16, preferred_element_type=jnp.float32)


def _gelu(y):
    # TODO(synk): pretrained ViT/BERT use exact erf GELU; tanh approximation here.
    return 0.5 * y * (1.0 + jnp.tanh(0.7978845608028654 * (y + 0.044715 * y * y * y)))


def _layernorm(x, g, b, eps):
    m = jnp.mean(x, axis=-1, keepdims=True)
    v = jnp.mean((x - m) ** 2, axis=-1, keepdims=True)
    return (x - m) * jax.lax.rsqrt(v + eps) * g + b


def _encoder_layer(x, mask_ref, lrefs, *, pre_ln, eps, num_heads, batch, seq, dim):
    """One transformer encoder layer on a [B*S, D] residual-stream slab."""
    (ln1g, ln1b, wqkv, bqkv, wo, bo, ln2g, ln2b, w1, b1, w2, b2) = lrefs
    dh = dim // num_heads
    scale = 1.0 / math.sqrt(dh)
    bh = batch * num_heads

    # ---- attention sub-block ----
    h = _layernorm(x, ln1g[...], ln1b[...], eps) if pre_ln else x
    qkv = _mm(h, wqkv[...]) + bqkv[...]                      # [B*S, 3D] fused matmul

    def gather_heads(col0):
        # [B*S, 3D] -> [B*H, S, dh]; lane slices are 128-aligned (dh = 128).
        parts = []
        for bi in range(batch):
            r0 = bi * seq
            for hh in range(num_heads):
                c0 = col0 + hh * dh
                parts.append(qkv[r0:r0 + seq, c0:c0 + dh])
        return jnp.stack(parts, axis=0).astype(jnp.bfloat16)

    q3 = gather_heads(0)
    k3 = gather_heads(dim)
    v3 = gather_heads(2 * dim)

    # one batched dot_general over all (batch, head) pairs
    s = jax.lax.dot_general(q3, k3, (((2,), (2,)), ((0,), (0,))),
                            preferred_element_type=jnp.float32) * scale   # [BH,S,S]
    if mask_ref is not None:
        neg = (1.0 - mask_ref[...]) * -1e9                   # [B, S], built once
        bias = jnp.stack([neg[bi:bi + 1, :]
                          for bi in range(batch) for _ in range(num_heads)],
                         axis=0)                             # [BH, 1, S]
        s = s + bias
    s = s - jnp.max(s, axis=-1, keepdims=True)
    p = jnp.exp(s)
    p = p * pl.reciprocal(jnp.sum(p, axis=-1, keepdims=True), approx=True)
    o3 = jax.lax.dot_general(p.astype(jnp.bfloat16), v3,
                             (((2,), (1,)), ((0,), (0,))),
                             preferred_element_type=jnp.float32)          # [BH,S,dh]
    # recombine heads (128-aligned lane concat) -> single [B*S,D]x[D,D] out-proj
    o2d = jnp.concatenate(
        [jnp.concatenate([o3[bi * num_heads + hh] for hh in range(num_heads)],
                         axis=-1) for bi in range(batch)],
        axis=0)                                              # [B*S, D]
    x = x + _mm(o2d, wo[...]) + bo[...]
    if not pre_ln:
        x = _layernorm(x, ln1g[...], ln1b[...], eps)

    # ---- MLP sub-block ----
    h = _layernorm(x, ln2g[...], ln2b[...], eps) if pre_ln else x
    h = _gelu(_mm(h, w1[...]) + b1[...])
    h = _mm(h, w2[...]) + b2[...]
    x = x + h
    if not pre_ln:
        x = _layernorm(x, ln2g[...], ln2b[...], eps)
    return x


# ------------------------------ Pallas kernels --------------------------------
def make_vit_tower_kernel(*, batch, seq, n_patch, dim, num_heads, eps):
    def kernel(patches_ref, pw_ref, pb_ref, cls_ref, pos_ref,
               ln1g, ln1b, wqkv, bqkv, wo, bo, ln2g, ln2b, w1, b1, w2, b2, o_ref):
        l = pl.program_id(0)

        @pl.when(l == 0)
        def _():
            # patch projection (== Conv2d k=s=PATCH) + CLS + positional embedding
            proj = _mm(patches_ref[...], pw_ref[...]) + pb_ref[...]   # [B*NP, D]
            cls_row = cls_ref[...] + pos_ref[0:1, :]                  # [1, D]
            pos_pat = pos_ref[1:, :]                                  # [NP, D]
            rows = []
            for bi in range(batch):
                rows.append(cls_row)
                rows.append(proj[bi * n_patch:(bi + 1) * n_patch, :] + pos_pat)
            o_ref[...] = jnp.concatenate(rows, axis=0)                # [B*S, D]

        x = _encoder_layer(
            o_ref[...], None,
            (ln1g, ln1b, wqkv, bqkv, wo, bo, ln2g, ln2b, w1, b1, w2, b2),
            pre_ln=True, eps=eps, num_heads=num_heads,
            batch=batch, seq=seq, dim=dim)
        o_ref[...] = x
    return kernel


def make_bert_tower_kernel(*, batch, seq, dim, num_heads, eps_emb, eps):
    def kernel(emb_ref, mask_ref, lng_ref, lnb_ref,
               ln1g, ln1b, wqkv, bqkv, wo, bo, ln2g, ln2b, w1, b1, w2, b2, o_ref):
        l = pl.program_id(0)

        @pl.when(l == 0)
        def _():
            # BERT embedding LayerNorm fused into the first layer step
            o_ref[...] = _layernorm(emb_ref[...], lng_ref[...], lnb_ref[...], eps_emb)

        x = _encoder_layer(
            o_ref[...], mask_ref,
            (ln1g, ln1b, wqkv, bqkv, wo, bo, ln2g, ln2b, w1, b1, w2, b2),
            pre_ln=False, eps=eps, num_heads=num_heads,
            batch=batch, seq=seq, dim=dim)
        o_ref[...] = x
    return kernel


def fusion_head_kernel(img_ref, lng_ref, lnb_ref, wi_ref, bi_ref,
                       txt_ref, wt_ref, bt_ref, wf1_ref, wf2_ref, bf_ref, o_ref):
    # ViT final LayerNorm (eps=1e-6) applied to the CLS token, fused in here.
    x = _layernorm(img_ref[...], lng_ref[...], lnb_ref[...], 1e-6)
    i = _mm(x, wi_ref[...]) + bi_ref[...]
    t = _mm(txt_ref[...], wt_ref[...]) + bt_ref[...]
    # fusion_proj(cat([i, t])) == i @ W1 + t @ W2 + b
    f = _mm(i, wf1_ref[...]) + _mm(t, wf2_ref[...]) + bf_ref[...]
    # F.normalize(p=2, dim=1): f / max(||f||, 1e-12) == f * rsqrt(max(sum f^2, 1e-24))
    ss = jnp.sum(f * f, axis=-1, keepdims=True)
    o_ref[...] = f * jax.lax.rsqrt(jnp.maximum(ss, 1e-24))


# ------------------------------ Pallas wrappers --------------------------------
def _const_spec(arr):
    nd = arr.ndim
    return pl.BlockSpec(arr.shape, lambda l, _nd=nd: (0,) * _nd)


def _layer_spec(arr):
    nd = arr.ndim
    return pl.BlockSpec((None,) + tuple(arr.shape[1:]),
                        lambda l, _nd=nd: (l,) + (0,) * (_nd - 1))


_LAYER_KEYS = ("ln1_g", "ln1_b", "wqkv", "bqkv", "wo", "bo",
               "ln2_g", "ln2_b", "fc1_w", "fc1_b", "fc2_w", "fc2_b")


def _tower_call(kernel, const_args, layer_args, num_layers, out_rows, dim):
    return pl.pallas_call(
        kernel,
        out_shape=jax.ShapeDtypeStruct((out_rows, dim), jnp.float32),
        grid=(num_layers,),
        in_specs=[_const_spec(a) for a in const_args]
                 + [_layer_spec(a) for a in layer_args],
        out_specs=pl.BlockSpec((out_rows, dim), lambda l: (0, 0)),
        compiler_params=pltpu.CompilerParams(
            dimension_semantics=("arbitrary",),
            vmem_limit_bytes=VMEM_LIMIT_BYTES),
    )(*const_args, *layer_args)


def vit_tower(patches2d, p):
    kernel = make_vit_tower_kernel(batch=BATCH, seq=VIT_SEQ, n_patch=N_PATCH,
                                   dim=VIT_DIM, num_heads=VIT_HEADS, eps=1e-6)
    const_args = [patches2d, p["patch_w"], p["patch_b"], p["cls"], p["pos"]]
    layer_args = [p[k] for k in _LAYER_KEYS]
    return _tower_call(kernel, const_args, layer_args,
                       VIT_LAYERS, BATCH * VIT_SEQ, VIT_DIM)


def bert_tower(emb2d, mask_f, p):
    kernel = make_bert_tower_kernel(batch=BATCH, seq=TXT_SEQ, dim=BERT_DIM,
                                    num_heads=BERT_HEADS, eps_emb=1e-12, eps=1e-12)
    const_args = [emb2d, mask_f, p["ln_emb_g"], p["ln_emb_b"]]
    layer_args = [p[k] for k in _LAYER_KEYS]
    return _tower_call(kernel, const_args, layer_args,
                       BERT_LAYERS, BATCH * TXT_SEQ, BERT_DIM)


def fusion_head(img_cls, txt_cls, lnf_g, lnf_b, hp):
    args = [img_cls, lnf_g, lnf_b, hp["wi"], hp["bi"],
            txt_cls, hp["wt"], hp["bt"], hp["wf1"], hp["wf2"], hp["bf"]]
    return pl.pallas_call(
        fusion_head_kernel,
        out_shape=jax.ShapeDtypeStruct((img_cls.shape[0], EMBED_DIM), jnp.float32),
        in_specs=[_VMEM] * len(args), out_specs=_VMEM,
    )(*args)


# --------------------------- model building blocks ----------------------------
def vit_forward(image, p):
    # patchify (== Conv2d(kernel=stride=PATCH)) -- plain-JAX glue
    b = image.shape[0]
    nh = nw = IMG_HW // PATCH
    patches = image.reshape(b, IMG_C, nh, PATCH, nw, PATCH)
    patches = patches.transpose(0, 2, 4, 1, 3, 5).reshape(b * N_PATCH, CPP)
    x = vit_tower(patches, p)                                # [B*S, D], one call
    return x.reshape(b, VIT_SEQ, VIT_DIM)[:, 0]              # CLS (pre-final-LN)


def bert_forward(input_ids, attention_mask, p):
    b, s = input_ids.shape
    # TODO(synk): embedding gather stays in XLA (data-dependent gather).
    emb = (jnp.take(p["word_emb"], input_ids, axis=0)
           + p["pos_emb"][:s][None, :, :]
           + p["type_emb"][0][None, None, :])
    emb2d = emb.reshape(b * s, BERT_DIM)
    mask_f = attention_mask.astype(jnp.float32)
    x = bert_tower(emb2d, mask_f, p)                         # [B*S, D], one call
    return x.reshape(b, s, BERT_DIM)[:, 0]                   # last_hidden_state[:, 0]


def shopee_forward(image, input_ids, attention_mask, params):
    # TODO(synk): on v7x the two towers are independent and could run on the two
    # TensorCores via pl.core_map; kept sequential here for portability.
    img_cls = vit_forward(image, params["vit"])              # [B, VIT_DIM]
    txt_cls = bert_forward(input_ids, attention_mask, params["bert"])  # [B, BERT_DIM]
    return fusion_head(img_cls, txt_cls,
                       params["vit"]["lnf_g"], params["vit"]["lnf_b"],
                       params["head"])                       # [B, EMBED_DIM]


# ----------------------------- deterministic init ------------------------------
class KeyGen:
    def __init__(self, seed):
        self._key = jax.random.PRNGKey(seed)

    def __call__(self):
        self._key, sub = jax.random.split(self._key)
        return sub


def init_params(seed=42):
    kg = KeyGen(seed)

    def w32(*shape):
        return jax.random.normal(kg(), shape, jnp.float32) * 0.02

    def wbf(*shape):                       # matmul weights pre-cast to bf16 once
        return w32(*shape).astype(jnp.bfloat16)

    def zeros(*shape):
        return jnp.zeros(shape, jnp.float32)

    def ones(*shape):
        return jnp.ones(shape, jnp.float32)

    def stacked_layers(num_layers, dim, mlp):
        return {"ln1_g": ones(num_layers, 1, dim), "ln1_b": zeros(num_layers, 1, dim),
                "wqkv": wbf(num_layers, dim, 3 * dim), "bqkv": zeros(num_layers, 1, 3 * dim),
                "wo": wbf(num_layers, dim, dim), "bo": zeros(num_layers, 1, dim),
                "ln2_g": ones(num_layers, 1, dim), "ln2_b": zeros(num_layers, 1, dim),
                "fc1_w": wbf(num_layers, dim, mlp), "fc1_b": zeros(num_layers, 1, mlp),
                "fc2_w": wbf(num_layers, mlp, dim), "fc2_b": zeros(num_layers, 1, dim)}

    vit = {"patch_w": wbf(CPP, VIT_DIM), "patch_b": zeros(1, VIT_DIM),
           "cls": w32(1, VIT_DIM), "pos": w32(VIT_SEQ, VIT_DIM),
           "lnf_g": ones(1, VIT_DIM), "lnf_b": zeros(1, VIT_DIM)}
    vit.update(stacked_layers(VIT_LAYERS, VIT_DIM, VIT_MLP))

    bert = {"word_emb": w32(VOCAB, BERT_DIM), "pos_emb": w32(MAX_POS, BERT_DIM),
            "type_emb": w32(2, BERT_DIM),
            "ln_emb_g": ones(1, BERT_DIM), "ln_emb_b": zeros(1, BERT_DIM)}
    bert.update(stacked_layers(BERT_LAYERS, BERT_DIM, BERT_FFN))

    head = {"wi": wbf(VIT_DIM, EMBED_DIM), "bi": zeros(1, EMBED_DIM),
            "wt": wbf(BERT_DIM, EMBED_DIM), "bt": zeros(1, EMBED_DIM),
            # fusion_proj(cat([i, t])) == i @ W1 + t @ W2 + b
            "wf1": wbf(EMBED_DIM, EMBED_DIM), "wf2": wbf(EMBED_DIM, EMBED_DIM),
            "bf": zeros(1, EMBED_DIM)}

    return {"vit": vit, "bert": bert, "head": head}


# --------------------------------- main -----------------------------------------
if __name__ == "__main__":
    # TODO(synk): pretrained ViT-B/16 / BERT-base checkpoint weights are not
    # loadable here; deterministic random weights stand in for them.
    key = jax.random.PRNGKey(0)
    k_img, k_ids = jax.random.split(key)
    image = jax.random.normal(k_img, (BATCH, IMG_C, IMG_HW, IMG_HW), jnp.float32)
    input_ids = jax.random.randint(k_ids, (BATCH, TXT_SEQ), 0, VOCAB)
    attention_mask = jnp.ones((BATCH, TXT_SEQ), jnp.int32).at[1, TXT_SEQ - 2:].set(0)

    params = init_params()
    fwd = jax.jit(shopee_forward)
    out = fwd(image, input_ids, attention_mask, params)
    out = jax.block_until_ready(out)

    assert out.shape == (BATCH, EMBED_DIM)
    assert bool(jnp.all(jnp.isfinite(out)))
    # rows are L2-normalized
    assert bool(jnp.allclose(jnp.linalg.norm(out, axis=1), 1.0, atol=1e-4))
    print("KERNEL_OK")
</pallas_src>

<mosaic_0001>
module attributes {stable_mosaic.version = 11 : i64} {
  func.func @kernel(%arg0: i32, %arg1: memref<8x192xf32, #tpu.memory_space<vmem>>, %arg2: memref<192x256xbf16, #tpu.memory_space<vmem>>, %arg3: memref<1x256xf32, #tpu.memory_space<vmem>>, %arg4: memref<1x256xf32, #tpu.memory_space<vmem>>, %arg5: memref<5x256xf32, #tpu.memory_space<vmem>>, %arg6: memref<1x1x256xf32, #tpu.memory_space<vmem>>, %arg7: memref<1x1x256xf32, #tpu.memory_space<vmem>>, %arg8: memref<1x256x768xbf16, #tpu.memory_space<vmem>>, %arg9: memref<1x1x768xf32, #tpu.memory_space<vmem>>, %arg10: memref<1x256x256xbf16, #tpu.memory_space<vmem>>, %arg11: memref<1x1x256xf32, #tpu.memory_space<vmem>>, %arg12: memref<1x1x256xf32, #tpu.memory_space<vmem>>, %arg13: memref<1x1x256xf32, #tpu.memory_space<vmem>>, %arg14: memref<1x256x512xbf16, #tpu.memory_space<vmem>>, %arg15: memref<1x1x512xf32, #tpu.memory_space<vmem>>, %arg16: memref<1x512x256xbf16, #tpu.memory_space<vmem>>, %arg17: memref<1x1x256xf32, #tpu.memory_space<vmem>>, %arg18: memref<10x256xf32, #tpu.memory_space<vmem>>) attributes {dimension_semantics = [#tpu.dimension_semantics<arbitrary>], iteration_bounds = array<i64: 2>, scalar_prefetch = 0 : i64, scratch_operands = 0 : i64, tpu.core_type = #tpu.core_type<tc>, window_params = [{pipeline_mode = #tpu.pipeline_mode<synchronous>, transform_indices = @transform_0, window_bounds = array<i64: 8, 192>}, {pipeline_mode = #tpu.pipeline_mode<synchronous>, transform_indices = @transform_1, window_bounds = array<i64: 192, 256>}, {pipeline_mode = #tpu.pipeline_mode<synchronous>, transform_indices = @transform_2, window_bounds = array<i64: 1, 256>}, {pipeline_mode = #tpu.pipeline_mode<synchronous>, transform_indices = @transform_3, window_bounds = array<i64: 1, 256>}, {pipeline_mode = #tpu.pipeline_mode<synchronous>, transform_indices = @transform_4, window_bounds = array<i64: 5, 256>}, {transform_indices = @transform_5, window_bounds = array<i64: 1, 1, 256>}, {transform_indices = @transform_6, window_bounds = array<i64: 1, 1, 256>}, {transform_indices = @transform_7, window_bounds = array<i64: 1, 256, 768>}, {transform_indices = @transform_8, window_bounds = array<i64: 1, 1, 768>}, {transform_indices = @transform_9, window_bounds = array<i64: 1, 256, 256>}, {transform_indices = @transform_10, window_bounds = array<i64: 1, 1, 256>}, {transform_indices = @transform_11, window_bounds = array<i64: 1, 1, 256>}, {transform_indices = @transform_12, window_bounds = array<i64: 1, 1, 256>}, {transform_indices = @transform_13, window_bounds = array<i64: 1, 256, 512>}, {transform_indices = @transform_14, window_bounds = array<i64: 1, 1, 512>}, {transform_indices = @transform_15, window_bounds = array<i64: 1, 512, 256>}, {transform_indices = @transform_16, window_bounds = array<i64: 1, 1, 256>}, {pipeline_mode = #tpu.pipeline_mode<synchronous>, transform_indices = @transform_17, window_bounds = array<i64: 10, 256>}]} {
    %c0_i32 = arith.constant 0 : i32
    %0 = arith.cmpi eq, %arg0, %c0_i32 : i32
    %1 = arith.extui %0 : i1 to i32
    %c0_i32_0 = arith.constant 0 : i32
    %2 = arith.cmpi ne, %1, %c0_i32_0 : i32
    scf.if %2 {
      %c0_62 = arith.constant 0 : index
      %c0_63 = arith.constant 0 : index
      %160 = vector.load %arg1[%c0_62, %c0_63] : memref<8x192xf32, #tpu.memory_space<vmem>>, vector<8x192xf32>
      %c0_64 = arith.constant 0 : index
      %c0_65 = arith.constant 0 : index
      %161 = vector.load %arg2[%c0_64, %c0_65] : memref<192x256xbf16, #tpu.memory_space<vmem>>, vector<192x256xbf16>
      %162 = arith.truncf %160 : vector<8x192xf32> to vector<8x192xbf16>
      %cst_66 = arith.constant dense<0.000000e+00> : vector<8x256xf32>
      %163 = tpu.matmul %162, %161, %cst_66 {dimension_numbers = #tpu.dot_dimension_numbers<[1], [0], [0], [1], [0, 0, 1, 1], [], []>} : vector<8x192xbf16>, vector<192x256xbf16>, vector<8x256xf32> -> vector<8x256xf32>
      %c0_67 = arith.constant 0 : index
      %c0_68 = arith.constant 0 : index
      %164 = vector.load %arg3[%c0_67, %c0_68] : memref<1x256xf32, #tpu.memory_space<vmem>>, vector<1x256xf32>
      %165 = vector.broadcast %164 : vector<1x256xf32> to vector<8x256xf32>
      %166 = arith.addf %163, %165 : vector<8x256xf32>
      %c0_69 = arith.constant 0 : index
      %c0_70 = arith.constant 0 : index
      %167 = vector.load %arg4[%c0_69, %c0_70] : memref<1x256xf32, #tpu.memory_space<vmem>>, vector<1x256xf32>
      %c0_71 = arith.constant 0 : index
      %c0_72 = arith.constant 0 : index
      %168 = vector.load %arg5[%c0_71, %c0_72] : memref<5x256xf32, #tpu.memory_space<vmem>>, vector<1x256xf32>
      %169 = arith.addf %167, %168 : vector<1x256xf32>
      %c1 = arith.constant 1 : index
      %c0_73 = arith.constant 0 : index
      %170 = vector.load %arg5[%c1, %c0_73] : memref<5x256xf32, #tpu.memory_space<vmem>>, vector<4x256xf32>
      %171 = vector.extract_strided_slice %166 {offsets = [0, 0], sizes = [4, 256], strides = [1, 1]} : vector<8x256xf32> to vector<4x256xf32>
      %172 = arith.addf %171, %170 : vector<4x256xf32>
      %173 = vector.extract_strided_slice %166 {offsets = [4, 0], sizes = [4, 256], strides = [1, 1]} : vector<8x256xf32> to vector<4x256xf32>
      %174 = arith.addf %173, %170 : vector<4x256xf32>
      %175 = tpu.concatenate %169, %172, %169, %174 in 0 : vector<1x256xf32>, vector<4x256xf32>, vector<1x256xf32>, vector<4x256xf32> -> vector<10x256xf32>
      %c0_74 = arith.constant 0 : index
      %c0_75 = arith.constant 0 : index
      %176 = vector.load %arg18[%c0_74, %c0_75] : memref<10x256xf32, #tpu.memory_space<vmem>>, vector<10x256xf32>
      tpu.vector_store %arg18[%c0_74, %c0_75], %175 {strides = array<i32>} : memref<10x256xf32, #tpu.memory_space<vmem>>, vector<10x256xf32>,
    } else {
    }
    %c0 = arith.constant 0 : index
    %c0_1 = arith.constant 0 : index
    %3 = vector.load %arg18[%c0, %c0_1] : memref<10x256xf32, #tpu.memory_space<vmem>>, vector<10x256xf32>
    %c0_2 = arith.constant 0 : index
    %c0_3 = arith.constant 0 : index
    %c0_4 = arith.constant 0 : index
    %4 = vector.load %arg6[%c0_2, %c0_3, %c0_4] : memref<1x1x256xf32, #tpu.memory_space<vmem>>, vector<1x1x256xf32>
    %5 = vector.shape_cast %4 : vector<1x1x256xf32> to vector<1x256xf32>
    %c0_5 = arith.constant 0 : index
    %c0_6 = arith.constant 0 : index
    %c0_7 = arith.constant 0 : index
    %6 = vector.load %arg7[%c0_5, %c0_6, %c0_7] : memref<1x1x256xf32, #tpu.memory_space<vmem>>, vector<1x1x256xf32>
    %7 = vector.shape_cast %6 : vector<1x1x256xf32> to vector<1x256xf32>
    %cst = arith.constant dense<0.000000e+00> : vector<10xf32>
    %8 = vector.multi_reduction <add>, %3, %cst [1] : vector<10x256xf32> to vector<10xf32>
    %9 = vector.shape_cast %8 : vector<10xf32> to vector<10x1xf32>
    %cst_8 = arith.constant 2.560000e+02 : f32
    %10 = vector.broadcast %cst_8 : f32 to vector<10x1xf32>
    %11 = arith.divf %9, %10 : vector<10x1xf32>
    %12 = vector.broadcast %11 : vector<10x1xf32> to vector<10x256xf32>
    %13 = arith.subf %3, %12 : vector<10x256xf32>
    %14 = arith.mulf %13, %13 : vector<10x256xf32>
    %cst_9 = arith.constant dense<0.000000e+00> : vector<10xf32>
    %15 = vector.multi_reduction <add>, %14, %cst_9 [1] : vector<10x256xf32> to vector<10xf32>
    %16 = vector.shape_cast %15 : vector<10xf32> to vector<10x1xf32>
    %cst_10 = arith.constant 2.560000e+02 : f32
    %17 = vector.broadcast %cst_10 : f32 to vector<10x1xf32>
    %18 = arith.divf %16, %17 : vector<10x1xf32>
    %19 = vector.broadcast %11 : vector<10x1xf32> to vector<10x256xf32>
    %20 = arith.subf %3, %19 : vector<10x256xf32>
    %cst_11 = arith.constant 9.99999997E-7 : f32
    %21 = vector.broadcast %cst_11 : f32 to vector<10x1xf32>
    %22 = arith.addf %18, %21 : vector<10x1xf32>
    %23 = math.rsqrt %22 : vector<10x1xf32>
    %24 = vector.broadcast %23 : vector<10x1xf32> to vector<10x256xf32>
    %25 = arith.mulf %20, %24 : vector<10x256xf32>
    %26 = vector.broadcast %5 : vector<1x256xf32> to vector<10x256xf32>
    %27 = arith.mulf %25, %26 : vector<10x256xf32>
    %28 = vector.broadcast %7 : vector<1x256xf32> to vector<10x256xf32>
    %29 = arith.addf %27, %28 : vector<10x256xf32>
    %c0_12 = arith.constant 0 : index
    %c0_13 = arith.constant 0 : index
    %c0_14 = arith.constant 0 : index
    %30 = vector.load %arg8[%c0_12, %c0_13, %c0_14] : memref<1x256x768xbf16, #tpu.memory_space<vmem>>, vector<1x256x768xbf16>
    %31 = vector.shape_cast %30 : vector<1x256x768xbf16> to vector<256x768xbf16>
    %32 = arith.truncf %29 : vector<10x256xf32> to vector<10x256xbf16>
    %cst_15 = arith.constant dense<0.000000e+00> : vector<10x768xf32>
    %33 = tpu.matmul %32, %31, %cst_15 {dimension_numbers = #tpu.dot_dimension_numbers<[1], [0], [0], [1], [0, 0, 1, 1], [], []>} : vector<10x256xbf16>, vector<256x768xbf16>, vector<10x768xf32> -> vector<10x768xf32>
    %c0_16 = arith.constant 0 : index
    %c0_17 = arith.constant 0 : index
    %c0_18 = arith.constant 0 : index
    %34 = vector.load %arg9[%c0_16, %c0_17, %c0_18] : memref<1x1x768xf32, #tpu.memory_space<vmem>>, vector<1x1x768xf32>
    %35 = vector.shape_cast %34 : vector<1x1x768xf32> to vector<1x768xf32>
    %36 = vector.broadcast %35 : vector<1x768xf32> to vector<10x768xf32>
    %37 = arith.addf %33, %36 : vector<10x768xf32>
    %38 = vector.extract_strided_slice %37 {offsets = [0, 0], sizes = [5, 128], strides = [1, 1]} : vector<10x768xf32> to vector<5x128xf32>
    %39 = vector.extract_strided_slice %37 {offsets = [0, 128], sizes = [5, 128], strides = [1, 1]} : vector<10x768xf32> to vector<5x128xf32>
    %40 = vector.extract_strided_slice %37 {offsets = [5, 0], sizes = [5, 128], strides = [1, 1]} : vector<10x768xf32> to vector<5x128xf32>
    %41 = vector.extract_strided_slice %37 {offsets = [5, 128], sizes = [5, 128], strides = [1, 1]} : vector<10x768xf32> to vector<5x128xf32>
    %42 = vector.shape_cast %38 : vector<5x128xf32> to vector<1x5x128xf32>
    %43 = vector.shape_cast %39 : vector<5x128xf32> to vector<1x5x128xf32>
    %44 = vector.shape_cast %40 : vector<5x128xf32> to vector<1x5x128xf32>
    %45 = vector.shape_cast %41 : vector<5x128xf32> to vector<1x5x128xf32>
    %46 = tpu.concatenate %42, %43, %44, %45 in 0 : vector<1x5x128xf32>, vector<1x5x128xf32>, vector<1x5x128xf32>, vector<1x5x128xf32> -> vector<4x5x128xf32>
    %47 = arith.truncf %46 : vector<4x5x128xf32> to vector<4x5x128xbf16>
    %48 = vector.extract_strided_slice %37 {offsets = [0, 256], sizes = [5, 128], strides = [1, 1]} : vector<10x768xf32> to vector<5x128xf32>
    %49 = vector.extract_strided_slice %37 {offsets = [0, 384], sizes = [5, 128], strides = [1, 1]} : vector<10x768xf32> to vector<5x128xf32>
    %50 = vector.extract_strided_slice %37 {offsets = [5, 256], sizes = [5, 128], strides = [1, 1]} : vector<10x768xf32> to vector<5x128xf32>
    %51 = vector.extract_strided_slice %37 {offsets = [5, 384], sizes = [5, 128], strides = [1, 1]} : vector<10x768xf32> to vector<5x128xf32>
    %52 = vector.shape_cast %48 : vector<5x128xf32> to vector<1x5x128xf32>
    %53 = vector.shape_cast %49 : vector<5x128xf32> to vector<1x5x128xf32>
    %54 = vector.shape_cast %50 : vector<5x128xf32> to vector<1x5x128xf32>
    %55 = vector.shape_cast %51 : vector<5x128xf32> to vector<1x5x128xf32>
    %56 = tpu.concatenate %52, %53, %54, %55 in 0 : vector<1x5x128xf32>, vector<1x5x128xf32>, vector<1x5x128xf32>, vector<1x5x128xf32> -> vector<4x5x128xf32>
    %57 = arith.truncf %56 : vector<4x5x128xf32> to vector<4x5x128xbf16>
    %58 = vector.extract_strided_slice %37 {offsets = [0, 512], sizes = [5, 128], strides = [1, 1]} : vector<10x768xf32> to vector<5x128xf32>
    %59 = vector.extract_strided_slice %37 {offsets = [0, 640], sizes = [5, 128], strides = [1, 1]} : vector<10x768xf32> to vector<5x128xf32>
    %60 = vector.extract_strided_slice %37 {offsets = [5, 512], sizes = [5, 128], strides = [1, 1]} : vector<10x768xf32> to vector<5x128xf32>
    %61 = vector.extract_strided_slice %37 {offsets = [5, 640], sizes = [5, 128], strides = [1, 1]} : vector<10x768xf32> to vector<5x128xf32>
    %62 = vector.shape_cast %58 : vector<5x128xf32> to vector<1x5x128xf32>
    %63 = vector.shape_cast %59 : vector<5x128xf32> to vector<1x5x128xf32>
    %64 = vector.shape_cast %60 : vector<5x128xf32> to vector<1x5x128xf32>
    %65 = vector.shape_cast %61 : vector<5x128xf32> to vector<1x5x128xf32>
    %66 = tpu.concatenate %62, %63, %64, %65 in 0 : vector<1x5x128xf32>, vector<1x5x128xf32>, vector<1x5x128xf32>, vector<1x5x128xf32> -> vector<4x5x128xf32>
    %67 = arith.truncf %66 : vector<4x5x128xf32> to vector<4x5x128xbf16>
    %cst_19 = arith.constant dense<0.000000e+00> : vector<4x5x5xf32>
    %68 = tpu.matmul %47, %57, %cst_19 {dimension_numbers = #tpu.dot_dimension_numbers<[2], [2], [1], [1], [0, 0, 0, 1, 1, 1], [0], [0]>} : vector<4x5x128xbf16>, vector<4x5x128xbf16>, vector<4x5x5xf32> -> vector<4x5x5xf32>
    %cst_20 = arith.constant 0.0883883461 : f32
    %69 = vector.broadcast %cst_20 : f32 to vector<4x5x5xf32>
    %70 = arith.mulf %68, %69 : vector<4x5x5xf32>
    %cst_21 = arith.constant dense<0xFF800000> : vector<4x5xf32>
    %71 = vector.multi_reduction <maximumf>, %70, %cst_21 [2] : vector<4x5x5xf32> to vector<4x5xf32>
    %72 = vector.shape_cast %71 : vector<4x5xf32> to vector<4x5x1xf32>
    %73 = vector.broadcast %72 : vector<4x5x1xf32> to vector<4x5x5xf32>
    %74 = arith.subf %70, %73 : vector<4x5x5xf32>
    %75 = math.exp %74 : vector<4x5x5xf32>
    %cst_22 = arith.constant dense<0.000000e+00> : vector<4x5xf32>
    %76 = vector.multi_reduction <add>, %75, %cst_22 [2] : vector<4x5x5xf32> to vector<4x5xf32>
    %77 = vector.shape_cast %76 : vector<4x5xf32> to vector<4x5x1xf32>
    %78 = tpu.reciprocal %77 {approx = true} : vector<4x5x1xf32> -> vector<4x5x1xf32>
    %79 = vector.broadcast %78 : vector<4x5x1xf32> to vector<4x5x5xf32>
    %80 = arith.mulf %75, %79 : vector<4x5x5xf32>
    %81 = arith.truncf %80 : vector<4x5x5xf32> to vector<4x5x5xbf16>
    %cst_23 = arith.constant dense<0.000000e+00> : vector<4x5x128xf32>
    %82 = tpu.matmul %81, %67, %cst_23 {dimension_numbers = #tpu.dot_dimension_numbers<[2], [1], [1], [2], [0, 0, 0, 1, 1, 2], [0], [0]>} : vector<4x5x5xbf16>, vector<4x5x128xbf16>, vector<4x5x128xf32> -> vector<4x5x128xf32>
    %83 = vector.extract_strided_slice %82 {offsets = [0, 0, 0], sizes = [1, 5, 128], strides = [1, 1, 1]} : vector<4x5x128xf32> to vector<1x5x128xf32>
    %84 = vector.shape_cast %83 : vector<1x5x128xf32> to vector<5x128xf32>
    %85 = vector.extract_strided_slice %82 {offsets = [1, 0, 0], sizes = [1, 5, 128], strides = [1, 1, 1]} : vector<4x5x128xf32> to vector<1x5x128xf32>
    %86 = vector.shape_cast %85 : vector<1x5x128xf32> to vector<5x128xf32>
    %87 = tpu.concatenate %84, %86 in 1 : vector<5x128xf32>, vector<5x128xf32> -> vector<5x256xf32>
    %88 = vector.extract_strided_slice %82 {offsets = [2, 0, 0], sizes = [1, 5, 128], strides = [1, 1, 1]} : vector<4x5x128xf32> to vector<1x5x128xf32>
    %89 = vector.shape_cast %88 : vector<1x5x128xf32> to vector<5x128xf32>
    %90 = vector.extract_strided_slice %82 {offsets = [3, 0, 0], sizes = [1, 5, 128], strides = [1, 1, 1]} : vector<4x5x128xf32> to vector<1x5x128xf32>
    %91 = vector.shape_cast %90 : vector<1x5x128xf32> to vector<5x128xf32>
    %92 = tpu.concatenate %89, %91 in 1 : vector<5x128xf32>, vector<5x128xf32> -> vector<5x256xf32>
    %93 = tpu.concatenate %87, %92 in 0 : vector<5x256xf32>, vector<5x256xf32> -> vector<10x256xf32>
    %c0_24 = arith.constant 0 : index
    %c0_25 = arith.constant 0 : index
    %c0_26 = arith.constant 0 : index
    %94 = vector.load %arg10[%c0_24, %c0_25, %c0_26] : memref<1x256x256xbf16, #tpu.memory_space<vmem>>, vector<1x256x256xbf16>
    %95 = vector.shape_cast %94 : vector<1x256x256xbf16> to vector<256x256xbf16>
    %96 = arith.truncf %93 : vector<10x256xf32> to vector<10x256xbf16>
    %cst_27 = arith.constant dense<0.000000e+00> : vector<10x256xf32>
    %97 = tpu.matmul %96, %95, %cst_27 {dimension_numbers = #tpu.dot_dimension_numbers<[1], [0], [0], [1], [0, 0, 1, 1], [], []>} : vector<10x256xbf16>, vector<256x256xbf16>, vector<10x256xf32> -> vector<10x256xf32>
    %98 = arith.addf %3, %97 : vector<10x256xf32>
    %c0_28 = arith.constant 0 : index
    %c0_29 = arith.constant 0 : index
    %c0_30 = arith.constant 0 : index
    %99 = vector.load %arg11[%c0_28, %c0_29, %c0_30] : memref<1x1x256xf32, #tpu.memory_space<vmem>>, vector<1x1x256xf32>
    %100 = vector.shape_cast %99 : vector<1x1x256xf32> to vector<1x256xf32>
    %101 = vector.broadcast %100 : vector<1x256xf32> to vector<10x256xf32>
    %102 = arith.addf %98, %101 : vector<10x256xf32>
    %c0_31 = arith.constant 0 : index
    %c0_32 = arith.constant 0 : index
    %c0_33 = arith.constant 0 : index
    %103 = vector.load %arg12[%c0_31, %c0_32, %c0_33] : memref<1x1x256xf32, #tpu.memory_space<vmem>>, vector<1x1x256xf32>
    %104 = vector.shape_cast %103 : vector<1x1x256xf32> to vector<1x256xf32>
    %c0_34 = arith.constant 0 : index
    %c0_35 = arith.constant 0 : index
    %c0_36 = arith.constant 0 : index
    %105 = vector.load %arg13[%c0_34, %c0_35, %c0_36] : memref<1x1x256xf32, #tpu.memory_space<vmem>>, vector<1x1x256xf32>
    %106 = vector.shape_cast %105 : vector<1x1x256xf32> to vector<1x256xf32>
    %cst_37 = arith.constant dense<0.000000e+00> : vector<10xf32>
    %107 = vector.multi_reduction <add>, %102, %cst_37 [1] : vector<10x256xf32> to vector<10xf32>
    %108 = vector.shape_cast %107 : vector<10xf32> to vector<10x1xf32>
    %cst_38 = arith.constant 2.560000e+02 : f32
    %109 = vector.broadcast %cst_38 : f32 to vector<10x1xf32>
    %110 = arith.divf %108, %109 : vector<10x1xf32>
    %111 = vector.broadcast %110 : vector<10x1xf32> to vector<10x256xf32>
    %112 = arith.subf %102, %111 : vector<10x256xf32>
    %113 = arith.mulf %112, %112 : vector<10x256xf32>
    %cst_39 = arith.constant dense<0.000000e+00> : vector<10xf32>
    %114 = vector.multi_reduction <add>, %113, %cst_39 [1] : vector<10x256xf32> to vector<10xf32>
    %115 = vector.shape_cast %114 : vector<10xf32> to vector<10x1xf32>
    %cst_40 = arith.constant 2.560000e+02 : f32
    %116 = vector.broadcast %cst_40 : f32 to vector<10x1xf32>
    %117 = arith.divf %115, %116 : vector<10x1xf32>
    %118 = vector.broadcast %110 : vector<10x1xf32> to vector<10x256xf32>
    %119 = arith.subf %102, %118 : vector<10x256xf32>
    %cst_41 = arith.constant 9.99999997E-7 : f32
    %120 = vector.broadcast %cst_41 : f32 to vector<10x1xf32>
    %121 = arith.addf %117, %120 : vector<10x1xf32>
    %122 = math.rsqrt %121 : vector<10x1xf32>
    %123 = vector.broadcast %122 : vector<10x1xf32> to vector<10x256xf32>
    %124 = arith.mulf %119, %123 : vector<10x256xf32>
    %125 = vector.broadcast %104 : vector<1x256xf32> to vector<10x256xf32>
    %126 = arith.mulf %124, %125 : vector<10x256xf32>
    %127 = vector.broadcast %106 : vector<1x256xf32> to vector<10x256xf32>
    %128 = arith.addf %126, %127 : vector<10x256xf32>
    %c0_42 = arith.constant 0 : index
    %c0_43 = arith.constant 0 : index
    %c0_44 = arith.constant 0 : index
    %129 = vector.load %arg14[%c0_42, %c0_43, %c0_44] : memref<1x256x512xbf16, #tpu.memory_space<vmem>>, vector<1x256x512xbf16>
    %130 = vector.shape_cast %129 : vector<1x256x512xbf16> to vector<256x512xbf16>
    %131 = arith.truncf %128 : vector<10x256xf32> to vector<10x256xbf16>
    %cst_45 = arith.constant dense<0.000000e+00> : vector<10x512xf32>
    %132 = tpu.matmul %131, %130, %cst_45 {dimension_numbers = #tpu.dot_dimension_numbers<[1], [0], [0], [1], [0, 0, 1, 1], [], []>} : vector<10x256xbf16>, vector<256x512xbf16>, vector<10x512xf32> -> vector<10x512xf32>
    %c0_46 = arith.constant 0 : index
    %c0_47 = arith.constant 0 : index
    %c0_48 = arith.constant 0 : index
    %133 = vector.load %arg15[%c0_46, %c0_47, %c0_48] : memref<1x1x512xf32, #tpu.memory_space<vmem>>, vector<1x1x512xf32>
    %134 = vector.shape_cast %133 : vector<1x1x512xf32> to vector<1x512xf32>
    %135 = vector.broadcast %134 : vector<1x512xf32> to vector<10x512xf32>
    %136 = arith.addf %132, %135 : vector<10x512xf32>
    %cst_49 = arith.constant 5.000000e-01 : f32
    %137 = vector.broadcast %cst_49 : f32 to vector<10x512xf32>
    %138 = arith.mulf %137, %136 : vector<10x512xf32>
    %cst_50 = arith.constant 4.471500e-02 : f32
    %139 = vector.broadcast %cst_50 : f32 to vector<10x512xf32>
    %140 = arith.mulf %139, %136 : vector<10x512xf32>
    %141 = arith.mulf %140, %136 : vector<10x512xf32>
    %142 = arith.mulf %141, %136 : vector<10x512xf32>
    %143 = arith.addf %136, %142 : vector<10x512xf32>
    %cst_51 = arith.constant 0.797884583 : f32
    %144 = vector.broadcast %cst_51 : f32 to vector<10x512xf32>
    %145 = arith.mulf %144, %143 : vector<10x512xf32>
    %146 = math.tanh %145 : vector<10x512xf32>
    %cst_52 = arith.constant 1.000000e+00 : f32
    %147 = vector.broadcast %cst_52 : f32 to vector<10x512xf32>
    %148 = arith.addf %147, %146 : vector<10x512xf32>
    %149 = arith.mulf %138, %148 : vector<10x512xf32>
    %c0_53 = arith.constant 0 : index
    %c0_54 = arith.constant 0 : index
    %c0_55 = arith.constant 0 : index
    %150 = vector.load %arg16[%c0_53, %c0_54, %c0_55] : memref<1x512x256xbf16, #tpu.memory_space<vmem>>, vector<1x512x256xbf16>
    %151 = vector.shape_cast %150 : vector<1x512x256xbf16> to vector<512x256xbf16>
    %152 = arith.truncf %149 : vector<10x512xf32> to vector<10x512xbf16>
    %cst_56 = arith.constant dense<0.000000e+00> : vector<10x256xf32>
    %153 = tpu.matmul %152, %151, %cst_56 {dimension_numbers = #tpu.dot_dimension_numbers<[1], [0], [0], [1], [0, 0, 1, 1], [], []>} : vector<10x512xbf16>, vector<512x256xbf16>, vector<10x256xf32> -> vector<10x256xf32>
    %c0_57 = arith.constant 0 : index
    %c0_58 = arith.constant 0 : index
    %c0_59 = arith.constant 0 : index
    %154 = vector.load %arg17[%c0_57, %c0_58, %c0_59] : memref<1x1x256xf32, #tpu.memory_space<vmem>>, vector<1x1x256xf32>
    %155 = vector.shape_cast %154 : vector<1x1x256xf32> to vector<1x256xf32>
    %156 = vector.broadcast %155 : vector<1x256xf32> to vector<10x256xf32>
    %157 = arith.addf %153, %156 : vector<10x256xf32>
    %158 = arith.addf %102, %157 : vector<10x256xf32>
    %c0_60 = arith.constant 0 : index
    %c0_61 = arith.constant 0 : index
    %159 = vector.load %arg18[%c0_60, %c0_61] : memref<10x256xf32, #tpu.memory_space<vmem>>, vector<10x256xf32>
    tpu.vector_store %arg18[%c0_60, %c0_61], %158 {strides = array<i32>} : memref<10x256xf32, #tpu.memory_space<vmem>>, vector<10x256xf32>,
    return
  }
  func.func @transform_0(%arg0: i32) -> (i32, i32) {
    %c0_i32 = arith.constant 0 : i32
    %c0_i32_0 = arith.constant 0 : i32
    %c0_i32_1 = arith.constant 0 : i32
    return %c0_i32, %c0_i32_0 : i32, i32
  }
  func.func @transform_1(%arg0: i32) -> (i32, i32) {
    %c0_i32 = arith.constant 0 : i32
    %c0_i32_0 = arith.constant 0 : i32
    %c0_i32_1 = arith.constant 0 : i32
    return %c0_i32, %c0_i32_0 : i32, i32
  }
  func.func @transform_2(%arg0: i32) -> (i32, i32) {
    %c0_i32 = arith.constant 0 : i32
    %c0_i32_0 = arith.constant 0 : i32
    %c0_i32_1 = arith.constant 0 : i32
    return %c0_i32, %c0_i32_0 : i32, i32
  }
  func.func @transform_3(%arg0: i32) -> (i32, i32) {
    %c0_i32 = arith.constant 0 : i32
    %c0_i32_0 = arith.constant 0 : i32
    %c0_i32_1 = arith.constant 0 : i32
    return %c0_i32, %c0_i32_0 : i32, i32
  }
  func.func @transform_4(%arg0: i32) -> (i32, i32) {
    %c0_i32 = arith.constant 0 : i32
    %c0_i32_0 = arith.constant 0 : i32
    %c0_i32_1 = arith.constant 0 : i32
    return %c0_i32, %c0_i32_0 : i32, i32
  }
  func.func @transform_5(%arg0: i32) -> (i32, i32, i32) {
    %c0_i32 = arith.constant 0 : i32
    %c0_i32_0 = arith.constant 0 : i32
    %c0_i32_1 = arith.constant 0 : i32
    return %arg0, %c0_i32, %c0_i32_0 : i32, i32, i32
  }
  func.func @transform_6(%arg0: i32) -> (i32, i32, i32) {
    %c0_i32 = arith.constant 0 : i32
    %c0_i32_0 = arith.constant 0 : i32
    %c0_i32_1 = arith.constant 0 : i32
    return %arg0, %c0_i32, %c0_i32_0 : i32, i32, i32
  }
  func.func @transform_7(%arg0: i32) -> (i32, i32, i32) {
    %c0_i32 = arith.constant 0 : i32
    %c0_i32_0 = arith.constant 0 : i32
    %c0_i32_1 = arith.constant 0 : i32
    return %arg0, %c0_i32, %c0_i32_0 : i32, i32, i32
  }
  func.func @transform_8(%arg0: i32) -> (i32, i32, i32) {
    %c0_i32 = arith.constant 0 : i32
    %c0_i32_0 = arith.constant 0 : i32
    %c0_i32_1 = arith.constant 0 : i32
    return %arg0, %c0_i32, %c0_i32_0 : i32, i32, i32
  }
  func.func @transform_9(%arg0: i32) -> (i32, i32, i32) {
    %c0_i32 = arith.constant 0 : i32
    %c0_i32_0 = arith.constant 0 : i32
    %c0_i32_1 = arith.constant 0 : i32
    return %arg0, %c0_i32, %c0_i32_0 : i32, i32, i32
  }
  func.func @transform_10(%arg0: i32) -> (i32, i32, i32) {
    %c0_i32 = arith.constant 0 : i32
    %c0_i32_0 = arith.constant 0 : i32
    %c0_i32_1 = arith.constant 0 : i32
    return %arg0, %c0_i32, %c0_i32_0 : i32, i32, i32
  }
  func.func @transform_11(%arg0: i32) -> (i32, i32, i32) {
    %c0_i32 = arith.constant 0 : i32
    %c0_i32_0 = arith.constant 0 : i32
    %c0_i32_1 = arith.constant 0 : i32
    return %arg0, %c0_i32, %c0_i32_0 : i32, i32, i32
  }
  func.func @transform_12(%arg0: i32) -> (i32, i32, i32) {
    %c0_i32 = arith.constant 0 : i32
    %c0_i32_0 = arith.constant 0 : i32
    %c0_i32_1 = arith.constant 0 : i32
    return %arg0, %c0_i32, %c0_i32_0 : i32, i32, i32
  }
  func.func @transform_13(%arg0: i32) -> (i32, i32, i32) {
    %c0_i32 = arith.constant 0 : i32
    %c0_i32_0 = arith.constant 0 : i32
    %c0_i32_1 = arith.constant 0 : i32
    return %arg0, %c0_i32, %c0_i32_0 : i32, i32, i32
  }
  func.func @transform_14(%arg0: i32) -> (i32, i32, i32) {
    %c0_i32 = arith.constant 0 : i32
    %c0_i32_0 = arith.constant 0 : i32
    %c0_i32_1 = arith.constant 0 : i32
    return %arg0, %c0_i32, %c0_i32_0 : i32, i32, i32
  }
  func.func @transform_15(%arg0: i32) -> (i32, i32, i32) {
    %c0_i32 = arith.constant 0 : i32
    %c0_i32_0 = arith.constant 0 : i32
    %c0_i32_1 = arith.constant 0 : i32
    return %arg0, %c0_i32, %c0_i32_0 : i32, i32, i32
  }
  func.func @transform_16(%arg0: i32) -> (i32, i32, i32) {
    %c0_i32 = arith.constant 0 : i32
    %c0_i32_0 = arith.constant 0 : i32
    %c0_i32_1 = arith.constant 0 : i32
    return %arg0, %c0_i32, %c0_i32_0 : i32, i32, i32
  }
  func.func @transform_17(%arg0: i32) -> (i32, i32) {
    %c0_i32 = arith.constant 0 : i32
    %c0_i32_0 = arith.constant 0 : i32
    %c0_i32_1 = arith.constant 0 : i32
    return %c0_i32, %c0_i32_0 : i32, i32
  }
}

module attributes {stable_mosaic.version = 11 : i64} {
  func.func @fusion_head_kernel(%arg0: memref<2x256xf32, #tpu.memory_space<vmem>>, %arg1: memref<1x256xf32, #tpu.memory_space<vmem>>, %arg2: memref<1x256xf32, #tpu.memory_space<vmem>>, %arg3: memref<256x256xbf16, #tpu.memory_space<vmem>>, %arg4: memref<1x256xf32, #tpu.memory_space<vmem>>, %arg5: memref<2x256xf32, #tpu.memory_space<vmem>>, %arg6: memref<256x256xbf16, #tpu.memory_space<vmem>>, %arg7: memref<1x256xf32, #tpu.memory_space<vmem>>, %arg8: memref<256x256xbf16, #tpu.memory_space<vmem>>, %arg9: memref<256x256xbf16, #tpu.memory_space<vmem>>, %arg10: memref<1x256xf32, #tpu.memory_space<vmem>>, %arg11: memref<2x256xf32, #tpu.memory_space<vmem>>) attributes {dimension_semantics = [], scalar_prefetch = 0 : i64, scratch_operands = 0 : i64, tpu.core_type = #tpu.core_type<tc>} {
    %c0 = arith.constant 0 : index
    %c0_0 = arith.constant 0 : index
    %0 = vector.load %arg0[%c0, %c0_0] : memref<2x256xf32, #tpu.memory_space<vmem>>, vector<2x256xf32>
    %c0_1 = arith.constant 0 : index
    %c0_2 = arith.constant 0 : index
    %1 = vector.load %arg1[%c0_1, %c0_2] : memref<1x256xf32, #tpu.memory_space<vmem>>, vector<1x256xf32>
    %c0_3 = arith.constant 0 : index
    %c0_4 = arith.constant 0 : index
    %2 = vector.load %arg2[%c0_3, %c0_4] : memref<1x256xf32, #tpu.memory_space<vmem>>, vector<1x256xf32>
    %cst = arith.constant dense<0.000000e+00> : vector<2xf32>
    %3 = vector.multi_reduction <add>, %0, %cst [1] : vector<2x256xf32> to vector<2xf32>
    %4 = vector.shape_cast %3 : vector<2xf32> to vector<2x1xf32>
    %cst_5 = arith.constant 2.560000e+02 : f32
    %5 = vector.broadcast %cst_5 : f32 to vector<2x1xf32>
    %6 = arith.divf %4, %5 : vector<2x1xf32>
    %7 = vector.broadcast %6 : vector<2x1xf32> to vector<2x256xf32>
    %8 = arith.subf %0, %7 : vector<2x256xf32>
    %9 = arith.mulf %8, %8 : vector<2x256xf32>
    %cst_6 = arith.constant dense<0.000000e+00> : vector<2xf32>
    %10 = vector.multi_reduction <add>, %9, %cst_6 [1] : vector<2x256xf32> to vector<2xf32>
    %11 = vector.shape_cast %10 : vector<2xf32> to vector<2x1xf32>
    %cst_7 = arith.constant 2.560000e+02 : f32
    %12 = vector.broadcast %cst_7 : f32 to vector<2x1xf32>
    %13 = arith.divf %11, %12 : vector<2x1xf32>
    %14 = vector.broadcast %6 : vector<2x1xf32> to vector<2x256xf32>
    %15 = arith.subf %0, %14 : vector<2x256xf32>
    %cst_8 = arith.constant 9.99999997E-7 : f32
    %16 = vector.broadcast %cst_8 : f32 to vector<2x1xf32>
    %17 = arith.addf %13, %16 : vector<2x1xf32>
    %18 = math.rsqrt %17 : vector<2x1xf32>
    %19 = vector.broadcast %18 : vector<2x1xf32> to vector<2x256xf32>
    %20 = arith.mulf %15, %19 : vector<2x256xf32>
    %21 = vector.broadcast %1 : vector<1x256xf32> to vector<2x256xf32>
    %22 = arith.mulf %20, %21 : vector<2x256xf32>
    %23 = vector.broadcast %2 : vector<1x256xf32> to vector<2x256xf32>
    %24 = arith.addf %22, %23 : vector<2x256xf32>
    %c0_9 = arith.constant 0 : index
    %c0_10 = arith.constant 0 : index
    %25 = vector.load %arg3[%c0_9, %c0_10] : memref<256x256xbf16, #tpu.memory_space<vmem>>, vector<256x256xbf16>
    %26 = arith.truncf %24 : vector<2x256xf32> to vector<2x256xbf16>
    %cst_11 = arith.constant dense<0.000000e+00> : vector<2x256xf32>
    %27 = tpu.matmul %26, %25, %cst_11 {dimension_numbers = #tpu.dot_dimension_numbers<[1], [0], [0], [1], [0, 0, 1, 1], [], []>} : vector<2x256xbf16>, vector<256x256xbf16>, vector<2x256xf32> -> vector<2x256xf32>
    %c0_12 = arith.constant 0 : index
    %c0_13 = arith.constant 0 : index
    %28 = vector.load %arg4[%c0_12, %c0_13] : memref<1x256xf32, #tpu.memory_space<vmem>>, vector<1x256xf32>
    %29 = vector.broadcast %28 : vector<1x256xf32> to vector<2x256xf32>
    %30 = arith.addf %27, %29 : vector<2x256xf32>
    %c0_14 = arith.constant 0 : index
    %c0_15 = arith.constant 0 : index
    %31 = vector.load %arg5[%c0_14, %c0_15] : memref<2x256xf32, #tpu.memory_space<vmem>>, vector<2x256xf32>
    %c0_16 = arith.constant 0 : index
    %c0_17 = arith.constant 0 : index
    %32 = vector.load %arg6[%c0_16, %c0_17] : memref<256x256xbf16, #tpu.memory_space<vmem>>, vector<256x256xbf16>
    %33 = arith.truncf %31 : vector<2x256xf32> to vector<2x256xbf16>
    %cst_18 = arith.constant dense<0.000000e+00> : vector<2x256xf32>
    %34 = tpu.matmul %33, %32, %cst_18 {dimension_numbers = #tpu.dot_dimension_numbers<[1], [0], [0], [1], [0, 0, 1, 1], [], []>} : vector<2x256xbf16>, vector<256x256xbf16>, vector<2x256xf32> -> vector<2x256xf32>
    %c0_19 = arith.constant 0 : index
    %c0_20 = arith.constant 0 : index
    %35 = vector.load %arg7[%c0_19, %c0_20] : memref<1x256xf32, #tpu.memory_space<vmem>>, vector<1x256xf32>
    %36 = vector.broadcast %35 : vector<1x256xf32> to vector<2x256xf32>
    %37 = arith.addf %34, %36 : vector<2x256xf32>
    %c0_21 = arith.constant 0 : index
    %c0_22 = arith.constant 0 : index
    %38 = vector.load %arg8[%c0_21, %c0_22] : memref<256x256xbf16, #tpu.memory_space<vmem>>, vector<256x256xbf16>
    %39 = arith.truncf %30 : vector<2x256xf32> to vector<2x256xbf16>
    %cst_23 = arith.constant dense<0.000000e+00> : vector<2x256xf32>
    %40 = tpu.matmul %39, %38, %cst_23 {dimension_numbers = #tpu.dot_dimension_numbers<[1], [0], [0], [1], [0, 0, 1, 1], [], []>} : vector<2x256xbf16>, vector<256x256xbf16>, vector<2x256xf32> -> vector<2x256xf32>
    %c0_24 = arith.constant 0 : index
    %c0_25 = arith.constant 0 : index
    %41 = vector.load %arg9[%c0_24, %c0_25] : memref<256x256xbf16, #tpu.memory_space<vmem>>, vector<256x256xbf16>
    %42 = arith.truncf %37 : vector<2x256xf32> to vector<2x256xbf16>
    %cst_26 = arith.constant dense<0.000000e+00> : vector<2x256xf32>
    %43 = tpu.matmul %42, %41, %cst_26 {dimension_numbers = #tpu.dot_dimension_numbers<[1], [0], [0], [1], [0, 0, 1, 1], [], []>} : vector<2x256xbf16>, vector<256x256xbf16>, vector<2x256xf32> -> vector<2x256xf32>
    %44 = arith.addf %40, %43 : vector<2x256xf32>
    %c0_27 = arith.constant 0 : index
    %c0_28 = arith.constant 0 : index
    %45 = vector.load %arg10[%c0_27, %c0_28] : memref<1x256xf32, #tpu.memory_space<vmem>>, vector<1x256xf32>
    %46 = vector.broadcast %45 : vector<1x256xf32> to vector<2x256xf32>
    %47 = arith.addf %44, %46 : vector<2x256xf32>
    %48 = arith.mulf %47, %47 : vector<2x256xf32>
    %cst_29 = arith.constant dense<0.000000e+00> : vector<2xf32>
    %49 = vector.multi_reduction <add>, %48, %cst_29 [1] : vector<2x256xf32> to vector<2xf32>
    %50 = vector.shape_cast %49 : vector<2xf32> to vector<2x1xf32>
    %cst_30 = arith.constant 1.000000e-24 : f32
    %51 = vector.broadcast %cst_30 : f32 to vector<2x1xf32>
    %52 = arith.maximumf %50, %51 : vector<2x1xf32>
    %53 = math.rsqrt %52 : vector<2x1xf32>
    %54 = vector.broadcast %53 : vector<2x1xf32> to vector<2x256xf32>
    %55 = arith.mulf %47, %54 : vector<2x256xf32>
    %c0_31 = arith.constant 0 : index
    %c0_32 = arith.constant 0 : index
    %56 = vector.load %arg11[%c0_31, %c0_32] : memref<2x256xf32, #tpu.memory_space<vmem>>, vector<2x256xf32>
    tpu.vector_store %arg11[%c0_31, %c0_32], %55 {strides = array<i32>} : memref<2x256xf32, #tpu.memory_space<vmem>>, vector<2x256xf32>,
    return
  }
}

module attributes {stable_mosaic.version = 11 : i64} {
  func.func @kernel(%arg0: i32, %arg1: memref<16x256xf32, #tpu.memory_space<vmem>>, %arg2: memref<2x8xf32, #tpu.memory_space<vmem>>, %arg3: memref<1x256xf32, #tpu.memory_space<vmem>>, %arg4: memref<1x256xf32, #tpu.memory_space<vmem>>, %arg5: memref<1x1x256xf32, #tpu.memory_space<vmem>>, %arg6: memref<1x1x256xf32, #tpu.memory_space<vmem>>, %arg7: memref<1x256x768xbf16, #tpu.memory_space<vmem>>, %arg8: memref<1x1x768xf32, #tpu.memory_space<vmem>>, %arg9: memref<1x256x256xbf16, #tpu.memory_space<vmem>>, %arg10: memref<1x1x256xf32, #tpu.memory_space<vmem>>, %arg11: memref<1x1x256xf32, #tpu.memory_space<vmem>>, %arg12: memref<1x1x256xf32, #tpu.memory_space<vmem>>, %arg13: memref<1x256x512xbf16, #tpu.memory_space<vmem>>, %arg14: memref<1x1x512xf32, #tpu.memory_space<vmem>>, %arg15: memref<1x512x256xbf16, #tpu.memory_space<vmem>>, %arg16: memref<1x1x256xf32, #tpu.memory_space<vmem>>, %arg17: memref<16x256xf32, #tpu.memory_space<vmem>>) attributes {dimension_semantics = [#tpu.dimension_semantics<arbitrary>], iteration_bounds = array<i64: 2>, scalar_prefetch = 0 : i64, scratch_operands = 0 : i64, tpu.core_type = #tpu.core_type<tc>, window_params = [{pipeline_mode = #tpu.pipeline_mode<synchronous>, transform_indices = @transform_0, window_bounds = array<i64: 16, 256>}, {pipeline_mode = #tpu.pipeline_mode<synchronous>, transform_indices = @transform_1, window_bounds = array<i64: 2, 8>}, {pipeline_mode = #tpu.pipeline_mode<synchronous>, transform_indices = @transform_2, window_bounds = array<i64: 1, 256>}, {pipeline_mode = #tpu.pipeline_mode<synchronous>, transform_indices = @transform_3, window_bounds = array<i64: 1, 256>}, {transform_indices = @transform_4, window_bounds = array<i64: 1, 1, 256>}, {transform_indices = @transform_5, window_bounds = array<i64: 1, 1, 256>}, {transform_indices = @transform_6, window_bounds = array<i64: 1, 256, 768>}, {transform_indices = @transform_7, window_bounds = array<i64: 1, 1, 768>}, {transform_indices = @transform_8, window_bounds = array<i64: 1, 256, 256>}, {transform_indices = @transform_9, window_bounds = array<i64: 1, 1, 256>}, {transform_indices = @transform_10, window_bounds = array<i64: 1, 1, 256>}, {transform_indices = @transform_11, window_bounds = array<i64: 1, 1, 256>}, {transform_indices = @transform_12, window_bounds = array<i64: 1, 256, 512>}, {transform_indices = @transform_13, window_bounds = array<i64: 1, 1, 512>}, {transform_indices = @transform_14, window_bounds = array<i64: 1, 512, 256>}, {transform_indices = @transform_15, window_bounds = array<i64: 1, 1, 256>}, {pipeline_mode = #tpu.pipeline_mode<synchronous>, transform_indices = @transform_16, window_bounds = array<i64: 16, 256>}]} {
    %c0_i32 = arith.constant 0 : i32
    %0 = arith.cmpi eq, %arg0, %c0_i32 : i32
    %1 = arith.extui %0 : i1 to i32
    %c0_i32_0 = arith.constant 0 : i32
    %2 = arith.cmpi ne, %1, %c0_i32_0 : i32
    scf.if %2 {
      %c0_66 = arith.constant 0 : index
      %c0_67 = arith.constant 0 : index
      %176 = vector.load %arg1[%c0_66, %c0_67] : memref<16x256xf32, #tpu.memory_space<vmem>>, vector<16x256xf32>
      %c0_68 = arith.constant 0 : index
      %c0_69 = arith.constant 0 : index
      %177 = vector.load %arg3[%c0_68, %c0_69] : memref<1x256xf32, #tpu.memory_space<vmem>>, vector<1x256xf32>
      %c0_70 = arith.constant 0 : index
      %c0_71 = arith.constant 0 : index
      %178 = vector.load %arg4[%c0_70, %c0_71] : memref<1x256xf32, #tpu.memory_space<vmem>>, vector<1x256xf32>
      %cst_72 = arith.constant dense<0.000000e+00> : vector<16xf32>
      %179 = vector.multi_reduction <add>, %176, %cst_72 [1] : vector<16x256xf32> to vector<16xf32>
      %180 = vector.shape_cast %179 : vector<16xf32> to vector<16x1xf32>
      %cst_73 = arith.constant 2.560000e+02 : f32
      %181 = vector.broadcast %cst_73 : f32 to vector<16x1xf32>
      %182 = arith.divf %180, %181 : vector<16x1xf32>
      %183 = vector.broadcast %182 : vector<16x1xf32> to vector<16x256xf32>
      %184 = arith.subf %176, %183 : vector<16x256xf32>
      %185 = arith.mulf %184, %184 : vector<16x256xf32>
      %cst_74 = arith.constant dense<0.000000e+00> : vector<16xf32>
      %186 = vector.multi_reduction <add>, %185, %cst_74 [1] : vector<16x256xf32> to vector<16xf32>
      %187 = vector.shape_cast %186 : vector<16xf32> to vector<16x1xf32>
      %cst_75 = arith.constant 2.560000e+02 : f32
      %188 = vector.broadcast %cst_75 : f32 to vector<16x1xf32>
      %189 = arith.divf %187, %188 : vector<16x1xf32>
      %190 = vector.broadcast %182 : vector<16x1xf32> to vector<16x256xf32>
      %191 = arith.subf %176, %190 : vector<16x256xf32>
      %cst_76 = arith.constant 9.99999996E-13 : f32
      %192 = vector.broadcast %cst_76 : f32 to vector<16x1xf32>
      %193 = arith.addf %189, %192 : vector<16x1xf32>
      %194 = math.rsqrt %193 : vector<16x1xf32>
      %195 = vector.broadcast %194 : vector<16x1xf32> to vector<16x256xf32>
      %196 = arith.mulf %191, %195 : vector<16x256xf32>
      %197 = vector.broadcast %177 : vector<1x256xf32> to vector<16x256xf32>
      %198 = arith.mulf %196, %197 : vector<16x256xf32>
      %199 = vector.broadcast %178 : vector<1x256xf32> to vector<16x256xf32>
      %200 = arith.addf %198, %199 : vector<16x256xf32>
      %c0_77 = arith.constant 0 : index
      %c0_78 = arith.constant 0 : index
      %201 = vector.load %arg17[%c0_77, %c0_78] : memref<16x256xf32, #tpu.memory_space<vmem>>, vector<16x256xf32>
      tpu.vector_store %arg17[%c0_77, %c0_78], %200 {strides = array<i32>} : memref<16x256xf32, #tpu.memory_space<vmem>>, vector<16x256xf32>,
    } else {
    }
    %c0 = arith.constant 0 : index
    %c0_1 = arith.constant 0 : index
    %3 = vector.load %arg17[%c0, %c0_1] : memref<16x256xf32, #tpu.memory_space<vmem>>, vector<16x256xf32>
    %c0_2 = arith.constant 0 : index
    %c0_3 = arith.constant 0 : index
    %c0_4 = arith.constant 0 : index
    %4 = vector.load %arg7[%c0_2, %c0_3, %c0_4] : memref<1x256x768xbf16, #tpu.memory_space<vmem>>, vector<1x256x768xbf16>
    %5 = vector.shape_cast %4 : vector<1x256x768xbf16> to vector<256x768xbf16>
    %6 = arith.truncf %3 : vector<16x256xf32> to vector<16x256xbf16>
    %cst = arith.constant dense<0.000000e+00> : vector<16x768xf32>
    %7 = tpu.matmul %6, %5, %cst {dimension_numbers = #tpu.dot_dimension_numbers<[1], [0], [0], [1], [0, 0, 1, 1], [], []>} : vector<16x256xbf16>, vector<256x768xbf16>, vector<16x768xf32> -> vector<16x768xf32>
    %c0_5 = arith.constant 0 : index
    %c0_6 = arith.constant 0 : index
    %c0_7 = arith.constant 0 : index
    %8 = vector.load %arg8[%c0_5, %c0_6, %c0_7] : memref<1x1x768xf32, #tpu.memory_space<vmem>>, vector<1x1x768xf32>
    %9 = vector.shape_cast %8 : vector<1x1x768xf32> to vector<1x768xf32>
    %10 = vector.broadcast %9 : vector<1x768xf32> to vector<16x768xf32>
    %11 = arith.addf %7, %10 : vector<16x768xf32>
    %12 = vector.extract_strided_slice %11 {offsets = [0, 0], sizes = [8, 128], strides = [1, 1]} : vector<16x768xf32> to vector<8x128xf32>
    %13 = vector.extract_strided_slice %11 {offsets = [0, 128], sizes = [8, 128], strides = [1, 1]} : vector<16x768xf32> to vector<8x128xf32>
    %14 = vector.extract_strided_slice %11 {offsets = [8, 0], sizes = [8, 128], strides = [1, 1]} : vector<16x768xf32> to vector<8x128xf32>
    %15 = vector.extract_strided_slice %11 {offsets = [8, 128], sizes = [8, 128], strides = [1, 1]} : vector<16x768xf32> to vector<8x128xf32>
    %16 = vector.shape_cast %12 : vector<8x128xf32> to vector<1x8x128xf32>
    %17 = vector.shape_cast %13 : vector<8x128xf32> to vector<1x8x128xf32>
    %18 = vector.shape_cast %14 : vector<8x128xf32> to vector<1x8x128xf32>
    %19 = vector.shape_cast %15 : vector<8x128xf32> to vector<1x8x128xf32>
    %20 = tpu.concatenate %16, %17, %18, %19 in 0 : vector<1x8x128xf32>, vector<1x8x128xf32>, vector<1x8x128xf32>, vector<1x8x128xf32> -> vector<4x8x128xf32>
    %21 = arith.truncf %20 : vector<4x8x128xf32> to vector<4x8x128xbf16>
    %22 = vector.extract_strided_slice %11 {offsets = [0, 256], sizes = [8, 128], strides = [1, 1]} : vector<16x768xf32> to vector<8x128xf32>
    %23 = vector.extract_strided_slice %11 {offsets = [0, 384], sizes = [8, 128], strides = [1, 1]} : vector<16x768xf32> to vector<8x128xf32>
    %24 = vector.extract_strided_slice %11 {offsets = [8, 256], sizes = [8, 128], strides = [1, 1]} : vector<16x768xf32> to vector<8x128xf32>
    %25 = vector.extract_strided_slice %11 {offsets = [8, 384], sizes = [8, 128], strides = [1, 1]} : vector<16x768xf32> to vector<8x128xf32>
    %26 = vector.shape_cast %22 : vector<8x128xf32> to vector<1x8x128xf32>
    %27 = vector.shape_cast %23 : vector<8x128xf32> to vector<1x8x128xf32>
    %28 = vector.shape_cast %24 : vector<8x128xf32> to vector<1x8x128xf32>
    %29 = vector.shape_cast %25 : vector<8x128xf32> to vector<1x8x128xf32>
    %30 = tpu.concatenate %26, %27, %28, %29 in 0 : vector<1x8x128xf32>, vector<1x8x128xf32>, vector<1x8x128xf32>, vector<1x8x128xf32> -> vector<4x8x128xf32>
    %31 = arith.truncf %30 : vector<4x8x128xf32> to vector<4x8x128xbf16>
    %32 = vector.extract_strided_slice %11 {offsets = [0, 512], sizes = [8, 128], strides = [1, 1]} : vector<16x768xf32> to vector<8x128xf32>
    %33 = vector.extract_strided_slice %11 {offsets = [0, 640], sizes = [8, 128], strides = [1, 1]} : vector<16x768xf32> to vector<8x128xf32>
    %34 = vector.extract_strided_slice %11 {offsets = [8, 512], sizes = [8, 128], strides = [1, 1]} : vector<16x768xf32> to vector<8x128xf32>
    %35 = vector.extract_strided_slice %11 {offsets = [8, 640], sizes = [8, 128], strides = [1, 1]} : vector<16x768xf32> to vector<8x128xf32>
    %36 = vector.shape_cast %32 : vector<8x128xf32> to vector<1x8x128xf32>
    %37 = vector.shape_cast %33 : vector<8x128xf32> to vector<1x8x128xf32>
    %38 = vector.shape_cast %34 : vector<8x128xf32> to vector<1x8x128xf32>
    %39 = vector.shape_cast %35 : vector<8x128xf32> to vector<1x8x128xf32>
    %40 = tpu.concatenate %36, %37, %38, %39 in 0 : vector<1x8x128xf32>, vector<1x8x128xf32>, vector<1x8x128xf32>, vector<1x8x128xf32> -> vector<4x8x128xf32>
    %41 = arith.truncf %40 : vector<4x8x128xf32> to vector<4x8x128xbf16>
    %cst_8 = arith.constant dense<0.000000e+00> : vector<4x8x8xf32>
    %42 = tpu.matmul %21, %31, %cst_8 {dimension_numbers = #tpu.dot_dimension_numbers<[2], [2], [1], [1], [0, 0, 0, 1, 1, 1], [0], [0]>} : vector<4x8x128xbf16>, vector<4x8x128xbf16>, vector<4x8x8xf32> -> vector<4x8x8xf32>
    %cst_9 = arith.constant 0.0883883461 : f32
    %43 = vector.broadcast %cst_9 : f32 to vector<4x8x8xf32>
    %44 = arith.mulf %42, %43 : vector<4x8x8xf32>
    %c0_10 = arith.constant 0 : index
    %c0_11 = arith.constant 0 : index
    %45 = vector.load %arg2[%c0_10, %c0_11] : memref<2x8xf32, #tpu.memory_space<vmem>>, vector<2x8xf32>
    %cst_12 = arith.constant 1.000000e+00 : f32
    %46 = vector.broadcast %cst_12 : f32 to vector<2x8xf32>
    %47 = arith.subf %46, %45 : vector<2x8xf32>
    %cst_13 = arith.constant -1.000000e+09 : f32
    %48 = vector.broadcast %cst_13 : f32 to vector<2x8xf32>
    %49 = arith.mulf %47, %48 : vector<2x8xf32>
    %50 = vector.extract_strided_slice %49 {offsets = [0, 0], sizes = [1, 8], strides = [1, 1]} : vector<2x8xf32> to vector<1x8xf32>
    %51 = vector.extract_strided_slice %49 {offsets = [0, 0], sizes = [1, 8], strides = [1, 1]} : vector<2x8xf32> to vector<1x8xf32>
    %52 = vector.extract_strided_slice %49 {offsets = [1, 0], sizes = [1, 8], strides = [1, 1]} : vector<2x8xf32> to vector<1x8xf32>
    %53 = vector.extract_strided_slice %49 {offsets = [1, 0], sizes = [1, 8], strides = [1, 1]} : vector<2x8xf32> to vector<1x8xf32>
    %54 = vector.shape_cast %50 : vector<1x8xf32> to vector<1x1x8xf32>
    %55 = vector.shape_cast %51 : vector<1x8xf32> to vector<1x1x8xf32>
    %56 = vector.shape_cast %52 : vector<1x8xf32> to vector<1x1x8xf32>
    %57 = vector.shape_cast %53 : vector<1x8xf32> to vector<1x1x8xf32>
    %58 = tpu.concatenate %54, %55, %56, %57 in 0 : vector<1x1x8xf32>, vector<1x1x8xf32>, vector<1x1x8xf32>, vector<1x1x8xf32> -> vector<4x1x8xf32>
    %59 = vector.broadcast %58 : vector<4x1x8xf32> to vector<4x8x8xf32>
    %60 = arith.addf %44, %59 : vector<4x8x8xf32>
    %cst_14 = arith.constant dense<0xFF800000> : vector<4x8xf32>
    %61 = vector.multi_reduction <maximumf>, %60, %cst_14 [2] : vector<4x8x8xf32> to vector<4x8xf32>
    %62 = vector.shape_cast %61 : vector<4x8xf32> to vector<4x8x1xf32>
    %63 = vector.broadcast %62 : vector<4x8x1xf32> to vector<4x8x8xf32>
    %64 = arith.subf %60, %63 : vector<4x8x8xf32>
    %65 = math.exp %64 : vector<4x8x8xf32>
    %cst_15 = arith.constant dense<0.000000e+00> : vector<4x8xf32>
    %66 = vector.multi_reduction <add>, %65, %cst_15 [2] : vector<4x8x8xf32> to vector<4x8xf32>
    %67 = vector.shape_cast %66 : vector<4x8xf32> to vector<4x8x1xf32>
    %68 = tpu.reciprocal %67 {approx = true} : vector<4x8x1xf32> -> vector<4x8x1xf32>
    %69 = vector.broadcast %68 : vector<4x8x1xf32> to vector<4x8x8xf32>
    %70 = arith.mulf %65, %69 : vector<4x8x8xf32>
    %71 = arith.truncf %70 : vector<4x8x8xf32> to vector<4x8x8xbf16>
    %cst_16 = arith.constant dense<0.000000e+00> : vector<4x8x128xf32>
    %72 = tpu.matmul %71, %41, %cst_16 {dimension_numbers = #tpu.dot_dimension_numbers<[2], [1], [1], [2], [0, 0, 0, 1, 1, 2], [0], [0]>} : vector<4x8x8xbf16>, vector<4x8x128xbf16>, vector<4x8x128xf32> -> vector<4x8x128xf32>
    %73 = vector.extract_strided_slice %72 {offsets = [0, 0, 0], sizes = [1, 8, 128], strides = [1, 1, 1]} : vector<4x8x128xf32> to vector<1x8x128xf32>
    %74 = vector.shape_cast %73 : vector<1x8x128xf32> to vector<8x128xf32>
    %75 = vector.extract_strided_slice %72 {offsets = [1, 0, 0], sizes = [1, 8, 128], strides = [1, 1, 1]} : vector<4x8x128xf32> to vector<1x8x128xf32>
    %76 = vector.shape_cast %75 : vector<1x8x128xf32> to vector<8x128xf32>
    %77 = tpu.concatenate %74, %76 in 1 : vector<8x128xf32>, vector<8x128xf32> -> vector<8x256xf32>
    %78 = vector.extract_strided_slice %72 {offsets = [2, 0, 0], sizes = [1, 8, 128], strides = [1, 1, 1]} : vector<4x8x128xf32> to vector<1x8x128xf32>
    %79 = vector.shape_cast %78 : vector<1x8x128xf32> to vector<8x128xf32>
    %80 = vector.extract_strided_slice %72 {offsets = [3, 0, 0], sizes = [1, 8, 128], strides = [1, 1, 1]} : vector<4x8x128xf32> to vector<1x8x128xf32>
    %81 = vector.shape_cast %80 : vector<1x8x128xf32> to vector<8x128xf32>
    %82 = tpu.concatenate %79, %81 in 1 : vector<8x128xf32>, vector<8x128xf32> -> vector<8x256xf32>
    %83 = tpu.concatenate %77, %82 in 0 : vector<8x256xf32>, vector<8x256xf32> -> vector<16x256xf32>
    %c0_17 = arith.constant 0 : index
    %c0_18 = arith.constant 0 : index
    %c0_19 = arith.constant 0 : index
    %84 = vector.load %arg9[%c0_17, %c0_18, %c0_19] : memref<1x256x256xbf16, #tpu.memory_space<vmem>>, vector<1x256x256xbf16>
    %85 = vector.shape_cast %84 : vector<1x256x256xbf16> to vector<256x256xbf16>
    %86 = arith.truncf %83 : vector<16x256xf32> to vector<16x256xbf16>
    %cst_20 = arith.constant dense<0.000000e+00> : vector<16x256xf32>
    %87 = tpu.matmul %86, %85, %cst_20 {dimension_numbers = #tpu.dot_dimension_numbers<[1], [0], [0], [1], [0, 0, 1, 1], [], []>} : vector<16x256xbf16>, vector<256x256xbf16>, vector<16x256xf32> -> vector<16x256xf32>
    %88 = arith.addf %3, %87 : vector<16x256xf32>
    %c0_21 = arith.constant 0 : index
    %c0_22 = arith.constant 0 : index
    %c0_23 = arith.constant 0 : index
    %89 = vector.load %arg10[%c0_21, %c0_22, %c0_23] : memref<1x1x256xf32, #tpu.memory_space<vmem>>, vector<1x1x256xf32>
    %90 = vector.shape_cast %89 : vector<1x1x256xf32> to vector<1x256xf32>
    %91 = vector.broadcast %90 : vector<1x256xf32> to vector<16x256xf32>
    %92 = arith.addf %88, %91 : vector<16x256xf32>
    %c0_24 = arith.constant 0 : index
    %c0_25 = arith.constant 0 : index
    %c0_26 = arith.constant 0 : index
    %93 = vector.load %arg5[%c0_24, %c0_25, %c0_26] : memref<1x1x256xf32, #tpu.memory_space<vmem>>, vector<1x1x256xf32>
    %94 = vector.shape_cast %93 : vector<1x1x256xf32> to vector<1x256xf32>
    %c0_27 = arith.constant 0 : index
    %c0_28 = arith.constant 0 : index
    %c0_29 = arith.constant 0 : index
    %95 = vector.load %arg6[%c0_27, %c0_28, %c0_29] : memref<1x1x256xf32, #tpu.memory_space<vmem>>, vector<1x1x256xf32>
    %96 = vector.shape_cast %95 : vector<1x1x256xf32> to vector<1x256xf32>
    %cst_30 = arith.constant dense<0.000000e+00> : vector<16xf32>
    %97 = vector.multi_reduction <add>, %92, %cst_30 [1] : vector<16x256xf32> to vector<16xf32>
    %98 = vector.shape_cast %97 : vector<16xf32> to vector<16x1xf32>
    %cst_31 = arith.constant 2.560000e+02 : f32
    %99 = vector.broadcast %cst_31 : f32 to vector<16x1xf32>
    %100 = arith.divf %98, %99 : vector<16x1xf32>
    %101 = vector.broadcast %100 : vector<16x1xf32> to vector<16x256xf32>
    %102 = arith.subf %92, %101 : vector<16x256xf32>
    %103 = arith.mulf %102, %102 : vector<16x256xf32>
    %cst_32 = arith.constant dense<0.000000e+00> : vector<16xf32>
    %104 = vector.multi_reduction <add>, %103, %cst_32 [1] : vector<16x256xf32> to vector<16xf32>
    %105 = vector.shape_cast %104 : vector<16xf32> to vector<16x1xf32>
    %cst_33 = arith.constant 2.560000e+02 : f32
    %106 = vector.broadcast %cst_33 : f32 to vector<16x1xf32>
    %107 = arith.divf %105, %106 : vector<16x1xf32>
    %108 = vector.broadcast %100 : vector<16x1xf32> to vector<16x256xf32>
    %109 = arith.subf %92, %108 : vector<16x256xf32>
    %cst_34 = arith.constant 9.99999996E-13 : f32
    %110 = vector.broadcast %cst_34 : f32 to vector<16x1xf32>
    %111 = arith.addf %107, %110 : vector<16x1xf32>
    %112 = math.rsqrt %111 : vector<16x1xf32>
    %113 = vector.broadcast %112 : vector<16x1xf32> to vector<16x256xf32>
    %114 = arith.mulf %109, %113 : vector<16x256xf32>
    %115 = vector.broadcast %94 : vector<1x256xf32> to vector<16x256xf32>
    %116 = arith.mulf %114, %115 : vector<16x256xf32>
    %117 = vector.broadcast %96 : vector<1x256xf32> to vector<16x256xf32>
    %118 = arith.addf %116, %117 : vector<16x256xf32>
    %c0_35 = arith.constant 0 : index
    %c0_36 = arith.constant 0 : index
    %c0_37 = arith.constant 0 : index
    %119 = vector.load %arg13[%c0_35, %c0_36, %c0_37] : memref<1x256x512xbf16, #tpu.memory_space<vmem>>, vector<1x256x512xbf16>
    %120 = vector.shape_cast %119 : vector<1x256x512xbf16> to vector<256x512xbf16>
    %121 = arith.truncf %118 : vector<16x256xf32> to vector<16x256xbf16>
    %cst_38 = arith.constant dense<0.000000e+00> : vector<16x512xf32>
    %122 = tpu.matmul %121, %120, %cst_38 {dimension_numbers = #tpu.dot_dimension_numbers<[1], [0], [0], [1], [0, 0, 1, 1], [], []>} : vector<16x256xbf16>, vector<256x512xbf16>, vector<16x512xf32> -> vector<16x512xf32>
    %c0_39 = arith.constant 0 : index
    %c0_40 = arith.constant 0 : index
    %c0_41 = arith.constant 0 : index
    %123 = vector.load %arg14[%c0_39, %c0_40, %c0_41] : memref<1x1x512xf32, #tpu.memory_space<vmem>>, vector<1x1x512xf32>
    %124 = vector.shape_cast %123 : vector<1x1x512xf32> to vector<1x512xf32>
    %125 = vector.broadcast %124 : vector<1x512xf32> to vector<16x512xf32>
    %126 = arith.addf %122, %125 : vector<16x512xf32>
    %cst_42 = arith.constant 5.000000e-01 : f32
    %127 = vector.broadcast %cst_42 : f32 to vector<16x512xf32>
    %128 = arith.mulf %127, %126 : vector<16x512xf32>
    %cst_43 = arith.constant 4.471500e-02 : f32
    %129 = vector.broadcast %cst_43 : f32 to vector<16x512xf32>
    %130 = arith.mulf %129, %126 : vector<16x512xf32>
    %131 = arith.mulf %130, %126 : vector<16x512xf32>
    %132 = arith.mulf %131, %126 : vector<16x512xf32>
    %133 = arith.addf %126, %132 : vector<16x512xf32>
    %cst_44 = arith.constant 0.797884583 : f32
    %134 = vector.broadcast %cst_44 : f32 to vector<16x512xf32>
    %135 = arith.mulf %134, %133 : vector<16x512xf32>
    %136 = math.tanh %135 : vector<16x512xf32>
    %cst_45 = arith.constant 1.000000e+00 : f32
    %137 = vector.broadcast %cst_45 : f32 to vector<16x512xf32>
    %138 = arith.addf %137, %136 : vector<16x512xf32>
    %139 = arith.mulf %128, %138 : vector<16x512xf32>
    %c0_46 = arith.constant 0 : index
    %c0_47 = arith.constant 0 : index
    %c0_48 = arith.constant 0 : index
    %140 = vector.load %arg15[%c0_46, %c0_47, %c0_48] : memref<1x512x256xbf16, #tpu.memory_space<vmem>>, vector<1x512x256xbf16>
    %141 = vector.shape_cast %140 : vector<1x512x256xbf16> to vector<512x256xbf16>
    %142 = arith.truncf %139 : vector<16x512xf32> to vector<16x512xbf16>
    %cst_49 = arith.constant dense<0.000000e+00> : vector<16x256xf32>
    %143 = tpu.matmul %142, %141, %cst_49 {dimension_numbers = #tpu.dot_dimension_numbers<[1], [0], [0], [1], [0, 0, 1, 1], [], []>} : vector<16x512xbf16>, vector<512x256xbf16>, vector<16x256xf32> -> vector<16x256xf32>
    %c0_50 = arith.constant 0 : index
    %c0_51 = arith.constant 0 : index
    %c0_52 = arith.constant 0 : index
    %144 = vector.load %arg16[%c0_50, %c0_51, %c0_52] : memref<1x1x256xf32, #tpu.memory_space<vmem>>, vector<1x1x256xf32>
    %145 = vector.shape_cast %144 : vector<1x1x256xf32> to vector<1x256xf32>
    %146 = vector.broadcast %145 : vector<1x256xf32> to vector<16x256xf32>
    %147 = arith.addf %143, %146 : vector<16x256xf32>
    %148 = arith.addf %118, %147 : vector<16x256xf32>
    %c0_53 = arith.constant 0 : index
    %c0_54 = arith.constant 0 : index
    %c0_55 = arith.constant 0 : index
    %149 = vector.load %arg11[%c0_53, %c0_54, %c0_55] : memref<1x1x256xf32, #tpu.memory_space<vmem>>, vector<1x1x256xf32>
    %150 = vector.shape_cast %149 : vector<1x1x256xf32> to vector<1x256xf32>
    %c0_56 = arith.constant 0 : index
    %c0_57 = arith.constant 0 : index
    %c0_58 = arith.constant 0 : index
    %151 = vector.load %arg12[%c0_56, %c0_57, %c0_58] : memref<1x1x256xf32, #tpu.memory_space<vmem>>, vector<1x1x256xf32>
    %152 = vector.shape_cast %151 : vector<1x1x256xf32> to vector<1x256xf32>
    %cst_59 = arith.constant dense<0.000000e+00> : vector<16xf32>
    %153 = vector.multi_reduction <add>, %148, %cst_59 [1] : vector<16x256xf32> to vector<16xf32>
    %154 = vector.shape_cast %153 : vector<16xf32> to vector<16x1xf32>
    %cst_60 = arith.constant 2.560000e+02 : f32
    %155 = vector.broadcast %cst_60 : f32 to vector<16x1xf32>
    %156 = arith.divf %154, %155 : vector<16x1xf32>
    %157 = vector.broadcast %156 : vector<16x1xf32> to vector<16x256xf32>
    %158 = arith.subf %148, %157 : vector<16x256xf32>
    %159 = arith.mulf %158, %158 : vector<16x256xf32>
    %cst_61 = arith.constant dense<0.000000e+00> : vector<16xf32>
    %160 = vector.multi_reduction <add>, %159, %cst_61 [1] : vector<16x256xf32> to vector<16xf32>
    %161 = vector.shape_cast %160 : vector<16xf32> to vector<16x1xf32>
    %cst_62 = arith.constant 2.560000e+02 : f32
    %162 = vector.broadcast %cst_62 : f32 to vector<16x1xf32>
    %163 = arith.divf %161, %162 : vector<16x1xf32>
    %164 = vector.broadcast %156 : vector<16x1xf32> to vector<16x256xf32>
    %165 = arith.subf %148, %164 : vector<16x256xf32>
    %cst_63 = arith.constant 9.99999996E-13 : f32
    %166 = vector.broadcast %cst_63 : f32 to vector<16x1xf32>
    %167 = arith.addf %163, %166 : vector<16x1xf32>
    %168 = math.rsqrt %167 : vector<16x1xf32>
    %169 = vector.broadcast %168 : vector<16x1xf32> to vector<16x256xf32>
    %170 = arith.mulf %165, %169 : vector<16x256xf32>
    %171 = vector.broadcast %150 : vector<1x256xf32> to vector<16x256xf32>
    %172 = arith.mulf %170, %171 : vector<16x256xf32>
    %173 = vector.broadcast %152 : vector<1x256xf32> to vector<16x256xf32>
    %174 = arith.addf %172, %173 : vector<16x256xf32>
    %c0_64 = arith.constant 0 : index
    %c0_65 = arith.constant 0 : index
    %175 = vector.load %arg17[%c0_64, %c0_65] : memref<16x256xf32, #tpu.memory_space<vmem>>, vector<16x256xf32>
    tpu.vector_store %arg17[%c0_64, %c0_65], %174 {strides = array<i32>} : memref<16x256xf32, #tpu.memory_space<vmem>>, vector<16x256xf32>,
    return
  }
  func.func @transform_0(%arg0: i32) -> (i32, i32) {
    %c0_i32 = arith.constant 0 : i32
    %c0_i32_0 = arith.constant 0 : i32
    %c0_i32_1 = arith.constant 0 : i32
    return %c0_i32, %c0_i32_0 : i32, i32
  }
  func.func @transform_1(%arg0: i32) -> (i32, i32) {
    %c0_i32 = arith.constant 0 : i32
    %c0_i32_0 = arith.constant 0 : i32
    %c0_i32_1 = arith.constant 0 : i32
    return %c0_i32, %c0_i32_0 : i32, i32
  }
  func.func @transform_2(%arg0: i32) -> (i32, i32) {
    %c0_i32 = arith.constant 0 : i32
    %c0_i32_0 = arith.constant 0 : i32
    %c0_i32_1 = arith.constant 0 : i32
    return %c0_i32, %c0_i32_0 : i32, i32
  }
  func.func @transform_3(%arg0: i32) -> (i32, i32) {
    %c0_i32 = arith.constant 0 : i32
    %c0_i32_0 = arith.constant 0 : i32
    %c0_i32_1 = arith.constant 0 : i32
    return %c0_i32, %c0_i32_0 : i32, i32
  }
  func.func @transform_4(%arg0: i32) -> (i32, i32, i32) {
    %c0_i32 = arith.constant 0 : i32
    %c0_i32_0 = arith.constant 0 : i32
    %c0_i32_1 = arith.constant 0 : i32
    return %arg0, %c0_i32, %c0_i32_0 : i32, i32, i32
  }
  func.func @transform_5(%arg0: i32) -> (i32, i32, i32) {
    %c0_i32 = arith.constant 0 : i32
    %c0_i32_0 = arith.constant 0 : i32
    %c0_i32_1 = arith.constant 0 : i32
    return %arg0, %c0_i32, %c0_i32_0 : i32, i32, i32
  }
  func.func @transform_6(%arg0: i32) -> (i32, i32, i32) {
    %c0_i32 = arith.constant 0 : i32
    %c0_i32_0 = arith.constant 0 : i32
    %c0_i32_1 = arith.constant 0 : i32
    return %arg0, %c0_i32, %c0_i32_0 : i32, i32, i32
  }
  func.func @transform_7(%arg0: i32) -> (i32, i32, i32) {
    %c0_i32 = arith.constant 0 : i32
    %c0_i32_0 = arith.constant 0 : i32
    %c0_i32_1 = arith.constant 0 : i32
    return %arg0, %c0_i32, %c0_i32_0 : i32, i32, i32
  }
  func.func @transform_8(%arg0: i32) -> (i32, i32, i32) {
    %c0_i32 = arith.constant 0 : i32
    %c0_i32_0 = arith.constant 0 : i32
    %c0_i32_1 = arith.constant 0 : i32
    return %arg0, %c0_i32, %c0_i32_0 : i32, i32, i32
  }
  func.func @transform_9(%arg0: i32) -> (i32, i32, i32) {
    %c0_i32 = arith.constant 0 : i32
    %c0_i32_0 = arith.constant 0 : i32
    %c0_i32_1 = arith.constant 0 : i32
    return %arg0, %c0_i32, %c0_i32_0 : i32, i32, i32
  }
  func.func @transform_10(%arg0: i32) -> (i32, i32, i32) {
    %c0_i32 = arith.constant 0 : i32
    %c0_i32_0 = arith.constant 0 : i32
    %c0_i32_1 = arith.constant 0 : i32
    return %arg0, %c0_i32, %c0_i32_0 : i32, i32, i32
  }
  func.func @transform_11(%arg0: i32) -> (i32, i32, i32) {
    %c0_i32 = arith.constant 0 : i32
    %c0_i32_0 = arith.constant 0 : i32
    %c0_i32_1 = arith.constant 0 : i32
    return %arg0, %c0_i32, %c0_i32_0 : i32, i32, i32
  }
  func.func @transform_12(%arg0: i32) -> (i32, i32, i32) {
    %c0_i32 = arith.constant 0 : i32
    %c0_i32_0 = arith.constant 0 : i32
    %c0_i32_1 = arith.constant 0 : i32
    return %arg0, %c0_i32, %c0_i32_0 : i32, i32, i32
  }
  func.func @transform_13(%arg0: i32) -> (i32, i32, i32) {
    %c0_i32 = arith.constant 0 : i32
    %c0_i32_0 = arith.constant 0 : i32
    %c0_i32_1 = arith.constant 0 : i32
    return %arg0, %c0_i32, %c0_i32_0 : i32, i32, i32
  }
  func.func @transform_14(%arg0: i32) -> (i32, i32, i32) {
    %c0_i32 = arith.constant 0 : i32
    %c0_i32_0 = arith.constant 0 : i32
    %c0_i32_1 = arith.constant 0 : i32
    return %arg0, %c0_i32, %c0_i32_0 : i32, i32, i32
  }
  func.func @transform_15(%arg0: i32) -> (i32, i32, i32) {
    %c0_i32 = arith.constant 0 : i32
    %c0_i32_0 = arith.constant 0 : i32
    %c0_i32_1 = arith.constant 0 : i32
    return %arg0, %c0_i32, %c0_i32_0 : i32, i32, i32
  }
  func.func @transform_16(%arg0: i32) -> (i32, i32) {
    %c0_i32 = arith.constant 0 : i32
    %c0_i32_0 = arith.constant 0 : i32
    %c0_i32_1 = arith.constant 0 : i32
    return %c0_i32, %c0_i32_0 : i32, i32
  }
}

</mosaic_0001>

<llo_original>
// kernel: shopee_forward.5
$region0: #{shopee_forward.5}
  #allocation0 [shape = 'u32[]', space=smem, size = 0x4, offset = 0x4, fixed_abs, tag = 'smem constant byte address 0x4 - core index']
  #allocation1 [shape = 'u32[144,128]{1,0:T(1,128)}', space=vmem, size = 0x12000, scoped, tag = 'internal scratch']
  %s0 = inlined_call_operand.vmem [shape: f32[2,256], index: 0, kind: input, shape index: {}]
  %s1 = inlined_call_operand.vmem [shape: f32[1,256], index: 1, kind: input, shape index: {}]
  %s2 = inlined_call_operand.vmem [shape: f32[1,256], index: 2, kind: input, shape index: {}]
  %s3 = inlined_call_operand.vmem [shape: bf16[256,256], index: 3, kind: input, shape index: {}]
  %s4 = inlined_call_operand.vmem [shape: f32[1,256], index: 4, kind: input, shape index: {}]
  %s5 = inlined_call_operand.vmem [shape: f32[2,256], index: 5, kind: input, shape index: {}]
  %s6 = inlined_call_operand.vmem [shape: bf16[256,256], index: 6, kind: input, shape index: {}]
  %s7 = inlined_call_operand.vmem [shape: f32[1,256], index: 7, kind: input, shape index: {}]
  %s8 = inlined_call_operand.vmem [shape: bf16[256,256], index: 8, kind: input, shape index: {}]
  %s9 = inlined_call_operand.vmem [shape: bf16[256,256], index: 9, kind: input, shape index: {}]
  %s10 = inlined_call_operand.vmem [shape: f32[1,256], index: 10, kind: input, shape index: {}]
  %s11 = inlined_call_operand.hbm [shape: f32[2,256], index: 11, kind: output, shape index: {}]
  %s12 = sld [smem:[#allocation0]]
  $region54: #{shopee_forward.5} parent=0
    _
  %s14 = ssub.s32 1, %s12
  %s15 = scalar_select 0, %s14, %s12
  $region1: #{shopee_forward.5} parent=0
    #allocation2 [shape = 'u8[2048]{0}', space=vmem, size = 0x800, scoped, tag = 'output window, operand 0, single buffered']
    #allocation3 [shape = 's32[1]{0}', space=sflag, size = 0x4, scoped, tag = 'scoped memory for shopee_forward.5']
    %16 = vsyncpa [#allocation3], 0
    // Predicated region
    $region2: #{shopee_forward.5} parent=1 // pred_check
      _
    $region3: #{shopee_forward.5} parent=1 // pred_check_branch
      %18 = sbr.rel (0) target = $region5
    $region4: #{shopee_forward.5} parent=1 // pred_region
      _
    $region5: #{shopee_forward.5} parent=1 // pred_fallthru
      _
    // Predicated region
    $region6: #{shopee_forward.5} parent=1 // pred_check
      _
    $region7: #{shopee_forward.5} parent=1 // pred_check_branch
      %20 = sbr.rel (0) target = $region9
    $region8: #{shopee_forward.5} parent=1 // pred_region
      _
    $region9: #{shopee_forward.5} parent=1 // pred_fallthru
      _
    // Predicated region
    $region10: #{shopee_forward.5} parent=1 // pred_check
      _
    $region11: #{shopee_forward.5} parent=1 // pred_check_branch
      %22 = sbr.rel (0) target = $region13
    $region12: #{shopee_forward.5} parent=1 // pred_region
      _
    $region13: #{shopee_forward.5} parent=1 // pred_fallthru
      _
    // Predicated region
    $region14: #{shopee_forward.5} parent=1 // pred_check
      _
    $region15: #{shopee_forward.5} parent=1 // pred_check_branch
      %24 = sbr.rel (0) target = $region17
    $region16: #{shopee_forward.5} parent=1 // pred_region
      _
    $region17: #{shopee_forward.5} parent=1 // pred_fallthru
      _
    // Predicated region
    $region18: #{shopee_forward.5} parent=1 // pred_check
      _
    $region19: #{shopee_forward.5} parent=1 // pred_check_branch
      %26 = sbr.rel (0) target = $region21
    $region20: #{shopee_forward.5} parent=1 // pred_region
      _
    $region21: #{shopee_forward.5} parent=1 // pred_fallthru
      _
    // Predicated region
    $region22: #{shopee_forward.5} parent=1 // pred_check
      _
    $region23: #{shopee_forward.5} parent=1 // pred_check_branch
      %28 = sbr.rel (0) target = $region25
    $region24: #{shopee_forward.5} parent=1 // pred_region
      _
    $region25: #{shopee_forward.5} parent=1 // pred_fallthru
      _
    // Predicated region
    $region26: #{shopee_forward.5} parent=1 // pred_check
      _
    $region27: #{shopee_forward.5} parent=1 // pred_check_branch
      %30 = sbr.rel (0) target = $region29
    $region28: #{shopee_forward.5} parent=1 // pred_region
      _
    $region29: #{shopee_forward.5} parent=1 // pred_fallthru
      _
    // Predicated region
    $region30: #{shopee_forward.5} parent=1 // pred_check
      _
    $region31: #{shopee_forward.5} parent=1 // pred_check_branch
      %32 = sbr.rel (0) target = $region33
    $region32: #{shopee_forward.5} parent=1 // pred_region
      _
    $region33: #{shopee_forward.5} parent=1 // pred_fallthru
      _
    // Predicated region
    $region34: #{shopee_forward.5} parent=1 // pred_check
      _
    $region35: #{shopee_forward.5} parent=1 // pred_check_branch
      %34 = sbr.rel (0) target = $region37
    $region36: #{shopee_forward.5} parent=1 // pred_region
      _
    $region37: #{shopee_forward.5} parent=1 // pred_fallthru
      _
    // Predicated region
    $region38: #{shopee_forward.5} parent=1 // pred_check
      _
    $region39: #{shopee_forward.5} parent=1 // pred_check_branch
      %36 = sbr.rel (0) target = $region41
    $region40: #{shopee_forward.5} parent=1 // pred_region
      _
    $region41: #{shopee_forward.5} parent=1 // pred_fallthru
      _
    // Predicated region
    $region42: #{shopee_forward.5} parent=1 // pred_check
      _
    $region43: #{shopee_forward.5} parent=1 // pred_check_branch
      %38 = sbr.rel (0) target = $region45
    $region44: #{shopee_forward.5} parent=1 // pred_region
      _
    $region45: #{shopee_forward.5} parent=1 // pred_fallthru
      _
    %v39 = vld [vmem:[%s0] sm:$0xf]
    %v40 = vld [vmem:[%s1] sm:$0x3]
    %v41 = vld [vmem:[%s2] sm:$0x3]
    %v44 = vunpack.c.l.s4 1983009808
    %v45 = vunpack.c.0.s8 %v44
    %v46 = vlaneseq
    %v47 = vshrl.u32 %v46, 7
    %v48 = vsub.s32 %v45, %v47
    %v49 = vrot.slane %v39, %v48
    %v50 = vcombine.high %v49, %v49
    %vm53 = vcmask 1041408
    %v54 = vsel %vm53, %v49, 0.0
    %v55 = vsel %vm53, %v50, 0.0
    %v56 = vadd.f32 %v54, %v55
    %57 = vadd.xlane.f32.xlu0 %v56
    %v58 = vpop.xlane.xlu0 %57
    %v59 = vrcp.pop 256.0
    %v60 = vmul.f32 %v58, %v59
    %v63 = vunpack.c.l.s4 269488144
    %v64 = vunpack.c.0.s8 %v63
    %v65 = vlaneseq
    %v66 = vshrl.u32 %v65, 7
    %v67 = vsub.s32 %v64, %v66
    %v68 = vrot.slane %v60, %v67
    %v70 = vsub.f32 %v39, %v68
    %v71 = vmul.f32 %v70, %v70
    %v74 = vunpack.c.l.s4 1983009808
    %v75 = vunpack.c.0.s8 %v74
    %v76 = vlaneseq
    %v77 = vshrl.u32 %v76, 7
    %v78 = vsub.s32 %v75, %v77
    %v79 = vrot.slane %v71, %v78
    %v80 = vcombine.high %v79, %v79
    %v83 = vsel %vm53, %v79, 0.0
    %v84 = vsel %vm53, %v80, 0.0
    %v85 = vadd.f32 %v83, %v84
    %86 = vadd.xlane.f32.xlu0 %v85
    %v87 = vpop.xlane.xlu0 %86
    %v88 = vmul.f32 %v87, %v59
    %v89 = vadd.f32 %v88, 1e-06
    %v90 = vrsqrt.pop %v89
    %v93 = vunpack.c.l.s4 269488144
    %v94 = vunpack.c.0.s8 %v93
    %v95 = vlaneseq
    %v96 = vshrl.u32 %v95, 7
    %v97 = vsub.s32 %v94, %v96
    %v98 = vrot.slane %v90, %v97
    %v100 = vmul.f32 %v70, %v98
    %v102 = vlaneseq
    %v103 = vshrl.u32 %v102, 7
    %v104 = vsub.s32 0, %v103
    %v105 = vrot.slane %v40, %v104
    %v106 = vlaneseq
    %v107 = vshrl.u32 %v106, 7
    %v108 = vsub.s32 1, %v107
    %v109 = vrot.slane %v40, %v108
    %v110 = vcombine.low %v105, %v109
    %v112 = vunpack.c.l.s4 1983009808
    %v113 = vunpack.c.0.s8 %v112
    %v114 = vlaneseq
    %v115 = vshrl.u32 %v114, 7
    %v116 = vsub.s32 %v113, %v115
    %v117 = vrot.slane %v110, %v116
    %v119 = vmul.f32 %v100, %v117
    %v121 = vlaneseq
    %v122 = vshrl.u32 %v121, 7
    %v123 = vsub.s32 0, %v122
    %v124 = vrot.slane %v41, %v123
    %v125 = vlaneseq
    %v126 = vshrl.u32 %v125, 7
    %v127 = vsub.s32 1, %v126
    %v128 = vrot.slane %v41, %v127
    %v129 = vcombine.low %v124, %v128
    %v131 = vunpack.c.l.s4 1983009808
    %v132 = vunpack.c.0.s8 %v131
    %v133 = vlaneseq
    %v134 = vshrl.u32 %v133, 7
    %v135 = vsub.s32 %v132, %v134
    %v136 = vrot.slane %v129, %v135
    %v138 = vadd.f32 %v119, %v136
    %v139 = vld [vmem:[%s3] sm:$0xff]
    %v140 = vld [vmem:[%s3 + $0x8] sm:$0xff]
    %v141 = vld [vmem:[%s3 + $0x10] sm:$0xff]
    %v142 = vld [vmem:[%s3 + $0x18] sm:$0xff]
    %v143 = vld [vmem:[%s3 + $0x20] sm:$0xff]
    %v144 = vld [vmem:[%s3 + $0x28] sm:$0xff]
    %v145 = vld [vmem:[%s3 + $0x30] sm:$0xff]
    %v146 = vld [vmem:[%s3 + $0x38] sm:$0xff]
    %v147 = vld [vmem:[%s3 + $0x40] sm:$0xff]
    %v148 = vld [vmem:[%s3 + $0x48] sm:$0xff]
    %v149 = vld [vmem:[%s3 + $0x50] sm:$0xff]
    %v150 = vld [vmem:[%s3 + $0x58] sm:$0xff]
    %v151 = vld [vmem:[%s3 + $0x60] sm:$0xff]
    %v152 = vld [vmem:[%s3 + $0x68] sm:$0xff]
    %v153 = vld [vmem:[%s3 + $0x70] sm:$0xff]
    %v154 = vld [vmem:[%s3 + $0x78] sm:$0xff]
    %v155 = vld [vmem:[%s3 + $0x80] sm:$0xff]
    %v156 = vld [vmem:[%s3 + $0x88] sm:$0xff]
    %v157 = vld [vmem:[%s3 + $0x90] sm:$0xff]
    %v158 = vld [vmem:[%s3 + $0x98] sm:$0xff]
    %v159 = vld [vmem:[%s3 + $0xa0] sm:$0xff]
    %v160 = vld [vmem:[%s3 + $0xa8] sm:$0xff]
    %v161 = vld [vmem:[%s3 + $0xb0] sm:$0xff]
    %v162 = vld [vmem:[%s3 + $0xb8] sm:$0xff]
    %v163 = vld [vmem:[%s3 + $0xc0] sm:$0xff]
    %v164 = vld [vmem:[%s3 + $0xc8] sm:$0xff]
    %v165 = vld [vmem:[%s3 + $0xd0] sm:$0xff]
    %v166 = vld [vmem:[%s3 + $0xd8] sm:$0xff]
    %v167 = vld [vmem:[%s3 + $0xe0] sm:$0xff]
    %v168 = vld [vmem:[%s3 + $0xe8] sm:$0xff]
    %v169 = vld [vmem:[%s3 + $0xf0] sm:$0xff]
    %v170 = vld [vmem:[%s3 + $0xf8] sm:$0xff]
    %v173 = vunpack.c.l.s4 1983009808
    %v174 = vunpack.c.0.s8 %v173
    %v175 = vlaneseq
    %v176 = vshrl.u32 %v175, 7
    %v177 = vsub.s32 %v174, %v176
    %v178 = vrot.slane %v138, %v177
    %v179 = vcombine.high %v178, %v178
    %v182 = vpack.c.bf16 %v178, %v178
    %v183 = vpack.c.bf16 %v179, %v179
    %v184 = vld [vmem:[%s4] sm:$0x3]
    %v186 = vlaneseq
    %v187 = vshrl.u32 %v186, 7
    %v188 = vsub.s32 0, %v187
    %v189 = vrot.slane %v184, %v188
    %v190 = vlaneseq
    %v191 = vshrl.u32 %v190, 7
    %v192 = vsub.s32 1, %v191
    %v193 = vrot.slane %v184, %v192
    %v228 = vunpack.c.l.b16 %v139
    %v229 = vunpack.c.h.b16 %v139
    %v230 = vunpack.c.l.b16 %v140
    %v231 = vunpack.c.h.b16 %v140
    %v232 = vunpack.c.l.b16 %v141
    %v233 = vunpack.c.h.b16 %v141
    %v234 = vunpack.c.l.b16 %v142
    %v235 = vunpack.c.h.b16 %v142
    %v236 = vunpack.c.l.b16 %v143
    %v237 = vunpack.c.h.b16 %v143
    %v238 = vunpack.c.l.b16 %v144
    %v239 = vunpack.c.h.b16 %v144
    %v240 = vunpack.c.l.b16 %v145
    %v241 = vunpack.c.h.b16 %v145
    %v242 = vunpack.c.l.b16 %v146
    %v243 = vunpack.c.h.b16 %v146
    %v244 = vunpack.c.l.b16 %v147
    %v245 = vunpack.c.h.b16 %v147
    %v246 = vunpack.c.l.b16 %v148
    %v247 = vunpack.c.h.b16 %v148
    %v248 = vunpack.c.l.b16 %v149
    %v249 = vunpack.c.h.b16 %v149
    %v250 = vunpack.c.l.b16 %v150
    %v251 = vunpack.c.h.b16 %v150
    %v252 = vunpack.c.l.b16 %v151
    %v253 = vunpack.c.h.b16 %v151
    %v254 = vunpack.c.l.b16 %v152
    %v255 = vunpack.c.h.b16 %v152
    %v256 = vunpack.c.l.b16 %v153
    %v257 = vunpack.c.h.b16 %v153
    %v258 = vunpack.c.l.b16 %v154
    %v259 = vunpack.c.h.b16 %v154
    %v260 = vunpack.c.l.b16 %v155
    %v261 = vunpack.c.h.b16 %v155
    %v262 = vunpack.c.l.b16 %v156
    %v263 = vunpack.c.h.b16 %v156
    %v264 = vunpack.c.l.b16 %v157
    %v265 = vunpack.c.h.b16 %v157
    %v266 = vunpack.c.l.b16 %v158
    %v267 = vunpack.c.h.b16 %v158
    %v268 = vunpack.c.l.b16 %v159
    %v269 = vunpack.c.h.b16 %v159
    %v270 = vunpack.c.l.b16 %v160
    %v271 = vunpack.c.h.b16 %v160
    %v272 = vunpack.c.l.b16 %v161
    %v273 = vunpack.c.h.b16 %v161
    %v274 = vunpack.c.l.b16 %v162
    %v275 = vunpack.c.h.b16 %v162
    %v276 = vunpack.c.l.b16 %v163
    %v277 = vunpack.c.h.b16 %v163
    %v278 = vunpack.c.l.b16 %v164
    %v279 = vunpack.c.h.b16 %v164
    %v280 = vunpack.c.l.b16 %v165
    %v281 = vunpack.c.h.b16 %v165
    %v282 = vunpack.c.l.b16 %v166
    %v283 = vunpack.c.h.b16 %v166
    %v284 = vunpack.c.l.b16 %v167
    %v285 = vunpack.c.h.b16 %v167
    %v286 = vunpack.c.l.b16 %v168
    %v287 = vunpack.c.h.b16 %v168
    %v288 = vunpack.c.l.b16 %v169
    %v289 = vunpack.c.h.b16 %v169
    %v290 = vunpack.c.l.b16 %v170
    %v291 = vunpack.c.h.b16 %v170
    %v292 = vpack.c.b16 %v230, %v228
    %v293 = vpack.c.b16 %v231, %v229
    %v294 = vpack.c.b16 %v234, %v232
    %v295 = vpack.c.b16 %v235, %v233
    %v296 = vpack.c.b16 %v238, %v236
    %v297 = vpack.c.b16 %v239, %v237
    %v298 = vpack.c.b16 %v242, %v240
    %v299 = vpack.c.b16 %v243, %v241
    %v300 = vpack.c.b16 %v246, %v244
    %v301 = vpack.c.b16 %v247, %v245
    %v302 = vpack.c.b16 %v250, %v248
    %v303 = vpack.c.b16 %v251, %v249
    %v304 = vpack.c.b16 %v254, %v252
    %v305 = vpack.c.b16 %v255, %v253
    %v306 = vpack.c.b16 %v258, %v256
    %v307 = vpack.c.b16 %v259, %v257
    %v308 = vpack.c.b16 %v262, %v260
    %v309 = vpack.c.b16 %v263, %v261
    %v310 = vpack.c.b16 %v266, %v264
    %v311 = vpack.c.b16 %v267, %v265
    %v312 = vpack.c.b16 %v270, %v268
    %v313 = vpack.c.b16 %v271, %v269
    %v314 = vpack.c.b16 %v274, %v272
    %v315 = vpack.c.b16 %v275, %v273
    %v316 = vpack.c.b16 %v278, %v276
    %v317 = vpack.c.b16 %v279, %v277
    %v318 = vpack.c.b16 %v282, %v280
    %v319 = vpack.c.b16 %v283, %v281
    %v320 = vpack.c.b16 %v286, %v284
    %v321 = vpack.c.b16 %v287, %v285
    %v322 = vpack.c.b16 %v290, %v288
    %v323 = vpack.c.b16 %v291, %v289
    %356 = vmatprep.subr.bf16.mxu0 %v293
    %357 = vmatpush1.bf16.msra.mxu0 %v292
    %358 = vmatprep.subr.bf16.mxu0 %v295
    %359 = vmatpush1.bf16.msra.mxu0 %v294
    %360 = vmatprep.subr.bf16.mxu0 %v297
    %361 = vmatpush1.bf16.msra.mxu0 %v296
    %362 = vmatprep.subr.bf16.mxu0 %v299
    %363 = vmatpush1.bf16.msra.mxu0 %v298
    %364 = vmatprep.subr.bf16.mxu0 %v301
    %365 = vmatpush1.bf16.msra.mxu0 %v300
    %366 = vmatprep.subr.bf16.mxu0 %v303
    %367 = vmatpush1.bf16.msra.mxu0 %v302
    %368 = vmatprep.subr.bf16.mxu0 %v305
    %369 = vmatpush1.bf16.msra.mxu0 %v304
    %370 = vmatprep.subr.bf16.mxu0 %v307
    %371 = vmatpush1.bf16.msra.mxu0 %v306
    %372 = vmatprep.subr.bf16.mxu0 %v309
    %373 = vmatpush1.bf16.msra.mxu0 %v308
    %374 = vmatprep.subr.bf16.mxu0 %v311
    %375 = vmatpush1.bf16.msra.mxu0 %v310
    %376 = vmatprep.subr.bf16.mxu0 %v313
    %377 = vmatpush1.bf16.msra.mxu0 %v312
    %378 = vmatprep.subr.bf16.mxu0 %v315
    %379 = vmatpush1.bf16.msra.mxu0 %v314
    %380 = vmatprep.subr.bf16.mxu0 %v317
    %381 = vmatpush1.bf16.msra.mxu0 %v316
    %382 = vmatprep.subr.bf16.mxu0 %v319
    %383 = vmatpush1.bf16.msra.mxu0 %v318
    %384 = vmatprep.subr.bf16.mxu0 %v321
    %385 = vmatpush1.bf16.msra.mxu0 %v320
    %386 = vmatprep.subr.bf16.mxu0 %v323
    %387 = vmatpush1.bf16.msra.mxu0 %v322
    %388 = vmatprep.mubr.bf16.mxu0 %v183
    %389 = vmatmul.mubr.bf16.gmra.mrb[0].mxu0 %v182
    %v390 = vpop.f32.mrb[0].mxu0
    %v391 = vadd.f32 %v189, %v390
    %v392 = vpop.f32.mrb[0].mxu0
    %v393 = vadd.f32 %v193, %v392
    %v394 = vpop.f32.mrb[0].mxu0
    %v395 = vpop.f32.mrb[0].mxu0
    %396 = vdwg.mxu0
    %v397 = vld [vmem:[%s5] sm:$0xf]
    %v398 = vld [vmem:[%s6] sm:$0xff]
    %v399 = vld [vmem:[%s6 + $0x8] sm:$0xff]
    %v400 = vld [vmem:[%s6 + $0x10] sm:$0xff]
    %v401 = vld [vmem:[%s6 + $0x18] sm:$0xff]
    %v402 = vld [vmem:[%s6 + $0x20] sm:$0xff]
    %v403 = vld [vmem:[%s6 + $0x28] sm:$0xff]
    %v404 = vld [vmem:[%s6 + $0x30] sm:$0xff]
    %v405 = vld [vmem:[%s6 + $0x38] sm:$0xff]
    %v406 = vld [vmem:[%s6 + $0x40] sm:$0xff]
    %v407 = vld [vmem:[%s6 + $0x48] sm:$0xff]
    %v408 = vld [vmem:[%s6 + $0x50] sm:$0xff]
    %v409 = vld [vmem:[%s6 + $0x58] sm:$0xff]
    %v410 = vld [vmem:[%s6 + $0x60] sm:$0xff]
    %v411 = vld [vmem:[%s6 + $0x68] sm:$0xff]
    %v412 = vld [vmem:[%s6 + $0x70] sm:$0xff]
    %v413 = vld [vmem:[%s6 + $0x78] sm:$0xff]
    %v414 = vld [vmem:[%s6 + $0x80] sm:$0xff]
    %v415 = vld [vmem:[%s6 + $0x88] sm:$0xff]
    %v416 = vld [vmem:[%s6 + $0x90] sm:$0xff]
    %v417 = vld [vmem:[%s6 + $0x98] sm:$0xff]
    %v418 = vld [vmem:[%s6 + $0xa0] sm:$0xff]
    %v419 = vld [vmem:[%s6 + $0xa8] sm:$0xff]
    %v420 = vld [vmem:[%s6 + $0xb0] sm:$0xff]
    %v421 = vld [vmem:[%s6 + $0xb8] sm:$0xff]
    %v422 = vld [vmem:[%s6 + $0xc0] sm:$0xff]
    %v423 = vld [vmem:[%s6 + $0xc8] sm:$0xff]
    %v424 = vld [vmem:[%s6 + $0xd0] sm:$0xff]
    %v425 = vld [vmem:[%s6 + $0xd8] sm:$0xff]
    %v426 = vld [vmem:[%s6 + $0xe0] sm:$0xff]
    %v427 = vld [vmem:[%s6 + $0xe8] sm:$0xff]
    %v428 = vld [vmem:[%s6 + $0xf0] sm:$0xff]
    %v429 = vld [vmem:[%s6 + $0xf8] sm:$0xff]
    %v432 = vunpack.c.l.s4 1983009808
    %v433 = vunpack.c.0.s8 %v432
    %v434 = vlaneseq
    %v435 = vshrl.u32 %v434, 7
    %v436 = vsub.s32 %v433, %v435
    %v437 = vrot.slane %v397, %v436
    %v438 = vcombine.high %v437, %v437
    %v441 = vpack.c.bf16 %v437, %v437
    %v442 = vpack.c.bf16 %v438, %v438
    %v443 = vld [vmem:[%s7] sm:$0x3]
    %v445 = vlaneseq
    %v446 = vshrl.u32 %v445, 7
    %v447 = vsub.s32 0, %v446
    %v448 = vrot.slane %v443, %v447
    %v449 = vlaneseq
    %v450 = vshrl.u32 %v449, 7
    %v451 = vsub.s32 1, %v450
    %v452 = vrot.slane %v443, %v451
    %v487 = vunpack.c.l.b16 %v398
    %v488 = vunpack.c.h.b16 %v398
    %v489 = vunpack.c.l.b16 %v399
    %v490 = vunpack.c.h.b16 %v399
    %v491 = vunpack.c.l.b16 %v400
    %v492 = vunpack.c.h.b16 %v400
    %v493 = vunpack.c.l.b16 %v401
    %v494 = vunpack.c.h.b16 %v401
    %v495 = vunpack.c.l.b16 %v402
    %v496 = vunpack.c.h.b16 %v402
    %v497 = vunpack.c.l.b16 %v403
    %v498 = vunpack.c.h.b16 %v403
    %v499 = vunpack.c.l.b16 %v404
    %v500 = vunpack.c.h.b16 %v404
    %v501 = vunpack.c.l.b16 %v405
    %v502 = vunpack.c.h.b16 %v405
    %v503 = vunpack.c.l.b16 %v406
    %v504 = vunpack.c.h.b16 %v406
    %v505 = vunpack.c.l.b16 %v407
    %v506 = vunpack.c.h.b16 %v407
    %v507 = vunpack.c.l.b16 %v408
    %v508 = vunpack.c.h.b16 %v408
    %v509 = vunpack.c.l.b16 %v409
    %v510 = vunpack.c.h.b16 %v409
    %v511 = vunpack.c.l.b16 %v410
    %v512 = vunpack.c.h.b16 %v410
    %v513 = vunpack.c.l.b16 %v411
    %v514 = vunpack.c.h.b16 %v411
    %v515 = vunpack.c.l.b16 %v412
    %v516 = vunpack.c.h.b16 %v412
    %v517 = vunpack.c.l.b16 %v413
    %v518 = vunpack.c.h.b16 %v413
    %v519 = vunpack.c.l.b16 %v414
    %v520 = vunpack.c.h.b16 %v414
    %v521 = vunpack.c.l.b16 %v415
    %v522 = vunpack.c.h.b16 %v415
    %v523 = vunpack.c.l.b16 %v416
    %v524 = vunpack.c.h.b16 %v416
    %v525 = vunpack.c.l.b16 %v417
    %v526 = vunpack.c.h.b16 %v417
    %v527 = vunpack.c.l.b16 %v418
    %v528 = vunpack.c.h.b16 %v418
    %v529 = vunpack.c.l.b16 %v419
    %v530 = vunpack.c.h.b16 %v419
    %v531 = vunpack.c.l.b16 %v420
    %v532 = vunpack.c.h.b16 %v420
    %v533 = vunpack.c.l.b16 %v421
    %v534 = vunpack.c.h.b16 %v421
    %v535 = vunpack.c.l.b16 %v422
    %v536 = vunpack.c.h.b16 %v422
    %v537 = vunpack.c.l.b16 %v423
    %v538 = vunpack.c.h.b16 %v423
    %v539 = vunpack.c.l.b16 %v424
    %v540 = vunpack.c.h.b16 %v424
    %v541 = vunpack.c.l.b16 %v425
    %v542 = vunpack.c.h.b16 %v425
    %v543 = vunpack.c.l.b16 %v426
    %v544 = vunpack.c.h.b16 %v426
    %v545 = vunpack.c.l.b16 %v427
    %v546 = vunpack.c.h.b16 %v427
    %v547 = vunpack.c.l.b16 %v428
    %v548 = vunpack.c.h.b16 %v428
    %v549 = vunpack.c.l.b16 %v429
    %v550 = vunpack.c.h.b16 %v429
    %v551 = vpack.c.b16 %v489, %v487
    %v552 = vpack.c.b16 %v490, %v488
    %v553 = vpack.c.b16 %v493, %v491
    %v554 = vpack.c.b16 %v494, %v492
    %v555 = vpack.c.b16 %v497, %v495
    %v556 = vpack.c.b16 %v498, %v496
    %v557 = vpack.c.b16 %v501, %v499
    %v558 = vpack.c.b16 %v502, %v500
    %v559 = vpack.c.b16 %v505, %v503
    %v560 = vpack.c.b16 %v506, %v504
    %v561 = vpack.c.b16 %v509, %v507
    %v562 = vpack.c.b16 %v510, %v508
    %v563 = vpack.c.b16 %v513, %v511
    %v564 = vpack.c.b16 %v514, %v512
    %v565 = vpack.c.b16 %v517, %v515
    %v566 = vpack.c.b16 %v518, %v516
    %v567 = vpack.c.b16 %v521, %v519
    %v568 = vpack.c.b16 %v522, %v520
    %v569 = vpack.c.b16 %v525, %v523
    %v570 = vpack.c.b16 %v526, %v524
    %v571 = vpack.c.b16 %v529, %v527
    %v572 = vpack.c.b16 %v530, %v528
    %v573 = vpack.c.b16 %v533, %v531
    %v574 = vpack.c.b16 %v534, %v532
    %v575 = vpack.c.b16 %v537, %v535
    %v576 = vpack.c.b16 %v538, %v536
    %v577 = vpack.c.b16 %v541, %v539
    %v578 = vpack.c.b16 %v542, %v540
    %v579 = vpack.c.b16 %v545, %v543
    %v580 = vpack.c.b16 %v546, %v544
    %v581 = vpack.c.b16 %v549, %v547
    %v582 = vpack.c.b16 %v550, %v548
    %615 = vmatprep.subr.bf16.mxu0 %v552
    %616 = vmatpush1.bf16.msra.mxu0 %v551
    %617 = vmatprep.subr.bf16.mxu0 %v554
    %618 = vmatpush1.bf16.msra.mxu0 %v553
    %619 = vmatprep.subr.bf16.mxu0 %v556
    %620 = vmatpush1.bf16.msra.mxu0 %v555
    %621 = vmatprep.subr.bf16.mxu0 %v558
    %622 = vmatpush1.bf16.msra.mxu0 %v557
    %623 = vmatprep.subr.bf16.mxu0 %v560
    %624 = vmatpush1.bf16.msra.mxu0 %v559
    %625 = vmatprep.subr.bf16.mxu0 %v562
    %626 = vmatpush1.bf16.msra.mxu0 %v561
    %627 = vmatprep.subr.bf16.mxu0 %v564
    %628 = vmatpush1.bf16.msra.mxu0 %v563
    %629 = vmatprep.subr.bf16.mxu0 %v566
    %630 = vmatpush1.bf16.msra.mxu0 %v565
    %631 = vmatprep.subr.bf16.mxu0 %v568
    %632 = vmatpush1.bf16.msra.mxu0 %v567
    %633 = vmatprep.subr.bf16.mxu0 %v570
    %634 = vmatpush1.bf16.msra.mxu0 %v569
    %635 = vmatprep.subr.bf16.mxu0 %v572
    %636 = vmatpush1.bf16.msra.mxu0 %v571
    %637 = vmatprep.subr.bf16.mxu0 %v574
    %638 = vmatpush1.bf16.msra.mxu0 %v573
    %639 = vmatprep.subr.bf16.mxu0 %v576
    %640 = vmatpush1.bf16.msra.mxu0 %v575
    %641 = vmatprep.subr.bf16.mxu0 %v578
    %642 = vmatpush1.bf16.msra.mxu0 %v577
    %643 = vmatprep.subr.bf16.mxu0 %v580
    %644 = vmatpush1.bf16.msra.mxu0 %v579
    %645 = vmatprep.subr.bf16.mxu0 %v582
    %646 = vmatpush1.bf16.msra.mxu0 %v581
    %647 = vmatprep.mubr.bf16.mxu0 %v442
    %648 = vmatmul.mubr.bf16.gmra.mrb[0].mxu0 %v441
    %v649 = vpop.f32.mrb[0].mxu0
    %v650 = vadd.f32 %v448, %v649
    %v651 = vpop.f32.mrb[0].mxu0
    %v652 = vadd.f32 %v452, %v651
    %v653 = vpop.f32.mrb[0].mxu0
    %v654 = vpop.f32.mrb[0].mxu0
    %655 = vdwg.mxu0
    %v656 = vld [vmem:[%s8] sm:$0xff]
    %v657 = vld [vmem:[%s8 + $0x8] sm:$0xff]
    %v658 = vld [vmem:[%s8 + $0x10] sm:$0xff]
    %v659 = vld [vmem:[%s8 + $0x18] sm:$0xff]
    %v660 = vld [vmem:[%s8 + $0x20] sm:$0xff]
    %v661 = vld [vmem:[%s8 + $0x28] sm:$0xff]
    %v662 = vld [vmem:[%s8 + $0x30] sm:$0xff]
    %v663 = vld [vmem:[%s8 + $0x38] sm:$0xff]
    %v664 = vld [vmem:[%s8 + $0x40] sm:$0xff]
    %v665 = vld [vmem:[%s8 + $0x48] sm:$0xff]
    %v666 = vld [vmem:[%s8 + $0x50] sm:$0xff]
    %v667 = vld [vmem:[%s8 + $0x58] sm:$0xff]
    %v668 = vld [vmem:[%s8 + $0x60] sm:$0xff]
    %v669 = vld [vmem:[%s8 + $0x68] sm:$0xff]
    %v670 = vld [vmem:[%s8 + $0x70] sm:$0xff]
    %v671 = vld [vmem:[%s8 + $0x78] sm:$0xff]
    %v672 = vld [vmem:[%s8 + $0x80] sm:$0xff]
    %v673 = vld [vmem:[%s8 + $0x88] sm:$0xff]
    %v674 = vld [vmem:[%s8 + $0x90] sm:$0xff]
    %v675 = vld [vmem:[%s8 + $0x98] sm:$0xff]
    %v676 = vld [vmem:[%s8 + $0xa0] sm:$0xff]
    %v677 = vld [vmem:[%s8 + $0xa8] sm:$0xff]
    %v678 = vld [vmem:[%s8 + $0xb0] sm:$0xff]
    %v679 = vld [vmem:[%s8 + $0xb8] sm:$0xff]
    %v680 = vld [vmem:[%s8 + $0xc0] sm:$0xff]
    %v681 = vld [vmem:[%s8 + $0xc8] sm:$0xff]
    %v682 = vld [vmem:[%s8 + $0xd0] sm:$0xff]
    %v683 = vld [vmem:[%s8 + $0xd8] sm:$0xff]
    %v684 = vld [vmem:[%s8 + $0xe0] sm:$0xff]
    %v685 = vld [vmem:[%s8 + $0xe8] sm:$0xff]
    %v686 = vld [vmem:[%s8 + $0xf0] sm:$0xff]
    %v687 = vld [vmem:[%s8 + $0xf8] sm:$0xff]
    %v688 = vpack.c.bf16 %v391, %v391
    %v689 = vpack.c.bf16 %v393, %v393
    %v690 = vld [vmem:[%s9] sm:$0xff]
    %v691 = vld [vmem:[%s9 + $0x8] sm:$0xff]
    %v692 = vld [vmem:[%s9 + $0x10] sm:$0xff]
    %v693 = vld [vmem:[%s9 + $0x18] sm:$0xff]
    %v694 = vld [vmem:[%s9 + $0x20] sm:$0xff]
    %v695 = vld [vmem:[%s9 + $0x28] sm:$0xff]
    %v696 = vld [vmem:[%s9 + $0x30] sm:$0xff]
    %v697 = vld [vmem:[%s9 + $0x38] sm:$0xff]
    %v698 = vld [vmem:[%s9 + $0x40] sm:$0xff]
    %v699 = vld [vmem:[%s9 + $0x48] sm:$0xff]
    %v700 = vld [vmem:[%s9 + $0x50] sm:$0xff]
    %v701 = vld [vmem:[%s9 + $0x58] sm:$0xff]
    %v702 = vld [vmem:[%s9 + $0x60] sm:$0xff]
    %v703 = vld [vmem:[%s9 + $0x68] sm:$0xff]
    %v704 = vld [vmem:[%s9 + $0x70] sm:$0xff]
    %v705 = vld [vmem:[%s9 + $0x78] sm:$0xff]
    %v706 = vld [vmem:[%s9 + $0x80] sm:$0xff]
    %v707 = vld [vmem:[%s9 + $0x88] sm:$0xff]
    %v708 = vld [vmem:[%s9 + $0x90] sm:$0xff]
    %v709 = vld [vmem:[%s9 + $0x98] sm:$0xff]
    %v710 = vld [vmem:[%s9 + $0xa0] sm:$0xff]
    %v711 = vld [vmem:[%s9 + $0xa8] sm:$0xff]
    %v712 = vld [vmem:[%s9 + $0xb0] sm:$0xff]
    %v713 = vld [vmem:[%s9 + $0xb8] sm:$0xff]
    %v714 = vld [vmem:[%s9 + $0xc0] sm:$0xff]
    %v715 = vld [vmem:[%s9 + $0xc8] sm:$0xff]
    %v716 = vld [vmem:[%s9 + $0xd0] sm:$0xff]
    %v717 = vld [vmem:[%s9 + $0xd8] sm:$0xff]
    %v718 = vld [vmem:[%s9 + $0xe0] sm:$0xff]
    %v719 = vld [vmem:[%s9 + $0xe8] sm:$0xff]
    %v720 = vld [vmem:[%s9 + $0xf0] sm:$0xff]
    %v721 = vld [vmem:[%s9 + $0xf8] sm:$0xff]
    %v722 = vpack.c.bf16 %v650, %v650
    %v723 = vpack.c.bf16 %v652, %v652
    %v756 = vunpack.c.l.b16 %v690
    %v757 = vunpack.c.h.b16 %v690
    %v758 = vunpack.c.l.b16 %v691
    %v759 = vunpack.c.h.b16 %v691
    %v760 = vunpack.c.l.b16 %v692
    %v761 = vunpack.c.h.b16 %v692
    %v762 = vunpack.c.l.b16 %v693
    %v763 = vunpack.c.h.b16 %v693
    %v764 = vunpack.c.l.b16 %v694
    %v765 = vunpack.c.h.b16 %v694
    %v766 = vunpack.c.l.b16 %v695
    %v767 = vunpack.c.h.b16 %v695
    %v768 = vunpack.c.l.b16 %v696
    %v769 = vunpack.c.h.b16 %v696
    %v770 = vunpack.c.l.b16 %v697
    %v771 = vunpack.c.h.b16 %v697
    %v772 = vunpack.c.l.b16 %v698
    %v773 = vunpack.c.h.b16 %v698
    %v774 = vunpack.c.l.b16 %v699
    %v775 = vunpack.c.h.b16 %v699
    %v776 = vunpack.c.l.b16 %v700
    %v777 = vunpack.c.h.b16 %v700
    %v778 = vunpack.c.l.b16 %v701
    %v779 = vunpack.c.h.b16 %v701
    %v780 = vunpack.c.l.b16 %v702
    %v781 = vunpack.c.h.b16 %v702
    %v782 = vunpack.c.l.b16 %v703
    %v783 = vunpack.c.h.b16 %v703
    %v784 = vunpack.c.l.b16 %v704
    %v785 = vunpack.c.h.b16 %v704
    %v786 = vunpack.c.l.b16 %v705
    %v787 = vunpack.c.h.b16 %v705
    %v788 = vunpack.c.l.b16 %v706
    %v789 = vunpack.c.h.b16 %v706
    %v790 = vunpack.c.l.b16 %v707
    %v791 = vunpack.c.h.b16 %v707
    %v792 = vunpack.c.l.b16 %v708
    %v793 = vunpack.c.h.b16 %v708
    %v794 = vunpack.c.l.b16 %v709
    %v795 = vunpack.c.h.b16 %v709
    %v796 = vunpack.c.l.b16 %v710
    %v797 = vunpack.c.h.b16 %v710
    %v798 = vunpack.c.l.b16 %v711
    %v799 = vunpack.c.h.b16 %v711
    %v800 = vunpack.c.l.b16 %v712
    %v801 = vunpack.c.h.b16 %v712
    %v802 = vunpack.c.l.b16 %v713
    %v803 = vunpack.c.h.b16 %v713
    %v804 = vunpack.c.l.b16 %v714
    %v805 = vunpack.c.h.b16 %v714
    %v806 = vunpack.c.l.b16 %v715
    %v807 = vunpack.c.h.b16 %v715
    %v808 = vunpack.c.l.b16 %v716
    %v809 = vunpack.c.h.b16 %v716
    %v810 = vunpack.c.l.b16 %v717
    %v811 = vunpack.c.h.b16 %v717
    %v812 = vunpack.c.l.b16 %v718
    %v813 = vunpack.c.h.b16 %v718
    %v814 = vunpack.c.l.b16 %v719
    %v815 = vunpack.c.h.b16 %v719
    %v816 = vunpack.c.l.b16 %v720
    %v817 = vunpack.c.h.b16 %v720
    %v818 = vunpack.c.l.b16 %v721
    %v819 = vunpack.c.h.b16 %v721
    %v820 = vpack.c.b16 %v758, %v756
    %v821 = vpack.c.b16 %v759, %v757
    %v822 = vpack.c.b16 %v762, %v760
    %v823 = vpack.c.b16 %v763, %v761
    %v824 = vpack.c.b16 %v766, %v764
    %v825 = vpack.c.b16 %v767, %v765
    %v826 = vpack.c.b16 %v770, %v768
    %v827 = vpack.c.b16 %v771, %v769
    %v828 = vpack.c.b16 %v774, %v772
    %v829 = vpack.c.b16 %v775, %v773
    %v830 = vpack.c.b16 %v778, %v776
    %v831 = vpack.c.b16 %v779, %v777
    %v832 = vpack.c.b16 %v782, %v780
    %v833 = vpack.c.b16 %v783, %v781
    %v834 = vpack.c.b16 %v786, %v784
    %v835 = vpack.c.b16 %v787, %v785
    %v836 = vpack.c.b16 %v790, %v788
    %v837 = vpack.c.b16 %v791, %v789
    %v838 = vpack.c.b16 %v794, %v792
    %v839 = vpack.c.b16 %v795, %v793
    %v840 = vpack.c.b16 %v798, %v796
    %v841 = vpack.c.b16 %v799, %v797
    %v842 = vpack.c.b16 %v802, %v800
    %v843 = vpack.c.b16 %v803, %v801
    %v844 = vpack.c.b16 %v806, %v804
    %v845 = vpack.c.b16 %v807, %v805
    %v846 = vpack.c.b16 %v810, %v808
    %v847 = vpack.c.b16 %v811, %v809
    %v848 = vpack.c.b16 %v814, %v812
    %v849 = vpack.c.b16 %v815, %v813
    %v850 = vpack.c.b16 %v818, %v816
    %v851 = vpack.c.b16 %v819, %v817
    %884 = vmatprep.subr.bf16.mxu0 %v821
    %885 = vmatpush1.bf16.msra.mxu0 %v820
    %886 = vmatprep.subr.bf16.mxu0 %v823
    %887 = vmatpush1.bf16.msra.mxu0 %v822
    %888 = vmatprep.subr.bf16.mxu0 %v825
    %889 = vmatpush1.bf16.msra.mxu0 %v824
    %890 = vmatprep.subr.bf16.mxu0 %v827
    %891 = vmatpush1.bf16.msra.mxu0 %v826
    %892 = vmatprep.subr.bf16.mxu0 %v829
    %893 = vmatpush1.bf16.msra.mxu0 %v828
    %894 = vmatprep.subr.bf16.mxu0 %v831
    %895 = vmatpush1.bf16.msra.mxu0 %v830
    %896 = vmatprep.subr.bf16.mxu0 %v833
    %897 = vmatpush1.bf16.msra.mxu0 %v832
    %898 = vmatprep.subr.bf16.mxu0 %v835
    %899 = vmatpush1.bf16.msra.mxu0 %v834
    %900 = vmatprep.subr.bf16.mxu0 %v837
    %901 = vmatpush1.bf16.msra.mxu0 %v836
    %902 = vmatprep.subr.bf16.mxu0 %v839
    %903 = vmatpush1.bf16.msra.mxu0 %v838
    %904 = vmatprep.subr.bf16.mxu0 %v841
    %905 = vmatpush1.bf16.msra.mxu0 %v840
    %906 = vmatprep.subr.bf16.mxu0 %v843
    %907 = vmatpush1.bf16.msra.mxu0 %v842
    %908 = vmatprep.subr.bf16.mxu0 %v845
    %909 = vmatpush1.bf16.msra.mxu0 %v844
    %910 = vmatprep.subr.bf16.mxu0 %v847
    %911 = vmatpush1.bf16.msra.mxu0 %v846
    %912 = vmatprep.subr.bf16.mxu0 %v849
    %913 = vmatpush1.bf16.msra.mxu0 %v848
    %914 = vmatprep.subr.bf16.mxu0 %v851
    %915 = vmatpush1.bf16.msra.mxu0 %v850
    %916 = vmatprep.mubr.bf16.mxu0 %v723
    %917 = vmatmul.mubr.bf16.gmra.mrb[0].mxu0 %v722
    %v918 = vpop.f32.mrb[0].mxu0
    %v919 = vadd.f32 0.0, %v918
    %v920 = vpop.f32.mrb[0].mxu0
    %v921 = vadd.f32 0.0, %v920
    %v922 = vpop.f32.mrb[0].mxu0
    %v923 = vpop.f32.mrb[0].mxu0
    %924 = vdwg.mxu0
    %v957 = vunpack.c.l.b16 %v656
    %v958 = vunpack.c.h.b16 %v656
    %v959 = vunpack.c.l.b16 %v657
    %v960 = vunpack.c.h.b16 %v657
    %v961 = vunpack.c.l.b16 %v658
    %v962 = vunpack.c.h.b16 %v658
    %v963 = vunpack.c.l.b16 %v659
    %v964 = vunpack.c.h.b16 %v659
    %v965 = vunpack.c.l.b16 %v660
    %v966 = vunpack.c.h.b16 %v660
    %v967 = vunpack.c.l.b16 %v661
    %v968 = vunpack.c.h.b16 %v661
    %v969 = vunpack.c.l.b16 %v662
    %v970 = vunpack.c.h.b16 %v662
    %v971 = vunpack.c.l.b16 %v663
    %v972 = vunpack.c.h.b16 %v663
    %v973 = vunpack.c.l.b16 %v664
    %v974 = vunpack.c.h.b16 %v664
    %v975 = vunpack.c.l.b16 %v665
    %v976 = vunpack.c.h.b16 %v665
    %v977 = vunpack.c.l.b16 %v666
    %v978 = vunpack.c.h.b16 %v666
    %v979 = vunpack.c.l.b16 %v667
    %v980 = vunpack.c.h.b16 %v667
    %v981 = vunpack.c.l.b16 %v668
    %v982 = vunpack.c.h.b16 %v668
    %v983 = vunpack.c.l.b16 %v669
    %v984 = vunpack.c.h.b16 %v669
    %v985 = vunpack.c.l.b16 %v670
    %v986 = vunpack.c.h.b16 %v670
    %v987 = vunpack.c.l.b16 %v671
    %v988 = vunpack.c.h.b16 %v671
    %v989 = vunpack.c.l.b16 %v672
    %v990 = vunpack.c.h.b16 %v672
    %v991 = vunpack.c.l.b16 %v673
    %v992 = vunpack.c.h.b16 %v673
    %v993 = vunpack.c.l.b16 %v674
    %v994 = vunpack.c.h.b16 %v674
    %v995 = vunpack.c.l.b16 %v675
    %v996 = vunpack.c.h.b16 %v675
    %v997 = vunpack.c.l.b16 %v676
    %v998 = vunpack.c.h.b16 %v676
    %v999 = vunpack.c.l.b16 %v677
    %v1000 = vunpack.c.h.b16 %v677
    %v1001 = vunpack.c.l.b16 %v678
    %v1002 = vunpack.c.h.b16 %v678
    %v1003 = vunpack.c.l.b16 %v679
    %v1004 = vunpack.c.h.b16 %v679
    %v1005 = vunpack.c.l.b16 %v680
    %v1006 = vunpack.c.h.b16 %v680
    %v1007 = vunpack.c.l.b16 %v681
    %v1008 = vunpack.c.h.b16 %v681
    %v1009 = vunpack.c.l.b16 %v682
    %v1010 = vunpack.c.h.b16 %v682
    %v1011 = vunpack.c.l.b16 %v683
    %v1012 = vunpack.c.h.b16 %v683
    %v1013 = vunpack.c.l.b16 %v684
    %v1014 = vunpack.c.h.b16 %v684
    %v1015 = vunpack.c.l.b16 %v685
    %v1016 = vunpack.c.h.b16 %v685
    %v1017 = vunpack.c.l.b16 %v686
    %v1018 = vunpack.c.h.b16 %v686
    %v1019 = vunpack.c.l.b16 %v687
    %v1020 = vunpack.c.h.b16 %v687
    %v1021 = vpack.c.b16 %v959, %v957
    %v1022 = vpack.c.b16 %v960, %v958
    %v1023 = vpack.c.b16 %v963, %v961
    %v1024 = vpack.c.b16 %v964, %v962
    %v1025 = vpack.c.b16 %v967, %v965
    %v1026 = vpack.c.b16 %v968, %v966
    %v1027 = vpack.c.b16 %v971, %v969
    %v1028 = vpack.c.b16 %v972, %v970
    %v1029 = vpack.c.b16 %v975, %v973
    %v1030 = vpack.c.b16 %v976, %v974
    %v1031 = vpack.c.b16 %v979, %v977
    %v1032 = vpack.c.b16 %v980, %v978
    %v1033 = vpack.c.b16 %v983, %v981
    %v1034 = vpack.c.b16 %v984, %v982
    %v1035 = vpack.c.b16 %v987, %v985
    %v1036 = vpack.c.b16 %v988, %v986
    %v1037 = vpack.c.b16 %v991, %v989
    %v1038 = vpack.c.b16 %v992, %v990
    %v1039 = vpack.c.b16 %v995, %v993
    %v1040 = vpack.c.b16 %v996, %v994
    %v1041 = vpack.c.b16 %v999, %v997
    %v1042 = vpack.c.b16 %v1000, %v998
    %v1043 = vpack.c.b16 %v1003, %v1001
    %v1044 = vpack.c.b16 %v1004, %v1002
    %v1045 = vpack.c.b16 %v1007, %v1005
    %v1046 = vpack.c.b16 %v1008, %v1006
    %v1047 = vpack.c.b16 %v1011, %v1009
    %v1048 = vpack.c.b16 %v1012, %v1010
    %v1049 = vpack.c.b16 %v1015, %v1013
    %v1050 = vpack.c.b16 %v1016, %v1014
    %v1051 = vpack.c.b16 %v1019, %v1017
    %v1052 = vpack.c.b16 %v1020, %v1018
    %1085 = vmatprep.subr.bf16.mxu0 %v1022
    %1086 = vmatpush1.bf16.msra.mxu0 %v1021
    %1087 = vmatprep.subr.bf16.mxu0 %v1024
    %1088 = vmatpush1.bf16.msra.mxu0 %v1023
    %1089 = vmatprep.subr.bf16.mxu0 %v1026
    %1090 = vmatpush1.bf16.msra.mxu0 %v1025
    %1091 = vmatprep.subr.bf16.mxu0 %v1028
    %1092 = vmatpush1.bf16.msra.mxu0 %v1027
    %1093 = vmatprep.subr.bf16.mxu0 %v1030
    %1094 = vmatpush1.bf16.msra.mxu0 %v1029
    %1095 = vmatprep.subr.bf16.mxu0 %v1032
    %1096 = vmatpush1.bf16.msra.mxu0 %v1031
    %1097 = vmatprep.subr.bf16.mxu0 %v1034
    %1098 = vmatpush1.bf16.msra.mxu0 %v1033
    %1099 = vmatprep.subr.bf16.mxu0 %v1036
    %1100 = vmatpush1.bf16.msra.mxu0 %v1035
    %1101 = vmatprep.subr.bf16.mxu0 %v1038
    %1102 = vmatpush1.bf16.msra.mxu0 %v1037
    %1103 = vmatprep.subr.bf16.mxu0 %v1040
    %1104 = vmatpush1.bf16.msra.mxu0 %v1039
    %1105 = vmatprep.subr.bf16.mxu0 %v1042
    %1106 = vmatpush1.bf16.msra.mxu0 %v1041
    %1107 = vmatprep.subr.bf16.mxu0 %v1044
    %1108 = vmatpush1.bf16.msra.mxu0 %v1043
    %1109 = vmatprep.subr.bf16.mxu0 %v1046
    %1110 = vmatpush1.bf16.msra.mxu0 %v1045
    %1111 = vmatprep.subr.bf16.mxu0 %v1048
    %1112 = vmatpush1.bf16.msra.mxu0 %v1047
    %1113 = vmatprep.subr.bf16.mxu0 %v1050
    %1114 = vmatpush1.bf16.msra.mxu0 %v1049
    %1115 = vmatprep.subr.bf16.mxu0 %v1052
    %1116 = vmatpush1.bf16.msra.mxu0 %v1051
    %1117 = vmatprep.mubr.bf16.mxu0 %v689
    %1118 = vmatmul.mubr.bf16.gmra.mrb[0].mxu0 %v688
    %v1119 = vpop.f32.mrb[0].mxu0
    %v1120 = vadd.f32 %v919, %v1119
    %v1121 = vpop.f32.mrb[0].mxu0
    %v1122 = vadd.f32 %v921, %v1121
    %v1123 = vpop.f32.mrb[0].mxu0
    %v1124 = vpop.f32.mrb[0].mxu0
    %1125 = vdwg.mxu0
    %v1126 = vld [vmem:[%s10] sm:$0x3]
    %v1128 = vlaneseq
    %v1129 = vshrl.u32 %v1128, 7
    %v1130 = vsub.s32 0, %v1129
    %v1131 = vrot.slane %v1126, %v1130
    %v1132 = vlaneseq
    %v1133 = vshrl.u32 %v1132, 7
    %v1134 = vsub.s32 1, %v1133
    %v1135 = vrot.slane %v1126, %v1134
    %v1138 = vadd.f32 %v1120, %v1131
    %v1139 = vadd.f32 %v1122, %v1135
    %v1140 = vmul.f32 %v1138, %v1138
    %v1141 = vmul.f32 %v1139, %v1139
    %v1142 = vsel %vm53, %v1140, 0.0
    %v1143 = vsel %vm53, %v1141, 0.0
    %v1144 = vadd.f32 %v1142, %v1143
    %1145 = vadd.xlane.f32.xlu0 %v1144
    %v1146 = vpop.xlane.xlu0 %1145
    %v1147 = vmax.f32 %v1146, 1e-24
    %v1148 = vrsqrt.pop %v1147
    %v1149 = vmul.f32 %v1138, %v1148
    %v1150 = vmul.f32 %v1139, %v1148
    %v1153 = vcombine.low %v1149, %v1150
    %v1155 = vunpack.c.l.s4 1983009808
    %v1156 = vunpack.c.0.s8 %v1155
    %v1157 = vlaneseq
    %v1158 = vshrl.u32 %v1157, 7
    %v1159 = vsub.s32 %v1156, %v1158
    %v1160 = vrot.slane %v1153, %v1159
    %1162 = vst [vmem:[#allocation2] sm:$0xf] %v1160
    // Predicated region
    $region46: #{shopee_forward.5} parent=1 // pred_check
      _
    $region47: #{shopee_forward.5} parent=1 // pred_check_branch
      %1164 = sbr.rel (0) target = $region49
    $region48: #{shopee_forward.5} parent=1 // pred_region
      %s1166 = ssub.s32 64, 64
      %1167 = vsyncadd [#allocation3], %s1166
      %s1169 = sshll.u32 [#allocation2], 4
      %s1170 = int_to_ptr.vmem [resolvable:$true] %s1169
      %1172 = dma.vmem_to_hbm [thread:$0]  %s1170, 64, %s11, [#allocation3]
    $region49: #{shopee_forward.5} parent=1 // pred_fallthru
      _
    // Predicated region
    $region50: #{shopee_forward.5} parent=1 // pred_check
      _
    $region51: #{shopee_forward.5} parent=1 // pred_check_branch
      %1174 = sbr.rel (0) target = $region53
    $region52: #{shopee_forward.5} parent=1 // pred_region
      %1175 = dma.done [#allocation3], 64
    $region53: #{shopee_forward.5} parent=1 // pred_fallthru
      _
    %1176 = vsyncpa [#allocation3], 1

// kernel: shopee_forward.3
$region0: #{shopee_forward.3}
  #allocation0 [shape = 'u32[]', space=smem, size = 0x4, offset = 0x4, fixed_abs, tag = 'smem constant byte address 0x4 - core index']
  #allocation1 [shape = 'u32[144,128]{1,0:T(1,128)}', space=vmem, size = 0x12000, scoped, tag = 'internal scratch']
  %s0 = inlined_call_operand.vmem [shape: f32[8,192], index: 0, kind: input, shape index: {}]
  %s1 = inlined_call_operand.hbm [shape: bf16[192,256], index: 1, kind: input, shape index: {}]
  %s2 = inlined_call_operand.vmem [shape: f32[1,256], index: 2, kind: input, shape index: {}]
  %s3 = inlined_call_operand.hbm [shape: f32[1,256], index: 3, kind: input, shape index: {}]
  %s4 = inlined_call_operand.hbm [shape: f32[5,256], index: 4, kind: input, shape index: {}]
  %s5 = inlined_call_operand.hbm [shape: f32[2,1,256], index: 5, kind: input, shape index: {}]
  %s6 = inlined_call_operand.hbm [shape: f32[2,1,256], index: 6, kind: input, shape index: {}]
  %s7 = inlined_call_operand.hbm [shape: bf16[2,256,768], index: 7, kind: input, shape index: {}]
  %s8 = inlined_call_operand.vmem [shape: f32[2,1,768], index: 8, kind: input, shape index: {}]
  %s9 = inlined_call_operand.hbm [shape: bf16[2,256,256], index: 9, kind: input, shape index: {}]
  %s10 = inlined_call_operand.hbm [shape: f32[2,1,256], index: 10, kind: input, shape index: {}]
  %s11 = inlined_call_operand.hbm [shape: f32[2,1,256], index: 11, kind: input, shape index: {}]
  %s12 = inlined_call_operand.hbm [shape: f32[2,1,256], index: 12, kind: input, shape index: {}]
  %s13 = inlined_call_operand.vmem [shape: bf16[2,256,512], index: 13, kind: input, shape index: {}]
  %s14 = inlined_call_operand.hbm [shape: f32[2,1,512], index: 14, kind: input, shape index: {}]
  %s15 = inlined_call_operand.hbm [shape: bf16[2,512,256], index: 15, kind: input, shape index: {}]
  %s16 = inlined_call_operand.hbm [shape: f32[2,1,256], index: 16, kind: input, shape index: {}]
  %s17 = inlined_call_operand.vmem [shape: f32[10,256], index: 17, kind: output, shape index: {}]
  %s18 = sld [smem:[#allocation0]]
  $region157: #{shopee_forward.3} parent=0
    _
  %s20 = ssub.s32 1, %s18
  %s21 = scalar_select 0, %s20, %s18
  $region1: #{shopee_forward.3} parent=0
    #allocation2 [shape = 'u8[98304]{0}', space=vmem, size = 0x18000, scoped, tag = 'input window, operand 1, single buffered']
    #allocation3 [shape = 's32[2]{0}', space=sflag, size = 0x8, scoped, tag = 'scoped memory for shopee_forward.3']
    #allocation4 [shape = 'u8[1024]{0}', space=vmem, size = 0x400, scoped, tag = 'input window, operand 3, single buffered']
    #allocation5 [shape = 's32[1]{0}', space=sflag, size = 0x4, scoped, tag = 'scoped memory for shopee_forward.3']
    #allocation6 [shape = 'u8[8192]{0}', space=vmem, size = 0x2000, scoped, tag = 'input window, operand 4, single buffered']
    #allocation7 [shape = 'u8[2048]{0}', space=vmem, size = 0x800, scoped, tag = 'input window, operand 5']
    #allocation8 [shape = 's32[2]{0}', space=sflag, size = 0x8, scoped, tag = 'scoped memory for shopee_forward.3']
    #allocation9 [shape = 'u8[2048]{0}', space=vmem, size = 0x800, scoped, tag = 'input window, operand 6']
    #allocation10 [shape = 'u8[786432]{0}', space=vmem, size = 0xc0000, scoped, tag = 'input window, operand 7']
    #allocation11 [shape = 's32[2]{0}', space=sflag, size = 0x8, scoped, tag = 'scoped memory for shopee_forward.3']
    #allocation12 [shape = 'u8[262144]{0}', space=vmem, size = 0x40000, scoped, tag = 'input window, operand 9']
    #allocation13 [shape = 'u8[2048]{0}', space=vmem, size = 0x800, scoped, tag = 'input window, operand 10']
    #allocation14 [shape = 's32[2]{0}', space=sflag, size = 0x8, scoped, tag = 'scoped memory for shopee_forward.3']
    #allocation15 [shape = 'u8[2048]{0}', space=vmem, size = 0x800, scoped, tag = 'input window, operand 11']
    #allocation16 [shape = 'u8[2048]{0}', space=vmem, size = 0x800, scoped, tag = 'input window, operand 12']
    #allocation17 [shape = 's32[2]{0}', space=sflag, size = 0x8, scoped, tag = 'scoped memory for shopee_forward.3']
    #allocation18 [shape = 'u8[4096]{0}', space=vmem, size = 0x1000, scoped, tag = 'input window, operand 14']
    #allocation19 [shape = 'u8[524288]{0}', space=vmem, size = 0x80000, scoped, tag = 'input window, operand 15']
    #allocation20 [shape = 's32[2]{0}', space=sflag, size = 0x8, scoped, tag = 'scoped memory for shopee_forward.3']
    #allocation21 [shape = 'u8[2048]{0}', space=vmem, size = 0x800, scoped, tag = 'input window, operand 16']
    %22 = vsyncpa [#allocation3], 0
    %23 = vsyncpa [#allocation5], 0
    %24 = vsyncpa [#allocation8], 0
    %s25 = scalar_lea.sflag [#allocation8], 1
    %26 = vsyncpa %s25, 0
    %27 = vsyncpa [#allocation11], 0
    %s28 = scalar_lea.sflag [#allocation11], 1
    %29 = vsyncpa %s28, 0
    %30 = vsyncpa [#allocation14], 0
    %s31 = scalar_lea.sflag [#allocation14], 1
    %32 = vsyncpa %s31, 0
    %33 = vsyncpa [#allocation17], 0
    %s34 = scalar_lea.sflag [#allocation17], 1
    %35 = vsyncpa %s34, 0
    %36 = vsyncpa [#allocation20], 0
    %s37 = scalar_lea.sflag [#allocation20], 1
    %38 = vsyncpa %s37, 0
    loop: start=0, step=1, limit=4
    $region2: #{shopee_forward.3} parent=1 // loop_pre_header
      _
    $region3: #{shopee_forward.3} parent=1 // loop_header
      %s40 = sphi 0, %s44
      %p41 = scmp.ge.s32.totalorder %s40, 4
      %s48 = sphi 0, %s48
      %s50 = sphi 0, %s48
      %s51 = sphi 0, %s50
      %s65 = sphi 0, %s51
      %s69 = sphi 0, %s69
      %s71 = sphi 0, %s69
      %s72 = sphi 0, %s71
      %s86 = sphi 0, %s72
      %s90 = sphi 0, %s90
      %s92 = sphi 0, %s90
      %s93 = sphi 0, %s92
      %s107 = sphi 0, %s93
      %s111 = sphi 0, %s111
      %s113 = sphi 0, %s111
      %s114 = sphi 0, %s113
      %s128 = sphi 0, %s114
      %s132 = sphi 0, %s132
      %s134 = sphi 0, %s132
      %s135 = sphi 0, %s134
      %s149 = sphi 0, %s135
      %s155 = sphi 0, %s157
      %s158 = sphi 0, %s155
      %s159 = sphi 0, %s158
      %s175 = sphi 0, %s159
      %s181 = sphi 0, %s183
      %s184 = sphi 0, %s181
      %s185 = sphi 0, %s184
      %s201 = sphi 0, %s185
      %s207 = sphi 0, %s209
      %s210 = sphi 0, %s207
      %s211 = sphi 0, %s210
      %s227 = sphi 0, %s211
      %s233 = sphi 0, %s235
      %s236 = sphi 0, %s233
      %s237 = sphi 0, %s236
      %s253 = sphi 0, %s237
      %s259 = sphi 0, %s261
      %s262 = sphi 0, %s259
      %s263 = sphi 0, %s262
      %s279 = sphi 0, %s263
      %s285 = sphi 0, %s287
      %s288 = sphi 0, %s285
      %s289 = sphi 0, %s288
      %s305 = sphi 0, %s289
      %s311 = sphi 0, %s313
      %s314 = sphi 0, %s311
      %s315 = sphi 0, %s314
      %s331 = sphi 0, %s315
      %s337 = sphi 0, %s339
      %s340 = sphi 0, %s337
      %s341 = sphi 0, %s340
      %s357 = sphi 0, %s341
      %s363 = sphi 0, %s365
      %s366 = sphi 0, %s363
      %s367 = sphi 0, %s366
      %s383 = sphi 0, %s367
      %s389 = sphi 0, %s391
      %s392 = sphi 0, %s389
      %s393 = sphi 0, %s392
      %s409 = sphi 0, %s393
      %s415 = sphi 0, %s417
      %s418 = sphi 0, %s415
      %s419 = sphi 0, %s418
      %s435 = sphi 0, %s419
      %s441 = sphi 0, %s443
      %s444 = sphi 0, %s441
      %s445 = sphi 0, %s444
      %s461 = sphi 0, %s445
      %s465 = sphi 0, %s465
      %s467 = sphi 0, %s465
      %s468 = sphi 0, %s467
      %s482 = sphi 0, %s468
    $region4: #{shopee_forward.3} parent=1 // loop_header_branch
      %43 = sbr.rel (%p41) target = $region8
    $region5: #{shopee_forward.3} parent=1 // loop_body
      %s45 = ssub.s32 %s40, 1
      %s46 = ssub.s32 %s40, 2
      %s47 = sadd.s32 %s40, 1
      %s49 = sadd.s32 %s48, 1
      %p52 = scmp.eq.s32.totalorder %s40, 1
      %p53 = scmp.ne.s32.totalorder %s48, %s50
      %p54 = scmp.eq.s32.totalorder %s40, 0
      %p55 = por %p53, %p54
      %p56 = scmp.ne.s32.totalorder %s48, %s50
      %p57 = scmp.eq.s32.totalorder %s45, 1
      %p58 = por %p56, %p57
      %p59 = scmp.ne.s32.totalorder %s50, %s51
      %p60 = scmp.eq.s32.totalorder %s45, 0
      %p61 = por %p59, %p60
      %p62 = scmp.ne.s32.totalorder %s50, %s51
      %p63 = scmp.eq.s32.totalorder %s46, 1
      %p64 = por %p62, %p63
      %p66 = scmp.ne.s32.totalorder %s51, %s65
      %p67 = scmp.eq.s32.totalorder %s46, 0
      %p68 = por %p66, %p67
      %s70 = sadd.s32 %s69, 1
      %p73 = scmp.eq.s32.totalorder %s40, 1
      %p74 = scmp.ne.s32.totalorder %s69, %s71
      %p75 = scmp.eq.s32.totalorder %s40, 0
      %p76 = por %p74, %p75
      %p77 = scmp.ne.s32.totalorder %s69, %s71
      %p78 = scmp.eq.s32.totalorder %s45, 1
      %p79 = por %p77, %p78
      %p80 = scmp.ne.s32.totalorder %s71, %s72
      %p81 = scmp.eq.s32.totalorder %s45, 0
      %p82 = por %p80, %p81
      %p83 = scmp.ne.s32.totalorder %s71, %s72
      %p84 = scmp.eq.s32.totalorder %s46, 1
      %p85 = por %p83, %p84
      %p87 = scmp.ne.s32.totalorder %s72, %s86
      %p88 = scmp.eq.s32.totalorder %s46, 0
      %p89 = por %p87, %p88
      %s91 = sadd.s32 %s90, 1
      %p94 = scmp.eq.s32.totalorder %s40, 1
      %p95 = scmp.ne.s32.totalorder %s90, %s92
      %p96 = scmp.eq.s32.totalorder %s40, 0
      %p97 = por %p95, %p96
      %p98 = scmp.ne.s32.totalorder %s90, %s92
      %p99 = scmp.eq.s32.totalorder %s45, 1
      %p100 = por %p98, %p99
      %p101 = scmp.ne.s32.totalorder %s92, %s93
      %p102 = scmp.eq.s32.totalorder %s45, 0
      %p103 = por %p101, %p102
      %p104 = scmp.ne.s32.totalorder %s92, %s93
      %p105 = scmp.eq.s32.totalorder %s46, 1
      %p106 = por %p104, %p105
      %p108 = scmp.ne.s32.totalorder %s93, %s107
      %p109 = scmp.eq.s32.totalorder %s46, 0
      %p110 = por %p108, %p109
      %s112 = sadd.s32 %s111, 1
      %p115 = scmp.eq.s32.totalorder %s40, 1
      %p116 = scmp.ne.s32.totalorder %s111, %s113
      %p117 = scmp.eq.s32.totalorder %s40, 0
      %p118 = por %p116, %p117
      %p119 = scmp.ne.s32.totalorder %s111, %s113
      %p120 = scmp.eq.s32.totalorder %s45, 1
      %p121 = por %p119, %p120
      %p122 = scmp.ne.s32.totalorder %s113, %s114
      %p123 = scmp.eq.s32.totalorder %s45, 0
      %p124 = por %p122, %p123
      %p125 = scmp.ne.s32.totalorder %s113, %s114
      %p126 = scmp.eq.s32.totalorder %s46, 1
      %p127 = por %p125, %p126
      %p129 = scmp.ne.s32.totalorder %s114, %s128
      %p130 = scmp.eq.s32.totalorder %s46, 0
      %p131 = por %p129, %p130
      %s133 = sadd.s32 %s132, 1
      %p136 = scmp.eq.s32.totalorder %s40, 1
      %p137 = scmp.ne.s32.totalorder %s132, %s134
      %p138 = scmp.eq.s32.totalorder %s40, 0
      %p139 = por %p137, %p138
      %p140 = scmp.ne.s32.totalorder %s132, %s134
      %p141 = scmp.eq.s32.totalorder %s45, 1
      %p142 = por %p140, %p141
      %p143 = scmp.ne.s32.totalorder %s134, %s135
      %p144 = scmp.eq.s32.totalorder %s45, 0
      %p145 = por %p143, %p144
      %p146 = scmp.ne.s32.totalorder %s134, %s135
      %p147 = scmp.eq.s32.totalorder %s46, 1
      %p148 = por %p146, %p147
      %p150 = scmp.ne.s32.totalorder %s135, %s149
      %p151 = scmp.eq.s32.totalorder %s46, 0
      %p152 = por %p150, %p151
      %s153 = ssub.s32 %s40, %s47
      %p154 = scmp.eq.s32.totalorder %s153, 0
      %s156 = sadd.s32 %s155, 1
      %s157 = scalar_select %p154, %s155, %s156
      %p160 = pneg %p154
      %p161 = scmp.eq.s32.totalorder %s40, 1
      %p162 = por %p160, %p161
      %p163 = scmp.ne.s32.totalorder %s155, %s158
      %p164 = scmp.eq.s32.totalorder %s40, 0
      %p165 = por %p163, %p164
      %p166 = scmp.ne.s32.totalorder %s155, %s158
      %p167 = scmp.eq.s32.totalorder %s45, 1
      %p168 = por %p166, %p167
      %p169 = scmp.ne.s32.totalorder %s158, %s159
      %p170 = scmp.eq.s32.totalorder %s45, 0
      %p171 = por %p169, %p170
      %p172 = scmp.ne.s32.totalorder %s158, %s159
      %p173 = scmp.eq.s32.totalorder %s46, 1
      %p174 = por %p172, %p173
      %p176 = scmp.ne.s32.totalorder %s159, %s175
      %p177 = scmp.eq.s32.totalorder %s46, 0
      %p178 = por %p176, %p177
      %s179 = ssub.s32 %s40, %s47
      %p180 = scmp.eq.s32.totalorder %s179, 0
      %s182 = sadd.s32 %s181, 1
      %s183 = scalar_select %p180, %s181, %s182
      %p186 = pneg %p180
      %p187 = scmp.eq.s32.totalorder %s40, 1
      %p188 = por %p186, %p187
      %p189 = scmp.ne.s32.totalorder %s181, %s184
      %p190 = scmp.eq.s32.totalorder %s40, 0
      %p191 = por %p189, %p190
      %p192 = scmp.ne.s32.totalorder %s181, %s184
      %p193 = scmp.eq.s32.totalorder %s45, 1
      %p194 = por %p192, %p193
      %p195 = scmp.ne.s32.totalorder %s184, %s185
      %p196 = scmp.eq.s32.totalorder %s45, 0
      %p197 = por %p195, %p196
      %p198 = scmp.ne.s32.totalorder %s184, %s185
      %p199 = scmp.eq.s32.totalorder %s46, 1
      %p200 = por %p198, %p199
      %p202 = scmp.ne.s32.totalorder %s185, %s201
      %p203 = scmp.eq.s32.totalorder %s46, 0
      %p204 = por %p202, %p203
      %s205 = ssub.s32 %s40, %s47
      %p206 = scmp.eq.s32.totalorder %s205, 0
      %s208 = sadd.s32 %s207, 1
      %s209 = scalar_select %p206, %s207, %s208
      %p212 = pneg %p206
      %p213 = scmp.eq.s32.totalorder %s40, 1
      %p214 = por %p212, %p213
      %p215 = scmp.ne.s32.totalorder %s207, %s210
      %p216 = scmp.eq.s32.totalorder %s40, 0
      %p217 = por %p215, %p216
      %p218 = scmp.ne.s32.totalorder %s207, %s210
      %p219 = scmp.eq.s32.totalorder %s45, 1
      %p220 = por %p218, %p219
      %p221 = scmp.ne.s32.totalorder %s210, %s211
      %p222 = scmp.eq.s32.totalorder %s45, 0
      %p223 = por %p221, %p222
      %p224 = scmp.ne.s32.totalorder %s210, %s211
      %p225 = scmp.eq.s32.totalorder %s46, 1
      %p226 = por %p224, %p225
      %p228 = scmp.ne.s32.totalorder %s211, %s227
      %p229 = scmp.eq.s32.totalorder %s46, 0
      %p230 = por %p228, %p229
      %s231 = ssub.s32 %s40, %s47
      %p232 = scmp.eq.s32.totalorder %s231, 0
      %s234 = sadd.s32 %s233, 1
      %s235 = scalar_select %p232, %s233, %s234
      %p238 = pneg %p232
      %p239 = scmp.eq.s32.totalorder %s40, 1
      %p240 = por %p238, %p239
      %p241 = scmp.ne.s32.totalorder %s233, %s236
      %p242 = scmp.eq.s32.totalorder %s40, 0
      %p243 = por %p241, %p242
      %p244 = scmp.ne.s32.totalorder %s233, %s236
      %p245 = scmp.eq.s32.totalorder %s45, 1
      %p246 = por %p244, %p245
      %p247 = scmp.ne.s32.totalorder %s236, %s237
      %p248 = scmp.eq.s32.totalorder %s45, 0
      %p249 = por %p247, %p248
      %p250 = scmp.ne.s32.totalorder %s236, %s237
      %p251 = scmp.eq.s32.totalorder %s46, 1
      %p252 = por %p250, %p251
      %p254 = scmp.ne.s32.totalorder %s237, %s253
      %p255 = scmp.eq.s32.totalorder %s46, 0
      %p256 = por %p254, %p255
      %s257 = ssub.s32 %s40, %s47
      %p258 = scmp.eq.s32.totalorder %s257, 0
      %s260 = sadd.s32 %s259, 1
      %s261 = scalar_select %p258, %s259, %s260
      %p264 = pneg %p258
      %p265 = scmp.eq.s32.totalorder %s40, 1
      %p266 = por %p264, %p265
      %p267 = scmp.ne.s32.totalorder %s259, %s262
      %p268 = scmp.eq.s32.totalorder %s40, 0
      %p269 = por %p267, %p268
      %p270 = scmp.ne.s32.totalorder %s259, %s262
      %p271 = scmp.eq.s32.totalorder %s45, 1
      %p272 = por %p270, %p271
      %p273 = scmp.ne.s32.totalorder %s262, %s263
      %p274 = scmp.eq.s32.totalorder %s45, 0
      %p275 = por %p273, %p274
      %p276 = scmp.ne.s32.totalorder %s262, %s263
      %p277 = scmp.eq.s32.totalorder %s46, 1
      %p278 = por %p276, %p277
      %p280 = scmp.ne.s32.totalorder %s263, %s279
      %p281 = scmp.eq.s32.totalorder %s46, 0
      %p282 = por %p280, %p281
      %s283 = ssub.s32 %s40, %s47
      %p284 = scmp.eq.s32.totalorder %s283, 0
      %s286 = sadd.s32 %s285, 1
      %s287 = scalar_select %p284, %s285, %s286
      %p290 = pneg %p284
      %p291 = scmp.eq.s32.totalorder %s40, 1
      %p292 = por %p290, %p291
      %p293 = scmp.ne.s32.totalorder %s285, %s288
      %p294 = scmp.eq.s32.totalorder %s40, 0
      %p295 = por %p293, %p294
      %p296 = scmp.ne.s32.totalorder %s285, %s288
      %p297 = scmp.eq.s32.totalorder %s45, 1
      %p298 = por %p296, %p297
      %p299 = scmp.ne.s32.totalorder %s288, %s289
      %p300 = scmp.eq.s32.totalorder %s45, 0
      %p301 = por %p299, %p300
      %p302 = scmp.ne.s32.totalorder %s288, %s289
      %p303 = scmp.eq.s32.totalorder %s46, 1
      %p304 = por %p302, %p303
      %p306 = scmp.ne.s32.totalorder %s289, %s305
      %p307 = scmp.eq.s32.totalorder %s46, 0
      %p308 = por %p306, %p307
      %s309 = ssub.s32 %s40, %s47
      %p310 = scmp.eq.s32.totalorder %s309, 0
      %s312 = sadd.s32 %s311, 1
      %s313 = scalar_select %p310, %s311, %s312
      %p316 = pneg %p310
      %p317 = scmp.eq.s32.totalorder %s40, 1
      %p318 = por %p316, %p317
      %p319 = scmp.ne.s32.totalorder %s311, %s314
      %p320 = scmp.eq.s32.totalorder %s40, 0
      %p321 = por %p319, %p320
      %p322 = scmp.ne.s32.totalorder %s311, %s314
      %p323 = scmp.eq.s32.totalorder %s45, 1
      %p324 = por %p322, %p323
      %p325 = scmp.ne.s32.totalorder %s314, %s315
      %p326 = scmp.eq.s32.totalorder %s45, 0
      %p327 = por %p325, %p326
      %p328 = scmp.ne.s32.totalorder %s314, %s315
      %p329 = scmp.eq.s32.totalorder %s46, 1
      %p330 = por %p328, %p329
      %p332 = scmp.ne.s32.totalorder %s315, %s331
      %p333 = scmp.eq.s32.totalorder %s46, 0
      %p334 = por %p332, %p333
      %s335 = ssub.s32 %s40, %s47
      %p336 = scmp.eq.s32.totalorder %s335, 0
      %s338 = sadd.s32 %s337, 1
      %s339 = scalar_select %p336, %s337, %s338
      %p342 = pneg %p336
      %p343 = scmp.eq.s32.totalorder %s40, 1
      %p344 = por %p342, %p343
      %p345 = scmp.ne.s32.totalorder %s337, %s340
      %p346 = scmp.eq.s32.totalorder %s40, 0
      %p347 = por %p345, %p346
      %p348 = scmp.ne.s32.totalorder %s337, %s340
      %p349 = scmp.eq.s32.totalorder %s45, 1
      %p350 = por %p348, %p349
      %p351 = scmp.ne.s32.totalorder %s340, %s341
      %p352 = scmp.eq.s32.totalorder %s45, 0
      %p353 = por %p351, %p352
      %p354 = scmp.ne.s32.totalorder %s340, %s341
      %p355 = scmp.eq.s32.totalorder %s46, 1
      %p356 = por %p354, %p355
      %p358 = scmp.ne.s32.totalorder %s341, %s357
      %p359 = scmp.eq.s32.totalorder %s46, 0
      %p360 = por %p358, %p359
      %s361 = ssub.s32 %s40, %s47
      %p362 = scmp.eq.s32.totalorder %s361, 0
      %s364 = sadd.s32 %s363, 1
      %s365 = scalar_select %p362, %s363, %s364
      %p368 = pneg %p362
      %p369 = scmp.eq.s32.totalorder %s40, 1
      %p370 = por %p368, %p369
      %p371 = scmp.ne.s32.totalorder %s363, %s366
      %p372 = scmp.eq.s32.totalorder %s40, 0
      %p373 = por %p371, %p372
      %p374 = scmp.ne.s32.totalorder %s363, %s366
      %p375 = scmp.eq.s32.totalorder %s45, 1
      %p376 = por %p374, %p375
      %p377 = scmp.ne.s32.totalorder %s366, %s367
      %p378 = scmp.eq.s32.totalorder %s45, 0
      %p379 = por %p377, %p378
      %p380 = scmp.ne.s32.totalorder %s366, %s367
      %p381 = scmp.eq.s32.totalorder %s46, 1
      %p382 = por %p380, %p381
      %p384 = scmp.ne.s32.totalorder %s367, %s383
      %p385 = scmp.eq.s32.totalorder %s46, 0
      %p386 = por %p384, %p385
      %s387 = ssub.s32 %s40, %s47
      %p388 = scmp.eq.s32.totalorder %s387, 0
      %s390 = sadd.s32 %s389, 1
      %s391 = scalar_select %p388, %s389, %s390
      %p394 = pneg %p388
      %p395 = scmp.eq.s32.totalorder %s40, 1
      %p396 = por %p394, %p395
      %p397 = scmp.ne.s32.totalorder %s389, %s392
      %p398 = scmp.eq.s32.totalorder %s40, 0
      %p399 = por %p397, %p398
      %p400 = scmp.ne.s32.totalorder %s389, %s392
      %p401 = scmp.eq.s32.totalorder %s45, 1
      %p402 = por %p400, %p401
      %p403 = scmp.ne.s32.totalorder %s392, %s393
      %p404 = scmp.eq.s32.totalorder %s45, 0
      %p405 = por %p403, %p404
      %p406 = scmp.ne.s32.totalorder %s392, %s393
      %p407 = scmp.eq.s32.totalorder %s46, 1
      %p408 = por %p406, %p407
      %p410 = scmp.ne.s32.totalorder %s393, %s409
      %p411 = scmp.eq.s32.totalorder %s46, 0
      %p412 = por %p410, %p411
      %s413 = ssub.s32 %s40, %s47
      %p414 = scmp.eq.s32.totalorder %s413, 0
      %s416 = sadd.s32 %s415, 1
      %s417 = scalar_select %p414, %s415, %s416
      %p420 = pneg %p414
      %p421 = scmp.eq.s32.totalorder %s40, 1
      %p422 = por %p420, %p421
      %p423 = scmp.ne.s32.totalorder %s415, %s418
      %p424 = scmp.eq.s32.totalorder %s40, 0
      %p425 = por %p423, %p424
      %p426 = scmp.ne.s32.totalorder %s415, %s418
      %p427 = scmp.eq.s32.totalorder %s45, 1
      %p428 = por %p426, %p427
      %p429 = scmp.ne.s32.totalorder %s418, %s419
      %p430 = scmp.eq.s32.totalorder %s45, 0
      %p431 = por %p429, %p430
      %p432 = scmp.ne.s32.totalorder %s418, %s419
      %p433 = scmp.eq.s32.totalorder %s46, 1
      %p434 = por %p432, %p433
      %p436 = scmp.ne.s32.totalorder %s419, %s435
      %p437 = scmp.eq.s32.totalorder %s46, 0
      %p438 = por %p436, %p437
      %s439 = ssub.s32 %s40, %s47
      %p440 = scmp.eq.s32.totalorder %s439, 0
      %s442 = sadd.s32 %s441, 1
      %s443 = scalar_select %p440, %s441, %s442
      %p446 = pneg %p440
      %p447 = scmp.eq.s32.totalorder %s40, 1
      %p448 = por %p446, %p447
      %p449 = scmp.ne.s32.totalorder %s441, %s444
      %p450 = scmp.eq.s32.totalorder %s40, 0
      %p451 = por %p449, %p450
      %p452 = scmp.ne.s32.totalorder %s441, %s444
      %p453 = scmp.eq.s32.totalorder %s45, 1
      %p454 = por %p452, %p453
      %p455 = scmp.ne.s32.totalorder %s444, %s445
      %p456 = scmp.eq.s32.totalorder %s45, 0
      %p457 = por %p455, %p456
      %p458 = scmp.ne.s32.totalorder %s444, %s445
      %p459 = scmp.eq.s32.totalorder %s46, 1
      %p460 = por %p458, %p459
      %p462 = scmp.ne.s32.totalorder %s445, %s461
      %p463 = scmp.eq.s32.totalorder %s46, 0
      %p464 = por %p462, %p463
      %s466 = sadd.s32 %s465, 1
      %p469 = scmp.eq.s32.totalorder %s40, 1
      %p470 = scmp.ne.s32.totalorder %s465, %s467
      %p471 = scmp.eq.s32.totalorder %s40, 0
      %p472 = por %p470, %p471
      %p473 = scmp.ne.s32.totalorder %s465, %s467
      %p474 = scmp.eq.s32.totalorder %s45, 1
      %p475 = por %p473, %p474
      %p476 = scmp.ne.s32.totalorder %s467, %s468
      %p477 = scmp.eq.s32.totalorder %s45, 0
      %p478 = por %p476, %p477
      %p479 = scmp.ne.s32.totalorder %s467, %s468
      %p480 = scmp.eq.s32.totalorder %s46, 1
      %p481 = por %p479, %p480
      %p483 = scmp.ne.s32.totalorder %s468, %s482
      %p484 = scmp.eq.s32.totalorder %s46, 0
      %p485 = por %p483, %p484
      %p486 = scmp.le.s32.totalorder 1, %s40
      %p487 = scmp.lt.s32.totalorder %s40, 3
      %p488 = pnand %p486, %p487
      %p489 = pneg %p488
      // Predicated region
      $region9: #{shopee_forward.3} parent=5 // pred_check
        _
      $region10: #{shopee_forward.3} parent=5 // pred_check_branch
        %491 = sbr.rel (%p488) target = $region12
      $region11: #{shopee_forward.3} parent=5 // pred_region
        %s492 = ssub.s32 %s40, 1
        // Predicated region
        $region13: #{shopee_forward.3} parent=11 // pred_check
          %p493 = pneg %p61
        $region14: #{shopee_forward.3} parent=11 // pred_check_branch
          %495 = sbr.rel (%p493) target = $region16
        $region15: #{shopee_forward.3} parent=11 // pred_region
          _
        $region16: #{shopee_forward.3} parent=11 // pred_fallthru
          _
        // Predicated region
        $region17: #{shopee_forward.3} parent=11 // pred_check
          %p496 = pneg %p82
        $region18: #{shopee_forward.3} parent=11 // pred_check_branch
          %498 = sbr.rel (%p496) target = $region20
        $region19: #{shopee_forward.3} parent=11 // pred_region
          %s500 = ssub.s32 3072, 3072
          %501 = vsyncadd [#allocation3], %s500
          %s502 = sshll.u32 [#allocation2], 4
          %s503 = int_to_ptr.vmem [resolvable:$true] %s502
          %508 = dma.hbm_to_vmem [thread:$0]  %s1, 3072, %s503, [#allocation3], 128, 128, 8
        $region20: #{shopee_forward.3} parent=11 // pred_fallthru
          _
        // Predicated region
        $region21: #{shopee_forward.3} parent=11 // pred_check
          %p509 = pneg %p103
        $region22: #{shopee_forward.3} parent=11 // pred_check_branch
          %511 = sbr.rel (%p509) target = $region24
        $region23: #{shopee_forward.3} parent=11 // pred_region
          _
        $region24: #{shopee_forward.3} parent=11 // pred_fallthru
          _
        // Predicated region
        $region25: #{shopee_forward.3} parent=11 // pred_check
          %p512 = pneg %p124
        $region26: #{shopee_forward.3} parent=11 // pred_check_branch
          %514 = sbr.rel (%p512) target = $region28
        $region27: #{shopee_forward.3} parent=11 // pred_region
          %s516 = ssub.s32 32, 32
          %517 = vsyncadd [#allocation5], %s516
          %s519 = sshll.u32 [#allocation4], 4
          %s520 = int_to_ptr.vmem [resolvable:$true] %s519
          %522 = dma.hbm_to_vmem [thread:$0]  %s3, 32, %s520, [#allocation5]
        $region28: #{shopee_forward.3} parent=11 // pred_fallthru
          _
        // Predicated region
        $region29: #{shopee_forward.3} parent=11 // pred_check
          %p523 = pneg %p145
        $region30: #{shopee_forward.3} parent=11 // pred_check_branch
          %525 = sbr.rel (%p523) target = $region32
        $region31: #{shopee_forward.3} parent=11 // pred_region
          %s527 = ssub.s32 256, 256
          %528 = vsyncadd [#allocation5], %s527
          %s530 = sshll.u32 [#allocation6], 4
          %s531 = int_to_ptr.vmem [resolvable:$true] %s530
          %533 = dma.hbm_to_vmem [thread:$0]  %s4, 256, %s531, [#allocation5]
        $region32: #{shopee_forward.3} parent=11 // pred_fallthru
          _
      $region12: #{shopee_forward.3} parent=5 // pred_fallthru
        _
      %p534 = scmp.lt.s32.totalorder %s40, 2
      // Predicated region
      $region33: #{shopee_forward.3} parent=5 // pred_check
        %p535 = pneg %p534
      $region34: #{shopee_forward.3} parent=5 // pred_check_branch
        %537 = sbr.rel (%p535) target = $region36
      $region35: #{shopee_forward.3} parent=5 // pred_region
        // Predicated region
        $region37: #{shopee_forward.3} parent=35 // pred_check
          %p538 = pneg %p165
        $region38: #{shopee_forward.3} parent=35 // pred_check_branch
          %540 = sbr.rel (%p538) target = $region40
        $region39: #{shopee_forward.3} parent=35 // pred_region
          %s541 = sand.u32 %s40, 1
          %s542 = scalar_lea.sflag [#allocation8], %s541
          %s543 = sand.u32 %s155, 1
          %s544 = smul.addr %s543, 2
          %s545 = scalar_lea.vmem [#allocation7], %s544
          %s547 = ssub.s32 32, 32
          %548 = vsyncadd %s542, %s547
          %s549 = smul.addr %s40, 2
          %s550 = smul.addr %s549, 16
          %s551 = scalar_lea.hbm %s5, %s550
          %s553 = sshll.u32 %s545, 4
          %s554 = int_to_ptr.vmem [resolvable:$true] %s553
          %556 = dma.hbm_to_vmem [thread:$0]  %s551, 32, %s554, %s542
        $region40: #{shopee_forward.3} parent=35 // pred_fallthru
          _
        // Predicated region
        $region41: #{shopee_forward.3} parent=35 // pred_check
          %p557 = pneg %p191
        $region42: #{shopee_forward.3} parent=35 // pred_check_branch
          %559 = sbr.rel (%p557) target = $region44
        $region43: #{shopee_forward.3} parent=35 // pred_region
          %s560 = sand.u32 %s40, 1
          %s561 = scalar_lea.sflag [#allocation8], %s560
          %s562 = sand.u32 %s181, 1
          %s563 = smul.addr %s562, 2
          %s564 = scalar_lea.vmem [#allocation9], %s563
          %s566 = ssub.s32 32, 32
          %567 = vsyncadd %s561, %s566
          %s568 = smul.addr %s40, 2
          %s569 = smul.addr %s568, 16
          %s570 = scalar_lea.hbm %s6, %s569
          %s572 = sshll.u32 %s564, 4
          %s573 = int_to_ptr.vmem [resolvable:$true] %s572
          %575 = dma.hbm_to_vmem [thread:$0]  %s570, 32, %s573, %s561
        $region44: #{shopee_forward.3} parent=35 // pred_fallthru
          _
        // Predicated region
        $region45: #{shopee_forward.3} parent=35 // pred_check
          %p576 = pneg %p217
        $region46: #{shopee_forward.3} parent=35 // pred_check_branch
          %578 = sbr.rel (%p576) target = $region48
        $region47: #{shopee_forward.3} parent=35 // pred_region
          %s579 = sand.u32 %s40, 1
          %s580 = scalar_lea.sflag [#allocation11], %s579
          %s581 = sand.u32 %s207, 1
          %s582 = smul.addr %s581, 768
          %s583 = scalar_lea.vmem [#allocation10], %s582
          %s585 = ssub.s32 12288, 12288
          %586 = vsyncadd %s580, %s585
          %s587 = smul.addr %s40, 192
          %s588 = smul.addr %s587, 64
          %s589 = scalar_lea.hbm %s7, %s588
          %s590 = sshll.u32 %s583, 4
          %s591 = int_to_ptr.vmem [resolvable:$true] %s590
          %596 = dma.hbm_to_vmem [thread:$0]  %s589, 12288, %s591, %s580, 384, 384, 24
        $region48: #{shopee_forward.3} parent=35 // pred_fallthru
          _
        // Predicated region
        $region49: #{shopee_forward.3} parent=35 // pred_check
          %p597 = pneg %p243
        $region50: #{shopee_forward.3} parent=35 // pred_check_branch
          %599 = sbr.rel (%p597) target = $region52
        $region51: #{shopee_forward.3} parent=35 // pred_region
          %p600 = scmp.lt.s32.totalorder %s40, 1
          %s601 = scalar_select %p600, %s40, 1
          %s602 = smul.addr %s601, 6
          %s603 = scalar_lea.vmem %s8, %s602
        $region52: #{shopee_forward.3} parent=35 // pred_fallthru
          _
        // Predicated region
        $region53: #{shopee_forward.3} parent=35 // pred_check
          %p604 = pneg %p269
        $region54: #{shopee_forward.3} parent=35 // pred_check_branch
          %606 = sbr.rel (%p604) target = $region56
        $region55: #{shopee_forward.3} parent=35 // pred_region
          %s607 = sand.u32 %s40, 1
          %s608 = scalar_lea.sflag [#allocation11], %s607
          %s609 = sand.u32 %s259, 1
          %s610 = smul.addr %s609, 256
          %s611 = scalar_lea.vmem [#allocation12], %s610
          %s613 = ssub.s32 4096, 4096
          %614 = vsyncadd %s608, %s613
          %s615 = smul.addr %s40, 64
          %s616 = smul.addr %s615, 64
          %s617 = scalar_lea.hbm %s9, %s616
          %s618 = sshll.u32 %s611, 4
          %s619 = int_to_ptr.vmem [resolvable:$true] %s618
          %624 = dma.hbm_to_vmem [thread:$0]  %s617, 4096, %s619, %s608, 128, 128, 8
        $region56: #{shopee_forward.3} parent=35 // pred_fallthru
          _
        // Predicated region
        $region57: #{shopee_forward.3} parent=35 // pred_check
          %p625 = pneg %p295
        $region58: #{shopee_forward.3} parent=35 // pred_check_branch
          %627 = sbr.rel (%p625) target = $region60
        $region59: #{shopee_forward.3} parent=35 // pred_region
          %s628 = sand.u32 %s40, 1
          %s629 = scalar_lea.sflag [#allocation14], %s628
          %s630 = sand.u32 %s285, 1
          %s631 = smul.addr %s630, 2
          %s632 = scalar_lea.vmem [#allocation13], %s631
          %s634 = ssub.s32 32, 32
          %635 = vsyncadd %s629, %s634
          %s636 = smul.addr %s40, 2
          %s637 = smul.addr %s636, 16
          %s638 = scalar_lea.hbm %s10, %s637
          %s640 = sshll.u32 %s632, 4
          %s641 = int_to_ptr.vmem [resolvable:$true] %s640
          %643 = dma.hbm_to_vmem [thread:$0]  %s638, 32, %s641, %s629
        $region60: #{shopee_forward.3} parent=35 // pred_fallthru
          _
        // Predicated region
        $region61: #{shopee_forward.3} parent=35 // pred_check
          %p644 = pneg %p321
        $region62: #{shopee_forward.3} parent=35 // pred_check_branch
          %646 = sbr.rel (%p644) target = $region64
        $region63: #{shopee_forward.3} parent=35 // pred_region
          %s647 = sand.u32 %s40, 1
          %s648 = scalar_lea.sflag [#allocation14], %s647
          %s649 = sand.u32 %s311, 1
          %s650 = smul.addr %s649, 2
          %s651 = scalar_lea.vmem [#allocation15], %s650
          %s653 = ssub.s32 32, 32
          %654 = vsyncadd %s648, %s653
          %s655 = smul.addr %s40, 2
          %s656 = smul.addr %s655, 16
          %s657 = scalar_lea.hbm %s11, %s656
          %s659 = sshll.u32 %s651, 4
          %s660 = int_to_ptr.vmem [resolvable:$true] %s659
          %662 = dma.hbm_to_vmem [thread:$0]  %s657, 32, %s660, %s648
        $region64: #{shopee_forward.3} parent=35 // pred_fallthru
          _
        // Predicated region
        $region65: #{shopee_forward.3} parent=35 // pred_check
          %p663 = pneg %p347
        $region66: #{shopee_forward.3} parent=35 // pred_check_branch
          %665 = sbr.rel (%p663) target = $region68
        $region67: #{shopee_forward.3} parent=35 // pred_region
          %s666 = sand.u32 %s40, 1
          %s667 = scalar_lea.sflag [#allocation17], %s666
          %s668 = sand.u32 %s337, 1
          %s669 = smul.addr %s668, 2
          %s670 = scalar_lea.vmem [#allocation16], %s669
          %s672 = ssub.s32 32, 32
          %673 = vsyncadd %s667, %s672
          %s674 = smul.addr %s40, 2
          %s675 = smul.addr %s674, 16
          %s676 = scalar_lea.hbm %s12, %s675
          %s678 = sshll.u32 %s670, 4
          %s679 = int_to_ptr.vmem [resolvable:$true] %s678
          %681 = dma.hbm_to_vmem [thread:$0]  %s676, 32, %s679, %s667
        $region68: #{shopee_forward.3} parent=35 // pred_fallthru
          _
        // Predicated region
        $region69: #{shopee_forward.3} parent=35 // pred_check
          %p682 = pneg %p373
        $region70: #{shopee_forward.3} parent=35 // pred_check_branch
          %684 = sbr.rel (%p682) target = $region72
        $region71: #{shopee_forward.3} parent=35 // pred_region
          %p685 = scmp.lt.s32.totalorder %s40, 1
          %s686 = scalar_select %p685, %s40, 1
          %s687 = smul.addr %s686, 128
          %s688 = smul.addr %s687, 4
          %s689 = scalar_lea.vmem %s13, %s688
        $region72: #{shopee_forward.3} parent=35 // pred_fallthru
          _
        // Predicated region
        $region73: #{shopee_forward.3} parent=35 // pred_check
          %p690 = pneg %p399
        $region74: #{shopee_forward.3} parent=35 // pred_check_branch
          %692 = sbr.rel (%p690) target = $region76
        $region75: #{shopee_forward.3} parent=35 // pred_region
          %s693 = sand.u32 %s40, 1
          %s694 = scalar_lea.sflag [#allocation17], %s693
          %s695 = sand.u32 %s389, 1
          %s696 = smul.addr %s695, 4
          %s697 = scalar_lea.vmem [#allocation18], %s696
          %s699 = ssub.s32 64, 64
          %700 = vsyncadd %s694, %s699
          %s701 = smul.addr %s40, 4
          %s702 = smul.addr %s701, 16
          %s703 = scalar_lea.hbm %s14, %s702
          %s705 = sshll.u32 %s697, 4
          %s706 = int_to_ptr.vmem [resolvable:$true] %s705
          %708 = dma.hbm_to_vmem [thread:$0]  %s703, 64, %s706, %s694
        $region76: #{shopee_forward.3} parent=35 // pred_fallthru
          _
        // Predicated region
        $region77: #{shopee_forward.3} parent=35 // pred_check
          %p709 = pneg %p425
        $region78: #{shopee_forward.3} parent=35 // pred_check_branch
          %711 = sbr.rel (%p709) target = $region80
        $region79: #{shopee_forward.3} parent=35 // pred_region
          %s712 = sand.u32 %s40, 1
          %s713 = scalar_lea.sflag [#allocation20], %s712
          %s714 = sand.u32 %s415, 1
          %s715 = smul.addr %s714, 512
          %s716 = scalar_lea.vmem [#allocation19], %s715
          %s718 = ssub.s32 8192, 8192
          %719 = vsyncadd %s713, %s718
          %s720 = smul.addr %s40, 128
          %s721 = smul.addr %s720, 64
          %s722 = scalar_lea.hbm %s15, %s721
          %s723 = sshll.u32 %s716, 4
          %s724 = int_to_ptr.vmem [resolvable:$true] %s723
          %729 = dma.hbm_to_vmem [thread:$0]  %s722, 8192, %s724, %s713, 128, 128, 8
        $region80: #{shopee_forward.3} parent=35 // pred_fallthru
          _
        // Predicated region
        $region81: #{shopee_forward.3} parent=35 // pred_check
          %p730 = pneg %p451
        $region82: #{shopee_forward.3} parent=35 // pred_check_branch
          %732 = sbr.rel (%p730) target = $region84
        $region83: #{shopee_forward.3} parent=35 // pred_region
          %s733 = sand.u32 %s40, 1
          %s734 = scalar_lea.sflag [#allocation20], %s733
          %s735 = sand.u32 %s441, 1
          %s736 = smul.addr %s735, 2
          %s737 = scalar_lea.vmem [#allocation21], %s736
          %s739 = ssub.s32 32, 32
          %740 = vsyncadd %s734, %s739
          %s741 = smul.addr %s40, 2
          %s742 = smul.addr %s741, 16
          %s743 = scalar_lea.hbm %s16, %s742
          %s745 = sshll.u32 %s737, 4
          %s746 = int_to_ptr.vmem [resolvable:$true] %s745
          %748 = dma.hbm_to_vmem [thread:$0]  %s743, 32, %s746, %s734
        $region84: #{shopee_forward.3} parent=35 // pred_fallthru
          _
      $region36: #{shopee_forward.3} parent=5 // pred_fallthru
        _
      %p749 = scmp.le.s32.totalorder 1, %s40
      %p750 = scmp.lt.s32.totalorder %s40, 3
      %p751 = pnand %p749, %p750
      %p752 = pneg %p751
      // Predicated region
      $region85: #{shopee_forward.3} parent=5 // pred_check
        _
      $region86: #{shopee_forward.3} parent=5 // pred_check_branch
        %754 = sbr.rel (%p751) target = $region88
      $region87: #{shopee_forward.3} parent=5 // pred_region
        %s755 = ssub.s32 %s40, 1
        // Predicated region
        $region89: #{shopee_forward.3} parent=87 // pred_check
          %p756 = pneg %p82
        $region90: #{shopee_forward.3} parent=87 // pred_check_branch
          %758 = sbr.rel (%p756) target = $region92
        $region91: #{shopee_forward.3} parent=87 // pred_region
          %759 = dma.done [#allocation3], 3072
        $region92: #{shopee_forward.3} parent=87 // pred_fallthru
          _
        // Predicated region
        $region93: #{shopee_forward.3} parent=87 // pred_check
          %p760 = pneg %p124
        $region94: #{shopee_forward.3} parent=87 // pred_check_branch
          %762 = sbr.rel (%p760) target = $region96
        $region95: #{shopee_forward.3} parent=87 // pred_region
          %763 = dma.done [#allocation5], 32
        $region96: #{shopee_forward.3} parent=87 // pred_fallthru
          _
        // Predicated region
        $region97: #{shopee_forward.3} parent=87 // pred_check
          %p764 = pneg %p145
        $region98: #{shopee_forward.3} parent=87 // pred_check_branch
          %766 = sbr.rel (%p764) target = $region100
        $region99: #{shopee_forward.3} parent=87 // pred_region
          %767 = dma.done [#allocation5], 256
        $region100: #{shopee_forward.3} parent=87 // pred_fallthru
          _
        %s768 = sand.u32 %s45, 1
        %s769 = scalar_lea.sflag [#allocation8], %s768
        %s770 = sand.u32 %s158, 1
        %s771 = smul.addr %s770, 2
        %s772 = scalar_lea.vmem [#allocation7], %s771
        // Predicated region
        $region101: #{shopee_forward.3} parent=87 // pred_check
          %p773 = pneg %p171
        $region102: #{shopee_forward.3} parent=87 // pred_check_branch
          %775 = sbr.rel (%p773) target = $region104
        $region103: #{shopee_forward.3} parent=87 // pred_region
          %776 = dma.done %s769, 32
        $region104: #{shopee_forward.3} parent=87 // pred_fallthru
          _
        %s777 = sand.u32 %s45, 1
        %s778 = scalar_lea.sflag [#allocation8], %s777
        %s779 = sand.u32 %s184, 1
        %s780 = smul.addr %s779, 2
        %s781 = scalar_lea.vmem [#allocation9], %s780
        // Predicated region
        $region105: #{shopee_forward.3} parent=87 // pred_check
          %p782 = pneg %p197
        $region106: #{shopee_forward.3} parent=87 // pred_check_branch
          %784 = sbr.rel (%p782) target = $region108
        $region107: #{shopee_forward.3} parent=87 // pred_region
          %785 = dma.done %s778, 32
        $region108: #{shopee_forward.3} parent=87 // pred_fallthru
          _
        %s786 = sand.u32 %s45, 1
        %s787 = scalar_lea.sflag [#allocation11], %s786
        %s788 = sand.u32 %s210, 1
        %s789 = smul.addr %s788, 768
        %s790 = scalar_lea.vmem [#allocation10], %s789
        // Predicated region
        $region109: #{shopee_forward.3} parent=87 // pred_check
          %p791 = pneg %p223
        $region110: #{shopee_forward.3} parent=87 // pred_check_branch
          %793 = sbr.rel (%p791) target = $region112
        $region111: #{shopee_forward.3} parent=87 // pred_region
          %794 = dma.done %s787, 12288
        $region112: #{shopee_forward.3} parent=87 // pred_fallthru
          _
        %s795 = sand.u32 %s45, 1
        %s796 = scalar_lea.sflag [#allocation11], %s795
        %s797 = sand.u32 %s262, 1
        %s798 = smul.addr %s797, 256
        %s799 = scalar_lea.vmem [#allocation12], %s798
        // Predicated region
        $region113: #{shopee_forward.3} parent=87 // pred_check
          %p800 = pneg %p275
        $region114: #{shopee_forward.3} parent=87 // pred_check_branch
          %802 = sbr.rel (%p800) target = $region116
        $region115: #{shopee_forward.3} parent=87 // pred_region
          %803 = dma.done %s796, 4096
        $region116: #{shopee_forward.3} parent=87 // pred_fallthru
          _
        %s804 = sand.u32 %s45, 1
        %s805 = scalar_lea.sflag [#allocation14], %s804
        %s806 = sand.u32 %s288, 1
        %s807 = smul.addr %s806, 2
        %s808 = scalar_lea.vmem [#allocation13], %s807
        // Predicated region
        $region117: #{shopee_forward.3} parent=87 // pred_check
          %p809 = pneg %p301
        $region118: #{shopee_forward.3} parent=87 // pred_check_branch
          %811 = sbr.rel (%p809) target = $region120
        $region119: #{shopee_forward.3} parent=87 // pred_region
          %812 = dma.done %s805, 32
        $region120: #{shopee_forward.3} parent=87 // pred_fallthru
          _
        %s813 = sand.u32 %s45, 1
        %s814 = scalar_lea.sflag [#allocation14], %s813
        %s815 = sand.u32 %s314, 1
        %s816 = smul.addr %s815, 2
        %s817 = scalar_lea.vmem [#allocation15], %s816
        // Predicated region
        $region121: #{shopee_forward.3} parent=87 // pred_check
          %p818 = pneg %p327
        $region122: #{shopee_forward.3} parent=87 // pred_check_branch
          %820 = sbr.rel (%p818) target = $region124
        $region123: #{shopee_forward.3} parent=87 // pred_region
          %821 = dma.done %s814, 32
        $region124: #{shopee_forward.3} parent=87 // pred_fallthru
          _
        %s822 = sand.u32 %s45, 1
        %s823 = scalar_lea.sflag [#allocation17], %s822
        %s824 = sand.u32 %s340, 1
        %s825 = smul.addr %s824, 2
        %s826 = scalar_lea.vmem [#allocation16], %s825
        // Predicated region
        $region125: #{shopee_forward.3} parent=87 // pred_check
          %p827 = pneg %p353
        $region126: #{shopee_forward.3} parent=87 // pred_check_branch
          %829 = sbr.rel (%p827) target = $region128
        $region127: #{shopee_forward.3} parent=87 // pred_region
          %830 = dma.done %s823, 32
        $region128: #{shopee_forward.3} parent=87 // pred_fallthru
          _
        %s831 = sand.u32 %s45, 1
        %s832 = scalar_lea.sflag [#allocation17], %s831
        %s833 = sand.u32 %s392, 1
        %s834 = smul.addr %s833, 4
        %s835 = scalar_lea.vmem [#allocation18], %s834
        // Predicated region
        $region129: #{shopee_forward.3} parent=87 // pred_check
          %p836 = pneg %p405
        $region130: #{shopee_forward.3} parent=87 // pred_check_branch
          %838 = sbr.rel (%p836) target = $region132
        $region131: #{shopee_forward.3} parent=87 // pred_region
          %839 = dma.done %s832, 64
        $region132: #{shopee_forward.3} parent=87 // pred_fallthru
          _
        %s840 = sand.u32 %s45, 1
        %s841 = scalar_lea.sflag [#allocation20], %s840
        %s842 = sand.u32 %s418, 1
        %s843 = smul.addr %s842, 512
        %s844 = scalar_lea.vmem [#allocation19], %s843
        // Predicated region
        $region133: #{shopee_forward.3} parent=87 // pred_check
          %p845 = pneg %p431
        $region134: #{shopee_forward.3} parent=87 // pred_check_branch
          %847 = sbr.rel (%p845) target = $region136
        $region135: #{shopee_forward.3} parent=87 // pred_region
          %848 = dma.done %s841, 8192
        $region136: #{shopee_forward.3} parent=87 // pred_fallthru
          _
        %s849 = sand.u32 %s45, 1
        %s850 = scalar_lea.sflag [#allocation20], %s849
        %s851 = sand.u32 %s444, 1
        %s852 = smul.addr %s851, 2
        %s853 = scalar_lea.vmem [#allocation21], %s852
        // Predicated region
        $region137: #{shopee_forward.3} parent=87 // pred_check
          %p854 = pneg %p457
        $region138: #{shopee_forward.3} parent=87 // pred_check_branch
          %856 = sbr.rel (%p854) target = $region140
        $region139: #{shopee_forward.3} parent=87 // pred_region
          %857 = dma.done %s850, 32
        $region140: #{shopee_forward.3} parent=87 // pred_fallthru
          _
        %p858 = pneg %p61
        %p859 = pneg %p58
        %p860 = pneg %p82
        %p861 = pneg %p79
        %p862 = pneg %p103
        %p863 = pneg %p100
        %p864 = pneg %p124
        %p865 = pneg %p121
        %p866 = pneg %p145
        %p867 = pneg %p142
        %s868 = sand.u32 %s45, 1
        %s869 = scalar_lea.sflag [#allocation8], %s868
        %s870 = sand.u32 %s158, 1
        %s871 = smul.addr %s870, 2
        %s872 = scalar_lea.vmem [#allocation7], %s871
        %p873 = pneg %p171
        %p874 = pneg %p168
        %s875 = sand.u32 %s45, 1
        %s876 = scalar_lea.sflag [#allocation8], %s875
        %s877 = sand.u32 %s184, 1
        %s878 = smul.addr %s877, 2
        %s879 = scalar_lea.vmem [#allocation9], %s878
        %p880 = pneg %p197
        %p881 = pneg %p194
        %s882 = sand.u32 %s45, 1
        %s883 = scalar_lea.sflag [#allocation11], %s882
        %s884 = sand.u32 %s210, 1
        %s885 = smul.addr %s884, 768
        %s886 = scalar_lea.vmem [#allocation10], %s885
        %p887 = pneg %p223
        %p888 = pneg %p220
        %p889 = scmp.lt.s32.totalorder %s45, 1
        %s890 = scalar_select %p889, %s45, 1
        %s891 = smul.addr %s890, 6
        %s892 = scalar_lea.vmem %s8, %s891
        %p893 = pneg %p249
        %p894 = pneg %p246
        %s895 = sand.u32 %s45, 1
        %s896 = scalar_lea.sflag [#allocation11], %s895
        %s897 = sand.u32 %s262, 1
        %s898 = smul.addr %s897, 256
        %s899 = scalar_lea.vmem [#allocation12], %s898
        %p900 = pneg %p275
        %p901 = pneg %p272
        %s902 = sand.u32 %s45, 1
        %s903 = scalar_lea.sflag [#allocation14], %s902
        %s904 = sand.u32 %s288, 1
        %s905 = smul.addr %s904, 2
        %s906 = scalar_lea.vmem [#allocation13], %s905
        %p907 = pneg %p301
        %p908 = pneg %p298
        %s909 = sand.u32 %s45, 1
        %s910 = scalar_lea.sflag [#allocation14], %s909
        %s911 = sand.u32 %s314, 1
        %s912 = smul.addr %s911, 2
        %s913 = scalar_lea.vmem [#allocation15], %s912
        %p914 = pneg %p327
        %p915 = pneg %p324
        %s916 = sand.u32 %s45, 1
        %s917 = scalar_lea.sflag [#allocation17], %s916
        %s918 = sand.u32 %s340, 1
        %s919 = smul.addr %s918, 2
        %s920 = scalar_lea.vmem [#allocation16], %s919
        %p921 = pneg %p353
        %p922 = pneg %p350
        %p923 = scmp.lt.s32.totalorder %s45, 1
        %s924 = scalar_select %p923, %s45, 1
        %s925 = smul.addr %s924, 128
        %s926 = smul.addr %s925, 4
        %s927 = scalar_lea.vmem %s13, %s926
        %p928 = pneg %p379
        %p929 = pneg %p376
        %s930 = sand.u32 %s45, 1
        %s931 = scalar_lea.sflag [#allocation17], %s930
        %s932 = sand.u32 %s392, 1
        %s933 = smul.addr %s932, 4
        %s934 = scalar_lea.vmem [#allocation18], %s933
        %p935 = pneg %p405
        %p936 = pneg %p402
        %s937 = sand.u32 %s45, 1
        %s938 = scalar_lea.sflag [#allocation20], %s937
        %s939 = sand.u32 %s418, 1
        %s940 = smul.addr %s939, 512
        %s941 = scalar_lea.vmem [#allocation19], %s940
        %p942 = pneg %p431
        %p943 = pneg %p428
        %s944 = sand.u32 %s45, 1
        %s945 = scalar_lea.sflag [#allocation20], %s944
        %s946 = sand.u32 %s444, 1
        %s947 = smul.addr %s946, 2
        %s948 = scalar_lea.vmem [#allocation21], %s947
        %p949 = pneg %p457
        %p950 = pneg %p454
        %p951 = pneg %p478
        %p952 = pneg %p475
        %p953 = scmp.lt.s32.totalorder %s45, 1
        %s954 = scalar_select %p953, %s45, 1
        %s955 = smul.addr %s954, 6
        %s956 = scalar_lea.vmem %s8, %s955
        %p957 = scmp.lt.s32.totalorder %s45, 1
        %s958 = scalar_select %p957, %s45, 1
        %s959 = smul.addr %s958, 128
        %s960 = smul.addr %s959, 4
        %s961 = scalar_lea.vmem %s13, %s960
        %p963 = scmp.eq.s32.totalorder %s45, 0
        // Predicated region
        $region141: #{shopee_forward.3} parent=87 // pred_check
          %p964 = pneg %p963
        $region142: #{shopee_forward.3} parent=87 // pred_check_branch
          %966 = sbr.rel (%p964) target = $region144
        $region143: #{shopee_forward.3} parent=87 // pred_region
          %v967 = vld [vmem:[%s0] sm:$0xff]
          %v968 = vld [vmem:[%s0 + $0x8] sm:$0xff]
          %v969 = vld [vmem:[#allocation2] sm:$0xff]
          %v970 = vld [vmem:[#allocation2 + $0x8] sm:$0xff]
          %v971 = vld [vmem:[#allocation2 + $0x10] sm:$0xff]
          %v972 = vld [vmem:[#allocation2 + $0x18] sm:$0xff]
          %v973 = vld [vmem:[#allocation2 + $0x20] sm:$0xff]
          %v974 = vld [vmem:[#allocation2 + $0x28] sm:$0xff]
          %v975 = vld [vmem:[#allocation2 + $0x30] sm:$0xff]
          %v976 = vld [vmem:[#allocation2 + $0x38] sm:$0xff]
          %v977 = vld [vmem:[#allocation2 + $0x40] sm:$0xff]
          %v978 = vld [vmem:[#allocation2 + $0x48] sm:$0xff]
          %v979 = vld [vmem:[#allocation2 + $0x50] sm:$0xff]
          %v980 = vld [vmem:[#allocation2 + $0x58] sm:$0xff]
          %v981 = vld [vmem:[#allocation2 + $0x60] sm:$0xff]
          %v982 = vld [vmem:[#allocation2 + $0x68] sm:$0xff]
          %v983 = vld [vmem:[#allocation2 + $0x70] sm:$0xff]
          %v984 = vld [vmem:[#allocation2 + $0x78] sm:$0xff]
          %v985 = vld [vmem:[#allocation2 + $0x80] sm:$0xff]
          %v986 = vld [vmem:[#allocation2 + $0x88] sm:$0xff]
          %v987 = vld [vmem:[#allocation2 + $0x90] sm:$0xff]
          %v988 = vld [vmem:[#allocation2 + $0x98] sm:$0xff]
          %v989 = vld [vmem:[#allocation2 + $0xa0] sm:$0xff]
          %v990 = vld [vmem:[#allocation2 + $0xa8] sm:$0xff]
          %v991 = vld [vmem:[#allocation2 + $0xb0] sm:$0xff]
          %v992 = vld [vmem:[#allocation2 + $0xb8] sm:$0xff]
          %v993 = vpack.c.bf16 %v967, %v967
          %v994 = vpack.c.bf16 %v968, %v968
          %v995 = vld [vmem:[%s2] sm:$0x3]
          %v997 = vlaneseq
          %v998 = vshrl.u32 %v997, 7
          %v999 = vsub.s32 0, %v998
          %v1000 = vrot.slane %v995, %v999
          %v1001 = vlaneseq
          %v1002 = vshrl.u32 %v1001, 7
          %v1003 = vsub.s32 1, %v1002
          %v1004 = vrot.slane %v995, %v1003
          %v1031 = vunpack.c.l.b16 %v969
          %v1032 = vunpack.c.h.b16 %v969
          %v1033 = vunpack.c.l.b16 %v970
          %v1034 = vunpack.c.h.b16 %v970
          %v1035 = vunpack.c.l.b16 %v971
          %v1036 = vunpack.c.h.b16 %v971
          %v1037 = vunpack.c.l.b16 %v972
          %v1038 = vunpack.c.h.b16 %v972
          %v1039 = vunpack.c.l.b16 %v973
          %v1040 = vunpack.c.h.b16 %v973
          %v1041 = vunpack.c.l.b16 %v974
          %v1042 = vunpack.c.h.b16 %v974
          %v1043 = vunpack.c.l.b16 %v975
          %v1044 = vunpack.c.h.b16 %v975
          %v1045 = vunpack.c.l.b16 %v976
          %v1046 = vunpack.c.h.b16 %v976
          %v1047 = vunpack.c.l.b16 %v977
          %v1048 = vunpack.c.h.b16 %v977
          %v1049 = vunpack.c.l.b16 %v978
          %v1050 = vunpack.c.h.b16 %v978
          %v1051 = vunpack.c.l.b16 %v979
          %v1052 = vunpack.c.h.b16 %v979
          %v1053 = vunpack.c.l.b16 %v980
          %v1054 = vunpack.c.h.b16 %v980
          %v1055 = vunpack.c.l.b16 %v981
          %v1056 = vunpack.c.h.b16 %v981
          %v1057 = vunpack.c.l.b16 %v982
          %v1058 = vunpack.c.h.b16 %v982
          %v1059 = vunpack.c.l.b16 %v983
          %v1060 = vunpack.c.h.b16 %v983
          %v1061 = vunpack.c.l.b16 %v984
          %v1062 = vunpack.c.h.b16 %v984
          %v1063 = vunpack.c.l.b16 %v985
          %v1064 = vunpack.c.h.b16 %v985
          %v1065 = vunpack.c.l.b16 %v986
          %v1066 = vunpack.c.h.b16 %v986
          %v1067 = vunpack.c.l.b16 %v987
          %v1068 = vunpack.c.h.b16 %v987
          %v1069 = vunpack.c.l.b16 %v988
          %v1070 = vunpack.c.h.b16 %v988
          %v1071 = vunpack.c.l.b16 %v989
          %v1072 = vunpack.c.h.b16 %v989
          %v1073 = vunpack.c.l.b16 %v990
          %v1074 = vunpack.c.h.b16 %v990
          %v1075 = vunpack.c.l.b16 %v991
          %v1076 = vunpack.c.h.b16 %v991
          %v1077 = vunpack.c.l.b16 %v992
          %v1078 = vunpack.c.h.b16 %v992
          %v1079 = vpack.c.b16 %v1033, %v1031
          %v1080 = vpack.c.b16 %v1034, %v1032
          %v1081 = vpack.c.b16 %v1037, %v1035
          %v1082 = vpack.c.b16 %v1038, %v1036
          %v1083 = vpack.c.b16 %v1041, %v1039
          %v1084 = vpack.c.b16 %v1042, %v1040
          %v1085 = vpack.c.b16 %v1045, %v1043
          %v1086 = vpack.c.b16 %v1046, %v1044
          %v1087 = vpack.c.b16 %v1049, %v1047
          %v1088 = vpack.c.b16 %v1050, %v1048
          %v1089 = vpack.c.b16 %v1053, %v1051
          %v1090 = vpack.c.b16 %v1054, %v1052
          %v1091 = vpack.c.b16 %v1057, %v1055
          %v1092 = vpack.c.b16 %v1058, %v1056
          %v1093 = vpack.c.b16 %v1061, %v1059
          %v1094 = vpack.c.b16 %v1062, %v1060
          %v1095 = vpack.c.b16 %v1065, %v1063
          %v1096 = vpack.c.b16 %v1066, %v1064
          %v1097 = vpack.c.b16 %v1069, %v1067
          %v1098 = vpack.c.b16 %v1070, %v1068
          %v1099 = vpack.c.b16 %v1073, %v1071
          %v1100 = vpack.c.b16 %v1074, %v1072
          %v1101 = vpack.c.b16 %v1077, %v1075
          %v1102 = vpack.c.b16 %v1078, %v1076
          %vm1127 = vcmask 523264
          %v1129 = vsel %vm1127, %v994, 0
          %1131 = vmatprep.subr.bf16.mxu0 %v1080
          %1132 = vmatpush1.bf16.msra.mxu0 %v1079
          %1133 = vmatprep.subr.bf16.mxu0 %v1082
          %1134 = vmatpush1.bf16.msra.mxu0 %v1081
          %1135 = vmatprep.subr.bf16.mxu0 %v1084
          %1136 = vmatpush1.bf16.msra.mxu0 %v1083
          %1137 = vmatprep.subr.bf16.mxu0 %v1086
          %1138 = vmatpush1.bf16.msra.mxu0 %v1085
          %1139 = vmatprep.subr.bf16.mxu0 %v1088
          %1140 = vmatpush1.bf16.msra.mxu0 %v1087
          %1141 = vmatprep.subr.bf16.mxu0 %v1090
          %1142 = vmatpush1.bf16.msra.mxu0 %v1089
          %1143 = vmatprep.subr.bf16.mxu0 %v1092
          %1144 = vmatpush1.bf16.msra.mxu0 %v1091
          %1145 = vmatprep.subr.bf16.mxu0 %v1094
          %1146 = vmatpush1.bf16.msra.mxu0 %v1093
          %1147 = vmatprep.subr.bf16.mxu0 %v1096
          %1148 = vmatpush1.bf16.msra.mxu0 %v1095
          %1149 = vmatprep.subr.bf16.mxu0 %v1098
          %1150 = vmatpush1.bf16.msra.mxu0 %v1097
          %1151 = vmatprep.subr.bf16.mxu0 %v1100
          %1152 = vmatpush1.bf16.msra.mxu0 %v1099
          %1153 = vmatprep.subr.bf16.mxu0 %v1102
          %1154 = vmatpush1.bf16.msra.mxu0 %v1101
          %1155 = vmatprep.subr.bf16.mxu0 0
          %1156 = vmatpush1.bf16.msra.mxu0 0
          %1157 = vmatprep.subr.bf16.mxu0 0
          %1158 = vmatpush1.bf16.msra.mxu0 0
          %1159 = vmatprep.subr.bf16.mxu0 0
          %1160 = vmatpush1.bf16.msra.mxu0 0
          %1161 = vmatprep.subr.bf16.mxu0 0
          %1162 = vmatpush1.bf16.msra.mxu0 0
          %1163 = vmatprep.mubr.bf16.mxu0 %v1129
          %1164 = vmatmul.mubr.bf16.gmra.mrb[0].mxu0 %v993
          %v1165 = vpop.f32.mrb[0].mxu0
          %v1166 = vadd.f32 %v1000, %v1165
          %v1167 = vpop.f32.mrb[0].mxu0
          %v1168 = vadd.f32 %v1004, %v1167
          %v1169 = vpop.f32.mrb[0].mxu0
          %v1170 = vpop.f32.mrb[0].mxu0
          %1171 = vdwg.mxu0
          %v1172 = vld [vmem:[#allocation4] sm:$0x3]
          %v1173 = vld [vmem:[#allocation6] ss:$8 sm:$0x3]
          %v1174 = vadd.f32 %v1172, %v1173
          %v1175 = vld [vmem:[#allocation6] sm:$0x1e]
          %v1176 = vld [vmem:[#allocation6 + $0x8] sm:$0x1e]
          %v1179 = vrot.slane %v1175, 1
          %v1180 = vrot.slane %v1176, 1
          %v1183 = vadd.f32 %v1166, %v1179
          %v1184 = vadd.f32 %v1168, %v1180
          %v1185 = vrot.slane %v1175, 5
          %v1186 = vrot.slane %v1176, 5
          %v1189 = vadd.f32 %v1166, %v1185
          %v1190 = vadd.f32 %v1168, %v1186
          %v1192 = vlaneseq
          %v1193 = vshrl.u32 %v1192, 7
          %v1194 = vsub.s32 0, %v1193
          %v1195 = vrot.slane %v1174, %v1194
          %v1196 = vlaneseq
          %v1197 = vshrl.u32 %v1196, 7
          %v1198 = vsub.s32 1, %v1197
          %v1199 = vrot.slane %v1174, %v1198
          %v1204 = vrot.slane %v1183, 7
          %v1205 = vrot.slane %v1184, 7
          %v1210 = vrot.slane %v1189, 6
          %v1211 = vrot.slane %v1190, 6
          %vm1214 = vcmask 1040384
          %v1215 = vsel %vm1214, %v1195, %v1204
          %v1216 = vsel %vm1214, %v1199, %v1205
          %vm1217 = vcmask 1044480
          %v1218 = vsel %vm1217, %v1215, %v1195
          %v1219 = vsel %vm1217, %v1216, %v1199
          %vm1220 = vcmask 1045504
          %v1221 = vsel %vm1220, %v1218, %v1210
          %v1222 = vsel %vm1220, %v1219, %v1211
          %1223 = vst [vmem:[%s17] sm:$0xff] %v1221
          %1224 = vst [vmem:[%s17 + $0x8] sm:$0xff] %v1222
          %1225 = vst [vmem:[%s17 + $0x10] sm:$0x3] %v1210
          %1226 = vst [vmem:[%s17 + $0x18] sm:$0x3] %v1211
        $region144: #{shopee_forward.3} parent=87 // pred_fallthru
          _
        %v1227 = vld [vmem:[%s17] sm:$0xff]
        %v1228 = vld [vmem:[%s17 + $0x8] sm:$0xff]
        %v1229 = vld [vmem:[%s17 + $0x10] sm:$0x3]
        %v1230 = vld [vmem:[%s17 + $0x18] sm:$0x3]
        %v1231 = vld [vmem:[%s772] sm:$0x3]
        %v1232 = vld [vmem:[%s781] sm:$0x3]
        %v1233 = vadd.f32 %v1227, %v1228
        %1234 = vadd.xlane.f32.xlu0 %v1233
        %v1235 = vpop.xlane.xlu0 %1234
        %vm1236 = vcmask 1041408
        %v1237 = vsel %vm1236, %v1229, 0.0
        %v1238 = vsel %vm1236, %v1230, 0.0
        %v1239 = vadd.f32 %v1237, %v1238
        %1240 = vadd.xlane.f32.xlu0 %v1239
        %v1241 = vpop.xlane.xlu0 %1240
        %v1242 = vrcp.pop 256.0
        %v1243 = vmul.f32 %v1235, %v1242
        %v1244 = vmul.f32 %v1241, %v1242
        %v1245 = vsub.f32 %v1227, %v1243
        %v1246 = vsub.f32 %v1228, %v1243
        %v1247 = vsub.f32 %v1229, %v1244
        %v1248 = vsub.f32 %v1230, %v1244
        %v1249 = vmul.f32 %v1245, %v1245
        %v1250 = vmul.f32 %v1246, %v1246
        %v1251 = vmul.f32 %v1247, %v1247
        %v1252 = vmul.f32 %v1248, %v1248
        %v1253 = vadd.f32 %v1249, %v1250
        %1254 = vadd.xlane.f32.xlu0 %v1253
        %v1255 = vpop.xlane.xlu0 %1254
        %v1256 = vsel %vm1236, %v1251, 0.0
        %v1257 = vsel %vm1236, %v1252, 0.0
        %v1258 = vadd.f32 %v1256, %v1257
        %1259 = vadd.xlane.f32.xlu0 %v1258
        %v1260 = vpop.xlane.xlu0 %1259
        %v1261 = vmul.f32 %v1255, %v1242
        %v1262 = vmul.f32 %v1260, %v1242
        %v1263 = vadd.f32 %v1261, 1e-06
        %v1264 = vadd.f32 %v1262, 1e-06
        %v1265 = vrsqrt.pop %v1263
        %v1266 = vrsqrt.pop %v1264
        %v1267 = vmul.f32 %v1245, %v1265
        %v1268 = vmul.f32 %v1246, %v1265
        %v1269 = vmul.f32 %v1247, %v1266
        %v1270 = vmul.f32 %v1248, %v1266
        %v1272 = vlaneseq
        %v1273 = vshrl.u32 %v1272, 7
        %v1274 = vsub.s32 0, %v1273
        %v1275 = vrot.slane %v1231, %v1274
        %v1276 = vlaneseq
        %v1277 = vshrl.u32 %v1276, 7
        %v1278 = vsub.s32 1, %v1277
        %v1279 = vrot.slane %v1231, %v1278
        %v1282 = vmul.f32 %v1267, %v1275
        %v1283 = vmul.f32 %v1268, %v1279
        %v1284 = vmul.f32 %v1269, %v1275
        %v1285 = vmul.f32 %v1270, %v1279
        %v1287 = vlaneseq
        %v1288 = vshrl.u32 %v1287, 7
        %v1289 = vsub.s32 0, %v1288
        %v1290 = vrot.slane %v1232, %v1289
        %v1291 = vlaneseq
        %v1292 = vshrl.u32 %v1291, 7
        %v1293 = vsub.s32 1, %v1292
        %v1294 = vrot.slane %v1232, %v1293
        %v1297 = vadd.f32 %v1282, %v1290
        %v1298 = vadd.f32 %v1283, %v1294
        %v1299 = vadd.f32 %v1284, %v1290
        %v1300 = vadd.f32 %v1285, %v1294
        %v1301 = vld [vmem:[%s790] sm:$0xff]
        %v1302 = vld [vmem:[%s790 + $0x8] sm:$0xff]
        %v1303 = vld [vmem:[%s790 + $0x10] sm:$0xff]
        %v1304 = vld [vmem:[%s790 + $0x18] sm:$0xff]
        %v1305 = vld [vmem:[%s790 + $0x20] sm:$0xff]
        %v1306 = vld [vmem:[%s790 + $0x28] sm:$0xff]
        %v1307 = vld [vmem:[%s790 + $0x30] sm:$0xff]
        %v1308 = vld [vmem:[%s790 + $0x38] sm:$0xff]
        %v1309 = vld [vmem:[%s790 + $0x40] sm:$0xff]
        %v1310 = vld [vmem:[%s790 + $0x48] sm:$0xff]
        %v1311 = vld [vmem:[%s790 + $0x50] sm:$0xff]
        %v1312 = vld [vmem:[%s790 + $0x58] sm:$0xff]
        %v1313 = vld [vmem:[%s790 + $0x60] sm:$0xff]
        %v1314 = vld [vmem:[%s790 + $0x68] sm:$0xff]
        %v1315 = vld [vmem:[%s790 + $0x70] sm:$0xff]
        %v1316 = vld [vmem:[%s790 + $0x78] sm:$0xff]
        %v1317 = vld [vmem:[%s790 + $0x80] sm:$0xff]
        %v1318 = vld [vmem:[%s790 + $0x88] sm:$0xff]
        %v1319 = vld [vmem:[%s790 + $0x90] sm:$0xff]
        %v1320 = vld [vmem:[%s790 + $0x98] sm:$0xff]
        %v1321 = vld [vmem:[%s790 + $0xa0] sm:$0xff]
        %v1322 = vld [vmem:[%s790 + $0xa8] sm:$0xff]
        %v1323 = vld [vmem:[%s790 + $0xb0] sm:$0xff]
        %v1324 = vld [vmem:[%s790 + $0xb8] sm:$0xff]
        %v1325 = vld [vmem:[%s790 + $0xc0] sm:$0xff]
        %v1326 = vld [vmem:[%s790 + $0xc8] sm:$0xff]
        %v1327 = vld [vmem:[%s790 + $0xd0] sm:$0xff]
        %v1328 = vld [vmem:[%s790 + $0xd8] sm:$0xff]
        %v1329 = vld [vmem:[%s790 + $0xe0] sm:$0xff]
        %v1330 = vld [vmem:[%s790 + $0xe8] sm:$0xff]
        %v1331 = vld [vmem:[%s790 + $0xf0] sm:$0xff]
        %v1332 = vld [vmem:[%s790 + $0xf8] sm:$0xff]
        %v1333 = vld [vmem:[%s790 + $0x100] sm:$0xff]
        %v1334 = vld [vmem:[%s790 + $0x108] sm:$0xff]
        %v1335 = vld [vmem:[%s790 + $0x110] sm:$0xff]
        %v1336 = vld [vmem:[%s790 + $0x118] sm:$0xff]
        %v1337 = vld [vmem:[%s790 + $0x120] sm:$0xff]
        %v1338 = vld [vmem:[%s790 + $0x128] sm:$0xff]
        %v1339 = vld [vmem:[%s790 + $0x130] sm:$0xff]
        %v1340 = vld [vmem:[%s790 + $0x138] sm:$0xff]
        %v1341 = vld [vmem:[%s790 + $0x140] sm:$0xff]
        %v1342 = vld [vmem:[%s790 + $0x148] sm:$0xff]
        %v1343 = vld [vmem:[%s790 + $0x150] sm:$0xff]
        %v1344 = vld [vmem:[%s790 + $0x158] sm:$0xff]
        %v1345 = vld [vmem:[%s790 + $0x160] sm:$0xff]
        %v1346 = vld [vmem:[%s790 + $0x168] sm:$0xff]
        %v1347 = vld [vmem:[%s790 + $0x170] sm:$0xff]
        %v1348 = vld [vmem:[%s790 + $0x178] sm:$0xff]
        %v1349 = vld [vmem:[%s790 + $0x180] sm:$0xff]
        %v1350 = vld [vmem:[%s790 + $0x188] sm:$0xff]
        %v1351 = vld [vmem:[%s790 + $0x190] sm:$0xff]
        %v1352 = vld [vmem:[%s790 + $0x198] sm:$0xff]
        %v1353 = vld [vmem:[%s790 + $0x1a0] sm:$0xff]
        %v1354 = vld [vmem:[%s790 + $0x1a8] sm:$0xff]
        %v1355 = vld [vmem:[%s790 + $0x1b0] sm:$0xff]
        %v1356 = vld [vmem:[%s790 + $0x1b8] sm:$0xff]
        %v1357 = vld [vmem:[%s790 + $0x1c0] sm:$0xff]
        %v1358 = vld [vmem:[%s790 + $0x1c8] sm:$0xff]
        %v1359 = vld [vmem:[%s790 + $0x1d0] sm:$0xff]
        %v1360 = vld [vmem:[%s790 + $0x1d8] sm:$0xff]
        %v1361 = vld [vmem:[%s790 + $0x1e0] sm:$0xff]
        %v1362 = vld [vmem:[%s790 + $0x1e8] sm:$0xff]
        %v1363 = vld [vmem:[%s790 + $0x1f0] sm:$0xff]
        %v1364 = vld [vmem:[%s790 + $0x1f8] sm:$0xff]
        %v1365 = vld [vmem:[%s790 + $0x200] sm:$0xff]
        %v1366 = vld [vmem:[%s790 + $0x208] sm:$0xff]
        %v1367 = vld [vmem:[%s790 + $0x210] sm:$0xff]
        %v1368 = vld [vmem:[%s790 + $0x218] sm:$0xff]
        %v1369 = vld [vmem:[%s790 + $0x220] sm:$0xff]
        %v1370 = vld [vmem:[%s790 + $0x228] sm:$0xff]
        %v1371 = vld [vmem:[%s790 + $0x230] sm:$0xff]
        %v1372 = vld [vmem:[%s790 + $0x238] sm:$0xff]
        %v1373 = vld [vmem:[%s790 + $0x240] sm:$0xff]
        %v1374 = vld [vmem:[%s790 + $0x248] sm:$0xff]
        %v1375 = vld [vmem:[%s790 + $0x250] sm:$0xff]
        %v1376 = vld [vmem:[%s790 + $0x258] sm:$0xff]
        %v1377 = vld [vmem:[%s790 + $0x260] sm:$0xff]
        %v1378 = vld [vmem:[%s790 + $0x268] sm:$0xff]
        %v1379 = vld [vmem:[%s790 + $0x270] sm:$0xff]
        %v1380 = vld [vmem:[%s790 + $0x278] sm:$0xff]
        %v1381 = vld [vmem:[%s790 + $0x280] sm:$0xff]
        %v1382 = vld [vmem:[%s790 + $0x288] sm:$0xff]
        %v1383 = vld [vmem:[%s790 + $0x290] sm:$0xff]
        %v1384 = vld [vmem:[%s790 + $0x298] sm:$0xff]
        %v1385 = vld [vmem:[%s790 + $0x2a0] sm:$0xff]
        %v1386 = vld [vmem:[%s790 + $0x2a8] sm:$0xff]
        %v1387 = vld [vmem:[%s790 + $0x2b0] sm:$0xff]
        %v1388 = vld [vmem:[%s790 + $0x2b8] sm:$0xff]
        %v1389 = vld [vmem:[%s790 + $0x2c0] sm:$0xff]
        %v1390 = vld [vmem:[%s790 + $0x2c8] sm:$0xff]
        %v1391 = vld [vmem:[%s790 + $0x2d0] sm:$0xff]
        %v1392 = vld [vmem:[%s790 + $0x2d8] sm:$0xff]
        %v1393 = vld [vmem:[%s790 + $0x2e0] sm:$0xff]
        %v1394 = vld [vmem:[%s790 + $0x2e8] sm:$0xff]
        %v1395 = vld [vmem:[%s790 + $0x2f0] sm:$0xff]
        %v1396 = vld [vmem:[%s790 + $0x2f8] sm:$0xff]
        %v1397 = vpack.c.bf16 %v1299, %v1297
        %v1398 = vpack.c.bf16 %v1300, %v1298
        %v1399 = vld [vmem:[%s956] sm:$0x3f]
        %v1401 = vlaneseq
        %v1402 = vshrl.u32 %v1401, 7
        %v1403 = vsub.s32 0, %v1402
        %v1404 = vrot.slane %v1399, %v1403
        %v1405 = vlaneseq
        %v1406 = vshrl.u32 %v1405, 7
        %v1407 = vsub.s32 1, %v1406
        %v1408 = vrot.slane %v1399, %v1407
        %v1409 = vlaneseq
        %v1410 = vshrl.u32 %v1409, 7
        %v1411 = vsub.s32 2, %v1410
        %v1412 = vrot.slane %v1399, %v1411
        %v1413 = vlaneseq
        %v1414 = vshrl.u32 %v1413, 7
        %v1415 = vsub.s32 3, %v1414
        %v1416 = vrot.slane %v1399, %v1415
        %v1417 = vlaneseq
        %v1418 = vshrl.u32 %v1417, 7
        %v1419 = vsub.s32 4, %v1418
        %v1420 = vrot.slane %v1399, %v1419
        %v1421 = vlaneseq
        %v1422 = vshrl.u32 %v1421, 7
        %v1423 = vsub.s32 5, %v1422
        %v1424 = vrot.slane %v1399, %v1423
        %v1527 = vunpack.c.l.b16 %v1301
        %v1528 = vunpack.c.h.b16 %v1301
        %v1529 = vunpack.c.l.b16 %v1302
        %v1530 = vunpack.c.h.b16 %v1302
        %v1531 = vunpack.c.l.b16 %v1303
        %v1532 = vunpack.c.h.b16 %v1303
        %v1533 = vunpack.c.l.b16 %v1304
        %v1534 = vunpack.c.h.b16 %v1304
        %v1535 = vunpack.c.l.b16 %v1305
        %v1536 = vunpack.c.h.b16 %v1305
        %v1537 = vunpack.c.l.b16 %v1306
        %v1538 = vunpack.c.h.b16 %v1306
        %v1539 = vunpack.c.l.b16 %v1307
        %v1540 = vunpack.c.h.b16 %v1307
        %v1541 = vunpack.c.l.b16 %v1308
        %v1542 = vunpack.c.h.b16 %v1308
        %v1543 = vunpack.c.l.b16 %v1309
        %v1544 = vunpack.c.h.b16 %v1309
        %v1545 = vunpack.c.l.b16 %v1310
        %v1546 = vunpack.c.h.b16 %v1310
        %v1547 = vunpack.c.l.b16 %v1311
        %v1548 = vunpack.c.h.b16 %v1311
        %v1549 = vunpack.c.l.b16 %v1312
        %v1550 = vunpack.c.h.b16 %v1312
        %v1551 = vunpack.c.l.b16 %v1313
        %v1552 = vunpack.c.h.b16 %v1313
        %v1553 = vunpack.c.l.b16 %v1314
        %v1554 = vunpack.c.h.b16 %v1314
        %v1555 = vunpack.c.l.b16 %v1315
        %v1556 = vunpack.c.h.b16 %v1315
        %v1557 = vunpack.c.l.b16 %v1316
        %v1558 = vunpack.c.h.b16 %v1316
        %v1559 = vunpack.c.l.b16 %v1317
        %v1560 = vunpack.c.h.b16 %v1317
        %v1561 = vunpack.c.l.b16 %v1318
        %v1562 = vunpack.c.h.b16 %v1318
        %v1563 = vunpack.c.l.b16 %v1319
        %v1564 = vunpack.c.h.b16 %v1319
        %v1565 = vunpack.c.l.b16 %v1320
        %v1566 = vunpack.c.h.b16 %v1320
        %v1567 = vunpack.c.l.b16 %v1321
        %v1568 = vunpack.c.h.b16 %v1321
        %v1569 = vunpack.c.l.b16 %v1322
        %v1570 = vunpack.c.h.b16 %v1322
        %v1571 = vunpack.c.l.b16 %v1323
        %v1572 = vunpack.c.h.b16 %v1323
        %v1573 = vunpack.c.l.b16 %v1324
        %v1574 = vunpack.c.h.b16 %v1324
        %v1575 = vunpack.c.l.b16 %v1325
        %v1576 = vunpack.c.h.b16 %v1325
        %v1577 = vunpack.c.l.b16 %v1326
        %v1578 = vunpack.c.h.b16 %v1326
        %v1579 = vunpack.c.l.b16 %v1327
        %v1580 = vunpack.c.h.b16 %v1327
        %v1581 = vunpack.c.l.b16 %v1328
        %v1582 = vunpack.c.h.b16 %v1328
        %v1583 = vunpack.c.l.b16 %v1329
        %v1584 = vunpack.c.h.b16 %v1329
        %v1585 = vunpack.c.l.b16 %v1330
        %v1586 = vunpack.c.h.b16 %v1330
        %v1587 = vunpack.c.l.b16 %v1331
        %v1588 = vunpack.c.h.b16 %v1331
        %v1589 = vunpack.c.l.b16 %v1332
        %v1590 = vunpack.c.h.b16 %v1332
        %v1591 = vunpack.c.l.b16 %v1333
        %v1592 = vunpack.c.h.b16 %v1333
        %v1593 = vunpack.c.l.b16 %v1334
        %v1594 = vunpack.c.h.b16 %v1334
        %v1595 = vunpack.c.l.b16 %v1335
        %v1596 = vunpack.c.h.b16 %v1335
        %v1597 = vunpack.c.l.b16 %v1336
        %v1598 = vunpack.c.h.b16 %v1336
        %v1599 = vunpack.c.l.b16 %v1337
        %v1600 = vunpack.c.h.b16 %v1337
        %v1601 = vunpack.c.l.b16 %v1338
        %v1602 = vunpack.c.h.b16 %v1338
        %v1603 = vunpack.c.l.b16 %v1339
        %v1604 = vunpack.c.h.b16 %v1339
        %v1605 = vunpack.c.l.b16 %v1340
        %v1606 = vunpack.c.h.b16 %v1340
        %v1607 = vunpack.c.l.b16 %v1341
        %v1608 = vunpack.c.h.b16 %v1341
        %v1609 = vunpack.c.l.b16 %v1342
        %v1610 = vunpack.c.h.b16 %v1342
        %v1611 = vunpack.c.l.b16 %v1343
        %v1612 = vunpack.c.h.b16 %v1343
        %v1613 = vunpack.c.l.b16 %v1344
        %v1614 = vunpack.c.h.b16 %v1344
        %v1615 = vunpack.c.l.b16 %v1345
        %v1616 = vunpack.c.h.b16 %v1345
        %v1617 = vunpack.c.l.b16 %v1346
        %v1618 = vunpack.c.h.b16 %v1346
        %v1619 = vunpack.c.l.b16 %v1347
        %v1620 = vunpack.c.h.b16 %v1347
        %v1621 = vunpack.c.l.b16 %v1348
        %v1622 = vunpack.c.h.b16 %v1348
        %v1623 = vunpack.c.l.b16 %v1349
        %v1624 = vunpack.c.h.b16 %v1349
        %v1625 = vunpack.c.l.b16 %v1350
        %v1626 = vunpack.c.h.b16 %v1350
        %v1627 = vunpack.c.l.b16 %v1351
        %v1628 = vunpack.c.h.b16 %v1351
        %v1629 = vunpack.c.l.b16 %v1352
        %v1630 = vunpack.c.h.b16 %v1352
        %v1631 = vunpack.c.l.b16 %v1353
        %v1632 = vunpack.c.h.b16 %v1353
        %v1633 = vunpack.c.l.b16 %v1354
        %v1634 = vunpack.c.h.b16 %v1354
        %v1635 = vunpack.c.l.b16 %v1355
        %v1636 = vunpack.c.h.b16 %v1355
        %v1637 = vunpack.c.l.b16 %v1356
        %v1638 = vunpack.c.h.b16 %v1356
        %v1639 = vunpack.c.l.b16 %v1357
        %v1640 = vunpack.c.h.b16 %v1357
        %v1641 = vunpack.c.l.b16 %v1358
        %v1642 = vunpack.c.h.b16 %v1358
        %v1643 = vunpack.c.l.b16 %v1359
        %v1644 = vunpack.c.h.b16 %v1359
        %v1645 = vunpack.c.l.b16 %v1360
        %v1646 = vunpack.c.h.b16 %v1360
        %v1647 = vunpack.c.l.b16 %v1361
        %v1648 = vunpack.c.h.b16 %v1361
        %v1649 = vunpack.c.l.b16 %v1362
        %v1650 = vunpack.c.h.b16 %v1362
        %v1651 = vunpack.c.l.b16 %v1363
        %v1652 = vunpack.c.h.b16 %v1363
        %v1653 = vunpack.c.l.b16 %v1364
        %v1654 = vunpack.c.h.b16 %v1364
        %v1655 = vunpack.c.l.b16 %v1365
        %v1656 = vunpack.c.h.b16 %v1365
        %v1657 = vunpack.c.l.b16 %v1366
        %v1658 = vunpack.c.h.b16 %v1366
        %v1659 = vunpack.c.l.b16 %v1367
        %v1660 = vunpack.c.h.b16 %v1367
        %v1661 = vunpack.c.l.b16 %v1368
        %v1662 = vunpack.c.h.b16 %v1368
        %v1663 = vunpack.c.l.b16 %v1369
        %v1664 = vunpack.c.h.b16 %v1369
        %v1665 = vunpack.c.l.b16 %v1370
        %v1666 = vunpack.c.h.b16 %v1370
        %v1667 = vunpack.c.l.b16 %v1371
        %v1668 = vunpack.c.h.b16 %v1371
        %v1669 = vunpack.c.l.b16 %v1372
        %v1670 = vunpack.c.h.b16 %v1372
        %v1671 = vunpack.c.l.b16 %v1373
        %v1672 = vunpack.c.h.b16 %v1373
        %v1673 = vunpack.c.l.b16 %v1374
        %v1674 = vunpack.c.h.b16 %v1374
        %v1675 = vunpack.c.l.b16 %v1375
        %v1676 = vunpack.c.h.b16 %v1375
        %v1677 = vunpack.c.l.b16 %v1376
        %v1678 = vunpack.c.h.b16 %v1376
        %v1679 = vunpack.c.l.b16 %v1377
        %v1680 = vunpack.c.h.b16 %v1377
        %v1681 = vunpack.c.l.b16 %v1378
        %v1682 = vunpack.c.h.b16 %v1378
        %v1683 = vunpack.c.l.b16 %v1379
        %v1684 = vunpack.c.h.b16 %v1379
        %v1685 = vunpack.c.l.b16 %v1380
        %v1686 = vunpack.c.h.b16 %v1380
        %v1687 = vunpack.c.l.b16 %v1381
        %v1688 = vunpack.c.h.b16 %v1381
        %v1689 = vunpack.c.l.b16 %v1382
        %v1690 = vunpack.c.h.b16 %v1382
        %v1691 = vunpack.c.l.b16 %v1383
        %v1692 = vunpack.c.h.b16 %v1383
        %v1693 = vunpack.c.l.b16 %v1384
        %v1694 = vunpack.c.h.b16 %v1384
        %v1695 = vunpack.c.l.b16 %v1385
        %v1696 = vunpack.c.h.b16 %v1385
        %v1697 = vunpack.c.l.b16 %v1386
        %v1698 = vunpack.c.h.b16 %v1386
        %v1699 = vunpack.c.l.b16 %v1387
        %v1700 = vunpack.c.h.b16 %v1387
        %v1701 = vunpack.c.l.b16 %v1388
        %v1702 = vunpack.c.h.b16 %v1388
        %v1703 = vunpack.c.l.b16 %v1389
        %v1704 = vunpack.c.h.b16 %v1389
        %v1705 = vunpack.c.l.b16 %v1390
        %v1706 = vunpack.c.h.b16 %v1390
        %v1707 = vunpack.c.l.b16 %v1391
        %v1708 = vunpack.c.h.b16 %v1391
        %v1709 = vunpack.c.l.b16 %v1392
        %v1710 = vunpack.c.h.b16 %v1392
        %v1711 = vunpack.c.l.b16 %v1393
        %v1712 = vunpack.c.h.b16 %v1393
        %v1713 = vunpack.c.l.b16 %v1394
        %v1714 = vunpack.c.h.b16 %v1394
        %v1715 = vunpack.c.l.b16 %v1395
        %v1716 = vunpack.c.h.b16 %v1395
        %v1717 = vunpack.c.l.b16 %v1396
        %v1718 = vunpack.c.h.b16 %v1396
        %v1719 = vpack.c.b16 %v1533, %v1527
        %v1720 = vpack.c.b16 %v1534, %v1528
        %v1721 = vpack.c.b16 %v1535, %v1529
        %v1722 = vpack.c.b16 %v1536, %v1530
        %v1723 = vpack.c.b16 %v1537, %v1531
        %v1724 = vpack.c.b16 %v1538, %v1532
        %v1725 = vpack.c.b16 %v1545, %v1539
        %v1726 = vpack.c.b16 %v1546, %v1540
        %v1727 = vpack.c.b16 %v1547, %v1541
        %v1728 = vpack.c.b16 %v1548, %v1542
        %v1729 = vpack.c.b16 %v1549, %v1543
        %v1730 = vpack.c.b16 %v1550, %v1544
        %v1731 = vpack.c.b16 %v1557, %v1551
        %v1732 = vpack.c.b16 %v1558, %v1552
        %v1733 = vpack.c.b16 %v1559, %v1553
        %v1734 = vpack.c.b16 %v1560, %v1554
        %v1735 = vpack.c.b16 %v1561, %v1555
        %v1736 = vpack.c.b16 %v1562, %v1556
        %v1737 = vpack.c.b16 %v1569, %v1563
        %v1738 = vpack.c.b16 %v1570, %v1564
        %v1739 = vpack.c.b16 %v1571, %v1565
        %v1740 = vpack.c.b16 %v1572, %v1566
        %v1741 = vpack.c.b16 %v1573, %v1567
        %v1742 = vpack.c.b16 %v1574, %v1568
        %v1743 = vpack.c.b16 %v1581, %v1575
        %v1744 = vpack.c.b16 %v1582, %v1576
        %v1745 = vpack.c.b16 %v1583, %v1577
        %v1746 = vpack.c.b16 %v1584, %v1578
        %v1747 = vpack.c.b16 %v1585, %v1579
        %v1748 = vpack.c.b16 %v1586, %v1580
        %v1749 = vpack.c.b16 %v1593, %v1587
        %v1750 = vpack.c.b16 %v1594, %v1588
        %v1751 = vpack.c.b16 %v1595, %v1589
        %v1752 = vpack.c.b16 %v1596, %v1590
        %v1753 = vpack.c.b16 %v1597, %v1591
        %v1754 = vpack.c.b16 %v1598, %v1592
        %v1755 = vpack.c.b16 %v1605, %v1599
        %v1756 = vpack.c.b16 %v1606, %v1600
        %v1757 = vpack.c.b16 %v1607, %v1601
        %v1758 = vpack.c.b16 %v1608, %v1602
        %v1759 = vpack.c.b16 %v1609, %v1603
        %v1760 = vpack.c.b16 %v1610, %v1604
        %v1761 = vpack.c.b16 %v1617, %v1611
        %v1762 = vpack.c.b16 %v1618, %v1612
        %v1763 = vpack.c.b16 %v1619, %v1613
        %v1764 = vpack.c.b16 %v1620, %v1614
        %v1765 = vpack.c.b16 %v1621, %v1615
        %v1766 = vpack.c.b16 %v1622, %v1616
        %v1767 = vpack.c.b16 %v1629, %v1623
        %v1768 = vpack.c.b16 %v1630, %v1624
        %v1769 = vpack.c.b16 %v1631, %v1625
        %v1770 = vpack.c.b16 %v1632, %v1626
        %v1771 = vpack.c.b16 %v1633, %v1627
        %v1772 = vpack.c.b16 %v1634, %v1628
        %v1773 = vpack.c.b16 %v1641, %v1635
        %v1774 = vpack.c.b16 %v1642, %v1636
        %v1775 = vpack.c.b16 %v1643, %v1637
        %v1776 = vpack.c.b16 %v1644, %v1638
        %v1777 = vpack.c.b16 %v1645, %v1639
        %v1778 = vpack.c.b16 %v1646, %v1640
        %v1779 = vpack.c.b16 %v1653, %v1647
        %v1780 = vpack.c.b16 %v1654, %v1648
        %v1781 = vpack.c.b16 %v1655, %v1649
        %v1782 = vpack.c.b16 %v1656, %v1650
        %v1783 = vpack.c.b16 %v1657, %v1651
        %v1784 = vpack.c.b16 %v1658, %v1652
        %v1785 = vpack.c.b16 %v1665, %v1659
        %v1786 = vpack.c.b16 %v1666, %v1660
        %v1787 = vpack.c.b16 %v1667, %v1661
        %v1788 = vpack.c.b16 %v1668, %v1662
        %v1789 = vpack.c.b16 %v1669, %v1663
        %v1790 = vpack.c.b16 %v1670, %v1664
        %v1791 = vpack.c.b16 %v1677, %v1671
        %v1792 = vpack.c.b16 %v1678, %v1672
        %v1793 = vpack.c.b16 %v1679, %v1673
        %v1794 = vpack.c.b16 %v1680, %v1674
        %v1795 = vpack.c.b16 %v1681, %v1675
        %v1796 = vpack.c.b16 %v1682, %v1676
        %v1797 = vpack.c.b16 %v1689, %v1683
        %v1798 = vpack.c.b16 %v1690, %v1684
        %v1799 = vpack.c.b16 %v1691, %v1685
        %v1800 = vpack.c.b16 %v1692, %v1686
        %v1801 = vpack.c.b16 %v1693, %v1687
        %v1802 = vpack.c.b16 %v1694, %v1688
        %v1803 = vpack.c.b16 %v1701, %v1695
        %v1804 = vpack.c.b16 %v1702, %v1696
        %v1805 = vpack.c.b16 %v1703, %v1697
        %v1806 = vpack.c.b16 %v1704, %v1698
        %v1807 = vpack.c.b16 %v1705, %v1699
        %v1808 = vpack.c.b16 %v1706, %v1700
        %v1809 = vpack.c.b16 %v1713, %v1707
        %v1810 = vpack.c.b16 %v1714, %v1708
        %v1811 = vpack.c.b16 %v1715, %v1709
        %v1812 = vpack.c.b16 %v1716, %v1710
        %v1813 = vpack.c.b16 %v1717, %v1711
        %v1814 = vpack.c.b16 %v1718, %v1712
        %1911 = vmatprep.subr.bf16.mxu0 %v1720
        %1912 = vmatpush1.bf16.msra.mxu0 %v1719
        %1913 = vmatprep.subr.bf16.mxu0 %v1726
        %1914 = vmatpush1.bf16.msra.mxu0 %v1725
        %1915 = vmatprep.subr.bf16.mxu0 %v1732
        %1916 = vmatpush1.bf16.msra.mxu0 %v1731
        %1917 = vmatprep.subr.bf16.mxu0 %v1738
        %1918 = vmatpush1.bf16.msra.mxu0 %v1737
        %1919 = vmatprep.subr.bf16.mxu0 %v1744
        %1920 = vmatpush1.bf16.msra.mxu0 %v1743
        %1921 = vmatprep.subr.bf16.mxu0 %v1750
        %1922 = vmatpush1.bf16.msra.mxu0 %v1749
        %1923 = vmatprep.subr.bf16.mxu0 %v1756
        %1924 = vmatpush1.bf16.msra.mxu0 %v1755
        %1925 = vmatprep.subr.bf16.mxu0 %v1762
        %1926 = vmatpush1.bf16.msra.mxu0 %v1761
        %1927 = vmatprep.subr.bf16.mxu0 %v1768
        %1928 = vmatpush1.bf16.msra.mxu0 %v1767
        %1929 = vmatprep.subr.bf16.mxu0 %v1774
        %1930 = vmatpush1.bf16.msra.mxu0 %v1773
        %1931 = vmatprep.subr.bf16.mxu0 %v1780
        %1932 = vmatpush1.bf16.msra.mxu0 %v1779
        %1933 = vmatprep.subr.bf16.mxu0 %v1786
        %1934 = vmatpush1.bf16.msra.mxu0 %v1785
        %1935 = vmatprep.subr.bf16.mxu0 %v1792
        %1936 = vmatpush1.bf16.msra.mxu0 %v1791
        %1937 = vmatprep.subr.bf16.mxu0 %v1798
        %1938 = vmatpush1.bf16.msra.mxu0 %v1797
        %1939 = vmatprep.subr.bf16.mxu0 %v1804
        %1940 = vmatpush1.bf16.msra.mxu0 %v1803
        %1941 = vmatprep.subr.bf16.mxu0 %v1810
        %1942 = vmatpush1.bf16.msra.mxu0 %v1809
        %1943 = vmatprep.mubr.bf16.mxu0 %v1398
        %1944 = vmatmul.mubr.bf16.gmra.mrb[0].mxu0 %v1397
        %v1945 = vpop.f32.mrb[0].mxu0
        %v1946 = vadd.f32 %v1404, %v1945
        %v1947 = vpop.f32.mrb[0].mxu0
        %v1948 = vadd.f32 %v1408, %v1947
        %v1949 = vpop.f32.mrb[0].mxu0
        %v1950 = vadd.f32 %v1404, %v1949
        %v1951 = vpop.f32.mrb[0].mxu0
        %v1952 = vadd.f32 %v1408, %v1951
        %1953 = vdwg.mxu0
        %1954 = vmatprep.subr.bf16.mxu0 %v1722
        %1955 = vmatpush1.bf16.msra.mxu0 %v1721
        %1956 = vmatprep.subr.bf16.mxu0 %v1728
        %1957 = vmatpush1.bf16.msra.mxu0 %v1727
        %1958 = vmatprep.subr.bf16.mxu0 %v1734
        %1959 = vmatpush1.bf16.msra.mxu0 %v1733
        %1960 = vmatprep.subr.bf16.mxu0 %v1740
        %1961 = vmatpush1.bf16.msra.mxu0 %v1739
        %1962 = vmatprep.subr.bf16.mxu0 %v1746
        %1963 = vmatpush1.bf16.msra.mxu0 %v1745
        %1964 = vmatprep.subr.bf16.mxu0 %v1752
        %1965 = vmatpush1.bf16.msra.mxu0 %v1751
        %1966 = vmatprep.subr.bf16.mxu0 %v1758
        %1967 = vmatpush1.bf16.msra.mxu0 %v1757
        %1968 = vmatprep.subr.bf16.mxu0 %v1764
        %1969 = vmatpush1.bf16.msra.mxu0 %v1763
        %1970 = vmatprep.subr.bf16.mxu0 %v1770
        %1971 = vmatpush1.bf16.msra.mxu0 %v1769
        %1972 = vmatprep.subr.bf16.mxu0 %v1776
        %1973 = vmatpush1.bf16.msra.mxu0 %v1775
        %1974 = vmatprep.subr.bf16.mxu0 %v1782
        %1975 = vmatpush1.bf16.msra.mxu0 %v1781
        %1976 = vmatprep.subr.bf16.mxu0 %v1788
        %1977 = vmatpush1.bf16.msra.mxu0 %v1787
        %1978 = vmatprep.subr.bf16.mxu0 %v1794
        %1979 = vmatpush1.bf16.msra.mxu0 %v1793
        %1980 = vmatprep.subr.bf16.mxu0 %v1800
        %1981 = vmatpush1.bf16.msra.mxu0 %v1799
        %1982 = vmatprep.subr.bf16.mxu0 %v1806
        %1983 = vmatpush1.bf16.msra.mxu0 %v1805
        %1984 = vmatprep.subr.bf16.mxu0 %v1812
        %1985 = vmatpush1.bf16.msra.mxu0 %v1811
        %1986 = vmatprep.mubr.bf16.mxu0 %v1398
        %1987 = vmatmul.mubr.bf16.gmra.mrb[0].mxu0 %v1397
        %v1988 = vpop.f32.mrb[0].mxu0
        %v1989 = vadd.f32 %v1412, %v1988
        %v1990 = vpop.f32.mrb[0].mxu0
        %v1991 = vadd.f32 %v1416, %v1990
        %v1992 = vpop.f32.mrb[0].mxu0
        %v1993 = vadd.f32 %v1412, %v1992
        %v1994 = vpop.f32.mrb[0].mxu0
        %v1995 = vadd.f32 %v1416, %v1994
        %1996 = vdwg.mxu0
        %1997 = vmatprep.subr.bf16.mxu0 %v1724
        %1998 = vmatpush1.bf16.msra.mxu0 %v1723
        %1999 = vmatprep.subr.bf16.mxu0 %v1730
        %2000 = vmatpush1.bf16.msra.mxu0 %v1729
        %2001 = vmatprep.subr.bf16.mxu0 %v1736
        %2002 = vmatpush1.bf16.msra.mxu0 %v1735
        %2003 = vmatprep.subr.bf16.mxu0 %v1742
        %2004 = vmatpush1.bf16.msra.mxu0 %v1741
        %2005 = vmatprep.subr.bf16.mxu0 %v1748
        %2006 = vmatpush1.bf16.msra.mxu0 %v1747
        %2007 = vmatprep.subr.bf16.mxu0 %v1754
        %2008 = vmatpush1.bf16.msra.mxu0 %v1753
        %2009 = vmatprep.subr.bf16.mxu0 %v1760
        %2010 = vmatpush1.bf16.msra.mxu0 %v1759
        %2011 = vmatprep.subr.bf16.mxu0 %v1766
        %2012 = vmatpush1.bf16.msra.mxu0 %v1765
        %2013 = vmatprep.subr.bf16.mxu0 %v1772
        %2014 = vmatpush1.bf16.msra.mxu0 %v1771
        %2015 = vmatprep.subr.bf16.mxu0 %v1778
        %2016 = vmatpush1.bf16.msra.mxu0 %v1777
        %2017 = vmatprep.subr.bf16.mxu0 %v1784
        %2018 = vmatpush1.bf16.msra.mxu0 %v1783
        %2019 = vmatprep.subr.bf16.mxu0 %v1790
        %2020 = vmatpush1.bf16.msra.mxu0 %v1789
        %2021 = vmatprep.subr.bf16.mxu0 %v1796
        %2022 = vmatpush1.bf16.msra.mxu0 %v1795
        %2023 = vmatprep.subr.bf16.mxu0 %v1802
        %2024 = vmatpush1.bf16.msra.mxu0 %v1801
        %2025 = vmatprep.subr.bf16.mxu0 %v1808
        %2026 = vmatpush1.bf16.msra.mxu0 %v1807
        %2027 = vmatprep.subr.bf16.mxu0 %v1814
        %2028 = vmatpush1.bf16.msra.mxu0 %v1813
        %2029 = vmatprep.mubr.bf16.mxu0 %v1398
        %2030 = vmatmul.mubr.bf16.gmra.mrb[0].mxu0 %v1397
        %v2031 = vpop.f32.mrb[0].mxu0
        %v2032 = vadd.f32 %v1420, %v2031
        %v2033 = vpop.f32.mrb[0].mxu0
        %v2034 = vadd.f32 %v1424, %v2033
        %v2035 = vpop.f32.mrb[0].mxu0
        %v2036 = vadd.f32 %v1420, %v2035
        %v2037 = vpop.f32.mrb[0].mxu0
        %v2038 = vadd.f32 %v1424, %v2037
        %2039 = vdwg.mxu0
        %vm2042 = vcmask 1042432
        %v2043 = vrot.slane %v1946, 5
        %v2044 = vrot.slane %v1950, 5
        %v2045 = vsel %vm2042, %v2043, %v2044
        %v2049 = vrot.slane %v1948, 5
        %v2050 = vrot.slane %v1952, 5
        %v2051 = vsel %vm2042, %v2049, %v2050
        %v2053 = vpack.c.bf16 %v1946, %v1946
        %v2054 = vpack.c.bf16 %v1948, %v1948
        %v2055 = vpack.c.bf16 %v2045, %v2045
        %v2056 = vpack.c.bf16 %v2051, %v2051
        %v2059 = vrot.slane %v1989, 5
        %v2060 = vrot.slane %v1993, 5
        %v2061 = vsel %vm2042, %v2059, %v2060
        %v2065 = vrot.slane %v1991, 5
        %v2066 = vrot.slane %v1995, 5
        %v2067 = vsel %vm2042, %v2065, %v2066
        %v2069 = vpack.c.bf16 %v1989, %v1989
        %v2070 = vpack.c.bf16 %v1991, %v1991
        %v2071 = vpack.c.bf16 %v2061, %v2061
        %v2072 = vpack.c.bf16 %v2067, %v2067
        %v2075 = vrot.slane %v2032, 5
        %v2076 = vrot.slane %v2036, 5
        %v2077 = vsel %vm2042, %v2075, %v2076
        %v2081 = vrot.slane %v2034, 5
        %v2082 = vrot.slane %v2038, 5
        %v2083 = vsel %vm2042, %v2081, %v2082
        %v2085 = vpack.c.bf16 %v2032, %v2032
        %v2086 = vpack.c.bf16 %v2034, %v2034
        %v2087 = vpack.c.bf16 %v2077, %v2077
        %v2088 = vpack.c.bf16 %v2083, %v2083
        %2089 = vmatprep.subr.bf16.mxu0 0
        %2090 = vmatpush1.bf16.xpose.msra.mxu0 %v2069
        %2091 = vmatprep.subr.bf16.mxu0 0
        %2092 = vmatpush1.bf16.xpose.msra.mxu0 0
        %2093 = vmatprep.subr.bf16.mxu0 0
        %2094 = vmatpush1.bf16.xpose.msra.mxu0 0
        %2095 = vmatprep.subr.bf16.mxu0 0
        %2096 = vmatpush1.bf16.xpose.msra.mxu0 0
        %2097 = vmatprep.subr.bf16.mxu0 0
        %2098 = vmatpush1.bf16.xpose.msra.mxu0 0
        %2099 = vmatprep.subr.bf16.mxu0 0
        %2100 = vmatpush1.bf16.xpose.msra.mxu0 0
        %2101 = vmatprep.subr.bf16.mxu0 0
        %2102 = vmatpush1.bf16.xpose.msra.mxu0 0
        %2103 = vmatprep.subr.bf16.mxu0 0
        %2104 = vmatpush1.bf16.xpose.msra.mxu0 0
        %2105 = vmatprep.subr.bf16.mxu0 0
        %2106 = vmatpush1.bf16.xpose.msra.mxu0 0
        %2107 = vmatprep.subr.bf16.mxu0 0
        %2108 = vmatpush1.bf16.xpose.msra.mxu0 0
        %2109 = vmatprep.subr.bf16.mxu0 0
        %2110 = vmatpush1.bf16.xpose.msra.mxu0 0
        %2111 = vmatprep.subr.bf16.mxu0 0
        %2112 = vmatpush1.bf16.xpose.msra.mxu0 0
        %2113 = vmatprep.subr.bf16.mxu0 0
        %2114 = vmatpush1.bf16.xpose.msra.mxu0 0
        %2115 = vmatprep.subr.bf16.mxu0 0
        %2116 = vmatpush1.bf16.xpose.msra.mxu0 0
        %2117 = vmatprep.subr.bf16.mxu0 0
        %2118 = vmatpush1.bf16.xpose.msra.mxu0 0
        %2119 = vmatprep.subr.bf16.mxu0 0
        %2120 = vmatpush1.bf16.xpose.msra.mxu0 0
        %2121 = vmatprep.mubr.bf16.mxu0 0
        %2122 = vmatmul.mubr.bf16.gmra.mrb[0].mxu0 %v2053
        %v2123 = vpop.f32.mrb[0].mxu0
        %v2124 = vadd.f32 0.0, %v2123
        %v2125 = vpop.f32.mrb[0].mxu0
        %v2126 = vpop.f32.mrb[0].mxu0
        %v2127 = vpop.f32.mrb[0].mxu0
        %2128 = vdwg.mxu0
        %2129 = vmatprep.subr.bf16.mxu0 0
        %2130 = vmatpush1.bf16.xpose.msra.mxu0 %v2070
        %2131 = vmatprep.subr.bf16.mxu0 0
        %2132 = vmatpush1.bf16.xpose.msra.mxu0 0
        %2133 = vmatprep.subr.bf16.mxu0 0
        %2134 = vmatpush1.bf16.xpose.msra.mxu0 0
        %2135 = vmatprep.subr.bf16.mxu0 0
        %2136 = vmatpush1.bf16.xpose.msra.mxu0 0
        %2137 = vmatprep.subr.bf16.mxu0 0
        %2138 = vmatpush1.bf16.xpose.msra.mxu0 0
        %2139 = vmatprep.subr.bf16.mxu0 0
        %2140 = vmatpush1.bf16.xpose.msra.mxu0 0
        %2141 = vmatprep.subr.bf16.mxu0 0
        %2142 = vmatpush1.bf16.xpose.msra.mxu0 0
        %2143 = vmatprep.subr.bf16.mxu0 0
        %2144 = vmatpush1.bf16.xpose.msra.mxu0 0
        %2145 = vmatprep.subr.bf16.mxu0 0
        %2146 = vmatpush1.bf16.xpose.msra.mxu0 0
        %2147 = vmatprep.subr.bf16.mxu0 0
        %2148 = vmatpush1.bf16.xpose.msra.mxu0 0
        %2149 = vmatprep.subr.bf16.mxu0 0
        %2150 = vmatpush1.bf16.xpose.msra.mxu0 0
        %2151 = vmatprep.subr.bf16.mxu0 0
        %2152 = vmatpush1.bf16.xpose.msra.mxu0 0
        %2153 = vmatprep.subr.bf16.mxu0 0
        %2154 = vmatpush1.bf16.xpose.msra.mxu0 0
        %2155 = vmatprep.subr.bf16.mxu0 0
        %2156 = vmatpush1.bf16.xpose.msra.mxu0 0
        %2157 = vmatprep.subr.bf16.mxu0 0
        %2158 = vmatpush1.bf16.xpose.msra.mxu0 0
        %2159 = vmatprep.subr.bf16.mxu0 0
        %2160 = vmatpush1.bf16.xpose.msra.mxu0 0
        %2161 = vmatprep.mubr.bf16.mxu0 0
        %2162 = vmatmul.mubr.bf16.gmra.mrb[0].mxu0 %v2054
        %v2163 = vpop.f32.mrb[0].mxu0
        %v2164 = vadd.f32 0.0, %v2163
        %v2165 = vpop.f32.mrb[0].mxu0
        %v2166 = vpop.f32.mrb[0].mxu0
        %v2167 = vpop.f32.mrb[0].mxu0
        %2168 = vdwg.mxu0
        %2169 = vmatprep.subr.bf16.mxu0 0
        %2170 = vmatpush1.bf16.xpose.msra.mxu0 %v2071
        %2171 = vmatprep.subr.bf16.mxu0 0
        %2172 = vmatpush1.bf16.xpose.msra.mxu0 0
        %2173 = vmatprep.subr.bf16.mxu0 0
        %2174 = vmatpush1.bf16.xpose.msra.mxu0 0
        %2175 = vmatprep.subr.bf16.mxu0 0
        %2176 = vmatpush1.bf16.xpose.msra.mxu0 0
        %2177 = vmatprep.subr.bf16.mxu0 0
        %2178 = vmatpush1.bf16.xpose.msra.mxu0 0
        %2179 = vmatprep.subr.bf16.mxu0 0
        %2180 = vmatpush1.bf16.xpose.msra.mxu0 0
        %2181 = vmatprep.subr.bf16.mxu0 0
        %2182 = vmatpush1.bf16.xpose.msra.mxu0 0
        %2183 = vmatprep.subr.bf16.mxu0 0
        %2184 = vmatpush1.bf16.xpose.msra.mxu0 0
        %2185 = vmatprep.subr.bf16.mxu0 0
        %2186 = vmatpush1.bf16.xpose.msra.mxu0 0
        %2187 = vmatprep.subr.bf16.mxu0 0
        %2188 = vmatpush1.bf16.xpose.msra.mxu0 0
        %2189 = vmatprep.subr.bf16.mxu0 0
        %2190 = vmatpush1.bf16.xpose.msra.mxu0 0
        %2191 = vmatprep.subr.bf16.mxu0 0
        %2192 = vmatpush1.bf16.xpose.msra.mxu0 0
        %2193 = vmatprep.subr.bf16.mxu0 0
        %2194 = vmatpush1.bf16.xpose.msra.mxu0 0
        %2195 = vmatprep.subr.bf16.mxu0 0
        %2196 = vmatpush1.bf16.xpose.msra.mxu0 0
        %2197 = vmatprep.subr.bf16.mxu0 0
        %2198 = vmatpush1.bf16.xpose.msra.mxu0 0
        %2199 = vmatprep.subr.bf16.mxu0 0
        %2200 = vmatpush1.bf16.xpose.msra.mxu0 0
        %2201 = vmatprep.mubr.bf16.mxu0 0
        %2202 = vmatmul.mubr.bf16.gmra.mrb[0].mxu0 %v2055
        %v2203 = vpop.f32.mrb[0].mxu0
        %v2204 = vadd.f32 0.0, %v2203
        %v2205 = vpop.f32.mrb[0].mxu0
        %v2206 = vpop.f32.mrb[0].mxu0
        %v2207 = vpop.f32.mrb[0].mxu0
        %2208 = vdwg.mxu0
        %2209 = vmatprep.subr.bf16.mxu0 0
        %2210 = vmatpush1.bf16.xpose.msra.mxu0 %v2072
        %2211 = vmatprep.subr.bf16.mxu0 0
        %2212 = vmatpush1.bf16.xpose.msra.mxu0 0
        %2213 = vmatprep.subr.bf16.mxu0 0
        %2214 = vmatpush1.bf16.xpose.msra.mxu0 0
        %2215 = vmatprep.subr.bf16.mxu0 0
        %2216 = vmatpush1.bf16.xpose.msra.mxu0 0
        %2217 = vmatprep.subr.bf16.mxu0 0
        %2218 = vmatpush1.bf16.xpose.msra.mxu0 0
        %2219 = vmatprep.subr.bf16.mxu0 0
        %2220 = vmatpush1.bf16.xpose.msra.mxu0 0
        %2221 = vmatprep.subr.bf16.mxu0 0
        %2222 = vmatpush1.bf16.xpose.msra.mxu0 0
        %2223 = vmatprep.subr.bf16.mxu0 0
        %2224 = vmatpush1.bf16.xpose.msra.mxu0 0
        %2225 = vmatprep.subr.bf16.mxu0 0
        %2226 = vmatpush1.bf16.xpose.msra.mxu0 0
        %2227 = vmatprep.subr.bf16.mxu0 0
        %2228 = vmatpush1.bf16.xpose.msra.mxu0 0
        %2229 = vmatprep.subr.bf16.mxu0 0
        %2230 = vmatpush1.bf16.xpose.msra.mxu0 0
        %2231 = vmatprep.subr.bf16.mxu0 0
        %2232 = vmatpush1.bf16.xpose.msra.mxu0 0
        %2233 = vmatprep.subr.bf16.mxu0 0
        %2234 = vmatpush1.bf16.xpose.msra.mxu0 0
        %2235 = vmatprep.subr.bf16.mxu0 0
        %2236 = vmatpush1.bf16.xpose.msra.mxu0 0
        %2237 = vmatprep.subr.bf16.mxu0 0
        %2238 = vmatpush1.bf16.xpose.msra.mxu0 0
        %2239 = vmatprep.subr.bf16.mxu0 0
        %2240 = vmatpush1.bf16.xpose.msra.mxu0 0
        %2241 = vmatprep.mubr.bf16.mxu0 0
        %2242 = vmatmul.mubr.bf16.gmra.mrb[0].mxu0 %v2056
        %v2243 = vpop.f32.mrb[0].mxu0
        %v2244 = vadd.f32 0.0, %v2243
        %v2245 = vpop.f32.mrb[0].mxu0
        %v2246 = vpop.f32.mrb[0].mxu0
        %v2247 = vpop.f32.mrb[0].mxu0
        %2248 = vdwg.mxu0
        %v2249 = vmul.f32 %v2124, 0.088388346
        %v2250 = vmul.f32 %v2164, 0.088388346
        %v2251 = vmul.f32 %v2204, 0.088388346
        %v2252 = vmul.f32 %v2244, 0.088388346
        %vm2253 = vcmask 36864
        %v2254 = vsel %vm2253, %v2249, -inf
        %2255 = vmax.xlane.f32.xlu0 %v2254
        %v2256 = vpop.xlane.xlu0 %2255
        %v2257 = vsel %vm2253, %v2250, -inf
        %2258 = vmax.xlane.f32.xlu0 %v2257
        %v2259 = vpop.xlane.xlu0 %2258
        %v2260 = vsel %vm2253, %v2251, -inf
        %2261 = vmax.xlane.f32.xlu0 %v2260
        %v2262 = vpop.xlane.xlu0 %2261
        %v2263 = vsel %vm2253, %v2252, -inf
        %2264 = vmax.xlane.f32.xlu0 %v2263
        %v2265 = vpop.xlane.xlu0 %2264
        %v2266 = vsub.f32 %v2249, %v2256
        %v2267 = vsub.f32 %v2250, %v2259
        %v2268 = vsub.f32 %v2251, %v2262
        %v2269 = vsub.f32 %v2252, %v2265
        %v2270 = vmul.f32 %v2266, 1.442695
        %v2271 = vpow.pop %v2270
        %v2272 = vmul.f32 %v2267, 1.442695
        %v2273 = vpow.pop %v2272
        %v2274 = vmul.f32 %v2268, 1.442695
        %v2275 = vpow.pop %v2274
        %v2276 = vmul.f32 %v2269, 1.442695
        %v2277 = vpow.pop %v2276
        %v2278 = vsel %vm2253, %v2271, 0.0
        %2279 = vadd.xlane.f32.xlu0 %v2278
        %v2280 = vpop.xlane.xlu0 %2279
        %v2281 = vsel %vm2253, %v2273, 0.0
        %2282 = vadd.xlane.f32.xlu0 %v2281
        %v2283 = vpop.xlane.xlu0 %2282
        %v2284 = vsel %vm2253, %v2275, 0.0
        %2285 = vadd.xlane.f32.xlu0 %v2284
        %v2286 = vpop.xlane.xlu0 %2285
        %v2287 = vsel %vm2253, %v2277, 0.0
        %2288 = vadd.xlane.f32.xlu0 %v2287
        %v2289 = vpop.xlane.xlu0 %2288
        %v2290 = vrcp.pop %v2280
        %v2291 = vrcp.pop %v2283
        %v2292 = vrcp.pop %v2286
        %v2293 = vrcp.pop %v2289
        %v2294 = vmul.f32 %v2271, %v2290
        %v2295 = vmul.f32 %v2273, %v2291
        %v2296 = vmul.f32 %v2275, %v2292
        %v2297 = vmul.f32 %v2277, %v2293
        %v2298 = vpack.c.bf16 %v2294, %v2294
        %v2299 = vpack.c.bf16 %v2295, %v2295
        %v2300 = vpack.c.bf16 %v2296, %v2296
        %v2301 = vpack.c.bf16 %v2297, %v2297
        %vm2302 = vcmask 39936
        %v2304 = vsel %vm2302, %v2298, 0
        %v2306 = vsel %vm1236, 4294967295, 65535
        %v2307 = vsel %vm2042, %v2306, 0
        %v2309 = vand.u32 %v2085, %v2307
        %2311 = vmatprep.subr.bf16.mxu0 0
        %2312 = vmatpush1.bf16.msra.mxu0 %v2309
        %2313 = vmatprep.subr.bf16.mxu0 0
        %2314 = vmatpush1.bf16.msra.mxu0 0
        %2315 = vmatprep.subr.bf16.mxu0 0
        %2316 = vmatpush1.bf16.msra.mxu0 0
        %2317 = vmatprep.subr.bf16.mxu0 0
        %2318 = vmatpush1.bf16.msra.mxu0 0
        %2319 = vmatprep.subr.bf16.mxu0 0
        %2320 = vmatpush1.bf16.msra.mxu0 0
        %2321 = vmatprep.subr.bf16.mxu0 0
        %2322 = vmatpush1.bf16.msra.mxu0 0
        %2323 = vmatprep.subr.bf16.mxu0 0
        %2324 = vmatpush1.bf16.msra.mxu0 0
        %2325 = vmatprep.subr.bf16.mxu0 0
        %2326 = vmatpush1.bf16.msra.mxu0 0
        %2327 = vmatprep.subr.bf16.mxu0 0
        %2328 = vmatpush1.bf16.msra.mxu0 0
        %2329 = vmatprep.subr.bf16.mxu0 0
        %2330 = vmatpush1.bf16.msra.mxu0 0
        %2331 = vmatprep.subr.bf16.mxu0 0
        %2332 = vmatpush1.bf16.msra.mxu0 0
        %2333 = vmatprep.subr.bf16.mxu0 0
        %2334 = vmatpush1.bf16.msra.mxu0 0
        %2335 = vmatprep.subr.bf16.mxu0 0
        %2336 = vmatpush1.bf16.msra.mxu0 0
        %2337 = vmatprep.subr.bf16.mxu0 0
        %2338 = vmatpush1.bf16.msra.mxu0 0
        %2339 = vmatprep.subr.bf16.mxu0 0
        %2340 = vmatpush1.bf16.msra.mxu0 0
        %2341 = vmatprep.subr.bf16.mxu0 0
        %2342 = vmatpush1.bf16.msra.mxu0 0
        %2343 = vmatprep.mubr.bf16.mxu0 0
        %2344 = vmatmul.mubr.bf16.gmra.mrb[0].mxu0 %v2304
        %v2345 = vpop.f32.mrb[0].mxu0
        %v2346 = vadd.f32 0.0, %v2345
        %v2347 = vpop.f32.mrb[0].mxu0
        %v2348 = vpop.f32.mrb[0].mxu0
        %v2349 = vpop.f32.mrb[0].mxu0
        %2350 = vdwg.mxu0
        %v2352 = vsel %vm2302, %v2299, 0
        %v2355 = vand.u32 %v2086, %v2307
        %2357 = vmatprep.subr.bf16.mxu0 0
        %2358 = vmatpush1.bf16.msra.mxu0 %v2355
        %2359 = vmatprep.subr.bf16.mxu0 0
        %2360 = vmatpush1.bf16.msra.mxu0 0
        %2361 = vmatprep.subr.bf16.mxu0 0
        %2362 = vmatpush1.bf16.msra.mxu0 0
        %2363 = vmatprep.subr.bf16.mxu0 0
        %2364 = vmatpush1.bf16.msra.mxu0 0
        %2365 = vmatprep.subr.bf16.mxu0 0
        %2366 = vmatpush1.bf16.msra.mxu0 0
        %2367 = vmatprep.subr.bf16.mxu0 0
        %2368 = vmatpush1.bf16.msra.mxu0 0
        %2369 = vmatprep.subr.bf16.mxu0 0
        %2370 = vmatpush1.bf16.msra.mxu0 0
        %2371 = vmatprep.subr.bf16.mxu0 0
        %2372 = vmatpush1.bf16.msra.mxu0 0
        %2373 = vmatprep.subr.bf16.mxu0 0
        %2374 = vmatpush1.bf16.msra.mxu0 0
        %2375 = vmatprep.subr.bf16.mxu0 0
        %2376 = vmatpush1.bf16.msra.mxu0 0
        %2377 = vmatprep.subr.bf16.mxu0 0
        %2378 = vmatpush1.bf16.msra.mxu0 0
        %2379 = vmatprep.subr.bf16.mxu0 0
        %2380 = vmatpush1.bf16.msra.mxu0 0
        %2381 = vmatprep.subr.bf16.mxu0 0
        %2382 = vmatpush1.bf16.msra.mxu0 0
        %2383 = vmatprep.subr.bf16.mxu0 0
        %2384 = vmatpush1.bf16.msra.mxu0 0
        %2385 = vmatprep.subr.bf16.mxu0 0
        %2386 = vmatpush1.bf16.msra.mxu0 0
        %2387 = vmatprep.subr.bf16.mxu0 0
        %2388 = vmatpush1.bf16.msra.mxu0 0
        %2389 = vmatprep.mubr.bf16.mxu0 0
        %2390 = vmatmul.mubr.bf16.gmra.mrb[0].mxu0 %v2352
        %v2391 = vpop.f32.mrb[0].mxu0
        %v2392 = vadd.f32 0.0, %v2391
        %v2393 = vpop.f32.mrb[0].mxu0
        %v2394 = vpop.f32.mrb[0].mxu0
        %v2395 = vpop.f32.mrb[0].mxu0
        %2396 = vdwg.mxu0
        %v2398 = vsel %vm2302, %v2300, 0
        %v2401 = vand.u32 %v2087, %v2307
        %2403 = vmatprep.subr.bf16.mxu0 0
        %2404 = vmatpush1.bf16.msra.mxu0 %v2401
        %2405 = vmatprep.subr.bf16.mxu0 0
        %2406 = vmatpush1.bf16.msra.mxu0 0
        %2407 = vmatprep.subr.bf16.mxu0 0
        %2408 = vmatpush1.bf16.msra.mxu0 0
        %2409 = vmatprep.subr.bf16.mxu0 0
        %2410 = vmatpush1.bf16.msra.mxu0 0
        %2411 = vmatprep.subr.bf16.mxu0 0
        %2412 = vmatpush1.bf16.msra.mxu0 0
        %2413 = vmatprep.subr.bf16.mxu0 0
        %2414 = vmatpush1.bf16.msra.mxu0 0
        %2415 = vmatprep.subr.bf16.mxu0 0
        %2416 = vmatpush1.bf16.msra.mxu0 0
        %2417 = vmatprep.subr.bf16.mxu0 0
        %2418 = vmatpush1.bf16.msra.mxu0 0
        %2419 = vmatprep.subr.bf16.mxu0 0
        %2420 = vmatpush1.bf16.msra.mxu0 0
        %2421 = vmatprep.subr.bf16.mxu0 0
        %2422 = vmatpush1.bf16.msra.mxu0 0
        %2423 = vmatprep.subr.bf16.mxu0 0
        %2424 = vmatpush1.bf16.msra.mxu0 0
        %2425 = vmatprep.subr.bf16.mxu0 0
        %2426 = vmatpush1.bf16.msra.mxu0 0
        %2427 = vmatprep.subr.bf16.mxu0 0
        %2428 = vmatpush1.bf16.msra.mxu0 0
        %2429 = vmatprep.subr.bf16.mxu0 0
        %2430 = vmatpush1.bf16.msra.mxu0 0
        %2431 = vmatprep.subr.bf16.mxu0 0
        %2432 = vmatpush1.bf16.msra.mxu0 0
        %2433 = vmatprep.subr.bf16.mxu0 0
        %2434 = vmatpush1.bf16.msra.mxu0 0
        %2435 = vmatprep.mubr.bf16.mxu0 0
        %2436 = vmatmul.mubr.bf16.gmra.mrb[0].mxu0 %v2398
        %v2437 = vpop.f32.mrb[0].mxu0
        %v2438 = vadd.f32 0.0, %v2437
        %v2439 = vpop.f32.mrb[0].mxu0
        %v2440 = vpop.f32.mrb[0].mxu0
        %v2441 = vpop.f32.mrb[0].mxu0
        %2442 = vdwg.mxu0
        %v2444 = vsel %vm2302, %v2301, 0
        %v2447 = vand.u32 %v2088, %v2307
        %2449 = vmatprep.subr.bf16.mxu0 0
        %2450 = vmatpush1.bf16.msra.mxu0 %v2447
        %2451 = vmatprep.subr.bf16.mxu0 0
        %2452 = vmatpush1.bf16.msra.mxu0 0
        %2453 = vmatprep.subr.bf16.mxu0 0
        %2454 = vmatpush1.bf16.msra.mxu0 0
        %2455 = vmatprep.subr.bf16.mxu0 0
        %2456 = vmatpush1.bf16.msra.mxu0 0
        %2457 = vmatprep.subr.bf16.mxu0 0
        %2458 = vmatpush1.bf16.msra.mxu0 0
        %2459 = vmatprep.subr.bf16.mxu0 0
        %2460 = vmatpush1.bf16.msra.mxu0 0
        %2461 = vmatprep.subr.bf16.mxu0 0
        %2462 = vmatpush1.bf16.msra.mxu0 0
        %2463 = vmatprep.subr.bf16.mxu0 0
        %2464 = vmatpush1.bf16.msra.mxu0 0
        %2465 = vmatprep.subr.bf16.mxu0 0
        %2466 = vmatpush1.bf16.msra.mxu0 0
        %2467 = vmatprep.subr.bf16.mxu0 0
        %2468 = vmatpush1.bf16.msra.mxu0 0
        %2469 = vmatprep.subr.bf16.mxu0 0
        %2470 = vmatpush1.bf16.msra.mxu0 0
        %2471 = vmatprep.subr.bf16.mxu0 0
        %2472 = vmatpush1.bf16.msra.mxu0 0
        %2473 = vmatprep.subr.bf16.mxu0 0
        %2474 = vmatpush1.bf16.msra.mxu0 0
        %2475 = vmatprep.subr.bf16.mxu0 0
        %2476 = vmatpush1.bf16.msra.mxu0 0
        %2477 = vmatprep.subr.bf16.mxu0 0
        %2478 = vmatpush1.bf16.msra.mxu0 0
        %2479 = vmatprep.subr.bf16.mxu0 0
        %2480 = vmatpush1.bf16.msra.mxu0 0
        %2481 = vmatprep.mubr.bf16.mxu0 0
        %2482 = vmatmul.mubr.bf16.gmra.mrb[0].mxu0 %v2444
        %v2483 = vpop.f32.mrb[0].mxu0
        %v2484 = vadd.f32 0.0, %v2483
        %v2485 = vpop.f32.mrb[0].mxu0
        %v2486 = vpop.f32.mrb[0].mxu0
        %v2487 = vpop.f32.mrb[0].mxu0
        %2488 = vdwg.mxu0
        %v2491 = vrot.slane %v2438, 3
        %v2492 = vrot.slane %v2484, 3
        %vm2495 = vcmask 1044480
        %v2496 = vsel %vm2495, %v2346, %v2491
        %v2497 = vsel %vm2495, %v2392, %v2492
        %v2498 = vld [vmem:[%s799] sm:$0xff]
        %v2499 = vld [vmem:[%s799 + $0x8] sm:$0xff]
        %v2500 = vld [vmem:[%s799 + $0x10] sm:$0xff]
        %v2501 = vld [vmem:[%s799 + $0x18] sm:$0xff]
        %v2502 = vld [vmem:[%s799 + $0x20] sm:$0xff]
        %v2503 = vld [vmem:[%s799 + $0x28] sm:$0xff]
        %v2504 = vld [vmem:[%s799 + $0x30] sm:$0xff]
        %v2505 = vld [vmem:[%s799 + $0x38] sm:$0xff]
        %v2506 = vld [vmem:[%s799 + $0x40] sm:$0xff]
        %v2507 = vld [vmem:[%s799 + $0x48] sm:$0xff]
        %v2508 = vld [vmem:[%s799 + $0x50] sm:$0xff]
        %v2509 = vld [vmem:[%s799 + $0x58] sm:$0xff]
        %v2510 = vld [vmem:[%s799 + $0x60] sm:$0xff]
        %v2511 = vld [vmem:[%s799 + $0x68] sm:$0xff]
        %v2512 = vld [vmem:[%s799 + $0x70] sm:$0xff]
        %v2513 = vld [vmem:[%s799 + $0x78] sm:$0xff]
        %v2514 = vld [vmem:[%s799 + $0x80] sm:$0xff]
        %v2515 = vld [vmem:[%s799 + $0x88] sm:$0xff]
        %v2516 = vld [vmem:[%s799 + $0x90] sm:$0xff]
        %v2517 = vld [vmem:[%s799 + $0x98] sm:$0xff]
        %v2518 = vld [vmem:[%s799 + $0xa0] sm:$0xff]
        %v2519 = vld [vmem:[%s799 + $0xa8] sm:$0xff]
        %v2520 = vld [vmem:[%s799 + $0xb0] sm:$0xff]
        %v2521 = vld [vmem:[%s799 + $0xb8] sm:$0xff]
        %v2522 = vld [vmem:[%s799 + $0xc0] sm:$0xff]
        %v2523 = vld [vmem:[%s799 + $0xc8] sm:$0xff]
        %v2524 = vld [vmem:[%s799 + $0xd0] sm:$0xff]
        %v2525 = vld [vmem:[%s799 + $0xd8] sm:$0xff]
        %v2526 = vld [vmem:[%s799 + $0xe0] sm:$0xff]
        %v2527 = vld [vmem:[%s799 + $0xe8] sm:$0xff]
        %v2528 = vld [vmem:[%s799 + $0xf0] sm:$0xff]
        %v2529 = vld [vmem:[%s799 + $0xf8] sm:$0xff]
        %v2530 = vpack.c.bf16 %v2491, %v2496
        %v2531 = vpack.c.bf16 %v2492, %v2497
        %v2564 = vunpack.c.l.b16 %v2498
        %v2565 = vunpack.c.h.b16 %v2498
        %v2566 = vunpack.c.l.b16 %v2499
        %v2567 = vunpack.c.h.b16 %v2499
        %v2568 = vunpack.c.l.b16 %v2500
        %v2569 = vunpack.c.h.b16 %v2500
        %v2570 = vunpack.c.l.b16 %v2501
        %v2571 = vunpack.c.h.b16 %v2501
        %v2572 = vunpack.c.l.b16 %v2502
        %v2573 = vunpack.c.h.b16 %v2502
        %v2574 = vunpack.c.l.b16 %v2503
        %v2575 = vunpack.c.h.b16 %v2503
        %v2576 = vunpack.c.l.b16 %v2504
        %v2577 = vunpack.c.h.b16 %v2504
        %v2578 = vunpack.c.l.b16 %v2505
        %v2579 = vunpack.c.h.b16 %v2505
        %v2580 = vunpack.c.l.b16 %v2506
        %v2581 = vunpack.c.h.b16 %v2506
        %v2582 = vunpack.c.l.b16 %v2507
        %v2583 = vunpack.c.h.b16 %v2507
        %v2584 = vunpack.c.l.b16 %v2508
        %v2585 = vunpack.c.h.b16 %v2508
        %v2586 = vunpack.c.l.b16 %v2509
        %v2587 = vunpack.c.h.b16 %v2509
        %v2588 = vunpack.c.l.b16 %v2510
        %v2589 = vunpack.c.h.b16 %v2510
        %v2590 = vunpack.c.l.b16 %v2511
        %v2591 = vunpack.c.h.b16 %v2511
        %v2592 = vunpack.c.l.b16 %v2512
        %v2593 = vunpack.c.h.b16 %v2512
        %v2594 = vunpack.c.l.b16 %v2513
        %v2595 = vunpack.c.h.b16 %v2513
        %v2596 = vunpack.c.l.b16 %v2514
        %v2597 = vunpack.c.h.b16 %v2514
        %v2598 = vunpack.c.l.b16 %v2515
        %v2599 = vunpack.c.h.b16 %v2515
        %v2600 = vunpack.c.l.b16 %v2516
        %v2601 = vunpack.c.h.b16 %v2516
        %v2602 = vunpack.c.l.b16 %v2517
        %v2603 = vunpack.c.h.b16 %v2517
        %v2604 = vunpack.c.l.b16 %v2518
        %v2605 = vunpack.c.h.b16 %v2518
        %v2606 = vunpack.c.l.b16 %v2519
        %v2607 = vunpack.c.h.b16 %v2519
        %v2608 = vunpack.c.l.b16 %v2520
        %v2609 = vunpack.c.h.b16 %v2520
        %v2610 = vunpack.c.l.b16 %v2521
        %v2611 = vunpack.c.h.b16 %v2521
        %v2612 = vunpack.c.l.b16 %v2522
        %v2613 = vunpack.c.h.b16 %v2522
        %v2614 = vunpack.c.l.b16 %v2523
        %v2615 = vunpack.c.h.b16 %v2523
        %v2616 = vunpack.c.l.b16 %v2524
        %v2617 = vunpack.c.h.b16 %v2524
        %v2618 = vunpack.c.l.b16 %v2525
        %v2619 = vunpack.c.h.b16 %v2525
        %v2620 = vunpack.c.l.b16 %v2526
        %v2621 = vunpack.c.h.b16 %v2526
        %v2622 = vunpack.c.l.b16 %v2527
        %v2623 = vunpack.c.h.b16 %v2527
        %v2624 = vunpack.c.l.b16 %v2528
        %v2625 = vunpack.c.h.b16 %v2528
        %v2626 = vunpack.c.l.b16 %v2529
        %v2627 = vunpack.c.h.b16 %v2529
        %v2628 = vpack.c.b16 %v2566, %v2564
        %v2629 = vpack.c.b16 %v2567, %v2565
        %v2630 = vpack.c.b16 %v2570, %v2568
        %v2631 = vpack.c.b16 %v2571, %v2569
        %v2632 = vpack.c.b16 %v2574, %v2572
        %v2633 = vpack.c.b16 %v2575, %v2573
        %v2634 = vpack.c.b16 %v2578, %v2576
        %v2635 = vpack.c.b16 %v2579, %v2577
        %v2636 = vpack.c.b16 %v2582, %v2580
        %v2637 = vpack.c.b16 %v2583, %v2581
        %v2638 = vpack.c.b16 %v2586, %v2584
        %v2639 = vpack.c.b16 %v2587, %v2585
        %v2640 = vpack.c.b16 %v2590, %v2588
        %v2641 = vpack.c.b16 %v2591, %v2589
        %v2642 = vpack.c.b16 %v2594, %v2592
        %v2643 = vpack.c.b16 %v2595, %v2593
        %v2644 = vpack.c.b16 %v2598, %v2596
        %v2645 = vpack.c.b16 %v2599, %v2597
        %v2646 = vpack.c.b16 %v2602, %v2600
        %v2647 = vpack.c.b16 %v2603, %v2601
        %v2648 = vpack.c.b16 %v2606, %v2604
        %v2649 = vpack.c.b16 %v2607, %v2605
        %v2650 = vpack.c.b16 %v2610, %v2608
        %v2651 = vpack.c.b16 %v2611, %v2609
        %v2652 = vpack.c.b16 %v2614, %v2612
        %v2653 = vpack.c.b16 %v2615, %v2613
        %v2654 = vpack.c.b16 %v2618, %v2616
        %v2655 = vpack.c.b16 %v2619, %v2617
        %v2656 = vpack.c.b16 %v2622, %v2620
        %v2657 = vpack.c.b16 %v2623, %v2621
        %v2658 = vpack.c.b16 %v2626, %v2624
        %v2659 = vpack.c.b16 %v2627, %v2625
        %2692 = vmatprep.subr.bf16.mxu0 %v2629
        %2693 = vmatpush1.bf16.msra.mxu0 %v2628
        %2694 = vmatprep.subr.bf16.mxu0 %v2631
        %2695 = vmatpush1.bf16.msra.mxu0 %v2630
        %2696 = vmatprep.subr.bf16.mxu0 %v2633
        %2697 = vmatpush1.bf16.msra.mxu0 %v2632
        %2698 = vmatprep.subr.bf16.mxu0 %v2635
        %2699 = vmatpush1.bf16.msra.mxu0 %v2634
        %2700 = vmatprep.subr.bf16.mxu0 %v2637
        %2701 = vmatpush1.bf16.msra.mxu0 %v2636
        %2702 = vmatprep.subr.bf16.mxu0 %v2639
        %2703 = vmatpush1.bf16.msra.mxu0 %v2638
        %2704 = vmatprep.subr.bf16.mxu0 %v2641
        %2705 = vmatpush1.bf16.msra.mxu0 %v2640
        %2706 = vmatprep.subr.bf16.mxu0 %v2643
        %2707 = vmatpush1.bf16.msra.mxu0 %v2642
        %2708 = vmatprep.subr.bf16.mxu0 %v2645
        %2709 = vmatpush1.bf16.msra.mxu0 %v2644
        %2710 = vmatprep.subr.bf16.mxu0 %v2647
        %2711 = vmatpush1.bf16.msra.mxu0 %v2646
        %2712 = vmatprep.subr.bf16.mxu0 %v2649
        %2713 = vmatpush1.bf16.msra.mxu0 %v2648
        %2714 = vmatprep.subr.bf16.mxu0 %v2651
        %2715 = vmatpush1.bf16.msra.mxu0 %v2650
        %2716 = vmatprep.subr.bf16.mxu0 %v2653
        %2717 = vmatpush1.bf16.msra.mxu0 %v2652
        %2718 = vmatprep.subr.bf16.mxu0 %v2655
        %2719 = vmatpush1.bf16.msra.mxu0 %v2654
        %2720 = vmatprep.subr.bf16.mxu0 %v2657
        %2721 = vmatpush1.bf16.msra.mxu0 %v2656
        %2722 = vmatprep.subr.bf16.mxu0 %v2659
        %2723 = vmatpush1.bf16.msra.mxu0 %v2658
        %2724 = vmatprep.mubr.bf16.mxu0 %v2531
        %2725 = vmatmul.mubr.bf16.gmra.mrb[0].mxu0 %v2530
        %v2726 = vpop.f32.mrb[0].mxu0
        %v2727 = vadd.f32 0.0, %v2726
        %v2728 = vpop.f32.mrb[0].mxu0
        %v2729 = vadd.f32 0.0, %v2728
        %v2730 = vpop.f32.mrb[0].mxu0
        %v2731 = vadd.f32 0.0, %v2730
        %v2732 = vpop.f32.mrb[0].mxu0
        %v2733 = vadd.f32 0.0, %v2732
        %2734 = vdwg.mxu0
        %v2735 = vadd.f32 %v1227, %v2727
        %v2736 = vadd.f32 %v1228, %v2729
        %v2737 = vadd.f32 %v1229, %v2731
        %v2738 = vadd.f32 %v1230, %v2733
        %v2739 = vld [vmem:[%s808] sm:$0x3]
        %v2741 = vlaneseq
        %v2742 = vshrl.u32 %v2741, 7
        %v2743 = vsub.s32 0, %v2742
        %v2744 = vrot.slane %v2739, %v2743
        %v2745 = vlaneseq
        %v2746 = vshrl.u32 %v2745, 7
        %v2747 = vsub.s32 1, %v2746
        %v2748 = vrot.slane %v2739, %v2747
        %v2751 = vadd.f32 %v2735, %v2744
        %v2752 = vadd.f32 %v2736, %v2748
        %v2753 = vadd.f32 %v2737, %v2744
        %v2754 = vadd.f32 %v2738, %v2748
        %v2755 = vld [vmem:[%s817] sm:$0x3]
        %v2756 = vld [vmem:[%s826] sm:$0x3]
        %v2757 = vadd.f32 %v2751, %v2752
        %2758 = vadd.xlane.f32.xlu0 %v2757
        %v2759 = vpop.xlane.xlu0 %2758
        %v2760 = vsel %vm1236, %v2753, 0.0
        %v2761 = vsel %vm1236, %v2754, 0.0
        %v2762 = vadd.f32 %v2760, %v2761
        %2763 = vadd.xlane.f32.xlu0 %v2762
        %v2764 = vpop.xlane.xlu0 %2763
        %v2765 = vmul.f32 %v2759, %v1242
        %v2766 = vmul.f32 %v2764, %v1242
        %v2767 = vsub.f32 %v2751, %v2765
        %v2768 = vsub.f32 %v2752, %v2765
        %v2769 = vsub.f32 %v2753, %v2766
        %v2770 = vsub.f32 %v2754, %v2766
        %v2771 = vmul.f32 %v2767, %v2767
        %v2772 = vmul.f32 %v2768, %v2768
        %v2773 = vmul.f32 %v2769, %v2769
        %v2774 = vmul.f32 %v2770, %v2770
        %v2775 = vadd.f32 %v2771, %v2772
        %2776 = vadd.xlane.f32.xlu0 %v2775
        %v2777 = vpop.xlane.xlu0 %2776
        %v2778 = vsel %vm1236, %v2773, 0.0
        %v2779 = vsel %vm1236, %v2774, 0.0
        %v2780 = vadd.f32 %v2778, %v2779
        %2781 = vadd.xlane.f32.xlu0 %v2780
        %v2782 = vpop.xlane.xlu0 %2781
        %v2783 = vmul.f32 %v2777, %v1242
        %v2784 = vmul.f32 %v2782, %v1242
        %v2785 = vadd.f32 %v2783, 1e-06
        %v2786 = vadd.f32 %v2784, 1e-06
        %v2787 = vrsqrt.pop %v2785
        %v2788 = vrsqrt.pop %v2786
        %v2789 = vmul.f32 %v2767, %v2787
        %v2790 = vmul.f32 %v2768, %v2787
        %v2791 = vmul.f32 %v2769, %v2788
        %v2792 = vmul.f32 %v2770, %v2788
        %v2794 = vlaneseq
        %v2795 = vshrl.u32 %v2794, 7
        %v2796 = vsub.s32 0, %v2795
        %v2797 = vrot.slane %v2755, %v2796
        %v2798 = vlaneseq
        %v2799 = vshrl.u32 %v2798, 7
        %v2800 = vsub.s32 1, %v2799
        %v2801 = vrot.slane %v2755, %v2800
        %v2804 = vmul.f32 %v2789, %v2797
        %v2805 = vmul.f32 %v2790, %v2801
        %v2806 = vmul.f32 %v2791, %v2797
        %v2807 = vmul.f32 %v2792, %v2801
        %v2809 = vlaneseq
        %v2810 = vshrl.u32 %v2809, 7
        %v2811 = vsub.s32 0, %v2810
        %v2812 = vrot.slane %v2756, %v2811
        %v2813 = vlaneseq
        %v2814 = vshrl.u32 %v2813, 7
        %v2815 = vsub.s32 1, %v2814
        %v2816 = vrot.slane %v2756, %v2815
        %v2819 = vadd.f32 %v2804, %v2812
        %v2820 = vadd.f32 %v2805, %v2816
        %v2821 = vadd.f32 %v2806, %v2812
        %v2822 = vadd.f32 %v2807, %v2816
        %v2823 = vld [vmem:[%s961] sm:$0xff]
        %v2824 = vld [vmem:[%s961 + $0x8] sm:$0xff]
        %v2825 = vld [vmem:[%s961 + $0x10] sm:$0xff]
        %v2826 = vld [vmem:[%s961 + $0x18] sm:$0xff]
        %v2827 = vld [vmem:[%s961 + $0x20] sm:$0xff]
        %v2828 = vld [vmem:[%s961 + $0x28] sm:$0xff]
        %v2829 = vld [vmem:[%s961 + $0x30] sm:$0xff]
        %v2830 = vld [vmem:[%s961 + $0x38] sm:$0xff]
        %v2831 = vld [vmem:[%s961 + $0x40] sm:$0xff]
        %v2832 = vld [vmem:[%s961 + $0x48] sm:$0xff]
        %v2833 = vld [vmem:[%s961 + $0x50] sm:$0xff]
        %v2834 = vld [vmem:[%s961 + $0x58] sm:$0xff]
        %v2835 = vld [vmem:[%s961 + $0x60] sm:$0xff]
        %v2836 = vld [vmem:[%s961 + $0x68] sm:$0xff]
        %v2837 = vld [vmem:[%s961 + $0x70] sm:$0xff]
        %v2838 = vld [vmem:[%s961 + $0x78] sm:$0xff]
        %v2839 = vld [vmem:[%s961 + $0x80] sm:$0xff]
        %v2840 = vld [vmem:[%s961 + $0x88] sm:$0xff]
        %v2841 = vld [vmem:[%s961 + $0x90] sm:$0xff]
        %v2842 = vld [vmem:[%s961 + $0x98] sm:$0xff]
        %v2843 = vld [vmem:[%s961 + $0xa0] sm:$0xff]
        %v2844 = vld [vmem:[%s961 + $0xa8] sm:$0xff]
        %v2845 = vld [vmem:[%s961 + $0xb0] sm:$0xff]
        %v2846 = vld [vmem:[%s961 + $0xb8] sm:$0xff]
        %v2847 = vld [vmem:[%s961 + $0xc0] sm:$0xff]
        %v2848 = vld [vmem:[%s961 + $0xc8] sm:$0xff]
        %v2849 = vld [vmem:[%s961 + $0xd0] sm:$0xff]
        %v2850 = vld [vmem:[%s961 + $0xd8] sm:$0xff]
        %v2851 = vld [vmem:[%s961 + $0xe0] sm:$0xff]
        %v2852 = vld [vmem:[%s961 + $0xe8] sm:$0xff]
        %v2853 = vld [vmem:[%s961 + $0xf0] sm:$0xff]
        %v2854 = vld [vmem:[%s961 + $0xf8] sm:$0xff]
        %v2855 = vld [vmem:[%s961 + $0x100] sm:$0xff]
        %v2856 = vld [vmem:[%s961 + $0x108] sm:$0xff]
        %v2857 = vld [vmem:[%s961 + $0x110] sm:$0xff]
        %v2858 = vld [vmem:[%s961 + $0x118] sm:$0xff]
        %v2859 = vld [vmem:[%s961 + $0x120] sm:$0xff]
        %v2860 = vld [vmem:[%s961 + $0x128] sm:$0xff]
        %v2861 = vld [vmem:[%s961 + $0x130] sm:$0xff]
        %v2862 = vld [vmem:[%s961 + $0x138] sm:$0xff]
        %v2863 = vld [vmem:[%s961 + $0x140] sm:$0xff]
        %v2864 = vld [vmem:[%s961 + $0x148] sm:$0xff]
        %v2865 = vld [vmem:[%s961 + $0x150] sm:$0xff]
        %v2866 = vld [vmem:[%s961 + $0x158] sm:$0xff]
        %v2867 = vld [vmem:[%s961 + $0x160] sm:$0xff]
        %v2868 = vld [vmem:[%s961 + $0x168] sm:$0xff]
        %v2869 = vld [vmem:[%s961 + $0x170] sm:$0xff]
        %v2870 = vld [vmem:[%s961 + $0x178] sm:$0xff]
        %v2871 = vld [vmem:[%s961 + $0x180] sm:$0xff]
        %v2872 = vld [vmem:[%s961 + $0x188] sm:$0xff]
        %v2873 = vld [vmem:[%s961 + $0x190] sm:$0xff]
        %v2874 = vld [vmem:[%s961 + $0x198] sm:$0xff]
        %v2875 = vld [vmem:[%s961 + $0x1a0] sm:$0xff]
        %v2876 = vld [vmem:[%s961 + $0x1a8] sm:$0xff]
        %v2877 = vld [vmem:[%s961 + $0x1b0] sm:$0xff]
        %v2878 = vld [vmem:[%s961 + $0x1b8] sm:$0xff]
        %v2879 = vld [vmem:[%s961 + $0x1c0] sm:$0xff]
        %v2880 = vld [vmem:[%s961 + $0x1c8] sm:$0xff]
        %v2881 = vld [vmem:[%s961 + $0x1d0] sm:$0xff]
        %v2882 = vld [vmem:[%s961 + $0x1d8] sm:$0xff]
        %v2883 = vld [vmem:[%s961 + $0x1e0] sm:$0xff]
        %v2884 = vld [vmem:[%s961 + $0x1e8] sm:$0xff]
        %v2885 = vld [vmem:[%s961 + $0x1f0] sm:$0xff]
        %v2886 = vld [vmem:[%s961 + $0x1f8] sm:$0xff]
        %v2887 = vpack.c.bf16 %v2821, %v2819
        %v2888 = vpack.c.bf16 %v2822, %v2820
        %v2889 = vld [vmem:[%s835] sm:$0xf]
        %v2891 = vlaneseq
        %v2892 = vshrl.u32 %v2891, 7
        %v2893 = vsub.s32 0, %v2892
        %v2894 = vrot.slane %v2889, %v2893
        %v2895 = vlaneseq
        %v2896 = vshrl.u32 %v2895, 7
        %v2897 = vsub.s32 1, %v2896
        %v2898 = vrot.slane %v2889, %v2897
        %v2899 = vlaneseq
        %v2900 = vshrl.u32 %v2899, 7
        %v2901 = vsub.s32 2, %v2900
        %v2902 = vrot.slane %v2889, %v2901
        %v2903 = vlaneseq
        %v2904 = vshrl.u32 %v2903, 7
        %v2905 = vsub.s32 3, %v2904
        %v2906 = vrot.slane %v2889, %v2905
        %v2975 = vunpack.c.l.b16 %v2823
        %v2976 = vunpack.c.h.b16 %v2823
        %v2977 = vunpack.c.l.b16 %v2824
        %v2978 = vunpack.c.h.b16 %v2824
        %v2979 = vunpack.c.l.b16 %v2825
        %v2980 = vunpack.c.h.b16 %v2825
        %v2981 = vunpack.c.l.b16 %v2826
        %v2982 = vunpack.c.h.b16 %v2826
        %v2983 = vunpack.c.l.b16 %v2827
        %v2984 = vunpack.c.h.b16 %v2827
        %v2985 = vunpack.c.l.b16 %v2828
        %v2986 = vunpack.c.h.b16 %v2828
        %v2987 = vunpack.c.l.b16 %v2829
        %v2988 = vunpack.c.h.b16 %v2829
        %v2989 = vunpack.c.l.b16 %v2830
        %v2990 = vunpack.c.h.b16 %v2830
        %v2991 = vunpack.c.l.b16 %v2831
        %v2992 = vunpack.c.h.b16 %v2831
        %v2993 = vunpack.c.l.b16 %v2832
        %v2994 = vunpack.c.h.b16 %v2832
        %v2995 = vunpack.c.l.b16 %v2833
        %v2996 = vunpack.c.h.b16 %v2833
        %v2997 = vunpack.c.l.b16 %v2834
        %v2998 = vunpack.c.h.b16 %v2834
        %v2999 = vunpack.c.l.b16 %v2835
        %v3000 = vunpack.c.h.b16 %v2835
        %v3001 = vunpack.c.l.b16 %v2836
        %v3002 = vunpack.c.h.b16 %v2836
        %v3003 = vunpack.c.l.b16 %v2837
        %v3004 = vunpack.c.h.b16 %v2837
        %v3005 = vunpack.c.l.b16 %v2838
        %v3006 = vunpack.c.h.b16 %v2838
        %v3007 = vunpack.c.l.b16 %v2839
        %v3008 = vunpack.c.h.b16 %v2839
        %v3009 = vunpack.c.l.b16 %v2840
        %v3010 = vunpack.c.h.b16 %v2840
        %v3011 = vunpack.c.l.b16 %v2841
        %v3012 = vunpack.c.h.b16 %v2841
        %v3013 = vunpack.c.l.b16 %v2842
        %v3014 = vunpack.c.h.b16 %v2842
        %v3015 = vunpack.c.l.b16 %v2843
        %v3016 = vunpack.c.h.b16 %v2843
        %v3017 = vunpack.c.l.b16 %v2844
        %v3018 = vunpack.c.h.b16 %v2844
        %v3019 = vunpack.c.l.b16 %v2845
        %v3020 = vunpack.c.h.b16 %v2845
        %v3021 = vunpack.c.l.b16 %v2846
        %v3022 = vunpack.c.h.b16 %v2846
        %v3023 = vunpack.c.l.b16 %v2847
        %v3024 = vunpack.c.h.b16 %v2847
        %v3025 = vunpack.c.l.b16 %v2848
        %v3026 = vunpack.c.h.b16 %v2848
        %v3027 = vunpack.c.l.b16 %v2849
        %v3028 = vunpack.c.h.b16 %v2849
        %v3029 = vunpack.c.l.b16 %v2850
        %v3030 = vunpack.c.h.b16 %v2850
        %v3031 = vunpack.c.l.b16 %v2851
        %v3032 = vunpack.c.h.b16 %v2851
        %v3033 = vunpack.c.l.b16 %v2852
        %v3034 = vunpack.c.h.b16 %v2852
        %v3035 = vunpack.c.l.b16 %v2853
        %v3036 = vunpack.c.h.b16 %v2853
        %v3037 = vunpack.c.l.b16 %v2854
        %v3038 = vunpack.c.h.b16 %v2854
        %v3039 = vunpack.c.l.b16 %v2855
        %v3040 = vunpack.c.h.b16 %v2855
        %v3041 = vunpack.c.l.b16 %v2856
        %v3042 = vunpack.c.h.b16 %v2856
        %v3043 = vunpack.c.l.b16 %v2857
        %v3044 = vunpack.c.h.b16 %v2857
        %v3045 = vunpack.c.l.b16 %v2858
        %v3046 = vunpack.c.h.b16 %v2858
        %v3047 = vunpack.c.l.b16 %v2859
        %v3048 = vunpack.c.h.b16 %v2859
        %v3049 = vunpack.c.l.b16 %v2860
        %v3050 = vunpack.c.h.b16 %v2860
        %v3051 = vunpack.c.l.b16 %v2861
        %v3052 = vunpack.c.h.b16 %v2861
        %v3053 = vunpack.c.l.b16 %v2862
        %v3054 = vunpack.c.h.b16 %v2862
        %v3055 = vunpack.c.l.b16 %v2863
        %v3056 = vunpack.c.h.b16 %v2863
        %v3057 = vunpack.c.l.b16 %v2864
        %v3058 = vunpack.c.h.b16 %v2864
        %v3059 = vunpack.c.l.b16 %v2865
        %v3060 = vunpack.c.h.b16 %v2865
        %v3061 = vunpack.c.l.b16 %v2866
        %v3062 = vunpack.c.h.b16 %v2866
        %v3063 = vunpack.c.l.b16 %v2867
        %v3064 = vunpack.c.h.b16 %v2867
        %v3065 = vunpack.c.l.b16 %v2868
        %v3066 = vunpack.c.h.b16 %v2868
        %v3067 = vunpack.c.l.b16 %v2869
        %v3068 = vunpack.c.h.b16 %v2869
        %v3069 = vunpack.c.l.b16 %v2870
        %v3070 = vunpack.c.h.b16 %v2870
        %v3071 = vunpack.c.l.b16 %v2871
        %v3072 = vunpack.c.h.b16 %v2871
        %v3073 = vunpack.c.l.b16 %v2872
        %v3074 = vunpack.c.h.b16 %v2872
        %v3075 = vunpack.c.l.b16 %v2873
        %v3076 = vunpack.c.h.b16 %v2873
        %v3077 = vunpack.c.l.b16 %v2874
        %v3078 = vunpack.c.h.b16 %v2874
        %v3079 = vunpack.c.l.b16 %v2875
        %v3080 = vunpack.c.h.b16 %v2875
        %v3081 = vunpack.c.l.b16 %v2876
        %v3082 = vunpack.c.h.b16 %v2876
        %v3083 = vunpack.c.l.b16 %v2877
        %v3084 = vunpack.c.h.b16 %v2877
        %v3085 = vunpack.c.l.b16 %v2878
        %v3086 = vunpack.c.h.b16 %v2878
        %v3087 = vunpack.c.l.b16 %v2879
        %v3088 = vunpack.c.h.b16 %v2879
        %v3089 = vunpack.c.l.b16 %v2880
        %v3090 = vunpack.c.h.b16 %v2880
        %v3091 = vunpack.c.l.b16 %v2881
        %v3092 = vunpack.c.h.b16 %v2881
        %v3093 = vunpack.c.l.b16 %v2882
        %v3094 = vunpack.c.h.b16 %v2882
        %v3095 = vunpack.c.l.b16 %v2883
        %v3096 = vunpack.c.h.b16 %v2883
        %v3097 = vunpack.c.l.b16 %v2884
        %v3098 = vunpack.c.h.b16 %v2884
        %v3099 = vunpack.c.l.b16 %v2885
        %v3100 = vunpack.c.h.b16 %v2885
        %v3101 = vunpack.c.l.b16 %v2886
        %v3102 = vunpack.c.h.b16 %v2886
        %v3103 = vpack.c.b16 %v2979, %v2975
        %v3104 = vpack.c.b16 %v2980, %v2976
        %v3105 = vpack.c.b16 %v2981, %v2977
        %v3106 = vpack.c.b16 %v2982, %v2978
        %v3107 = vpack.c.b16 %v2987, %v2983
        %v3108 = vpack.c.b16 %v2988, %v2984
        %v3109 = vpack.c.b16 %v2989, %v2985
        %v3110 = vpack.c.b16 %v2990, %v2986
        %v3111 = vpack.c.b16 %v2995, %v2991
        %v3112 = vpack.c.b16 %v2996, %v2992
        %v3113 = vpack.c.b16 %v2997, %v2993
        %v3114 = vpack.c.b16 %v2998, %v2994
        %v3115 = vpack.c.b16 %v3003, %v2999
        %v3116 = vpack.c.b16 %v3004, %v3000
        %v3117 = vpack.c.b16 %v3005, %v3001
        %v3118 = vpack.c.b16 %v3006, %v3002
        %v3119 = vpack.c.b16 %v3011, %v3007
        %v3120 = vpack.c.b16 %v3012, %v3008
        %v3121 = vpack.c.b16 %v3013, %v3009
        %v3122 = vpack.c.b16 %v3014, %v3010
        %v3123 = vpack.c.b16 %v3019, %v3015
        %v3124 = vpack.c.b16 %v3020, %v3016
        %v3125 = vpack.c.b16 %v3021, %v3017
        %v3126 = vpack.c.b16 %v3022, %v3018
        %v3127 = vpack.c.b16 %v3027, %v3023
        %v3128 = vpack.c.b16 %v3028, %v3024
        %v3129 = vpack.c.b16 %v3029, %v3025
        %v3130 = vpack.c.b16 %v3030, %v3026
        %v3131 = vpack.c.b16 %v3035, %v3031
        %v3132 = vpack.c.b16 %v3036, %v3032
        %v3133 = vpack.c.b16 %v3037, %v3033
        %v3134 = vpack.c.b16 %v3038, %v3034
        %v3135 = vpack.c.b16 %v3043, %v3039
        %v3136 = vpack.c.b16 %v3044, %v3040
        %v3137 = vpack.c.b16 %v3045, %v3041
        %v3138 = vpack.c.b16 %v3046, %v3042
        %v3139 = vpack.c.b16 %v3051, %v3047
        %v3140 = vpack.c.b16 %v3052, %v3048
        %v3141 = vpack.c.b16 %v3053, %v3049
        %v3142 = vpack.c.b16 %v3054, %v3050
        %v3143 = vpack.c.b16 %v3059, %v3055
        %v3144 = vpack.c.b16 %v3060, %v3056
        %v3145 = vpack.c.b16 %v3061, %v3057
        %v3146 = vpack.c.b16 %v3062, %v3058
        %v3147 = vpack.c.b16 %v3067, %v3063
        %v3148 = vpack.c.b16 %v3068, %v3064
        %v3149 = vpack.c.b16 %v3069, %v3065
        %v3150 = vpack.c.b16 %v3070, %v3066
        %v3151 = vpack.c.b16 %v3075, %v3071
        %v3152 = vpack.c.b16 %v3076, %v3072
        %v3153 = vpack.c.b16 %v3077, %v3073
        %v3154 = vpack.c.b16 %v3078, %v3074
        %v3155 = vpack.c.b16 %v3083, %v3079
        %v3156 = vpack.c.b16 %v3084, %v3080
        %v3157 = vpack.c.b16 %v3085, %v3081
        %v3158 = vpack.c.b16 %v3086, %v3082
        %v3159 = vpack.c.b16 %v3091, %v3087
        %v3160 = vpack.c.b16 %v3092, %v3088
        %v3161 = vpack.c.b16 %v3093, %v3089
        %v3162 = vpack.c.b16 %v3094, %v3090
        %v3163 = vpack.c.b16 %v3099, %v3095
        %v3164 = vpack.c.b16 %v3100, %v3096
        %v3165 = vpack.c.b16 %v3101, %v3097
        %v3166 = vpack.c.b16 %v3102, %v3098
        %3231 = vmatprep.subr.bf16.mxu0 %v3104
        %3232 = vmatpush1.bf16.msra.mxu0 %v3103
        %3233 = vmatprep.subr.bf16.mxu0 %v3108
        %3234 = vmatpush1.bf16.msra.mxu0 %v3107
        %3235 = vmatprep.subr.bf16.mxu0 %v3112
        %3236 = vmatpush1.bf16.msra.mxu0 %v3111
        %3237 = vmatprep.subr.bf16.mxu0 %v3116
        %3238 = vmatpush1.bf16.msra.mxu0 %v3115
        %3239 = vmatprep.subr.bf16.mxu0 %v3120
        %3240 = vmatpush1.bf16.msra.mxu0 %v3119
        %3241 = vmatprep.subr.bf16.mxu0 %v3124
        %3242 = vmatpush1.bf16.msra.mxu0 %v3123
        %3243 = vmatprep.subr.bf16.mxu0 %v3128
        %3244 = vmatpush1.bf16.msra.mxu0 %v3127
        %3245 = vmatprep.subr.bf16.mxu0 %v3132
        %3246 = vmatpush1.bf16.msra.mxu0 %v3131
        %3247 = vmatprep.subr.bf16.mxu0 %v3136
        %3248 = vmatpush1.bf16.msra.mxu0 %v3135
        %3249 = vmatprep.subr.bf16.mxu0 %v3140
        %3250 = vmatpush1.bf16.msra.mxu0 %v3139
        %3251 = vmatprep.subr.bf16.mxu0 %v3144
        %3252 = vmatpush1.bf16.msra.mxu0 %v3143
        %3253 = vmatprep.subr.bf16.mxu0 %v3148
        %3254 = vmatpush1.bf16.msra.mxu0 %v3147
        %3255 = vmatprep.subr.bf16.mxu0 %v3152
        %3256 = vmatpush1.bf16.msra.mxu0 %v3151
        %3257 = vmatprep.subr.bf16.mxu0 %v3156
        %3258 = vmatpush1.bf16.msra.mxu0 %v3155
        %3259 = vmatprep.subr.bf16.mxu0 %v3160
        %3260 = vmatpush1.bf16.msra.mxu0 %v3159
        %3261 = vmatprep.subr.bf16.mxu0 %v3164
        %3262 = vmatpush1.bf16.msra.mxu0 %v3163
        %3263 = vmatprep.mubr.bf16.mxu0 %v2888
        %3264 = vmatmul.mubr.bf16.gmra.mrb[0].mxu0 %v2887
        %v3265 = vpop.f32.mrb[0].mxu0
        %v3266 = vadd.f32 %v2894, %v3265
        %v3267 = vpop.f32.mrb[0].mxu0
        %v3268 = vadd.f32 %v2898, %v3267
        %v3269 = vpop.f32.mrb[0].mxu0
        %v3270 = vadd.f32 %v2894, %v3269
        %v3271 = vpop.f32.mrb[0].mxu0
        %v3272 = vadd.f32 %v2898, %v3271
        %3273 = vdwg.mxu0
        %3274 = vmatprep.subr.bf16.mxu0 %v3106
        %3275 = vmatpush1.bf16.msra.mxu0 %v3105
        %3276 = vmatprep.subr.bf16.mxu0 %v3110
        %3277 = vmatpush1.bf16.msra.mxu0 %v3109
        %3278 = vmatprep.subr.bf16.mxu0 %v3114
        %3279 = vmatpush1.bf16.msra.mxu0 %v3113
        %3280 = vmatprep.subr.bf16.mxu0 %v3118
        %3281 = vmatpush1.bf16.msra.mxu0 %v3117
        %3282 = vmatprep.subr.bf16.mxu0 %v3122
        %3283 = vmatpush1.bf16.msra.mxu0 %v3121
        %3284 = vmatprep.subr.bf16.mxu0 %v3126
        %3285 = vmatpush1.bf16.msra.mxu0 %v3125
        %3286 = vmatprep.subr.bf16.mxu0 %v3130
        %3287 = vmatpush1.bf16.msra.mxu0 %v3129
        %3288 = vmatprep.subr.bf16.mxu0 %v3134
        %3289 = vmatpush1.bf16.msra.mxu0 %v3133
        %3290 = vmatprep.subr.bf16.mxu0 %v3138
        %3291 = vmatpush1.bf16.msra.mxu0 %v3137
        %3292 = vmatprep.subr.bf16.mxu0 %v3142
        %3293 = vmatpush1.bf16.msra.mxu0 %v3141
        %3294 = vmatprep.subr.bf16.mxu0 %v3146
        %3295 = vmatpush1.bf16.msra.mxu0 %v3145
        %3296 = vmatprep.subr.bf16.mxu0 %v3150
        %3297 = vmatpush1.bf16.msra.mxu0 %v3149
        %3298 = vmatprep.subr.bf16.mxu0 %v3154
        %3299 = vmatpush1.bf16.msra.mxu0 %v3153
        %3300 = vmatprep.subr.bf16.mxu0 %v3158
        %3301 = vmatpush1.bf16.msra.mxu0 %v3157
        %3302 = vmatprep.subr.bf16.mxu0 %v3162
        %3303 = vmatpush1.bf16.msra.mxu0 %v3161
        %3304 = vmatprep.subr.bf16.mxu0 %v3166
        %3305 = vmatpush1.bf16.msra.mxu0 %v3165
        %3306 = vmatprep.mubr.bf16.mxu0 %v2888
        %3307 = vmatmul.mubr.bf16.gmra.mrb[0].mxu0 %v2887
        %v3308 = vpop.f32.mrb[0].mxu0
        %v3309 = vadd.f32 %v2902, %v3308
        %v3310 = vpop.f32.mrb[0].mxu0
        %v3311 = vadd.f32 %v2906, %v3310
        %v3312 = vpop.f32.mrb[0].mxu0
        %v3313 = vadd.f32 %v2902, %v3312
        %v3314 = vpop.f32.mrb[0].mxu0
        %v3315 = vadd.f32 %v2906, %v3314
        %3316 = vdwg.mxu0
        %v3317 = vmul.f32 %v3266, 0.5
        %v3318 = vmul.f32 %v3268, 0.5
        %v3319 = vmul.f32 %v3309, 0.5
        %v3320 = vmul.f32 %v3311, 0.5
        %v3321 = vmul.f32 %v3270, 0.5
        %v3322 = vmul.f32 %v3272, 0.5
        %v3323 = vmul.f32 %v3313, 0.5
        %v3324 = vmul.f32 %v3315, 0.5
        %v3325 = vmul.f32 %v3266, 0.044715
        %v3326 = vmul.f32 %v3268, 0.044715
        %v3327 = vmul.f32 %v3309, 0.044715
        %v3328 = vmul.f32 %v3311, 0.044715
        %v3329 = vmul.f32 %v3270, 0.044715
        %v3330 = vmul.f32 %v3272, 0.044715
        %v3331 = vmul.f32 %v3313, 0.044715
        %v3332 = vmul.f32 %v3315, 0.044715
        %v3333 = vmul.f32 %v3325, %v3266
        %v3334 = vmul.f32 %v3326, %v3268
        %v3335 = vmul.f32 %v3327, %v3309
        %v3336 = vmul.f32 %v3328, %v3311
        %v3337 = vmul.f32 %v3329, %v3270
        %v3338 = vmul.f32 %v3330, %v3272
        %v3339 = vmul.f32 %v3331, %v3313
        %v3340 = vmul.f32 %v3332, %v3315
        %v3341 = vmul.f32 %v3333, %v3266
        %v3342 = vmul.f32 %v3334, %v3268
        %v3343 = vmul.f32 %v3335, %v3309
        %v3344 = vmul.f32 %v3336, %v3311
        %v3345 = vmul.f32 %v3337, %v3270
        %v3346 = vmul.f32 %v3338, %v3272
        %v3347 = vmul.f32 %v3339, %v3313
        %v3348 = vmul.f32 %v3340, %v3315
        %v3349 = vadd.f32 %v3266, %v3341
        %v3350 = vadd.f32 %v3268, %v3342
        %v3351 = vadd.f32 %v3309, %v3343
        %v3352 = vadd.f32 %v3311, %v3344
        %v3353 = vadd.f32 %v3270, %v3345
        %v3354 = vadd.f32 %v3272, %v3346
        %v3355 = vadd.f32 %v3313, %v3347
        %v3356 = vadd.f32 %v3315, %v3348
        %v3357 = vmul.f32 %v3349, 0.7978846
        %v3358 = vmul.f32 %v3350, 0.7978846
        %v3359 = vmul.f32 %v3351, 0.7978846
        %v3360 = vmul.f32 %v3352, 0.7978846
        %v3361 = vmul.f32 %v3353, 0.7978846
        %v3362 = vmul.f32 %v3354, 0.7978846
        %v3363 = vmul.f32 %v3355, 0.7978846
        %v3364 = vmul.f32 %v3356, 0.7978846
        %v3365 = vtanh.pop %v3357
        %v3366 = vtanh.pop %v3358
        %v3367 = vtanh.pop %v3359
        %v3368 = vtanh.pop %v3360
        %v3369 = vtanh.pop %v3361
        %v3370 = vtanh.pop %v3362
        %v3371 = vtanh.pop %v3363
        %v3372 = vtanh.pop %v3364
        %v3373 = vadd.f32 %v3365, 1.0
        %v3374 = vadd.f32 %v3366, 1.0
        %v3375 = vadd.f32 %v3367, 1.0
        %v3376 = vadd.f32 %v3368, 1.0
        %v3377 = vadd.f32 %v3369, 1.0
        %v3378 = vadd.f32 %v3370, 1.0
        %v3379 = vadd.f32 %v3371, 1.0
        %v3380 = vadd.f32 %v3372, 1.0
        %v3381 = vmul.f32 %v3317, %v3373
        %v3382 = vmul.f32 %v3318, %v3374
        %v3383 = vmul.f32 %v3319, %v3375
        %v3384 = vmul.f32 %v3320, %v3376
        %v3385 = vmul.f32 %v3321, %v3377
        %v3386 = vmul.f32 %v3322, %v3378
        %v3387 = vmul.f32 %v3323, %v3379
        %v3388 = vmul.f32 %v3324, %v3380
        %v3389 = vld [vmem:[%s844] sm:$0xff]
        %v3390 = vld [vmem:[%s844 + $0x8] sm:$0xff]
        %v3391 = vld [vmem:[%s844 + $0x10] sm:$0xff]
        %v3392 = vld [vmem:[%s844 + $0x18] sm:$0xff]
        %v3393 = vld [vmem:[%s844 + $0x20] sm:$0xff]
        %v3394 = vld [vmem:[%s844 + $0x28] sm:$0xff]
        %v3395 = vld [vmem:[%s844 + $0x30] sm:$0xff]
        %v3396 = vld [vmem:[%s844 + $0x38] sm:$0xff]
        %v3397 = vld [vmem:[%s844 + $0x40] sm:$0xff]
        %v3398 = vld [vmem:[%s844 + $0x48] sm:$0xff]
        %v3399 = vld [vmem:[%s844 + $0x50] sm:$0xff]
        %v3400 = vld [vmem:[%s844 + $0x58] sm:$0xff]
        %v3401 = vld [vmem:[%s844 + $0x60] sm:$0xff]
        %v3402 = vld [vmem:[%s844 + $0x68] sm:$0xff]
        %v3403 = vld [vmem:[%s844 + $0x70] sm:$0xff]
        %v3404 = vld [vmem:[%s844 + $0x78] sm:$0xff]
        %v3405 = vld [vmem:[%s844 + $0x80] sm:$0xff]
        %v3406 = vld [vmem:[%s844 + $0x88] sm:$0xff]
        %v3407 = vld [vmem:[%s844 + $0x90] sm:$0xff]
        %v3408 = vld [vmem:[%s844 + $0x98] sm:$0xff]
        %v3409 = vld [vmem:[%s844 + $0xa0] sm:$0xff]
        %v3410 = vld [vmem:[%s844 + $0xa8] sm:$0xff]
        %v3411 = vld [vmem:[%s844 + $0xb0] sm:$0xff]
        %v3412 = vld [vmem:[%s844 + $0xb8] sm:$0xff]
        %v3413 = vld [vmem:[%s844 + $0xc0] sm:$0xff]
        %v3414 = vld [vmem:[%s844 + $0xc8] sm:$0xff]
        %v3415 = vld [vmem:[%s844 + $0xd0] sm:$0xff]
        %v3416 = vld [vmem:[%s844 + $0xd8] sm:$0xff]
        %v3417 = vld [vmem:[%s844 + $0xe0] sm:$0xff]
        %v3418 = vld [vmem:[%s844 + $0xe8] sm:$0xff]
        %v3419 = vld [vmem:[%s844 + $0xf0] sm:$0xff]
        %v3420 = vld [vmem:[%s844 + $0xf8] sm:$0xff]
        %v3421 = vld [vmem:[%s844 + $0x100] sm:$0xff]
        %v3422 = vld [vmem:[%s844 + $0x108] sm:$0xff]
        %v3423 = vld [vmem:[%s844 + $0x110] sm:$0xff]
        %v3424 = vld [vmem:[%s844 + $0x118] sm:$0xff]
        %v3425 = vld [vmem:[%s844 + $0x120] sm:$0xff]
        %v3426 = vld [vmem:[%s844 + $0x128] sm:$0xff]
        %v3427 = vld [vmem:[%s844 + $0x130] sm:$0xff]
        %v3428 = vld [vmem:[%s844 + $0x138] sm:$0xff]
        %v3429 = vld [vmem:[%s844 + $0x140] sm:$0xff]
        %v3430 = vld [vmem:[%s844 + $0x148] sm:$0xff]
        %v3431 = vld [vmem:[%s844 + $0x150] sm:$0xff]
        %v3432 = vld [vmem:[%s844 + $0x158] sm:$0xff]
        %v3433 = vld [vmem:[%s844 + $0x160] sm:$0xff]
        %v3434 = vld [vmem:[%s844 + $0x168] sm:$0xff]
        %v3435 = vld [vmem:[%s844 + $0x170] sm:$0xff]
        %v3436 = vld [vmem:[%s844 + $0x178] sm:$0xff]
        %v3437 = vld [vmem:[%s844 + $0x180] sm:$0xff]
        %v3438 = vld [vmem:[%s844 + $0x188] sm:$0xff]
        %v3439 = vld [vmem:[%s844 + $0x190] sm:$0xff]
        %v3440 = vld [vmem:[%s844 + $0x198] sm:$0xff]
        %v3441 = vld [vmem:[%s844 + $0x1a0] sm:$0xff]
        %v3442 = vld [vmem:[%s844 + $0x1a8] sm:$0xff]
        %v3443 = vld [vmem:[%s844 + $0x1b0] sm:$0xff]
        %v3444 = vld [vmem:[%s844 + $0x1b8] sm:$0xff]
        %v3445 = vld [vmem:[%s844 + $0x1c0] sm:$0xff]
        %v3446 = vld [vmem:[%s844 + $0x1c8] sm:$0xff]
        %v3447 = vld [vmem:[%s844 + $0x1d0] sm:$0xff]
        %v3448 = vld [vmem:[%s844 + $0x1d8] sm:$0xff]
        %v3449 = vld [vmem:[%s844 + $0x1e0] sm:$0xff]
        %v3450 = vld [vmem:[%s844 + $0x1e8] sm:$0xff]
        %v3451 = vld [vmem:[%s844 + $0x1f0] sm:$0xff]
        %v3452 = vld [vmem:[%s844 + $0x1f8] sm:$0xff]
        %v3453 = vpack.c.bf16 %v3385, %v3381
        %v3454 = vpack.c.bf16 %v3386, %v3382
        %v3455 = vpack.c.bf16 %v3387, %v3383
        %v3456 = vpack.c.bf16 %v3388, %v3384
        %v3457 = vld [vmem:[%s853] sm:$0x3]
        %v3459 = vlaneseq
        %v3460 = vshrl.u32 %v3459, 7
        %v3461 = vsub.s32 0, %v3460
        %v3462 = vrot.slane %v3457, %v3461
        %v3463 = vlaneseq
        %v3464 = vshrl.u32 %v3463, 7
        %v3465 = vsub.s32 1, %v3464
        %v3466 = vrot.slane %v3457, %v3465
        %v3533 = vunpack.c.l.b16 %v3389
        %v3534 = vunpack.c.h.b16 %v3389
        %v3535 = vunpack.c.l.b16 %v3390
        %v3536 = vunpack.c.h.b16 %v3390
        %v3537 = vunpack.c.l.b16 %v3391
        %v3538 = vunpack.c.h.b16 %v3391
        %v3539 = vunpack.c.l.b16 %v3392
        %v3540 = vunpack.c.h.b16 %v3392
        %v3541 = vunpack.c.l.b16 %v3393
        %v3542 = vunpack.c.h.b16 %v3393
        %v3543 = vunpack.c.l.b16 %v3394
        %v3544 = vunpack.c.h.b16 %v3394
        %v3545 = vunpack.c.l.b16 %v3395
        %v3546 = vunpack.c.h.b16 %v3395
        %v3547 = vunpack.c.l.b16 %v3396
        %v3548 = vunpack.c.h.b16 %v3396
        %v3549 = vunpack.c.l.b16 %v3397
        %v3550 = vunpack.c.h.b16 %v3397
        %v3551 = vunpack.c.l.b16 %v3398
        %v3552 = vunpack.c.h.b16 %v3398
        %v3553 = vunpack.c.l.b16 %v3399
        %v3554 = vunpack.c.h.b16 %v3399
        %v3555 = vunpack.c.l.b16 %v3400
        %v3556 = vunpack.c.h.b16 %v3400
        %v3557 = vunpack.c.l.b16 %v3401
        %v3558 = vunpack.c.h.b16 %v3401
        %v3559 = vunpack.c.l.b16 %v3402
        %v3560 = vunpack.c.h.b16 %v3402
        %v3561 = vunpack.c.l.b16 %v3403
        %v3562 = vunpack.c.h.b16 %v3403
        %v3563 = vunpack.c.l.b16 %v3404
        %v3564 = vunpack.c.h.b16 %v3404
        %v3565 = vunpack.c.l.b16 %v3405
        %v3566 = vunpack.c.h.b16 %v3405
        %v3567 = vunpack.c.l.b16 %v3406
        %v3568 = vunpack.c.h.b16 %v3406
        %v3569 = vunpack.c.l.b16 %v3407
        %v3570 = vunpack.c.h.b16 %v3407
        %v3571 = vunpack.c.l.b16 %v3408
        %v3572 = vunpack.c.h.b16 %v3408
        %v3573 = vunpack.c.l.b16 %v3409
        %v3574 = vunpack.c.h.b16 %v3409
        %v3575 = vunpack.c.l.b16 %v3410
        %v3576 = vunpack.c.h.b16 %v3410
        %v3577 = vunpack.c.l.b16 %v3411
        %v3578 = vunpack.c.h.b16 %v3411
        %v3579 = vunpack.c.l.b16 %v3412
        %v3580 = vunpack.c.h.b16 %v3412
        %v3581 = vunpack.c.l.b16 %v3413
        %v3582 = vunpack.c.h.b16 %v3413
        %v3583 = vunpack.c.l.b16 %v3414
        %v3584 = vunpack.c.h.b16 %v3414
        %v3585 = vunpack.c.l.b16 %v3415
        %v3586 = vunpack.c.h.b16 %v3415
        %v3587 = vunpack.c.l.b16 %v3416
        %v3588 = vunpack.c.h.b16 %v3416
        %v3589 = vunpack.c.l.b16 %v3417
        %v3590 = vunpack.c.h.b16 %v3417
        %v3591 = vunpack.c.l.b16 %v3418
        %v3592 = vunpack.c.h.b16 %v3418
        %v3593 = vunpack.c.l.b16 %v3419
        %v3594 = vunpack.c.h.b16 %v3419
        %v3595 = vunpack.c.l.b16 %v3420
        %v3596 = vunpack.c.h.b16 %v3420
        %v3597 = vunpack.c.l.b16 %v3421
        %v3598 = vunpack.c.h.b16 %v3421
        %v3599 = vunpack.c.l.b16 %v3422
        %v3600 = vunpack.c.h.b16 %v3422
        %v3601 = vunpack.c.l.b16 %v3423
        %v3602 = vunpack.c.h.b16 %v3423
        %v3603 = vunpack.c.l.b16 %v3424
        %v3604 = vunpack.c.h.b16 %v3424
        %v3605 = vunpack.c.l.b16 %v3425
        %v3606 = vunpack.c.h.b16 %v3425
        %v3607 = vunpack.c.l.b16 %v3426
        %v3608 = vunpack.c.h.b16 %v3426
        %v3609 = vunpack.c.l.b16 %v3427
        %v3610 = vunpack.c.h.b16 %v3427
        %v3611 = vunpack.c.l.b16 %v3428
        %v3612 = vunpack.c.h.b16 %v3428
        %v3613 = vunpack.c.l.b16 %v3429
        %v3614 = vunpack.c.h.b16 %v3429
        %v3615 = vunpack.c.l.b16 %v3430
        %v3616 = vunpack.c.h.b16 %v3430
        %v3617 = vunpack.c.l.b16 %v3431
        %v3618 = vunpack.c.h.b16 %v3431
        %v3619 = vunpack.c.l.b16 %v3432
        %v3620 = vunpack.c.h.b16 %v3432
        %v3621 = vunpack.c.l.b16 %v3433
        %v3622 = vunpack.c.h.b16 %v3433
        %v3623 = vunpack.c.l.b16 %v3434
        %v3624 = vunpack.c.h.b16 %v3434
        %v3625 = vunpack.c.l.b16 %v3435
        %v3626 = vunpack.c.h.b16 %v3435
        %v3627 = vunpack.c.l.b16 %v3436
        %v3628 = vunpack.c.h.b16 %v3436
        %v3629 = vunpack.c.l.b16 %v3437
        %v3630 = vunpack.c.h.b16 %v3437
        %v3631 = vunpack.c.l.b16 %v3438
        %v3632 = vunpack.c.h.b16 %v3438
        %v3633 = vunpack.c.l.b16 %v3439
        %v3634 = vunpack.c.h.b16 %v3439
        %v3635 = vunpack.c.l.b16 %v3440
        %v3636 = vunpack.c.h.b16 %v3440
        %v3637 = vunpack.c.l.b16 %v3441
        %v3638 = vunpack.c.h.b16 %v3441
        %v3639 = vunpack.c.l.b16 %v3442
        %v3640 = vunpack.c.h.b16 %v3442
        %v3641 = vunpack.c.l.b16 %v3443
        %v3642 = vunpack.c.h.b16 %v3443
        %v3643 = vunpack.c.l.b16 %v3444
        %v3644 = vunpack.c.h.b16 %v3444
        %v3645 = vunpack.c.l.b16 %v3445
        %v3646 = vunpack.c.h.b16 %v3445
        %v3647 = vunpack.c.l.b16 %v3446
        %v3648 = vunpack.c.h.b16 %v3446
        %v3649 = vunpack.c.l.b16 %v3447
        %v3650 = vunpack.c.h.b16 %v3447
        %v3651 = vunpack.c.l.b16 %v3448
        %v3652 = vunpack.c.h.b16 %v3448
        %v3653 = vunpack.c.l.b16 %v3449
        %v3654 = vunpack.c.h.b16 %v3449
        %v3655 = vunpack.c.l.b16 %v3450
        %v3656 = vunpack.c.h.b16 %v3450
        %v3657 = vunpack.c.l.b16 %v3451
        %v3658 = vunpack.c.h.b16 %v3451
        %v3659 = vunpack.c.l.b16 %v3452
        %v3660 = vunpack.c.h.b16 %v3452
        %v3661 = vpack.c.b16 %v3535, %v3533
        %v3662 = vpack.c.b16 %v3536, %v3534
        %v3663 = vpack.c.b16 %v3539, %v3537
        %v3664 = vpack.c.b16 %v3540, %v3538
        %v3665 = vpack.c.b16 %v3543, %v3541
        %v3666 = vpack.c.b16 %v3544, %v3542
        %v3667 = vpack.c.b16 %v3547, %v3545
        %v3668 = vpack.c.b16 %v3548, %v3546
        %v3669 = vpack.c.b16 %v3551, %v3549
        %v3670 = vpack.c.b16 %v3552, %v3550
        %v3671 = vpack.c.b16 %v3555, %v3553
        %v3672 = vpack.c.b16 %v3556, %v3554
        %v3673 = vpack.c.b16 %v3559, %v3557
        %v3674 = vpack.c.b16 %v3560, %v3558
        %v3675 = vpack.c.b16 %v3563, %v3561
        %v3676 = vpack.c.b16 %v3564, %v3562
        %v3677 = vpack.c.b16 %v3567, %v3565
        %v3678 = vpack.c.b16 %v3568, %v3566
        %v3679 = vpack.c.b16 %v3571, %v3569
        %v3680 = vpack.c.b16 %v3572, %v3570
        %v3681 = vpack.c.b16 %v3575, %v3573
        %v3682 = vpack.c.b16 %v3576, %v3574
        %v3683 = vpack.c.b16 %v3579, %v3577
        %v3684 = vpack.c.b16 %v3580, %v3578
        %v3685 = vpack.c.b16 %v3583, %v3581
        %v3686 = vpack.c.b16 %v3584, %v3582
        %v3687 = vpack.c.b16 %v3587, %v3585
        %v3688 = vpack.c.b16 %v3588, %v3586
        %v3689 = vpack.c.b16 %v3591, %v3589
        %v3690 = vpack.c.b16 %v3592, %v3590
        %v3691 = vpack.c.b16 %v3595, %v3593
        %v3692 = vpack.c.b16 %v3596, %v3594
        %v3693 = vpack.c.b16 %v3599, %v3597
        %v3694 = vpack.c.b16 %v3600, %v3598
        %v3695 = vpack.c.b16 %v3603, %v3601
        %v3696 = vpack.c.b16 %v3604, %v3602
        %v3697 = vpack.c.b16 %v3607, %v3605
        %v3698 = vpack.c.b16 %v3608, %v3606
        %v3699 = vpack.c.b16 %v3611, %v3609
        %v3700 = vpack.c.b16 %v3612, %v3610
        %v3701 = vpack.c.b16 %v3615, %v3613
        %v3702 = vpack.c.b16 %v3616, %v3614
        %v3703 = vpack.c.b16 %v3619, %v3617
        %v3704 = vpack.c.b16 %v3620, %v3618
        %v3705 = vpack.c.b16 %v3623, %v3621
        %v3706 = vpack.c.b16 %v3624, %v3622
        %v3707 = vpack.c.b16 %v3627, %v3625
        %v3708 = vpack.c.b16 %v3628, %v3626
        %v3709 = vpack.c.b16 %v3631, %v3629
        %v3710 = vpack.c.b16 %v3632, %v3630
        %v3711 = vpack.c.b16 %v3635, %v3633
        %v3712 = vpack.c.b16 %v3636, %v3634
        %v3713 = vpack.c.b16 %v3639, %v3637
        %v3714 = vpack.c.b16 %v3640, %v3638
        %v3715 = vpack.c.b16 %v3643, %v3641
        %v3716 = vpack.c.b16 %v3644, %v3642
        %v3717 = vpack.c.b16 %v3647, %v3645
        %v3718 = vpack.c.b16 %v3648, %v3646
        %v3719 = vpack.c.b16 %v3651, %v3649
        %v3720 = vpack.c.b16 %v3652, %v3650
        %v3721 = vpack.c.b16 %v3655, %v3653
        %v3722 = vpack.c.b16 %v3656, %v3654
        %v3723 = vpack.c.b16 %v3659, %v3657
        %v3724 = vpack.c.b16 %v3660, %v3658
        %3789 = vmatprep.subr.bf16.mxu0 %v3662
        %3790 = vmatpush1.bf16.msra.mxu0 %v3661
        %3791 = vmatprep.subr.bf16.mxu0 %v3664
        %3792 = vmatpush1.bf16.msra.mxu0 %v3663
        %3793 = vmatprep.subr.bf16.mxu0 %v3666
        %3794 = vmatpush1.bf16.msra.mxu0 %v3665
        %3795 = vmatprep.subr.bf16.mxu0 %v3668
        %3796 = vmatpush1.bf16.msra.mxu0 %v3667
        %3797 = vmatprep.subr.bf16.mxu0 %v3670
        %3798 = vmatpush1.bf16.msra.mxu0 %v3669
        %3799 = vmatprep.subr.bf16.mxu0 %v3672
        %3800 = vmatpush1.bf16.msra.mxu0 %v3671
        %3801 = vmatprep.subr.bf16.mxu0 %v3674
        %3802 = vmatpush1.bf16.msra.mxu0 %v3673
        %3803 = vmatprep.subr.bf16.mxu0 %v3676
        %3804 = vmatpush1.bf16.msra.mxu0 %v3675
        %3805 = vmatprep.subr.bf16.mxu0 %v3678
        %3806 = vmatpush1.bf16.msra.mxu0 %v3677
        %3807 = vmatprep.subr.bf16.mxu0 %v3680
        %3808 = vmatpush1.bf16.msra.mxu0 %v3679
        %3809 = vmatprep.subr.bf16.mxu0 %v3682
        %3810 = vmatpush1.bf16.msra.mxu0 %v3681
        %3811 = vmatprep.subr.bf16.mxu0 %v3684
        %3812 = vmatpush1.bf16.msra.mxu0 %v3683
        %3813 = vmatprep.subr.bf16.mxu0 %v3686
        %3814 = vmatpush1.bf16.msra.mxu0 %v3685
        %3815 = vmatprep.subr.bf16.mxu0 %v3688
        %3816 = vmatpush1.bf16.msra.mxu0 %v3687
        %3817 = vmatprep.subr.bf16.mxu0 %v3690
        %3818 = vmatpush1.bf16.msra.mxu0 %v3689
        %3819 = vmatprep.subr.bf16.mxu0 %v3692
        %3820 = vmatpush1.bf16.msra.mxu0 %v3691
        %3821 = vmatprep.mubr.bf16.mxu0 %v3454
        %3822 = vmatmul.mubr.bf16.gmra.mrb[0].mxu0 %v3453
        %v3823 = vpop.f32.mrb[0].mxu0
        %v3824 = vadd.f32 %v3462, %v3823
        %v3825 = vpop.f32.mrb[0].mxu0
        %v3826 = vadd.f32 %v3466, %v3825
        %v3827 = vpop.f32.mrb[0].mxu0
        %v3828 = vadd.f32 %v3462, %v3827
        %v3829 = vpop.f32.mrb[0].mxu0
        %v3830 = vadd.f32 %v3466, %v3829
        %3831 = vdwg.mxu0
        %3832 = vmatprep.subr.bf16.mxu0 %v3694
        %3833 = vmatpush1.bf16.msra.mxu0 %v3693
        %3834 = vmatprep.subr.bf16.mxu0 %v3696
        %3835 = vmatpush1.bf16.msra.mxu0 %v3695
        %3836 = vmatprep.subr.bf16.mxu0 %v3698
        %3837 = vmatpush1.bf16.msra.mxu0 %v3697
        %3838 = vmatprep.subr.bf16.mxu0 %v3700
        %3839 = vmatpush1.bf16.msra.mxu0 %v3699
        %3840 = vmatprep.subr.bf16.mxu0 %v3702
        %3841 = vmatpush1.bf16.msra.mxu0 %v3701
        %3842 = vmatprep.subr.bf16.mxu0 %v3704
        %3843 = vmatpush1.bf16.msra.mxu0 %v3703
        %3844 = vmatprep.subr.bf16.mxu0 %v3706
        %3845 = vmatpush1.bf16.msra.mxu0 %v3705
        %3846 = vmatprep.subr.bf16.mxu0 %v3708
        %3847 = vmatpush1.bf16.msra.mxu0 %v3707
        %3848 = vmatprep.subr.bf16.mxu0 %v3710
        %3849 = vmatpush1.bf16.msra.mxu0 %v3709
        %3850 = vmatprep.subr.bf16.mxu0 %v3712
        %3851 = vmatpush1.bf16.msra.mxu0 %v3711
        %3852 = vmatprep.subr.bf16.mxu0 %v3714
        %3853 = vmatpush1.bf16.msra.mxu0 %v3713
        %3854 = vmatprep.subr.bf16.mxu0 %v3716
        %3855 = vmatpush1.bf16.msra.mxu0 %v3715
        %3856 = vmatprep.subr.bf16.mxu0 %v3718
        %3857 = vmatpush1.bf16.msra.mxu0 %v3717
        %3858 = vmatprep.subr.bf16.mxu0 %v3720
        %3859 = vmatpush1.bf16.msra.mxu0 %v3719
        %3860 = vmatprep.subr.bf16.mxu0 %v3722
        %3861 = vmatpush1.bf16.msra.mxu0 %v3721
        %3862 = vmatprep.subr.bf16.mxu0 %v3724
        %3863 = vmatpush1.bf16.msra.mxu0 %v3723
        %3864 = vmatprep.mubr.bf16.mxu0 %v3456
        %3865 = vmatmul.mubr.bf16.gmra.mrb[0].mxu0 %v3455
        %v3866 = vpop.f32.mrb[0].mxu0
        %v3867 = vadd.f32 %v3824, %v3866
        %v3868 = vpop.f32.mrb[0].mxu0
        %v3869 = vadd.f32 %v3826, %v3868
        %v3870 = vpop.f32.mrb[0].mxu0
        %v3871 = vadd.f32 %v3828, %v3870
        %v3872 = vpop.f32.mrb[0].mxu0
        %v3873 = vadd.f32 %v3830, %v3872
        %3874 = vdwg.mxu0
        %v3875 = vadd.f32 %v2751, %v3867
        %v3876 = vadd.f32 %v2752, %v3869
        %v3877 = vadd.f32 %v2753, %v3871
        %v3878 = vadd.f32 %v2754, %v3873
        %3879 = vst [vmem:[%s17] sm:$0xff] %v3875
        %3880 = vst [vmem:[%s17 + $0x8] sm:$0xff] %v3876
        %3881 = vst [vmem:[%s17 + $0x10] sm:$0x3] %v3877
        %3882 = vst [vmem:[%s17 + $0x18] sm:$0x3] %v3878
        // Predicated region
        $region145: #{shopee_forward.3} parent=87 // pred_check
          %p3883 = pneg %p475
        $region146: #{shopee_forward.3} parent=87 // pred_check_branch
          %3885 = sbr.rel (%p3883) target = $region148
        $region147: #{shopee_forward.3} parent=87 // pred_region
          _
        $region148: #{shopee_forward.3} parent=87 // pred_fallthru
          _
        // Predicated region
        $region149: #{shopee_forward.3} parent=87 // pred_check
          %p3886 = pneg %p475
        $region150: #{shopee_forward.3} parent=87 // pred_check_branch
          %3888 = sbr.rel (%p3886) target = $region152
        $region151: #{shopee_forward.3} parent=87 // pred_region
          _
        $region152: #{shopee_forward.3} parent=87 // pred_fallthru
          _
      $region88: #{shopee_forward.3} parent=5 // pred_fallthru
        _
      %p3889 = scmp.le.s32.totalorder 2, %s40
      // Predicated region
      $region153: #{shopee_forward.3} parent=5 // pred_check
        %p3890 = pneg %p3889
      $region154: #{shopee_forward.3} parent=5 // pred_check_branch
        %3892 = sbr.rel (%p3890) target = $region156
      $region155: #{shopee_forward.3} parent=5 // pred_region
        %s3893 = ssub.s32 %s40, 2
      $region156: #{shopee_forward.3} parent=5 // pred_fallthru
        _
    $region6: #{shopee_forward.3} parent=1 // loop_footer
      %s44 = sadd.s32 1, %s40
    $region7: #{shopee_forward.3} parent=1 // loop_footer_branch
      %39 = sbr.rel target = $region3
    $region8: #{shopee_forward.3} parent=1 // loop_exit
      _
    %3894 = vsyncpa [#allocation3], 1
    %s3895 = scalar_lea.sflag [#allocation3], 1
    %3896 = vsyncpa %s3895, 1
    %3897 = vsyncpa [#allocation5], 1
    %3898 = vsyncpa [#allocation8], 1
    %s3899 = scalar_lea.sflag [#allocation8], 1
    %3900 = vsyncpa %s3899, 1
    %3901 = vsyncpa [#allocation11], 1
    %s3902 = scalar_lea.sflag [#allocation11], 1
    %3903 = vsyncpa %s3902, 1
    %3904 = vsyncpa [#allocation14], 1
    %s3905 = scalar_lea.sflag [#allocation14], 1
    %3906 = vsyncpa %s3905, 1
    %3907 = vsyncpa [#allocation17], 1
    %s3908 = scalar_lea.sflag [#allocation17], 1
    %3909 = vsyncpa %s3908, 1
    %3910 = vsyncpa [#allocation20], 1
    %s3911 = scalar_lea.sflag [#allocation20], 1
    %3912 = vsyncpa %s3911, 1

// kernel: shopee_forward.4
$region0: #{shopee_forward.4}
  #allocation0 [shape = 'u32[]', space=smem, size = 0x4, offset = 0x4, fixed_abs, tag = 'smem constant byte address 0x4 - core index']
  #allocation1 [shape = 'u32[144,128]{1,0:T(1,128)}', space=vmem, size = 0x12000, scoped, tag = 'internal scratch']
  %s0 = inlined_call_operand.vmem [shape: f32[16,256], index: 0, kind: input, shape index: {}]
  %s1 = inlined_call_operand.vmem [shape: f32[2,8], index: 1, kind: input, shape index: {}]
  %s2 = inlined_call_operand.vmem [shape: f32[1,256], index: 2, kind: input, shape index: {}]
  %s3 = inlined_call_operand.vmem [shape: f32[1,256], index: 3, kind: input, shape index: {}]
  %s4 = inlined_call_operand.vmem [shape: f32[2,1,256], index: 4, kind: input, shape index: {}]
  %s5 = inlined_call_operand.vmem [shape: f32[2,1,256], index: 5, kind: input, shape index: {}]
  %s6 = inlined_call_operand.vmem [shape: bf16[2,256,768], index: 6, kind: input, shape index: {}]
  %s7 = inlined_call_operand.vmem [shape: f32[2,1,768], index: 7, kind: input, shape index: {}]
  %s8 = inlined_call_operand.vmem [shape: bf16[2,256,256], index: 8, kind: input, shape index: {}]
  %s9 = inlined_call_operand.vmem [shape: f32[2,1,256], index: 9, kind: input, shape index: {}]
  %s10 = inlined_call_operand.vmem [shape: f32[2,1,256], index: 10, kind: input, shape index: {}]
  %s11 = inlined_call_operand.vmem [shape: f32[2,1,256], index: 11, kind: input, shape index: {}]
  %s12 = inlined_call_operand.vmem [shape: bf16[2,256,512], index: 12, kind: input, shape index: {}]
  %s13 = inlined_call_operand.vmem [shape: f32[2,1,512], index: 13, kind: input, shape index: {}]
  %s14 = inlined_call_operand.vmem [shape: bf16[2,512,256], index: 14, kind: input, shape index: {}]
  %s15 = inlined_call_operand.vmem [shape: f32[2,1,256], index: 15, kind: input, shape index: {}]
  %s16 = inlined_call_operand.vmem [shape: f32[16,256], index: 16, kind: output, shape index: {}]
  %s17 = sld [smem:[#allocation0]]
  $region101: #{shopee_forward.4} parent=0
    _
  %s19 = ssub.s32 1, %s17
  %s20 = scalar_select 0, %s19, %s17
  loop: start=0, step=1, limit=4
  $region2: #{shopee_forward.4} parent=0 // loop_pre_header
    _
  $region3: #{shopee_forward.4} parent=0 // loop_header
    %s22 = sphi 0, %s26
    %p23 = scmp.ge.s32.totalorder %s22, 4
    %s30 = sphi 0, %s30
    %s32 = sphi 0, %s30
    %s33 = sphi 0, %s32
    %s47 = sphi 0, %s33
    %s51 = sphi 0, %s51
    %s53 = sphi 0, %s51
    %s54 = sphi 0, %s53
    %s68 = sphi 0, %s54
    %s72 = sphi 0, %s72
    %s74 = sphi 0, %s72
    %s75 = sphi 0, %s74
    %s89 = sphi 0, %s75
    %s93 = sphi 0, %s93
    %s95 = sphi 0, %s93
    %s96 = sphi 0, %s95
    %s110 = sphi 0, %s96
    %s116 = sphi 0, %s118
    %s119 = sphi 0, %s116
    %s120 = sphi 0, %s119
    %s136 = sphi 0, %s120
    %s142 = sphi 0, %s144
    %s145 = sphi 0, %s142
    %s146 = sphi 0, %s145
    %s162 = sphi 0, %s146
    %s168 = sphi 0, %s170
    %s171 = sphi 0, %s168
    %s172 = sphi 0, %s171
    %s188 = sphi 0, %s172
    %s194 = sphi 0, %s196
    %s197 = sphi 0, %s194
    %s198 = sphi 0, %s197
    %s214 = sphi 0, %s198
    %s220 = sphi 0, %s222
    %s223 = sphi 0, %s220
    %s224 = sphi 0, %s223
    %s240 = sphi 0, %s224
    %s246 = sphi 0, %s248
    %s249 = sphi 0, %s246
    %s250 = sphi 0, %s249
    %s266 = sphi 0, %s250
    %s272 = sphi 0, %s274
    %s275 = sphi 0, %s272
    %s276 = sphi 0, %s275
    %s292 = sphi 0, %s276
    %s298 = sphi 0, %s300
    %s301 = sphi 0, %s298
    %s302 = sphi 0, %s301
    %s318 = sphi 0, %s302
    %s324 = sphi 0, %s326
    %s327 = sphi 0, %s324
    %s328 = sphi 0, %s327
    %s344 = sphi 0, %s328
    %s350 = sphi 0, %s352
    %s353 = sphi 0, %s350
    %s354 = sphi 0, %s353
    %s370 = sphi 0, %s354
    %s376 = sphi 0, %s378
    %s379 = sphi 0, %s376
    %s380 = sphi 0, %s379
    %s396 = sphi 0, %s380
    %s402 = sphi 0, %s404
    %s405 = sphi 0, %s402
    %s406 = sphi 0, %s405
    %s422 = sphi 0, %s406
    %s426 = sphi 0, %s426
    %s428 = sphi 0, %s426
    %s429 = sphi 0, %s428
    %s443 = sphi 0, %s429
  $region4: #{shopee_forward.4} parent=0 // loop_header_branch
    %25 = sbr.rel (%p23) target = $region8
  $region5: #{shopee_forward.4} parent=0 // loop_body
    %s27 = ssub.s32 %s22, 1
    %s28 = ssub.s32 %s22, 2
    %s29 = sadd.s32 %s22, 1
    %s31 = sadd.s32 %s30, 1
    %p34 = scmp.eq.s32.totalorder %s22, 1
    %p35 = scmp.ne.s32.totalorder %s30, %s32
    %p36 = scmp.eq.s32.totalorder %s22, 0
    %p37 = por %p35, %p36
    %p38 = scmp.ne.s32.totalorder %s30, %s32
    %p39 = scmp.eq.s32.totalorder %s27, 1
    %p40 = por %p38, %p39
    %p41 = scmp.ne.s32.totalorder %s32, %s33
    %p42 = scmp.eq.s32.totalorder %s27, 0
    %p43 = por %p41, %p42
    %p44 = scmp.ne.s32.totalorder %s32, %s33
    %p45 = scmp.eq.s32.totalorder %s28, 1
    %p46 = por %p44, %p45
    %p48 = scmp.ne.s32.totalorder %s33, %s47
    %p49 = scmp.eq.s32.totalorder %s28, 0
    %p50 = por %p48, %p49
    %s52 = sadd.s32 %s51, 1
    %p55 = scmp.eq.s32.totalorder %s22, 1
    %p56 = scmp.ne.s32.totalorder %s51, %s53
    %p57 = scmp.eq.s32.totalorder %s22, 0
    %p58 = por %p56, %p57
    %p59 = scmp.ne.s32.totalorder %s51, %s53
    %p60 = scmp.eq.s32.totalorder %s27, 1
    %p61 = por %p59, %p60
    %p62 = scmp.ne.s32.totalorder %s53, %s54
    %p63 = scmp.eq.s32.totalorder %s27, 0
    %p64 = por %p62, %p63
    %p65 = scmp.ne.s32.totalorder %s53, %s54
    %p66 = scmp.eq.s32.totalorder %s28, 1
    %p67 = por %p65, %p66
    %p69 = scmp.ne.s32.totalorder %s54, %s68
    %p70 = scmp.eq.s32.totalorder %s28, 0
    %p71 = por %p69, %p70
    %s73 = sadd.s32 %s72, 1
    %p76 = scmp.eq.s32.totalorder %s22, 1
    %p77 = scmp.ne.s32.totalorder %s72, %s74
    %p78 = scmp.eq.s32.totalorder %s22, 0
    %p79 = por %p77, %p78
    %p80 = scmp.ne.s32.totalorder %s72, %s74
    %p81 = scmp.eq.s32.totalorder %s27, 1
    %p82 = por %p80, %p81
    %p83 = scmp.ne.s32.totalorder %s74, %s75
    %p84 = scmp.eq.s32.totalorder %s27, 0
    %p85 = por %p83, %p84
    %p86 = scmp.ne.s32.totalorder %s74, %s75
    %p87 = scmp.eq.s32.totalorder %s28, 1
    %p88 = por %p86, %p87
    %p90 = scmp.ne.s32.totalorder %s75, %s89
    %p91 = scmp.eq.s32.totalorder %s28, 0
    %p92 = por %p90, %p91
    %s94 = sadd.s32 %s93, 1
    %p97 = scmp.eq.s32.totalorder %s22, 1
    %p98 = scmp.ne.s32.totalorder %s93, %s95
    %p99 = scmp.eq.s32.totalorder %s22, 0
    %p100 = por %p98, %p99
    %p101 = scmp.ne.s32.totalorder %s93, %s95
    %p102 = scmp.eq.s32.totalorder %s27, 1
    %p103 = por %p101, %p102
    %p104 = scmp.ne.s32.totalorder %s95, %s96
    %p105 = scmp.eq.s32.totalorder %s27, 0
    %p106 = por %p104, %p105
    %p107 = scmp.ne.s32.totalorder %s95, %s96
    %p108 = scmp.eq.s32.totalorder %s28, 1
    %p109 = por %p107, %p108
    %p111 = scmp.ne.s32.totalorder %s96, %s110
    %p112 = scmp.eq.s32.totalorder %s28, 0
    %p113 = por %p111, %p112
    %s114 = ssub.s32 %s22, %s29
    %p115 = scmp.eq.s32.totalorder %s114, 0
    %s117 = sadd.s32 %s116, 1
    %s118 = scalar_select %p115, %s116, %s117
    %p121 = pneg %p115
    %p122 = scmp.eq.s32.totalorder %s22, 1
    %p123 = por %p121, %p122
    %p124 = scmp.ne.s32.totalorder %s116, %s119
    %p125 = scmp.eq.s32.totalorder %s22, 0
    %p126 = por %p124, %p125
    %p127 = scmp.ne.s32.totalorder %s116, %s119
    %p128 = scmp.eq.s32.totalorder %s27, 1
    %p129 = por %p127, %p128
    %p130 = scmp.ne.s32.totalorder %s119, %s120
    %p131 = scmp.eq.s32.totalorder %s27, 0
    %p132 = por %p130, %p131
    %p133 = scmp.ne.s32.totalorder %s119, %s120
    %p134 = scmp.eq.s32.totalorder %s28, 1
    %p135 = por %p133, %p134
    %p137 = scmp.ne.s32.totalorder %s120, %s136
    %p138 = scmp.eq.s32.totalorder %s28, 0
    %p139 = por %p137, %p138
    %s140 = ssub.s32 %s22, %s29
    %p141 = scmp.eq.s32.totalorder %s140, 0
    %s143 = sadd.s32 %s142, 1
    %s144 = scalar_select %p141, %s142, %s143
    %p147 = pneg %p141
    %p148 = scmp.eq.s32.totalorder %s22, 1
    %p149 = por %p147, %p148
    %p150 = scmp.ne.s32.totalorder %s142, %s145
    %p151 = scmp.eq.s32.totalorder %s22, 0
    %p152 = por %p150, %p151
    %p153 = scmp.ne.s32.totalorder %s142, %s145
    %p154 = scmp.eq.s32.totalorder %s27, 1
    %p155 = por %p153, %p154
    %p156 = scmp.ne.s32.totalorder %s145, %s146
    %p157 = scmp.eq.s32.totalorder %s27, 0
    %p158 = por %p156, %p157
    %p159 = scmp.ne.s32.totalorder %s145, %s146
    %p160 = scmp.eq.s32.totalorder %s28, 1
    %p161 = por %p159, %p160
    %p163 = scmp.ne.s32.totalorder %s146, %s162
    %p164 = scmp.eq.s32.totalorder %s28, 0
    %p165 = por %p163, %p164
    %s166 = ssub.s32 %s22, %s29
    %p167 = scmp.eq.s32.totalorder %s166, 0
    %s169 = sadd.s32 %s168, 1
    %s170 = scalar_select %p167, %s168, %s169
    %p173 = pneg %p167
    %p174 = scmp.eq.s32.totalorder %s22, 1
    %p175 = por %p173, %p174
    %p176 = scmp.ne.s32.totalorder %s168, %s171
    %p177 = scmp.eq.s32.totalorder %s22, 0
    %p178 = por %p176, %p177
    %p179 = scmp.ne.s32.totalorder %s168, %s171
    %p180 = scmp.eq.s32.totalorder %s27, 1
    %p181 = por %p179, %p180
    %p182 = scmp.ne.s32.totalorder %s171, %s172
    %p183 = scmp.eq.s32.totalorder %s27, 0
    %p184 = por %p182, %p183
    %p185 = scmp.ne.s32.totalorder %s171, %s172
    %p186 = scmp.eq.s32.totalorder %s28, 1
    %p187 = por %p185, %p186
    %p189 = scmp.ne.s32.totalorder %s172, %s188
    %p190 = scmp.eq.s32.totalorder %s28, 0
    %p191 = por %p189, %p190
    %s192 = ssub.s32 %s22, %s29
    %p193 = scmp.eq.s32.totalorder %s192, 0
    %s195 = sadd.s32 %s194, 1
    %s196 = scalar_select %p193, %s194, %s195
    %p199 = pneg %p193
    %p200 = scmp.eq.s32.totalorder %s22, 1
    %p201 = por %p199, %p200
    %p202 = scmp.ne.s32.totalorder %s194, %s197
    %p203 = scmp.eq.s32.totalorder %s22, 0
    %p204 = por %p202, %p203
    %p205 = scmp.ne.s32.totalorder %s194, %s197
    %p206 = scmp.eq.s32.totalorder %s27, 1
    %p207 = por %p205, %p206
    %p208 = scmp.ne.s32.totalorder %s197, %s198
    %p209 = scmp.eq.s32.totalorder %s27, 0
    %p210 = por %p208, %p209
    %p211 = scmp.ne.s32.totalorder %s197, %s198
    %p212 = scmp.eq.s32.totalorder %s28, 1
    %p213 = por %p211, %p212
    %p215 = scmp.ne.s32.totalorder %s198, %s214
    %p216 = scmp.eq.s32.totalorder %s28, 0
    %p217 = por %p215, %p216
    %s218 = ssub.s32 %s22, %s29
    %p219 = scmp.eq.s32.totalorder %s218, 0
    %s221 = sadd.s32 %s220, 1
    %s222 = scalar_select %p219, %s220, %s221
    %p225 = pneg %p219
    %p226 = scmp.eq.s32.totalorder %s22, 1
    %p227 = por %p225, %p226
    %p228 = scmp.ne.s32.totalorder %s220, %s223
    %p229 = scmp.eq.s32.totalorder %s22, 0
    %p230 = por %p228, %p229
    %p231 = scmp.ne.s32.totalorder %s220, %s223
    %p232 = scmp.eq.s32.totalorder %s27, 1
    %p233 = por %p231, %p232
    %p234 = scmp.ne.s32.totalorder %s223, %s224
    %p235 = scmp.eq.s32.totalorder %s27, 0
    %p236 = por %p234, %p235
    %p237 = scmp.ne.s32.totalorder %s223, %s224
    %p238 = scmp.eq.s32.totalorder %s28, 1
    %p239 = por %p237, %p238
    %p241 = scmp.ne.s32.totalorder %s224, %s240
    %p242 = scmp.eq.s32.totalorder %s28, 0
    %p243 = por %p241, %p242
    %s244 = ssub.s32 %s22, %s29
    %p245 = scmp.eq.s32.totalorder %s244, 0
    %s247 = sadd.s32 %s246, 1
    %s248 = scalar_select %p245, %s246, %s247
    %p251 = pneg %p245
    %p252 = scmp.eq.s32.totalorder %s22, 1
    %p253 = por %p251, %p252
    %p254 = scmp.ne.s32.totalorder %s246, %s249
    %p255 = scmp.eq.s32.totalorder %s22, 0
    %p256 = por %p254, %p255
    %p257 = scmp.ne.s32.totalorder %s246, %s249
    %p258 = scmp.eq.s32.totalorder %s27, 1
    %p259 = por %p257, %p258
    %p260 = scmp.ne.s32.totalorder %s249, %s250
    %p261 = scmp.eq.s32.totalorder %s27, 0
    %p262 = por %p260, %p261
    %p263 = scmp.ne.s32.totalorder %s249, %s250
    %p264 = scmp.eq.s32.totalorder %s28, 1
    %p265 = por %p263, %p264
    %p267 = scmp.ne.s32.totalorder %s250, %s266
    %p268 = scmp.eq.s32.totalorder %s28, 0
    %p269 = por %p267, %p268
    %s270 = ssub.s32 %s22, %s29
    %p271 = scmp.eq.s32.totalorder %s270, 0
    %s273 = sadd.s32 %s272, 1
    %s274 = scalar_select %p271, %s272, %s273
    %p277 = pneg %p271
    %p278 = scmp.eq.s32.totalorder %s22, 1
    %p279 = por %p277, %p278
    %p280 = scmp.ne.s32.totalorder %s272, %s275
    %p281 = scmp.eq.s32.totalorder %s22, 0
    %p282 = por %p280, %p281
    %p283 = scmp.ne.s32.totalorder %s272, %s275
    %p284 = scmp.eq.s32.totalorder %s27, 1
    %p285 = por %p283, %p284
    %p286 = scmp.ne.s32.totalorder %s275, %s276
    %p287 = scmp.eq.s32.totalorder %s27, 0
    %p288 = por %p286, %p287
    %p289 = scmp.ne.s32.totalorder %s275, %s276
    %p290 = scmp.eq.s32.totalorder %s28, 1
    %p291 = por %p289, %p290
    %p293 = scmp.ne.s32.totalorder %s276, %s292
    %p294 = scmp.eq.s32.totalorder %s28, 0
    %p295 = por %p293, %p294
    %s296 = ssub.s32 %s22, %s29
    %p297 = scmp.eq.s32.totalorder %s296, 0
    %s299 = sadd.s32 %s298, 1
    %s300 = scalar_select %p297, %s298, %s299
    %p303 = pneg %p297
    %p304 = scmp.eq.s32.totalorder %s22, 1
    %p305 = por %p303, %p304
    %p306 = scmp.ne.s32.totalorder %s298, %s301
    %p307 = scmp.eq.s32.totalorder %s22, 0
    %p308 = por %p306, %p307
    %p309 = scmp.ne.s32.totalorder %s298, %s301
    %p310 = scmp.eq.s32.totalorder %s27, 1
    %p311 = por %p309, %p310
    %p312 = scmp.ne.s32.totalorder %s301, %s302
    %p313 = scmp.eq.s32.totalorder %s27, 0
    %p314 = por %p312, %p313
    %p315 = scmp.ne.s32.totalorder %s301, %s302
    %p316 = scmp.eq.s32.totalorder %s28, 1
    %p317 = por %p315, %p316
    %p319 = scmp.ne.s32.totalorder %s302, %s318
    %p320 = scmp.eq.s32.totalorder %s28, 0
    %p321 = por %p319, %p320
    %s322 = ssub.s32 %s22, %s29
    %p323 = scmp.eq.s32.totalorder %s322, 0
    %s325 = sadd.s32 %s324, 1
    %s326 = scalar_select %p323, %s324, %s325
    %p329 = pneg %p323
    %p330 = scmp.eq.s32.totalorder %s22, 1
    %p331 = por %p329, %p330
    %p332 = scmp.ne.s32.totalorder %s324, %s327
    %p333 = scmp.eq.s32.totalorder %s22, 0
    %p334 = por %p332, %p333
    %p335 = scmp.ne.s32.totalorder %s324, %s327
    %p336 = scmp.eq.s32.totalorder %s27, 1
    %p337 = por %p335, %p336
    %p338 = scmp.ne.s32.totalorder %s327, %s328
    %p339 = scmp.eq.s32.totalorder %s27, 0
    %p340 = por %p338, %p339
    %p341 = scmp.ne.s32.totalorder %s327, %s328
    %p342 = scmp.eq.s32.totalorder %s28, 1
    %p343 = por %p341, %p342
    %p345 = scmp.ne.s32.totalorder %s328, %s344
    %p346 = scmp.eq.s32.totalorder %s28, 0
    %p347 = por %p345, %p346
    %s348 = ssub.s32 %s22, %s29
    %p349 = scmp.eq.s32.totalorder %s348, 0
    %s351 = sadd.s32 %s350, 1
    %s352 = scalar_select %p349, %s350, %s351
    %p355 = pneg %p349
    %p356 = scmp.eq.s32.totalorder %s22, 1
    %p357 = por %p355, %p356
    %p358 = scmp.ne.s32.totalorder %s350, %s353
    %p359 = scmp.eq.s32.totalorder %s22, 0
    %p360 = por %p358, %p359
    %p361 = scmp.ne.s32.totalorder %s350, %s353
    %p362 = scmp.eq.s32.totalorder %s27, 1
    %p363 = por %p361, %p362
    %p364 = scmp.ne.s32.totalorder %s353, %s354
    %p365 = scmp.eq.s32.totalorder %s27, 0
    %p366 = por %p364, %p365
    %p367 = scmp.ne.s32.totalorder %s353, %s354
    %p368 = scmp.eq.s32.totalorder %s28, 1
    %p369 = por %p367, %p368
    %p371 = scmp.ne.s32.totalorder %s354, %s370
    %p372 = scmp.eq.s32.totalorder %s28, 0
    %p373 = por %p371, %p372
    %s374 = ssub.s32 %s22, %s29
    %p375 = scmp.eq.s32.totalorder %s374, 0
    %s377 = sadd.s32 %s376, 1
    %s378 = scalar_select %p375, %s376, %s377
    %p381 = pneg %p375
    %p382 = scmp.eq.s32.totalorder %s22, 1
    %p383 = por %p381, %p382
    %p384 = scmp.ne.s32.totalorder %s376, %s379
    %p385 = scmp.eq.s32.totalorder %s22, 0
    %p386 = por %p384, %p385
    %p387 = scmp.ne.s32.totalorder %s376, %s379
    %p388 = scmp.eq.s32.totalorder %s27, 1
    %p389 = por %p387, %p388
    %p390 = scmp.ne.s32.totalorder %s379, %s380
    %p391 = scmp.eq.s32.totalorder %s27, 0
    %p392 = por %p390, %p391
    %p393 = scmp.ne.s32.totalorder %s379, %s380
    %p394 = scmp.eq.s32.totalorder %s28, 1
    %p395 = por %p393, %p394
    %p397 = scmp.ne.s32.totalorder %s380, %s396
    %p398 = scmp.eq.s32.totalorder %s28, 0
    %p399 = por %p397, %p398
    %s400 = ssub.s32 %s22, %s29
    %p401 = scmp.eq.s32.totalorder %s400, 0
    %s403 = sadd.s32 %s402, 1
    %s404 = scalar_select %p401, %s402, %s403
    %p407 = pneg %p401
    %p408 = scmp.eq.s32.totalorder %s22, 1
    %p409 = por %p407, %p408
    %p410 = scmp.ne.s32.totalorder %s402, %s405
    %p411 = scmp.eq.s32.totalorder %s22, 0
    %p412 = por %p410, %p411
    %p413 = scmp.ne.s32.totalorder %s402, %s405
    %p414 = scmp.eq.s32.totalorder %s27, 1
    %p415 = por %p413, %p414
    %p416 = scmp.ne.s32.totalorder %s405, %s406
    %p417 = scmp.eq.s32.totalorder %s27, 0
    %p418 = por %p416, %p417
    %p419 = scmp.ne.s32.totalorder %s405, %s406
    %p420 = scmp.eq.s32.totalorder %s28, 1
    %p421 = por %p419, %p420
    %p423 = scmp.ne.s32.totalorder %s406, %s422
    %p424 = scmp.eq.s32.totalorder %s28, 0
    %p425 = por %p423, %p424
    %s427 = sadd.s32 %s426, 1
    %p430 = scmp.eq.s32.totalorder %s22, 1
    %p431 = scmp.ne.s32.totalorder %s426, %s428
    %p432 = scmp.eq.s32.totalorder %s22, 0
    %p433 = por %p431, %p432
    %p434 = scmp.ne.s32.totalorder %s426, %s428
    %p435 = scmp.eq.s32.totalorder %s27, 1
    %p436 = por %p434, %p435
    %p437 = scmp.ne.s32.totalorder %s428, %s429
    %p438 = scmp.eq.s32.totalorder %s27, 0
    %p439 = por %p437, %p438
    %p440 = scmp.ne.s32.totalorder %s428, %s429
    %p441 = scmp.eq.s32.totalorder %s28, 1
    %p442 = por %p440, %p441
    %p444 = scmp.ne.s32.totalorder %s429, %s443
    %p445 = scmp.eq.s32.totalorder %s28, 0
    %p446 = por %p444, %p445
    %p447 = scmp.le.s32.totalorder 1, %s22
    %p448 = scmp.lt.s32.totalorder %s22, 3
    %p449 = pnand %p447, %p448
    %p450 = pneg %p449
    // Predicated region
    $region9: #{shopee_forward.4} parent=5 // pred_check
      _
    $region10: #{shopee_forward.4} parent=5 // pred_check_branch
      %452 = sbr.rel (%p449) target = $region12
    $region11: #{shopee_forward.4} parent=5 // pred_region
      %s453 = ssub.s32 %s22, 1
      // Predicated region
      $region13: #{shopee_forward.4} parent=11 // pred_check
        %p454 = pneg %p43
      $region14: #{shopee_forward.4} parent=11 // pred_check_branch
        %456 = sbr.rel (%p454) target = $region16
      $region15: #{shopee_forward.4} parent=11 // pred_region
        _
      $region16: #{shopee_forward.4} parent=11 // pred_fallthru
        _
      // Predicated region
      $region17: #{shopee_forward.4} parent=11 // pred_check
        %p457 = pneg %p64
      $region18: #{shopee_forward.4} parent=11 // pred_check_branch
        %459 = sbr.rel (%p457) target = $region20
      $region19: #{shopee_forward.4} parent=11 // pred_region
        _
      $region20: #{shopee_forward.4} parent=11 // pred_fallthru
        _
      // Predicated region
      $region21: #{shopee_forward.4} parent=11 // pred_check
        %p460 = pneg %p85
      $region22: #{shopee_forward.4} parent=11 // pred_check_branch
        %462 = sbr.rel (%p460) target = $region24
      $region23: #{shopee_forward.4} parent=11 // pred_region
        _
      $region24: #{shopee_forward.4} parent=11 // pred_fallthru
        _
      // Predicated region
      $region25: #{shopee_forward.4} parent=11 // pred_check
        %p463 = pneg %p106
      $region26: #{shopee_forward.4} parent=11 // pred_check_branch
        %465 = sbr.rel (%p463) target = $region28
      $region27: #{shopee_forward.4} parent=11 // pred_region
        _
      $region28: #{shopee_forward.4} parent=11 // pred_fallthru
        _
    $region12: #{shopee_forward.4} parent=5 // pred_fallthru
      _
    %p466 = scmp.lt.s32.totalorder %s22, 2
    // Predicated region
    $region29: #{shopee_forward.4} parent=5 // pred_check
      %p467 = pneg %p466
    $region30: #{shopee_forward.4} parent=5 // pred_check_branch
      %469 = sbr.rel (%p467) target = $region32
    $region31: #{shopee_forward.4} parent=5 // pred_region
      // Predicated region
      $region33: #{shopee_forward.4} parent=31 // pred_check
        %p470 = pneg %p126
      $region34: #{shopee_forward.4} parent=31 // pred_check_branch
        %472 = sbr.rel (%p470) target = $region36
      $region35: #{shopee_forward.4} parent=31 // pred_region
        %p473 = scmp.lt.s32.totalorder %s22, 1
        %s474 = scalar_select %p473, %s22, 1
        %s475 = smul.addr %s474, 2
        %s476 = scalar_lea.vmem %s4, %s475
      $region36: #{shopee_forward.4} parent=31 // pred_fallthru
        _
      // Predicated region
      $region37: #{shopee_forward.4} parent=31 // pred_check
        %p477 = pneg %p152
      $region38: #{shopee_forward.4} parent=31 // pred_check_branch
        %479 = sbr.rel (%p477) target = $region40
      $region39: #{shopee_forward.4} parent=31 // pred_region
        %p480 = scmp.lt.s32.totalorder %s22, 1
        %s481 = scalar_select %p480, %s22, 1
        %s482 = smul.addr %s481, 2
        %s483 = scalar_lea.vmem %s5, %s482
      $region40: #{shopee_forward.4} parent=31 // pred_fallthru
        _
      // Predicated region
      $region41: #{shopee_forward.4} parent=31 // pred_check
        %p484 = pneg %p178
      $region42: #{shopee_forward.4} parent=31 // pred_check_branch
        %486 = sbr.rel (%p484) target = $region44
      $region43: #{shopee_forward.4} parent=31 // pred_region
        %p487 = scmp.lt.s32.totalorder %s22, 1
        %s488 = scalar_select %p487, %s22, 1
        %s489 = smul.addr %s488, 192
        %s490 = smul.addr %s489, 4
        %s491 = scalar_lea.vmem %s6, %s490
      $region44: #{shopee_forward.4} parent=31 // pred_fallthru
        _
      // Predicated region
      $region45: #{shopee_forward.4} parent=31 // pred_check
        %p492 = pneg %p204
      $region46: #{shopee_forward.4} parent=31 // pred_check_branch
        %494 = sbr.rel (%p492) target = $region48
      $region47: #{shopee_forward.4} parent=31 // pred_region
        %p495 = scmp.lt.s32.totalorder %s22, 1
        %s496 = scalar_select %p495, %s22, 1
        %s497 = smul.addr %s496, 6
        %s498 = scalar_lea.vmem %s7, %s497
      $region48: #{shopee_forward.4} parent=31 // pred_fallthru
        _
      // Predicated region
      $region49: #{shopee_forward.4} parent=31 // pred_check
        %p499 = pneg %p230
      $region50: #{shopee_forward.4} parent=31 // pred_check_branch
        %501 = sbr.rel (%p499) target = $region52
      $region51: #{shopee_forward.4} parent=31 // pred_region
        %p502 = scmp.lt.s32.totalorder %s22, 1
        %s503 = scalar_select %p502, %s22, 1
        %s504 = smul.addr %s503, 64
        %s505 = smul.addr %s504, 4
        %s506 = scalar_lea.vmem %s8, %s505
      $region52: #{shopee_forward.4} parent=31 // pred_fallthru
        _
      // Predicated region
      $region53: #{shopee_forward.4} parent=31 // pred_check
        %p507 = pneg %p256
      $region54: #{shopee_forward.4} parent=31 // pred_check_branch
        %509 = sbr.rel (%p507) target = $region56
      $region55: #{shopee_forward.4} parent=31 // pred_region
        %p510 = scmp.lt.s32.totalorder %s22, 1
        %s511 = scalar_select %p510, %s22, 1
        %s512 = smul.addr %s511, 2
        %s513 = scalar_lea.vmem %s9, %s512
      $region56: #{shopee_forward.4} parent=31 // pred_fallthru
        _
      // Predicated region
      $region57: #{shopee_forward.4} parent=31 // pred_check
        %p514 = pneg %p282
      $region58: #{shopee_forward.4} parent=31 // pred_check_branch
        %516 = sbr.rel (%p514) target = $region60
      $region59: #{shopee_forward.4} parent=31 // pred_region
        %p517 = scmp.lt.s32.totalorder %s22, 1
        %s518 = scalar_select %p517, %s22, 1
        %s519 = smul.addr %s518, 2
        %s520 = scalar_lea.vmem %s10, %s519
      $region60: #{shopee_forward.4} parent=31 // pred_fallthru
        _
      // Predicated region
      $region61: #{shopee_forward.4} parent=31 // pred_check
        %p521 = pneg %p308
      $region62: #{shopee_forward.4} parent=31 // pred_check_branch
        %523 = sbr.rel (%p521) target = $region64
      $region63: #{shopee_forward.4} parent=31 // pred_region
        %p524 = scmp.lt.s32.totalorder %s22, 1
        %s525 = scalar_select %p524, %s22, 1
        %s526 = smul.addr %s525, 2
        %s527 = scalar_lea.vmem %s11, %s526
      $region64: #{shopee_forward.4} parent=31 // pred_fallthru
        _
      // Predicated region
      $region65: #{shopee_forward.4} parent=31 // pred_check
        %p528 = pneg %p334
      $region66: #{shopee_forward.4} parent=31 // pred_check_branch
        %530 = sbr.rel (%p528) target = $region68
      $region67: #{shopee_forward.4} parent=31 // pred_region
        %p531 = scmp.lt.s32.totalorder %s22, 1
        %s532 = scalar_select %p531, %s22, 1
        %s533 = smul.addr %s532, 128
        %s534 = smul.addr %s533, 4
        %s535 = scalar_lea.vmem %s12, %s534
      $region68: #{shopee_forward.4} parent=31 // pred_fallthru
        _
      // Predicated region
      $region69: #{shopee_forward.4} parent=31 // pred_check
        %p536 = pneg %p360
      $region70: #{shopee_forward.4} parent=31 // pred_check_branch
        %538 = sbr.rel (%p536) target = $region72
      $region71: #{shopee_forward.4} parent=31 // pred_region
        %p539 = scmp.lt.s32.totalorder %s22, 1
        %s540 = scalar_select %p539, %s22, 1
        %s541 = smul.addr %s540, 4
        %s542 = scalar_lea.vmem %s13, %s541
      $region72: #{shopee_forward.4} parent=31 // pred_fallthru
        _
      // Predicated region
      $region73: #{shopee_forward.4} parent=31 // pred_check
        %p543 = pneg %p386
      $region74: #{shopee_forward.4} parent=31 // pred_check_branch
        %545 = sbr.rel (%p543) target = $region76
      $region75: #{shopee_forward.4} parent=31 // pred_region
        %p546 = scmp.lt.s32.totalorder %s22, 1
        %s547 = scalar_select %p546, %s22, 1
        %s548 = smul.addr %s547, 128
        %s549 = smul.addr %s548, 4
        %s550 = scalar_lea.vmem %s14, %s549
      $region76: #{shopee_forward.4} parent=31 // pred_fallthru
        _
      // Predicated region
      $region77: #{shopee_forward.4} parent=31 // pred_check
        %p551 = pneg %p412
      $region78: #{shopee_forward.4} parent=31 // pred_check_branch
        %553 = sbr.rel (%p551) target = $region80
      $region79: #{shopee_forward.4} parent=31 // pred_region
        %p554 = scmp.lt.s32.totalorder %s22, 1
        %s555 = scalar_select %p554, %s22, 1
        %s556 = smul.addr %s555, 2
        %s557 = scalar_lea.vmem %s15, %s556
      $region80: #{shopee_forward.4} parent=31 // pred_fallthru
        _
    $region32: #{shopee_forward.4} parent=5 // pred_fallthru
      _
    %p558 = scmp.le.s32.totalorder 1, %s22
    %p559 = scmp.lt.s32.totalorder %s22, 3
    %p560 = pnand %p558, %p559
    %p561 = pneg %p560
    // Predicated region
    $region81: #{shopee_forward.4} parent=5 // pred_check
      _
    $region82: #{shopee_forward.4} parent=5 // pred_check_branch
      %563 = sbr.rel (%p560) target = $region84
    $region83: #{shopee_forward.4} parent=5 // pred_region
      %s564 = ssub.s32 %s22, 1
      %p565 = pneg %p43
      %p566 = pneg %p40
      %p567 = pneg %p64
      %p568 = pneg %p61
      %p569 = pneg %p85
      %p570 = pneg %p82
      %p571 = pneg %p106
      %p572 = pneg %p103
      %p573 = scmp.lt.s32.totalorder %s27, 1
      %s574 = scalar_select %p573, %s27, 1
      %s575 = smul.addr %s574, 2
      %s576 = scalar_lea.vmem %s4, %s575
      %p577 = pneg %p132
      %p578 = pneg %p129
      %p579 = scmp.lt.s32.totalorder %s27, 1
      %s580 = scalar_select %p579, %s27, 1
      %s581 = smul.addr %s580, 2
      %s582 = scalar_lea.vmem %s5, %s581
      %p583 = pneg %p158
      %p584 = pneg %p155
      %p585 = scmp.lt.s32.totalorder %s27, 1
      %s586 = scalar_select %p585, %s27, 1
      %s587 = smul.addr %s586, 192
      %s588 = smul.addr %s587, 4
      %s589 = scalar_lea.vmem %s6, %s588
      %p590 = pneg %p184
      %p591 = pneg %p181
      %p592 = scmp.lt.s32.totalorder %s27, 1
      %s593 = scalar_select %p592, %s27, 1
      %s594 = smul.addr %s593, 6
      %s595 = scalar_lea.vmem %s7, %s594
      %p596 = pneg %p210
      %p597 = pneg %p207
      %p598 = scmp.lt.s32.totalorder %s27, 1
      %s599 = scalar_select %p598, %s27, 1
      %s600 = smul.addr %s599, 64
      %s601 = smul.addr %s600, 4
      %s602 = scalar_lea.vmem %s8, %s601
      %p603 = pneg %p236
      %p604 = pneg %p233
      %p605 = scmp.lt.s32.totalorder %s27, 1
      %s606 = scalar_select %p605, %s27, 1
      %s607 = smul.addr %s606, 2
      %s608 = scalar_lea.vmem %s9, %s607
      %p609 = pneg %p262
      %p610 = pneg %p259
      %p611 = scmp.lt.s32.totalorder %s27, 1
      %s612 = scalar_select %p611, %s27, 1
      %s613 = smul.addr %s612, 2
      %s614 = scalar_lea.vmem %s10, %s613
      %p615 = pneg %p288
      %p616 = pneg %p285
      %p617 = scmp.lt.s32.totalorder %s27, 1
      %s618 = scalar_select %p617, %s27, 1
      %s619 = smul.addr %s618, 2
      %s620 = scalar_lea.vmem %s11, %s619
      %p621 = pneg %p314
      %p622 = pneg %p311
      %p623 = scmp.lt.s32.totalorder %s27, 1
      %s624 = scalar_select %p623, %s27, 1
      %s625 = smul.addr %s624, 128
      %s626 = smul.addr %s625, 4
      %s627 = scalar_lea.vmem %s12, %s626
      %p628 = pneg %p340
      %p629 = pneg %p337
      %p630 = scmp.lt.s32.totalorder %s27, 1
      %s631 = scalar_select %p630, %s27, 1
      %s632 = smul.addr %s631, 4
      %s633 = scalar_lea.vmem %s13, %s632
      %p634 = pneg %p366
      %p635 = pneg %p363
      %p636 = scmp.lt.s32.totalorder %s27, 1
      %s637 = scalar_select %p636, %s27, 1
      %s638 = smul.addr %s637, 128
      %s639 = smul.addr %s638, 4
      %s640 = scalar_lea.vmem %s14, %s639
      %p641 = pneg %p392
      %p642 = pneg %p389
      %p643 = scmp.lt.s32.totalorder %s27, 1
      %s644 = scalar_select %p643, %s27, 1
      %s645 = smul.addr %s644, 2
      %s646 = scalar_lea.vmem %s15, %s645
      %p647 = pneg %p418
      %p648 = pneg %p415
      %p649 = pneg %p439
      %p650 = pneg %p436
      %p651 = scmp.lt.s32.totalorder %s27, 1
      %s652 = scalar_select %p651, %s27, 1
      %s653 = smul.addr %s652, 2
      %s654 = scalar_lea.vmem %s4, %s653
      %p655 = scmp.lt.s32.totalorder %s27, 1
      %s656 = scalar_select %p655, %s27, 1
      %s657 = smul.addr %s656, 2
      %s658 = scalar_lea.vmem %s5, %s657
      %p659 = scmp.lt.s32.totalorder %s27, 1
      %s660 = scalar_select %p659, %s27, 1
      %s661 = smul.addr %s660, 192
      %s662 = smul.addr %s661, 4
      %s663 = scalar_lea.vmem %s6, %s662
      %p664 = scmp.lt.s32.totalorder %s27, 1
      %s665 = scalar_select %p664, %s27, 1
      %s666 = smul.addr %s665, 6
      %s667 = scalar_lea.vmem %s7, %s666
      %p668 = scmp.lt.s32.totalorder %s27, 1
      %s669 = scalar_select %p668, %s27, 1
      %s670 = smul.addr %s669, 64
      %s671 = smul.addr %s670, 4
      %s672 = scalar_lea.vmem %s8, %s671
      %p673 = scmp.lt.s32.totalorder %s27, 1
      %s674 = scalar_select %p673, %s27, 1
      %s675 = smul.addr %s674, 2
      %s676 = scalar_lea.vmem %s9, %s675
      %p677 = scmp.lt.s32.totalorder %s27, 1
      %s678 = scalar_select %p677, %s27, 1
      %s679 = smul.addr %s678, 2
      %s680 = scalar_lea.vmem %s10, %s679
      %p681 = scmp.lt.s32.totalorder %s27, 1
      %s682 = scalar_select %p681, %s27, 1
      %s683 = smul.addr %s682, 2
      %s684 = scalar_lea.vmem %s11, %s683
      %p685 = scmp.lt.s32.totalorder %s27, 1
      %s686 = scalar_select %p685, %s27, 1
      %s687 = smul.addr %s686, 128
      %s688 = smul.addr %s687, 4
      %s689 = scalar_lea.vmem %s12, %s688
      %p690 = scmp.lt.s32.totalorder %s27, 1
      %s691 = scalar_select %p690, %s27, 1
      %s692 = smul.addr %s691, 4
      %s693 = scalar_lea.vmem %s13, %s692
      %p694 = scmp.lt.s32.totalorder %s27, 1
      %s695 = scalar_select %p694, %s27, 1
      %s696 = smul.addr %s695, 128
      %s697 = smul.addr %s696, 4
      %s698 = scalar_lea.vmem %s14, %s697
      %p699 = scmp.lt.s32.totalorder %s27, 1
      %s700 = scalar_select %p699, %s27, 1
      %s701 = smul.addr %s700, 2
      %s702 = scalar_lea.vmem %s15, %s701
      %p704 = scmp.eq.s32.totalorder %s27, 0
      // Predicated region
      $region85: #{shopee_forward.4} parent=83 // pred_check
        %p705 = pneg %p704
      $region86: #{shopee_forward.4} parent=83 // pred_check_branch
        %707 = sbr.rel (%p705) target = $region88
      $region87: #{shopee_forward.4} parent=83 // pred_region
        %v708 = vld [vmem:[%s0] sm:$0xff]
        %v709 = vld [vmem:[%s0 + $0x8] sm:$0xff]
        %v710 = vld [vmem:[%s0 + $0x10] sm:$0xff]
        %v711 = vld [vmem:[%s0 + $0x18] sm:$0xff]
        %v712 = vld [vmem:[%s2] sm:$0x3]
        %v713 = vld [vmem:[%s3] sm:$0x3]
        %v714 = vadd.f32 %v708, %v709
        %715 = vadd.xlane.f32.xlu0 %v714
        %v716 = vpop.xlane.xlu0 %715
        %v717 = vadd.f32 %v710, %v711
        %718 = vadd.xlane.f32.xlu0 %v717
        %v719 = vpop.xlane.xlu0 %718
        %v720 = vrcp.pop 256.0
        %v721 = vmul.f32 %v716, %v720
        %v722 = vmul.f32 %v719, %v720
        %v723 = vsub.f32 %v708, %v721
        %v724 = vsub.f32 %v709, %v721
        %v725 = vsub.f32 %v710, %v722
        %v726 = vsub.f32 %v711, %v722
        %v727 = vmul.f32 %v723, %v723
        %v728 = vmul.f32 %v724, %v724
        %v729 = vmul.f32 %v725, %v725
        %v730 = vmul.f32 %v726, %v726
        %v731 = vadd.f32 %v727, %v728
        %732 = vadd.xlane.f32.xlu0 %v731
        %v733 = vpop.xlane.xlu0 %732
        %v734 = vadd.f32 %v729, %v730
        %735 = vadd.xlane.f32.xlu0 %v734
        %v736 = vpop.xlane.xlu0 %735
        %v737 = vmul.f32 %v733, %v720
        %v738 = vmul.f32 %v736, %v720
        %v739 = vadd.f32 %v737, 1e-12
        %v740 = vadd.f32 %v738, 1e-12
        %v741 = vrsqrt.pop %v739
        %v742 = vrsqrt.pop %v740
        %v743 = vmul.f32 %v723, %v741
        %v744 = vmul.f32 %v724, %v741
        %v745 = vmul.f32 %v725, %v742
        %v746 = vmul.f32 %v726, %v742
        %v748 = vlaneseq
        %v749 = vshrl.u32 %v748, 7
        %v750 = vsub.s32 0, %v749
        %v751 = vrot.slane %v712, %v750
        %v752 = vlaneseq
        %v753 = vshrl.u32 %v752, 7
        %v754 = vsub.s32 1, %v753
        %v755 = vrot.slane %v712, %v754
        %v758 = vmul.f32 %v743, %v751
        %v759 = vmul.f32 %v744, %v755
        %v760 = vmul.f32 %v745, %v751
        %v761 = vmul.f32 %v746, %v755
        %v763 = vlaneseq
        %v764 = vshrl.u32 %v763, 7
        %v765 = vsub.s32 0, %v764
        %v766 = vrot.slane %v713, %v765
        %v767 = vlaneseq
        %v768 = vshrl.u32 %v767, 7
        %v769 = vsub.s32 1, %v768
        %v770 = vrot.slane %v713, %v769
        %v773 = vadd.f32 %v758, %v766
        %v774 = vadd.f32 %v759, %v770
        %v775 = vadd.f32 %v760, %v766
        %v776 = vadd.f32 %v761, %v770
        %777 = vst [vmem:[%s16] sm:$0xff] %v773
        %778 = vst [vmem:[%s16 + $0x8] sm:$0xff] %v774
        %779 = vst [vmem:[%s16 + $0x10] sm:$0xff] %v775
        %780 = vst [vmem:[%s16 + $0x18] sm:$0xff] %v776
      $region88: #{shopee_forward.4} parent=83 // pred_fallthru
        _
      %v781 = vld [vmem:[%s16] sm:$0xff]
      %v782 = vld [vmem:[%s16 + $0x8] sm:$0xff]
      %v783 = vld [vmem:[%s16 + $0x10] sm:$0xff]
      %v784 = vld [vmem:[%s16 + $0x18] sm:$0xff]
      %v785 = vld [vmem:[%s663] sm:$0xff]
      %v786 = vld [vmem:[%s663 + $0x8] sm:$0xff]
      %v787 = vld [vmem:[%s663 + $0x10] sm:$0xff]
      %v788 = vld [vmem:[%s663 + $0x18] sm:$0xff]
      %v789 = vld [vmem:[%s663 + $0x20] sm:$0xff]
      %v790 = vld [vmem:[%s663 + $0x28] sm:$0xff]
      %v791 = vld [vmem:[%s663 + $0x30] sm:$0xff]
      %v792 = vld [vmem:[%s663 + $0x38] sm:$0xff]
      %v793 = vld [vmem:[%s663 + $0x40] sm:$0xff]
      %v794 = vld [vmem:[%s663 + $0x48] sm:$0xff]
      %v795 = vld [vmem:[%s663 + $0x50] sm:$0xff]
      %v796 = vld [vmem:[%s663 + $0x58] sm:$0xff]
      %v797 = vld [vmem:[%s663 + $0x60] sm:$0xff]
      %v798 = vld [vmem:[%s663 + $0x68] sm:$0xff]
      %v799 = vld [vmem:[%s663 + $0x70] sm:$0xff]
      %v800 = vld [vmem:[%s663 + $0x78] sm:$0xff]
      %v801 = vld [vmem:[%s663 + $0x80] sm:$0xff]
      %v802 = vld [vmem:[%s663 + $0x88] sm:$0xff]
      %v803 = vld [vmem:[%s663 + $0x90] sm:$0xff]
      %v804 = vld [vmem:[%s663 + $0x98] sm:$0xff]
      %v805 = vld [vmem:[%s663 + $0xa0] sm:$0xff]
      %v806 = vld [vmem:[%s663 + $0xa8] sm:$0xff]
      %v807 = vld [vmem:[%s663 + $0xb0] sm:$0xff]
      %v808 = vld [vmem:[%s663 + $0xb8] sm:$0xff]
      %v809 = vld [vmem:[%s663 + $0xc0] sm:$0xff]
      %v810 = vld [vmem:[%s663 + $0xc8] sm:$0xff]
      %v811 = vld [vmem:[%s663 + $0xd0] sm:$0xff]
      %v812 = vld [vmem:[%s663 + $0xd8] sm:$0xff]
      %v813 = vld [vmem:[%s663 + $0xe0] sm:$0xff]
      %v814 = vld [vmem:[%s663 + $0xe8] sm:$0xff]
      %v815 = vld [vmem:[%s663 + $0xf0] sm:$0xff]
      %v816 = vld [vmem:[%s663 + $0xf8] sm:$0xff]
      %v817 = vld [vmem:[%s663 + $0x100] sm:$0xff]
      %v818 = vld [vmem:[%s663 + $0x108] sm:$0xff]
      %v819 = vld [vmem:[%s663 + $0x110] sm:$0xff]
      %v820 = vld [vmem:[%s663 + $0x118] sm:$0xff]
      %v821 = vld [vmem:[%s663 + $0x120] sm:$0xff]
      %v822 = vld [vmem:[%s663 + $0x128] sm:$0xff]
      %v823 = vld [vmem:[%s663 + $0x130] sm:$0xff]
      %v824 = vld [vmem:[%s663 + $0x138] sm:$0xff]
      %v825 = vld [vmem:[%s663 + $0x140] sm:$0xff]
      %v826 = vld [vmem:[%s663 + $0x148] sm:$0xff]
      %v827 = vld [vmem:[%s663 + $0x150] sm:$0xff]
      %v828 = vld [vmem:[%s663 + $0x158] sm:$0xff]
      %v829 = vld [vmem:[%s663 + $0x160] sm:$0xff]
      %v830 = vld [vmem:[%s663 + $0x168] sm:$0xff]
      %v831 = vld [vmem:[%s663 + $0x170] sm:$0xff]
      %v832 = vld [vmem:[%s663 + $0x178] sm:$0xff]
      %v833 = vld [vmem:[%s663 + $0x180] sm:$0xff]
      %v834 = vld [vmem:[%s663 + $0x188] sm:$0xff]
      %v835 = vld [vmem:[%s663 + $0x190] sm:$0xff]
      %v836 = vld [vmem:[%s663 + $0x198] sm:$0xff]
      %v837 = vld [vmem:[%s663 + $0x1a0] sm:$0xff]
      %v838 = vld [vmem:[%s663 + $0x1a8] sm:$0xff]
      %v839 = vld [vmem:[%s663 + $0x1b0] sm:$0xff]
      %v840 = vld [vmem:[%s663 + $0x1b8] sm:$0xff]
      %v841 = vld [vmem:[%s663 + $0x1c0] sm:$0xff]
      %v842 = vld [vmem:[%s663 + $0x1c8] sm:$0xff]
      %v843 = vld [vmem:[%s663 + $0x1d0] sm:$0xff]
      %v844 = vld [vmem:[%s663 + $0x1d8] sm:$0xff]
      %v845 = vld [vmem:[%s663 + $0x1e0] sm:$0xff]
      %v846 = vld [vmem:[%s663 + $0x1e8] sm:$0xff]
      %v847 = vld [vmem:[%s663 + $0x1f0] sm:$0xff]
      %v848 = vld [vmem:[%s663 + $0x1f8] sm:$0xff]
      %v849 = vld [vmem:[%s663 + $0x200] sm:$0xff]
      %v850 = vld [vmem:[%s663 + $0x208] sm:$0xff]
      %v851 = vld [vmem:[%s663 + $0x210] sm:$0xff]
      %v852 = vld [vmem:[%s663 + $0x218] sm:$0xff]
      %v853 = vld [vmem:[%s663 + $0x220] sm:$0xff]
      %v854 = vld [vmem:[%s663 + $0x228] sm:$0xff]
      %v855 = vld [vmem:[%s663 + $0x230] sm:$0xff]
      %v856 = vld [vmem:[%s663 + $0x238] sm:$0xff]
      %v857 = vld [vmem:[%s663 + $0x240] sm:$0xff]
      %v858 = vld [vmem:[%s663 + $0x248] sm:$0xff]
      %v859 = vld [vmem:[%s663 + $0x250] sm:$0xff]
      %v860 = vld [vmem:[%s663 + $0x258] sm:$0xff]
      %v861 = vld [vmem:[%s663 + $0x260] sm:$0xff]
      %v862 = vld [vmem:[%s663 + $0x268] sm:$0xff]
      %v863 = vld [vmem:[%s663 + $0x270] sm:$0xff]
      %v864 = vld [vmem:[%s663 + $0x278] sm:$0xff]
      %v865 = vld [vmem:[%s663 + $0x280] sm:$0xff]
      %v866 = vld [vmem:[%s663 + $0x288] sm:$0xff]
      %v867 = vld [vmem:[%s663 + $0x290] sm:$0xff]
      %v868 = vld [vmem:[%s663 + $0x298] sm:$0xff]
      %v869 = vld [vmem:[%s663 + $0x2a0] sm:$0xff]
      %v870 = vld [vmem:[%s663 + $0x2a8] sm:$0xff]
      %v871 = vld [vmem:[%s663 + $0x2b0] sm:$0xff]
      %v872 = vld [vmem:[%s663 + $0x2b8] sm:$0xff]
      %v873 = vld [vmem:[%s663 + $0x2c0] sm:$0xff]
      %v874 = vld [vmem:[%s663 + $0x2c8] sm:$0xff]
      %v875 = vld [vmem:[%s663 + $0x2d0] sm:$0xff]
      %v876 = vld [vmem:[%s663 + $0x2d8] sm:$0xff]
      %v877 = vld [vmem:[%s663 + $0x2e0] sm:$0xff]
      %v878 = vld [vmem:[%s663 + $0x2e8] sm:$0xff]
      %v879 = vld [vmem:[%s663 + $0x2f0] sm:$0xff]
      %v880 = vld [vmem:[%s663 + $0x2f8] sm:$0xff]
      %v881 = vpack.c.bf16 %v783, %v781
      %v882 = vpack.c.bf16 %v784, %v782
      %v883 = vld [vmem:[%s667] sm:$0x3f]
      %v885 = vlaneseq
      %v886 = vshrl.u32 %v885, 7
      %v887 = vsub.s32 0, %v886
      %v888 = vrot.slane %v883, %v887
      %v889 = vlaneseq
      %v890 = vshrl.u32 %v889, 7
      %v891 = vsub.s32 1, %v890
      %v892 = vrot.slane %v883, %v891
      %v893 = vlaneseq
      %v894 = vshrl.u32 %v893, 7
      %v895 = vsub.s32 2, %v894
      %v896 = vrot.slane %v883, %v895
      %v897 = vlaneseq
      %v898 = vshrl.u32 %v897, 7
      %v899 = vsub.s32 3, %v898
      %v900 = vrot.slane %v883, %v899
      %v901 = vlaneseq
      %v902 = vshrl.u32 %v901, 7
      %v903 = vsub.s32 4, %v902
      %v904 = vrot.slane %v883, %v903
      %v905 = vlaneseq
      %v906 = vshrl.u32 %v905, 7
      %v907 = vsub.s32 5, %v906
      %v908 = vrot.slane %v883, %v907
      %v1011 = vunpack.c.l.b16 %v785
      %v1012 = vunpack.c.h.b16 %v785
      %v1013 = vunpack.c.l.b16 %v786
      %v1014 = vunpack.c.h.b16 %v786
      %v1015 = vunpack.c.l.b16 %v787
      %v1016 = vunpack.c.h.b16 %v787
      %v1017 = vunpack.c.l.b16 %v788
      %v1018 = vunpack.c.h.b16 %v788
      %v1019 = vunpack.c.l.b16 %v789
      %v1020 = vunpack.c.h.b16 %v789
      %v1021 = vunpack.c.l.b16 %v790
      %v1022 = vunpack.c.h.b16 %v790
      %v1023 = vunpack.c.l.b16 %v791
      %v1024 = vunpack.c.h.b16 %v791
      %v1025 = vunpack.c.l.b16 %v792
      %v1026 = vunpack.c.h.b16 %v792
      %v1027 = vunpack.c.l.b16 %v793
      %v1028 = vunpack.c.h.b16 %v793
      %v1029 = vunpack.c.l.b16 %v794
      %v1030 = vunpack.c.h.b16 %v794
      %v1031 = vunpack.c.l.b16 %v795
      %v1032 = vunpack.c.h.b16 %v795
      %v1033 = vunpack.c.l.b16 %v796
      %v1034 = vunpack.c.h.b16 %v796
      %v1035 = vunpack.c.l.b16 %v797
      %v1036 = vunpack.c.h.b16 %v797
      %v1037 = vunpack.c.l.b16 %v798
      %v1038 = vunpack.c.h.b16 %v798
      %v1039 = vunpack.c.l.b16 %v799
      %v1040 = vunpack.c.h.b16 %v799
      %v1041 = vunpack.c.l.b16 %v800
      %v1042 = vunpack.c.h.b16 %v800
      %v1043 = vunpack.c.l.b16 %v801
      %v1044 = vunpack.c.h.b16 %v801
      %v1045 = vunpack.c.l.b16 %v802
      %v1046 = vunpack.c.h.b16 %v802
      %v1047 = vunpack.c.l.b16 %v803
      %v1048 = vunpack.c.h.b16 %v803
      %v1049 = vunpack.c.l.b16 %v804
      %v1050 = vunpack.c.h.b16 %v804
      %v1051 = vunpack.c.l.b16 %v805
      %v1052 = vunpack.c.h.b16 %v805
      %v1053 = vunpack.c.l.b16 %v806
      %v1054 = vunpack.c.h.b16 %v806
      %v1055 = vunpack.c.l.b16 %v807
      %v1056 = vunpack.c.h.b16 %v807
      %v1057 = vunpack.c.l.b16 %v808
      %v1058 = vunpack.c.h.b16 %v808
      %v1059 = vunpack.c.l.b16 %v809
      %v1060 = vunpack.c.h.b16 %v809
      %v1061 = vunpack.c.l.b16 %v810
      %v1062 = vunpack.c.h.b16 %v810
      %v1063 = vunpack.c.l.b16 %v811
      %v1064 = vunpack.c.h.b16 %v811
      %v1065 = vunpack.c.l.b16 %v812
      %v1066 = vunpack.c.h.b16 %v812
      %v1067 = vunpack.c.l.b16 %v813
      %v1068 = vunpack.c.h.b16 %v813
      %v1069 = vunpack.c.l.b16 %v814
      %v1070 = vunpack.c.h.b16 %v814
      %v1071 = vunpack.c.l.b16 %v815
      %v1072 = vunpack.c.h.b16 %v815
      %v1073 = vunpack.c.l.b16 %v816
      %v1074 = vunpack.c.h.b16 %v816
      %v1075 = vunpack.c.l.b16 %v817
      %v1076 = vunpack.c.h.b16 %v817
      %v1077 = vunpack.c.l.b16 %v818
      %v1078 = vunpack.c.h.b16 %v818
      %v1079 = vunpack.c.l.b16 %v819
      %v1080 = vunpack.c.h.b16 %v819
      %v1081 = vunpack.c.l.b16 %v820
      %v1082 = vunpack.c.h.b16 %v820
      %v1083 = vunpack.c.l.b16 %v821
      %v1084 = vunpack.c.h.b16 %v821
      %v1085 = vunpack.c.l.b16 %v822
      %v1086 = vunpack.c.h.b16 %v822
      %v1087 = vunpack.c.l.b16 %v823
      %v1088 = vunpack.c.h.b16 %v823
      %v1089 = vunpack.c.l.b16 %v824
      %v1090 = vunpack.c.h.b16 %v824
      %v1091 = vunpack.c.l.b16 %v825
      %v1092 = vunpack.c.h.b16 %v825
      %v1093 = vunpack.c.l.b16 %v826
      %v1094 = vunpack.c.h.b16 %v826
      %v1095 = vunpack.c.l.b16 %v827
      %v1096 = vunpack.c.h.b16 %v827
      %v1097 = vunpack.c.l.b16 %v828
      %v1098 = vunpack.c.h.b16 %v828
      %v1099 = vunpack.c.l.b16 %v829
      %v1100 = vunpack.c.h.b16 %v829
      %v1101 = vunpack.c.l.b16 %v830
      %v1102 = vunpack.c.h.b16 %v830
      %v1103 = vunpack.c.l.b16 %v831
      %v1104 = vunpack.c.h.b16 %v831
      %v1105 = vunpack.c.l.b16 %v832
      %v1106 = vunpack.c.h.b16 %v832
      %v1107 = vunpack.c.l.b16 %v833
      %v1108 = vunpack.c.h.b16 %v833
      %v1109 = vunpack.c.l.b16 %v834
      %v1110 = vunpack.c.h.b16 %v834
      %v1111 = vunpack.c.l.b16 %v835
      %v1112 = vunpack.c.h.b16 %v835
      %v1113 = vunpack.c.l.b16 %v836
      %v1114 = vunpack.c.h.b16 %v836
      %v1115 = vunpack.c.l.b16 %v837
      %v1116 = vunpack.c.h.b16 %v837
      %v1117 = vunpack.c.l.b16 %v838
      %v1118 = vunpack.c.h.b16 %v838
      %v1119 = vunpack.c.l.b16 %v839
      %v1120 = vunpack.c.h.b16 %v839
      %v1121 = vunpack.c.l.b16 %v840
      %v1122 = vunpack.c.h.b16 %v840
      %v1123 = vunpack.c.l.b16 %v841
      %v1124 = vunpack.c.h.b16 %v841
      %v1125 = vunpack.c.l.b16 %v842
      %v1126 = vunpack.c.h.b16 %v842
      %v1127 = vunpack.c.l.b16 %v843
      %v1128 = vunpack.c.h.b16 %v843
      %v1129 = vunpack.c.l.b16 %v844
      %v1130 = vunpack.c.h.b16 %v844
      %v1131 = vunpack.c.l.b16 %v845
      %v1132 = vunpack.c.h.b16 %v845
      %v1133 = vunpack.c.l.b16 %v846
      %v1134 = vunpack.c.h.b16 %v846
      %v1135 = vunpack.c.l.b16 %v847
      %v1136 = vunpack.c.h.b16 %v847
      %v1137 = vunpack.c.l.b16 %v848
      %v1138 = vunpack.c.h.b16 %v848
      %v1139 = vunpack.c.l.b16 %v849
      %v1140 = vunpack.c.h.b16 %v849
      %v1141 = vunpack.c.l.b16 %v850
      %v1142 = vunpack.c.h.b16 %v850
      %v1143 = vunpack.c.l.b16 %v851
      %v1144 = vunpack.c.h.b16 %v851
      %v1145 = vunpack.c.l.b16 %v852
      %v1146 = vunpack.c.h.b16 %v852
      %v1147 = vunpack.c.l.b16 %v853
      %v1148 = vunpack.c.h.b16 %v853
      %v1149 = vunpack.c.l.b16 %v854
      %v1150 = vunpack.c.h.b16 %v854
      %v1151 = vunpack.c.l.b16 %v855
      %v1152 = vunpack.c.h.b16 %v855
      %v1153 = vunpack.c.l.b16 %v856
      %v1154 = vunpack.c.h.b16 %v856
      %v1155 = vunpack.c.l.b16 %v857
      %v1156 = vunpack.c.h.b16 %v857
      %v1157 = vunpack.c.l.b16 %v858
      %v1158 = vunpack.c.h.b16 %v858
      %v1159 = vunpack.c.l.b16 %v859
      %v1160 = vunpack.c.h.b16 %v859
      %v1161 = vunpack.c.l.b16 %v860
      %v1162 = vunpack.c.h.b16 %v860
      %v1163 = vunpack.c.l.b16 %v861
      %v1164 = vunpack.c.h.b16 %v861
      %v1165 = vunpack.c.l.b16 %v862
      %v1166 = vunpack.c.h.b16 %v862
      %v1167 = vunpack.c.l.b16 %v863
      %v1168 = vunpack.c.h.b16 %v863
      %v1169 = vunpack.c.l.b16 %v864
      %v1170 = vunpack.c.h.b16 %v864
      %v1171 = vunpack.c.l.b16 %v865
      %v1172 = vunpack.c.h.b16 %v865
      %v1173 = vunpack.c.l.b16 %v866
      %v1174 = vunpack.c.h.b16 %v866
      %v1175 = vunpack.c.l.b16 %v867
      %v1176 = vunpack.c.h.b16 %v867
      %v1177 = vunpack.c.l.b16 %v868
      %v1178 = vunpack.c.h.b16 %v868
      %v1179 = vunpack.c.l.b16 %v869
      %v1180 = vunpack.c.h.b16 %v869
      %v1181 = vunpack.c.l.b16 %v870
      %v1182 = vunpack.c.h.b16 %v870
      %v1183 = vunpack.c.l.b16 %v871
      %v1184 = vunpack.c.h.b16 %v871
      %v1185 = vunpack.c.l.b16 %v872
      %v1186 = vunpack.c.h.b16 %v872
      %v1187 = vunpack.c.l.b16 %v873
      %v1188 = vunpack.c.h.b16 %v873
      %v1189 = vunpack.c.l.b16 %v874
      %v1190 = vunpack.c.h.b16 %v874
      %v1191 = vunpack.c.l.b16 %v875
      %v1192 = vunpack.c.h.b16 %v875
      %v1193 = vunpack.c.l.b16 %v876
      %v1194 = vunpack.c.h.b16 %v876
      %v1195 = vunpack.c.l.b16 %v877
      %v1196 = vunpack.c.h.b16 %v877
      %v1197 = vunpack.c.l.b16 %v878
      %v1198 = vunpack.c.h.b16 %v878
      %v1199 = vunpack.c.l.b16 %v879
      %v1200 = vunpack.c.h.b16 %v879
      %v1201 = vunpack.c.l.b16 %v880
      %v1202 = vunpack.c.h.b16 %v880
      %v1203 = vpack.c.b16 %v1017, %v1011
      %v1204 = vpack.c.b16 %v1018, %v1012
      %v1205 = vpack.c.b16 %v1019, %v1013
      %v1206 = vpack.c.b16 %v1020, %v1014
      %v1207 = vpack.c.b16 %v1021, %v1015
      %v1208 = vpack.c.b16 %v1022, %v1016
      %v1209 = vpack.c.b16 %v1029, %v1023
      %v1210 = vpack.c.b16 %v1030, %v1024
      %v1211 = vpack.c.b16 %v1031, %v1025
      %v1212 = vpack.c.b16 %v1032, %v1026
      %v1213 = vpack.c.b16 %v1033, %v1027
      %v1214 = vpack.c.b16 %v1034, %v1028
      %v1215 = vpack.c.b16 %v1041, %v1035
      %v1216 = vpack.c.b16 %v1042, %v1036
      %v1217 = vpack.c.b16 %v1043, %v1037
      %v1218 = vpack.c.b16 %v1044, %v1038
      %v1219 = vpack.c.b16 %v1045, %v1039
      %v1220 = vpack.c.b16 %v1046, %v1040
      %v1221 = vpack.c.b16 %v1053, %v1047
      %v1222 = vpack.c.b16 %v1054, %v1048
      %v1223 = vpack.c.b16 %v1055, %v1049
      %v1224 = vpack.c.b16 %v1056, %v1050
      %v1225 = vpack.c.b16 %v1057, %v1051
      %v1226 = vpack.c.b16 %v1058, %v1052
      %v1227 = vpack.c.b16 %v1065, %v1059
      %v1228 = vpack.c.b16 %v1066, %v1060
      %v1229 = vpack.c.b16 %v1067, %v1061
      %v1230 = vpack.c.b16 %v1068, %v1062
      %v1231 = vpack.c.b16 %v1069, %v1063
      %v1232 = vpack.c.b16 %v1070, %v1064
      %v1233 = vpack.c.b16 %v1077, %v1071
      %v1234 = vpack.c.b16 %v1078, %v1072
      %v1235 = vpack.c.b16 %v1079, %v1073
      %v1236 = vpack.c.b16 %v1080, %v1074
      %v1237 = vpack.c.b16 %v1081, %v1075
      %v1238 = vpack.c.b16 %v1082, %v1076
      %v1239 = vpack.c.b16 %v1089, %v1083
      %v1240 = vpack.c.b16 %v1090, %v1084
      %v1241 = vpack.c.b16 %v1091, %v1085
      %v1242 = vpack.c.b16 %v1092, %v1086
      %v1243 = vpack.c.b16 %v1093, %v1087
      %v1244 = vpack.c.b16 %v1094, %v1088
      %v1245 = vpack.c.b16 %v1101, %v1095
      %v1246 = vpack.c.b16 %v1102, %v1096
      %v1247 = vpack.c.b16 %v1103, %v1097
      %v1248 = vpack.c.b16 %v1104, %v1098
      %v1249 = vpack.c.b16 %v1105, %v1099
      %v1250 = vpack.c.b16 %v1106, %v1100
      %v1251 = vpack.c.b16 %v1113, %v1107
      %v1252 = vpack.c.b16 %v1114, %v1108
      %v1253 = vpack.c.b16 %v1115, %v1109
      %v1254 = vpack.c.b16 %v1116, %v1110
      %v1255 = vpack.c.b16 %v1117, %v1111
      %v1256 = vpack.c.b16 %v1118, %v1112
      %v1257 = vpack.c.b16 %v1125, %v1119
      %v1258 = vpack.c.b16 %v1126, %v1120
      %v1259 = vpack.c.b16 %v1127, %v1121
      %v1260 = vpack.c.b16 %v1128, %v1122
      %v1261 = vpack.c.b16 %v1129, %v1123
      %v1262 = vpack.c.b16 %v1130, %v1124
      %v1263 = vpack.c.b16 %v1137, %v1131
      %v1264 = vpack.c.b16 %v1138, %v1132
      %v1265 = vpack.c.b16 %v1139, %v1133
      %v1266 = vpack.c.b16 %v1140, %v1134
      %v1267 = vpack.c.b16 %v1141, %v1135
      %v1268 = vpack.c.b16 %v1142, %v1136
      %v1269 = vpack.c.b16 %v1149, %v1143
      %v1270 = vpack.c.b16 %v1150, %v1144
      %v1271 = vpack.c.b16 %v1151, %v1145
      %v1272 = vpack.c.b16 %v1152, %v1146
      %v1273 = vpack.c.b16 %v1153, %v1147
      %v1274 = vpack.c.b16 %v1154, %v1148
      %v1275 = vpack.c.b16 %v1161, %v1155
      %v1276 = vpack.c.b16 %v1162, %v1156
      %v1277 = vpack.c.b16 %v1163, %v1157
      %v1278 = vpack.c.b16 %v1164, %v1158
      %v1279 = vpack.c.b16 %v1165, %v1159
      %v1280 = vpack.c.b16 %v1166, %v1160
      %v1281 = vpack.c.b16 %v1173, %v1167
      %v1282 = vpack.c.b16 %v1174, %v1168
      %v1283 = vpack.c.b16 %v1175, %v1169
      %v1284 = vpack.c.b16 %v1176, %v1170
      %v1285 = vpack.c.b16 %v1177, %v1171
      %v1286 = vpack.c.b16 %v1178, %v1172
      %v1287 = vpack.c.b16 %v1185, %v1179
      %v1288 = vpack.c.b16 %v1186, %v1180
      %v1289 = vpack.c.b16 %v1187, %v1181
      %v1290 = vpack.c.b16 %v1188, %v1182
      %v1291 = vpack.c.b16 %v1189, %v1183
      %v1292 = vpack.c.b16 %v1190, %v1184
      %v1293 = vpack.c.b16 %v1197, %v1191
      %v1294 = vpack.c.b16 %v1198, %v1192
      %v1295 = vpack.c.b16 %v1199, %v1193
      %v1296 = vpack.c.b16 %v1200, %v1194
      %v1297 = vpack.c.b16 %v1201, %v1195
      %v1298 = vpack.c.b16 %v1202, %v1196
      %1395 = vmatprep.subr.bf16.mxu0 %v1204
      %1396 = vmatpush1.bf16.msra.mxu0 %v1203
      %1397 = vmatprep.subr.bf16.mxu0 %v1210
      %1398 = vmatpush1.bf16.msra.mxu0 %v1209
      %1399 = vmatprep.subr.bf16.mxu0 %v1216
      %1400 = vmatpush1.bf16.msra.mxu0 %v1215
      %1401 = vmatprep.subr.bf16.mxu0 %v1222
      %1402 = vmatpush1.bf16.msra.mxu0 %v1221
      %1403 = vmatprep.subr.bf16.mxu0 %v1228
      %1404 = vmatpush1.bf16.msra.mxu0 %v1227
      %1405 = vmatprep.subr.bf16.mxu0 %v1234
      %1406 = vmatpush1.bf16.msra.mxu0 %v1233
      %1407 = vmatprep.subr.bf16.mxu0 %v1240
      %1408 = vmatpush1.bf16.msra.mxu0 %v1239
      %1409 = vmatprep.subr.bf16.mxu0 %v1246
      %1410 = vmatpush1.bf16.msra.mxu0 %v1245
      %1411 = vmatprep.subr.bf16.mxu0 %v1252
      %1412 = vmatpush1.bf16.msra.mxu0 %v1251
      %1413 = vmatprep.subr.bf16.mxu0 %v1258
      %1414 = vmatpush1.bf16.msra.mxu0 %v1257
      %1415 = vmatprep.subr.bf16.mxu0 %v1264
      %1416 = vmatpush1.bf16.msra.mxu0 %v1263
      %1417 = vmatprep.subr.bf16.mxu0 %v1270
      %1418 = vmatpush1.bf16.msra.mxu0 %v1269
      %1419 = vmatprep.subr.bf16.mxu0 %v1276
      %1420 = vmatpush1.bf16.msra.mxu0 %v1275
      %1421 = vmatprep.subr.bf16.mxu0 %v1282
      %1422 = vmatpush1.bf16.msra.mxu0 %v1281
      %1423 = vmatprep.subr.bf16.mxu0 %v1288
      %1424 = vmatpush1.bf16.msra.mxu0 %v1287
      %1425 = vmatprep.subr.bf16.mxu0 %v1294
      %1426 = vmatpush1.bf16.msra.mxu0 %v1293
      %1427 = vmatprep.mubr.bf16.mxu0 %v882
      %1428 = vmatmul.mubr.bf16.gmra.mrb[0].mxu0 %v881
      %v1429 = vpop.f32.mrb[0].mxu0
      %v1430 = vadd.f32 %v888, %v1429
      %v1431 = vpop.f32.mrb[0].mxu0
      %v1432 = vadd.f32 %v892, %v1431
      %v1433 = vpop.f32.mrb[0].mxu0
      %v1434 = vadd.f32 %v888, %v1433
      %v1435 = vpop.f32.mrb[0].mxu0
      %v1436 = vadd.f32 %v892, %v1435
      %1437 = vdwg.mxu0
      %1438 = vmatprep.subr.bf16.mxu0 %v1206
      %1439 = vmatpush1.bf16.msra.mxu0 %v1205
      %1440 = vmatprep.subr.bf16.mxu0 %v1212
      %1441 = vmatpush1.bf16.msra.mxu0 %v1211
      %1442 = vmatprep.subr.bf16.mxu0 %v1218
      %1443 = vmatpush1.bf16.msra.mxu0 %v1217
      %1444 = vmatprep.subr.bf16.mxu0 %v1224
      %1445 = vmatpush1.bf16.msra.mxu0 %v1223
      %1446 = vmatprep.subr.bf16.mxu0 %v1230
      %1447 = vmatpush1.bf16.msra.mxu0 %v1229
      %1448 = vmatprep.subr.bf16.mxu0 %v1236
      %1449 = vmatpush1.bf16.msra.mxu0 %v1235
      %1450 = vmatprep.subr.bf16.mxu0 %v1242
      %1451 = vmatpush1.bf16.msra.mxu0 %v1241
      %1452 = vmatprep.subr.bf16.mxu0 %v1248
      %1453 = vmatpush1.bf16.msra.mxu0 %v1247
      %1454 = vmatprep.subr.bf16.mxu0 %v1254
      %1455 = vmatpush1.bf16.msra.mxu0 %v1253
      %1456 = vmatprep.subr.bf16.mxu0 %v1260
      %1457 = vmatpush1.bf16.msra.mxu0 %v1259
      %1458 = vmatprep.subr.bf16.mxu0 %v1266
      %1459 = vmatpush1.bf16.msra.mxu0 %v1265
      %1460 = vmatprep.subr.bf16.mxu0 %v1272
      %1461 = vmatpush1.bf16.msra.mxu0 %v1271
      %1462 = vmatprep.subr.bf16.mxu0 %v1278
      %1463 = vmatpush1.bf16.msra.mxu0 %v1277
      %1464 = vmatprep.subr.bf16.mxu0 %v1284
      %1465 = vmatpush1.bf16.msra.mxu0 %v1283
      %1466 = vmatprep.subr.bf16.mxu0 %v1290
      %1467 = vmatpush1.bf16.msra.mxu0 %v1289
      %1468 = vmatprep.subr.bf16.mxu0 %v1296
      %1469 = vmatpush1.bf16.msra.mxu0 %v1295
      %1470 = vmatprep.mubr.bf16.mxu0 %v882
      %1471 = vmatmul.mubr.bf16.gmra.mrb[0].mxu0 %v881
      %v1472 = vpop.f32.mrb[0].mxu0
      %v1473 = vadd.f32 %v896, %v1472
      %v1474 = vpop.f32.mrb[0].mxu0
      %v1475 = vadd.f32 %v900, %v1474
      %v1476 = vpop.f32.mrb[0].mxu0
      %v1477 = vadd.f32 %v896, %v1476
      %v1478 = vpop.f32.mrb[0].mxu0
      %v1479 = vadd.f32 %v900, %v1478
      %1480 = vdwg.mxu0
      %1481 = vmatprep.subr.bf16.mxu0 %v1208
      %1482 = vmatpush1.bf16.msra.mxu0 %v1207
      %1483 = vmatprep.subr.bf16.mxu0 %v1214
      %1484 = vmatpush1.bf16.msra.mxu0 %v1213
      %1485 = vmatprep.subr.bf16.mxu0 %v1220
      %1486 = vmatpush1.bf16.msra.mxu0 %v1219
      %1487 = vmatprep.subr.bf16.mxu0 %v1226
      %1488 = vmatpush1.bf16.msra.mxu0 %v1225
      %1489 = vmatprep.subr.bf16.mxu0 %v1232
      %1490 = vmatpush1.bf16.msra.mxu0 %v1231
      %1491 = vmatprep.subr.bf16.mxu0 %v1238
      %1492 = vmatpush1.bf16.msra.mxu0 %v1237
      %1493 = vmatprep.subr.bf16.mxu0 %v1244
      %1494 = vmatpush1.bf16.msra.mxu0 %v1243
      %1495 = vmatprep.subr.bf16.mxu0 %v1250
      %1496 = vmatpush1.bf16.msra.mxu0 %v1249
      %1497 = vmatprep.subr.bf16.mxu0 %v1256
      %1498 = vmatpush1.bf16.msra.mxu0 %v1255
      %1499 = vmatprep.subr.bf16.mxu0 %v1262
      %1500 = vmatpush1.bf16.msra.mxu0 %v1261
      %1501 = vmatprep.subr.bf16.mxu0 %v1268
      %1502 = vmatpush1.bf16.msra.mxu0 %v1267
      %1503 = vmatprep.subr.bf16.mxu0 %v1274
      %1504 = vmatpush1.bf16.msra.mxu0 %v1273
      %1505 = vmatprep.subr.bf16.mxu0 %v1280
      %1506 = vmatpush1.bf16.msra.mxu0 %v1279
      %1507 = vmatprep.subr.bf16.mxu0 %v1286
      %1508 = vmatpush1.bf16.msra.mxu0 %v1285
      %1509 = vmatprep.subr.bf16.mxu0 %v1292
      %1510 = vmatpush1.bf16.msra.mxu0 %v1291
      %1511 = vmatprep.subr.bf16.mxu0 %v1298
      %1512 = vmatpush1.bf16.msra.mxu0 %v1297
      %1513 = vmatprep.mubr.bf16.mxu0 %v882
      %1514 = vmatmul.mubr.bf16.gmra.mrb[0].mxu0 %v881
      %v1515 = vpop.f32.mrb[0].mxu0
      %v1516 = vadd.f32 %v904, %v1515
      %v1517 = vpop.f32.mrb[0].mxu0
      %v1518 = vadd.f32 %v908, %v1517
      %v1519 = vpop.f32.mrb[0].mxu0
      %v1520 = vadd.f32 %v904, %v1519
      %v1521 = vpop.f32.mrb[0].mxu0
      %v1522 = vadd.f32 %v908, %v1521
      %1523 = vdwg.mxu0
      %v1524 = vpack.c.bf16 %v1430, %v1430
      %v1525 = vpack.c.bf16 %v1432, %v1432
      %v1526 = vpack.c.bf16 %v1434, %v1434
      %v1527 = vpack.c.bf16 %v1436, %v1436
      %v1528 = vpack.c.bf16 %v1473, %v1473
      %v1529 = vpack.c.bf16 %v1475, %v1475
      %v1530 = vpack.c.bf16 %v1477, %v1477
      %v1531 = vpack.c.bf16 %v1479, %v1479
      %v1532 = vpack.c.bf16 %v1516, %v1516
      %v1533 = vpack.c.bf16 %v1518, %v1518
      %v1534 = vpack.c.bf16 %v1520, %v1520
      %v1535 = vpack.c.bf16 %v1522, %v1522
      %1536 = vmatprep.subr.bf16.mxu0 0
      %1537 = vmatpush1.bf16.xpose.msra.mxu0 %v1528
      %1538 = vmatprep.subr.bf16.mxu0 0
      %1539 = vmatpush1.bf16.xpose.msra.mxu0 0
      %1540 = vmatprep.subr.bf16.mxu0 0
      %1541 = vmatpush1.bf16.xpose.msra.mxu0 0
      %1542 = vmatprep.subr.bf16.mxu0 0
      %1543 = vmatpush1.bf16.xpose.msra.mxu0 0
      %1544 = vmatprep.subr.bf16.mxu0 0
      %1545 = vmatpush1.bf16.xpose.msra.mxu0 0
      %1546 = vmatprep.subr.bf16.mxu0 0
      %1547 = vmatpush1.bf16.xpose.msra.mxu0 0
      %1548 = vmatprep.subr.bf16.mxu0 0
      %1549 = vmatpush1.bf16.xpose.msra.mxu0 0
      %1550 = vmatprep.subr.bf16.mxu0 0
      %1551 = vmatpush1.bf16.xpose.msra.mxu0 0
      %1552 = vmatprep.subr.bf16.mxu0 0
      %1553 = vmatpush1.bf16.xpose.msra.mxu0 0
      %1554 = vmatprep.subr.bf16.mxu0 0
      %1555 = vmatpush1.bf16.xpose.msra.mxu0 0
      %1556 = vmatprep.subr.bf16.mxu0 0
      %1557 = vmatpush1.bf16.xpose.msra.mxu0 0
      %1558 = vmatprep.subr.bf16.mxu0 0
      %1559 = vmatpush1.bf16.xpose.msra.mxu0 0
      %1560 = vmatprep.subr.bf16.mxu0 0
      %1561 = vmatpush1.bf16.xpose.msra.mxu0 0
      %1562 = vmatprep.subr.bf16.mxu0 0
      %1563 = vmatpush1.bf16.xpose.msra.mxu0 0
      %1564 = vmatprep.subr.bf16.mxu0 0
      %1565 = vmatpush1.bf16.xpose.msra.mxu0 0
      %1566 = vmatprep.subr.bf16.mxu0 0
      %1567 = vmatpush1.bf16.xpose.msra.mxu0 0
      %1568 = vmatprep.mubr.bf16.mxu0 0
      %1569 = vmatmul.mubr.bf16.gmra.mrb[0].mxu0 %v1524
      %v1570 = vpop.f32.mrb[0].mxu0
      %v1571 = vadd.f32 0.0, %v1570
      %v1572 = vpop.f32.mrb[0].mxu0
      %v1573 = vpop.f32.mrb[0].mxu0
      %v1574 = vpop.f32.mrb[0].mxu0
      %1575 = vdwg.mxu0
      %1576 = vmatprep.subr.bf16.mxu0 0
      %1577 = vmatpush1.bf16.xpose.msra.mxu0 %v1529
      %1578 = vmatprep.subr.bf16.mxu0 0
      %1579 = vmatpush1.bf16.xpose.msra.mxu0 0
      %1580 = vmatprep.subr.bf16.mxu0 0
      %1581 = vmatpush1.bf16.xpose.msra.mxu0 0
      %1582 = vmatprep.subr.bf16.mxu0 0
      %1583 = vmatpush1.bf16.xpose.msra.mxu0 0
      %1584 = vmatprep.subr.bf16.mxu0 0
      %1585 = vmatpush1.bf16.xpose.msra.mxu0 0
      %1586 = vmatprep.subr.bf16.mxu0 0
      %1587 = vmatpush1.bf16.xpose.msra.mxu0 0
      %1588 = vmatprep.subr.bf16.mxu0 0
      %1589 = vmatpush1.bf16.xpose.msra.mxu0 0
      %1590 = vmatprep.subr.bf16.mxu0 0
      %1591 = vmatpush1.bf16.xpose.msra.mxu0 0
      %1592 = vmatprep.subr.bf16.mxu0 0
      %1593 = vmatpush1.bf16.xpose.msra.mxu0 0
      %1594 = vmatprep.subr.bf16.mxu0 0
      %1595 = vmatpush1.bf16.xpose.msra.mxu0 0
      %1596 = vmatprep.subr.bf16.mxu0 0
      %1597 = vmatpush1.bf16.xpose.msra.mxu0 0
      %1598 = vmatprep.subr.bf16.mxu0 0
      %1599 = vmatpush1.bf16.xpose.msra.mxu0 0
      %1600 = vmatprep.subr.bf16.mxu0 0
      %1601 = vmatpush1.bf16.xpose.msra.mxu0 0
      %1602 = vmatprep.subr.bf16.mxu0 0
      %1603 = vmatpush1.bf16.xpose.msra.mxu0 0
      %1604 = vmatprep.subr.bf16.mxu0 0
      %1605 = vmatpush1.bf16.xpose.msra.mxu0 0
      %1606 = vmatprep.subr.bf16.mxu0 0
      %1607 = vmatpush1.bf16.xpose.msra.mxu0 0
      %1608 = vmatprep.mubr.bf16.mxu0 0
      %1609 = vmatmul.mubr.bf16.gmra.mrb[0].mxu0 %v1525
      %v1610 = vpop.f32.mrb[0].mxu0
      %v1611 = vadd.f32 0.0, %v1610
      %v1612 = vpop.f32.mrb[0].mxu0
      %v1613 = vpop.f32.mrb[0].mxu0
      %v1614 = vpop.f32.mrb[0].mxu0
      %1615 = vdwg.mxu0
      %1616 = vmatprep.subr.bf16.mxu0 0
      %1617 = vmatpush1.bf16.xpose.msra.mxu0 %v1530
      %1618 = vmatprep.subr.bf16.mxu0 0
      %1619 = vmatpush1.bf16.xpose.msra.mxu0 0
      %1620 = vmatprep.subr.bf16.mxu0 0
      %1621 = vmatpush1.bf16.xpose.msra.mxu0 0
      %1622 = vmatprep.subr.bf16.mxu0 0
      %1623 = vmatpush1.bf16.xpose.msra.mxu0 0
      %1624 = vmatprep.subr.bf16.mxu0 0
      %1625 = vmatpush1.bf16.xpose.msra.mxu0 0
      %1626 = vmatprep.subr.bf16.mxu0 0
      %1627 = vmatpush1.bf16.xpose.msra.mxu0 0
      %1628 = vmatprep.subr.bf16.mxu0 0
      %1629 = vmatpush1.bf16.xpose.msra.mxu0 0
      %1630 = vmatprep.subr.bf16.mxu0 0
      %1631 = vmatpush1.bf16.xpose.msra.mxu0 0
      %1632 = vmatprep.subr.bf16.mxu0 0
      %1633 = vmatpush1.bf16.xpose.msra.mxu0 0
      %1634 = vmatprep.subr.bf16.mxu0 0
      %1635 = vmatpush1.bf16.xpose.msra.mxu0 0
      %1636 = vmatprep.subr.bf16.mxu0 0
      %1637 = vmatpush1.bf16.xpose.msra.mxu0 0
      %1638 = vmatprep.subr.bf16.mxu0 0
      %1639 = vmatpush1.bf16.xpose.msra.mxu0 0
      %1640 = vmatprep.subr.bf16.mxu0 0
      %1641 = vmatpush1.bf16.xpose.msra.mxu0 0
      %1642 = vmatprep.subr.bf16.mxu0 0
      %1643 = vmatpush1.bf16.xpose.msra.mxu0 0
      %1644 = vmatprep.subr.bf16.mxu0 0
      %1645 = vmatpush1.bf16.xpose.msra.mxu0 0
      %1646 = vmatprep.subr.bf16.mxu0 0
      %1647 = vmatpush1.bf16.xpose.msra.mxu0 0
      %1648 = vmatprep.mubr.bf16.mxu0 0
      %1649 = vmatmul.mubr.bf16.gmra.mrb[0].mxu0 %v1526
      %v1650 = vpop.f32.mrb[0].mxu0
      %v1651 = vadd.f32 0.0, %v1650
      %v1652 = vpop.f32.mrb[0].mxu0
      %v1653 = vpop.f32.mrb[0].mxu0
      %v1654 = vpop.f32.mrb[0].mxu0
      %1655 = vdwg.mxu0
      %1656 = vmatprep.subr.bf16.mxu0 0
      %1657 = vmatpush1.bf16.xpose.msra.mxu0 %v1531
      %1658 = vmatprep.subr.bf16.mxu0 0
      %1659 = vmatpush1.bf16.xpose.msra.mxu0 0
      %1660 = vmatprep.subr.bf16.mxu0 0
      %1661 = vmatpush1.bf16.xpose.msra.mxu0 0
      %1662 = vmatprep.subr.bf16.mxu0 0
      %1663 = vmatpush1.bf16.xpose.msra.mxu0 0
      %1664 = vmatprep.subr.bf16.mxu0 0
      %1665 = vmatpush1.bf16.xpose.msra.mxu0 0
      %1666 = vmatprep.subr.bf16.mxu0 0
      %1667 = vmatpush1.bf16.xpose.msra.mxu0 0
      %1668 = vmatprep.subr.bf16.mxu0 0
      %1669 = vmatpush1.bf16.xpose.msra.mxu0 0
      %1670 = vmatprep.subr.bf16.mxu0 0
      %1671 = vmatpush1.bf16.xpose.msra.mxu0 0
      %1672 = vmatprep.subr.bf16.mxu0 0
      %1673 = vmatpush1.bf16.xpose.msra.mxu0 0
      %1674 = vmatprep.subr.bf16.mxu0 0
      %1675 = vmatpush1.bf16.xpose.msra.mxu0 0
      %1676 = vmatprep.subr.bf16.mxu0 0
      %1677 = vmatpush1.bf16.xpose.msra.mxu0 0
      %1678 = vmatprep.subr.bf16.mxu0 0
      %1679 = vmatpush1.bf16.xpose.msra.mxu0 0
      %1680 = vmatprep.subr.bf16.mxu0 0
      %1681 = vmatpush1.bf16.xpose.msra.mxu0 0
      %1682 = vmatprep.subr.bf16.mxu0 0
      %1683 = vmatpush1.bf16.xpose.msra.mxu0 0
      %1684 = vmatprep.subr.bf16.mxu0 0
      %1685 = vmatpush1.bf16.xpose.msra.mxu0 0
      %1686 = vmatprep.subr.bf16.mxu0 0
      %1687 = vmatpush1.bf16.xpose.msra.mxu0 0
      %1688 = vmatprep.mubr.bf16.mxu0 0
      %1689 = vmatmul.mubr.bf16.gmra.mrb[0].mxu0 %v1527
      %v1690 = vpop.f32.mrb[0].mxu0
      %v1691 = vadd.f32 0.0, %v1690
      %v1692 = vpop.f32.mrb[0].mxu0
      %v1693 = vpop.f32.mrb[0].mxu0
      %v1694 = vpop.f32.mrb[0].mxu0
      %1695 = vdwg.mxu0
      %v1696 = vmul.f32 %v1571, 0.088388346
      %v1697 = vmul.f32 %v1611, 0.088388346
      %v1698 = vmul.f32 %v1651, 0.088388346
      %v1699 = vmul.f32 %v1691, 0.088388346
      %v1700 = vld [vmem:[%s1] sm:$0x3]
      %v1701 = vsub.f32 1.0, %v1700
      %v1702 = vmul.f32 %v1701, -1e+09
      %v1704 = vrot.slane %v1702, 1
      %v1706 = vlaneseq
      %v1707 = vshrl.u32 %v1706, 7
      %v1708 = vsub.s32 0, %v1707
      %v1709 = vrot.slane %v1702, %v1708
      %v1710 = vlaneseq
      %v1711 = vshrl.u32 %v1710, 7
      %v1712 = vsub.s32 0, %v1711
      %v1713 = vrot.slane %v1704, %v1712
      %v1714 = vadd.f32 %v1696, %v1709
      %v1715 = vadd.f32 %v1697, %v1709
      %v1716 = vadd.f32 %v1698, %v1713
      %v1717 = vadd.f32 %v1699, %v1713
      %vm1718 = vcmask 64512
      %v1719 = vsel %vm1718, %v1714, -inf
      %1720 = vmax.xlane.f32.xlu0 %v1719
      %v1721 = vpop.xlane.xlu0 %1720
      %v1722 = vsel %vm1718, %v1715, -inf
      %1723 = vmax.xlane.f32.xlu0 %v1722
      %v1724 = vpop.xlane.xlu0 %1723
      %v1725 = vsel %vm1718, %v1716, -inf
      %1726 = vmax.xlane.f32.xlu0 %v1725
      %v1727 = vpop.xlane.xlu0 %1726
      %v1728 = vsel %vm1718, %v1717, -inf
      %1729 = vmax.xlane.f32.xlu0 %v1728
      %v1730 = vpop.xlane.xlu0 %1729
      %v1731 = vsub.f32 %v1714, %v1721
      %v1732 = vsub.f32 %v1715, %v1724
      %v1733 = vsub.f32 %v1716, %v1727
      %v1734 = vsub.f32 %v1717, %v1730
      %v1735 = vmul.f32 %v1731, 1.442695
      %v1736 = vpow.pop %v1735
      %v1737 = vmul.f32 %v1732, 1.442695
      %v1738 = vpow.pop %v1737
      %v1739 = vmul.f32 %v1733, 1.442695
      %v1740 = vpow.pop %v1739
      %v1741 = vmul.f32 %v1734, 1.442695
      %v1742 = vpow.pop %v1741
      %v1743 = vsel %vm1718, %v1736, 0.0
      %1744 = vadd.xlane.f32.xlu0 %v1743
      %v1745 = vpop.xlane.xlu0 %1744
      %v1746 = vsel %vm1718, %v1738, 0.0
      %1747 = vadd.xlane.f32.xlu0 %v1746
      %v1748 = vpop.xlane.xlu0 %1747
      %v1749 = vsel %vm1718, %v1740, 0.0
      %1750 = vadd.xlane.f32.xlu0 %v1749
      %v1751 = vpop.xlane.xlu0 %1750
      %v1752 = vsel %vm1718, %v1742, 0.0
      %1753 = vadd.xlane.f32.xlu0 %v1752
      %v1754 = vpop.xlane.xlu0 %1753
      %v1755 = vrcp.pop %v1745
      %v1756 = vrcp.pop %v1748
      %v1757 = vrcp.pop %v1751
      %v1758 = vrcp.pop %v1754
      %v1759 = vmul.f32 %v1736, %v1755
      %v1760 = vmul.f32 %v1738, %v1756
      %v1761 = vmul.f32 %v1740, %v1757
      %v1762 = vmul.f32 %v1742, %v1758
      %v1763 = vpack.c.bf16 %v1759, %v1759
      %v1764 = vpack.c.bf16 %v1760, %v1760
      %v1765 = vpack.c.bf16 %v1761, %v1761
      %v1766 = vpack.c.bf16 %v1762, %v1762
      %v1768 = vsel %vm1718, %v1763, 0
      %vm1770 = vcmask 1043456
      %v1772 = vsel %vm1770, %v1532, 0
      %1774 = vmatprep.subr.bf16.mxu0 0
      %1775 = vmatpush1.bf16.msra.mxu0 %v1772
      %1776 = vmatprep.subr.bf16.mxu0 0
      %1777 = vmatpush1.bf16.msra.mxu0 0
      %1778 = vmatprep.subr.bf16.mxu0 0
      %1779 = vmatpush1.bf16.msra.mxu0 0
      %1780 = vmatprep.subr.bf16.mxu0 0
      %1781 = vmatpush1.bf16.msra.mxu0 0
      %1782 = vmatprep.subr.bf16.mxu0 0
      %1783 = vmatpush1.bf16.msra.mxu0 0
      %1784 = vmatprep.subr.bf16.mxu0 0
      %1785 = vmatpush1.bf16.msra.mxu0 0
      %1786 = vmatprep.subr.bf16.mxu0 0
      %1787 = vmatpush1.bf16.msra.mxu0 0
      %1788 = vmatprep.subr.bf16.mxu0 0
      %1789 = vmatpush1.bf16.msra.mxu0 0
      %1790 = vmatprep.subr.bf16.mxu0 0
      %1791 = vmatpush1.bf16.msra.mxu0 0
      %1792 = vmatprep.subr.bf16.mxu0 0
      %1793 = vmatpush1.bf16.msra.mxu0 0
      %1794 = vmatprep.subr.bf16.mxu0 0
      %1795 = vmatpush1.bf16.msra.mxu0 0
      %1796 = vmatprep.subr.bf16.mxu0 0
      %1797 = vmatpush1.bf16.msra.mxu0 0
      %1798 = vmatprep.subr.bf16.mxu0 0
      %1799 = vmatpush1.bf16.msra.mxu0 0
      %1800 = vmatprep.subr.bf16.mxu0 0
      %1801 = vmatpush1.bf16.msra.mxu0 0
      %1802 = vmatprep.subr.bf16.mxu0 0
      %1803 = vmatpush1.bf16.msra.mxu0 0
      %1804 = vmatprep.subr.bf16.mxu0 0
      %1805 = vmatpush1.bf16.msra.mxu0 0
      %1806 = vmatprep.mubr.bf16.mxu0 0
      %1807 = vmatmul.mubr.bf16.gmra.mrb[0].mxu0 %v1768
      %v1808 = vpop.f32.mrb[0].mxu0
      %v1809 = vadd.f32 0.0, %v1808
      %v1810 = vpop.f32.mrb[0].mxu0
      %v1811 = vpop.f32.mrb[0].mxu0
      %v1812 = vpop.f32.mrb[0].mxu0
      %1813 = vdwg.mxu0
      %v1815 = vsel %vm1718, %v1764, 0
      %v1818 = vsel %vm1770, %v1533, 0
      %1820 = vmatprep.subr.bf16.mxu0 0
      %1821 = vmatpush1.bf16.msra.mxu0 %v1818
      %1822 = vmatprep.subr.bf16.mxu0 0
      %1823 = vmatpush1.bf16.msra.mxu0 0
      %1824 = vmatprep.subr.bf16.mxu0 0
      %1825 = vmatpush1.bf16.msra.mxu0 0
      %1826 = vmatprep.subr.bf16.mxu0 0
      %1827 = vmatpush1.bf16.msra.mxu0 0
      %1828 = vmatprep.subr.bf16.mxu0 0
      %1829 = vmatpush1.bf16.msra.mxu0 0
      %1830 = vmatprep.subr.bf16.mxu0 0
      %1831 = vmatpush1.bf16.msra.mxu0 0
      %1832 = vmatprep.subr.bf16.mxu0 0
      %1833 = vmatpush1.bf16.msra.mxu0 0
      %1834 = vmatprep.subr.bf16.mxu0 0
      %1835 = vmatpush1.bf16.msra.mxu0 0
      %1836 = vmatprep.subr.bf16.mxu0 0
      %1837 = vmatpush1.bf16.msra.mxu0 0
      %1838 = vmatprep.subr.bf16.mxu0 0
      %1839 = vmatpush1.bf16.msra.mxu0 0
      %1840 = vmatprep.subr.bf16.mxu0 0
      %1841 = vmatpush1.bf16.msra.mxu0 0
      %1842 = vmatprep.subr.bf16.mxu0 0
      %1843 = vmatpush1.bf16.msra.mxu0 0
      %1844 = vmatprep.subr.bf16.mxu0 0
      %1845 = vmatpush1.bf16.msra.mxu0 0
      %1846 = vmatprep.subr.bf16.mxu0 0
      %1847 = vmatpush1.bf16.msra.mxu0 0
      %1848 = vmatprep.subr.bf16.mxu0 0
      %1849 = vmatpush1.bf16.msra.mxu0 0
      %1850 = vmatprep.subr.bf16.mxu0 0
      %1851 = vmatpush1.bf16.msra.mxu0 0
      %1852 = vmatprep.mubr.bf16.mxu0 0
      %1853 = vmatmul.mubr.bf16.gmra.mrb[0].mxu0 %v1815
      %v1854 = vpop.f32.mrb[0].mxu0
      %v1855 = vadd.f32 0.0, %v1854
      %v1856 = vpop.f32.mrb[0].mxu0
      %v1857 = vpop.f32.mrb[0].mxu0
      %v1858 = vpop.f32.mrb[0].mxu0
      %1859 = vdwg.mxu0
      %v1861 = vsel %vm1718, %v1765, 0
      %v1864 = vsel %vm1770, %v1534, 0
      %1866 = vmatprep.subr.bf16.mxu0 0
      %1867 = vmatpush1.bf16.msra.mxu0 %v1864
      %1868 = vmatprep.subr.bf16.mxu0 0
      %1869 = vmatpush1.bf16.msra.mxu0 0
      %1870 = vmatprep.subr.bf16.mxu0 0
      %1871 = vmatpush1.bf16.msra.mxu0 0
      %1872 = vmatprep.subr.bf16.mxu0 0
      %1873 = vmatpush1.bf16.msra.mxu0 0
      %1874 = vmatprep.subr.bf16.mxu0 0
      %1875 = vmatpush1.bf16.msra.mxu0 0
      %1876 = vmatprep.subr.bf16.mxu0 0
      %1877 = vmatpush1.bf16.msra.mxu0 0
      %1878 = vmatprep.subr.bf16.mxu0 0
      %1879 = vmatpush1.bf16.msra.mxu0 0
      %1880 = vmatprep.subr.bf16.mxu0 0
      %1881 = vmatpush1.bf16.msra.mxu0 0
      %1882 = vmatprep.subr.bf16.mxu0 0
      %1883 = vmatpush1.bf16.msra.mxu0 0
      %1884 = vmatprep.subr.bf16.mxu0 0
      %1885 = vmatpush1.bf16.msra.mxu0 0
      %1886 = vmatprep.subr.bf16.mxu0 0
      %1887 = vmatpush1.bf16.msra.mxu0 0
      %1888 = vmatprep.subr.bf16.mxu0 0
      %1889 = vmatpush1.bf16.msra.mxu0 0
      %1890 = vmatprep.subr.bf16.mxu0 0
      %1891 = vmatpush1.bf16.msra.mxu0 0
      %1892 = vmatprep.subr.bf16.mxu0 0
      %1893 = vmatpush1.bf16.msra.mxu0 0
      %1894 = vmatprep.subr.bf16.mxu0 0
      %1895 = vmatpush1.bf16.msra.mxu0 0
      %1896 = vmatprep.subr.bf16.mxu0 0
      %1897 = vmatpush1.bf16.msra.mxu0 0
      %1898 = vmatprep.mubr.bf16.mxu0 0
      %1899 = vmatmul.mubr.bf16.gmra.mrb[0].mxu0 %v1861
      %v1900 = vpop.f32.mrb[0].mxu0
      %v1901 = vadd.f32 0.0, %v1900
      %v1902 = vpop.f32.mrb[0].mxu0
      %v1903 = vpop.f32.mrb[0].mxu0
      %v1904 = vpop.f32.mrb[0].mxu0
      %1905 = vdwg.mxu0
      %v1907 = vsel %vm1718, %v1766, 0
      %v1910 = vsel %vm1770, %v1535, 0
      %1912 = vmatprep.subr.bf16.mxu0 0
      %1913 = vmatpush1.bf16.msra.mxu0 %v1910
      %1914 = vmatprep.subr.bf16.mxu0 0
      %1915 = vmatpush1.bf16.msra.mxu0 0
      %1916 = vmatprep.subr.bf16.mxu0 0
      %1917 = vmatpush1.bf16.msra.mxu0 0
      %1918 = vmatprep.subr.bf16.mxu0 0
      %1919 = vmatpush1.bf16.msra.mxu0 0
      %1920 = vmatprep.subr.bf16.mxu0 0
      %1921 = vmatpush1.bf16.msra.mxu0 0
      %1922 = vmatprep.subr.bf16.mxu0 0
      %1923 = vmatpush1.bf16.msra.mxu0 0
      %1924 = vmatprep.subr.bf16.mxu0 0
      %1925 = vmatpush1.bf16.msra.mxu0 0
      %1926 = vmatprep.subr.bf16.mxu0 0
      %1927 = vmatpush1.bf16.msra.mxu0 0
      %1928 = vmatprep.subr.bf16.mxu0 0
      %1929 = vmatpush1.bf16.msra.mxu0 0
      %1930 = vmatprep.subr.bf16.mxu0 0
      %1931 = vmatpush1.bf16.msra.mxu0 0
      %1932 = vmatprep.subr.bf16.mxu0 0
      %1933 = vmatpush1.bf16.msra.mxu0 0
      %1934 = vmatprep.subr.bf16.mxu0 0
      %1935 = vmatpush1.bf16.msra.mxu0 0
      %1936 = vmatprep.subr.bf16.mxu0 0
      %1937 = vmatpush1.bf16.msra.mxu0 0
      %1938 = vmatprep.subr.bf16.mxu0 0
      %1939 = vmatpush1.bf16.msra.mxu0 0
      %1940 = vmatprep.subr.bf16.mxu0 0
      %1941 = vmatpush1.bf16.msra.mxu0 0
      %1942 = vmatprep.subr.bf16.mxu0 0
      %1943 = vmatpush1.bf16.msra.mxu0 0
      %1944 = vmatprep.mubr.bf16.mxu0 0
      %1945 = vmatmul.mubr.bf16.gmra.mrb[0].mxu0 %v1907
      %v1946 = vpop.f32.mrb[0].mxu0
      %v1947 = vadd.f32 0.0, %v1946
      %v1948 = vpop.f32.mrb[0].mxu0
      %v1949 = vpop.f32.mrb[0].mxu0
      %v1950 = vpop.f32.mrb[0].mxu0
      %1951 = vdwg.mxu0
      %v1952 = vld [vmem:[%s672] sm:$0xff]
      %v1953 = vld [vmem:[%s672 + $0x8] sm:$0xff]
      %v1954 = vld [vmem:[%s672 + $0x10] sm:$0xff]
      %v1955 = vld [vmem:[%s672 + $0x18] sm:$0xff]
      %v1956 = vld [vmem:[%s672 + $0x20] sm:$0xff]
      %v1957 = vld [vmem:[%s672 + $0x28] sm:$0xff]
      %v1958 = vld [vmem:[%s672 + $0x30] sm:$0xff]
      %v1959 = vld [vmem:[%s672 + $0x38] sm:$0xff]
      %v1960 = vld [vmem:[%s672 + $0x40] sm:$0xff]
      %v1961 = vld [vmem:[%s672 + $0x48] sm:$0xff]
      %v1962 = vld [vmem:[%s672 + $0x50] sm:$0xff]
      %v1963 = vld [vmem:[%s672 + $0x58] sm:$0xff]
      %v1964 = vld [vmem:[%s672 + $0x60] sm:$0xff]
      %v1965 = vld [vmem:[%s672 + $0x68] sm:$0xff]
      %v1966 = vld [vmem:[%s672 + $0x70] sm:$0xff]
      %v1967 = vld [vmem:[%s672 + $0x78] sm:$0xff]
      %v1968 = vld [vmem:[%s672 + $0x80] sm:$0xff]
      %v1969 = vld [vmem:[%s672 + $0x88] sm:$0xff]
      %v1970 = vld [vmem:[%s672 + $0x90] sm:$0xff]
      %v1971 = vld [vmem:[%s672 + $0x98] sm:$0xff]
      %v1972 = vld [vmem:[%s672 + $0xa0] sm:$0xff]
      %v1973 = vld [vmem:[%s672 + $0xa8] sm:$0xff]
      %v1974 = vld [vmem:[%s672 + $0xb0] sm:$0xff]
      %v1975 = vld [vmem:[%s672 + $0xb8] sm:$0xff]
      %v1976 = vld [vmem:[%s672 + $0xc0] sm:$0xff]
      %v1977 = vld [vmem:[%s672 + $0xc8] sm:$0xff]
      %v1978 = vld [vmem:[%s672 + $0xd0] sm:$0xff]
      %v1979 = vld [vmem:[%s672 + $0xd8] sm:$0xff]
      %v1980 = vld [vmem:[%s672 + $0xe0] sm:$0xff]
      %v1981 = vld [vmem:[%s672 + $0xe8] sm:$0xff]
      %v1982 = vld [vmem:[%s672 + $0xf0] sm:$0xff]
      %v1983 = vld [vmem:[%s672 + $0xf8] sm:$0xff]
      %v1984 = vpack.c.bf16 %v1901, %v1809
      %v1985 = vpack.c.bf16 %v1947, %v1855
      %v2018 = vunpack.c.l.b16 %v1952
      %v2019 = vunpack.c.h.b16 %v1952
      %v2020 = vunpack.c.l.b16 %v1953
      %v2021 = vunpack.c.h.b16 %v1953
      %v2022 = vunpack.c.l.b16 %v1954
      %v2023 = vunpack.c.h.b16 %v1954
      %v2024 = vunpack.c.l.b16 %v1955
      %v2025 = vunpack.c.h.b16 %v1955
      %v2026 = vunpack.c.l.b16 %v1956
      %v2027 = vunpack.c.h.b16 %v1956
      %v2028 = vunpack.c.l.b16 %v1957
      %v2029 = vunpack.c.h.b16 %v1957
      %v2030 = vunpack.c.l.b16 %v1958
      %v2031 = vunpack.c.h.b16 %v1958
      %v2032 = vunpack.c.l.b16 %v1959
      %v2033 = vunpack.c.h.b16 %v1959
      %v2034 = vunpack.c.l.b16 %v1960
      %v2035 = vunpack.c.h.b16 %v1960
      %v2036 = vunpack.c.l.b16 %v1961
      %v2037 = vunpack.c.h.b16 %v1961
      %v2038 = vunpack.c.l.b16 %v1962
      %v2039 = vunpack.c.h.b16 %v1962
      %v2040 = vunpack.c.l.b16 %v1963
      %v2041 = vunpack.c.h.b16 %v1963
      %v2042 = vunpack.c.l.b16 %v1964
      %v2043 = vunpack.c.h.b16 %v1964
      %v2044 = vunpack.c.l.b16 %v1965
      %v2045 = vunpack.c.h.b16 %v1965
      %v2046 = vunpack.c.l.b16 %v1966
      %v2047 = vunpack.c.h.b16 %v1966
      %v2048 = vunpack.c.l.b16 %v1967
      %v2049 = vunpack.c.h.b16 %v1967
      %v2050 = vunpack.c.l.b16 %v1968
      %v2051 = vunpack.c.h.b16 %v1968
      %v2052 = vunpack.c.l.b16 %v1969
      %v2053 = vunpack.c.h.b16 %v1969
      %v2054 = vunpack.c.l.b16 %v1970
      %v2055 = vunpack.c.h.b16 %v1970
      %v2056 = vunpack.c.l.b16 %v1971
      %v2057 = vunpack.c.h.b16 %v1971
      %v2058 = vunpack.c.l.b16 %v1972
      %v2059 = vunpack.c.h.b16 %v1972
      %v2060 = vunpack.c.l.b16 %v1973
      %v2061 = vunpack.c.h.b16 %v1973
      %v2062 = vunpack.c.l.b16 %v1974
      %v2063 = vunpack.c.h.b16 %v1974
      %v2064 = vunpack.c.l.b16 %v1975
      %v2065 = vunpack.c.h.b16 %v1975
      %v2066 = vunpack.c.l.b16 %v1976
      %v2067 = vunpack.c.h.b16 %v1976
      %v2068 = vunpack.c.l.b16 %v1977
      %v2069 = vunpack.c.h.b16 %v1977
      %v2070 = vunpack.c.l.b16 %v1978
      %v2071 = vunpack.c.h.b16 %v1978
      %v2072 = vunpack.c.l.b16 %v1979
      %v2073 = vunpack.c.h.b16 %v1979
      %v2074 = vunpack.c.l.b16 %v1980
      %v2075 = vunpack.c.h.b16 %v1980
      %v2076 = vunpack.c.l.b16 %v1981
      %v2077 = vunpack.c.h.b16 %v1981
      %v2078 = vunpack.c.l.b16 %v1982
      %v2079 = vunpack.c.h.b16 %v1982
      %v2080 = vunpack.c.l.b16 %v1983
      %v2081 = vunpack.c.h.b16 %v1983
      %v2082 = vpack.c.b16 %v2020, %v2018
      %v2083 = vpack.c.b16 %v2021, %v2019
      %v2084 = vpack.c.b16 %v2024, %v2022
      %v2085 = vpack.c.b16 %v2025, %v2023
      %v2086 = vpack.c.b16 %v2028, %v2026
      %v2087 = vpack.c.b16 %v2029, %v2027
      %v2088 = vpack.c.b16 %v2032, %v2030
      %v2089 = vpack.c.b16 %v2033, %v2031
      %v2090 = vpack.c.b16 %v2036, %v2034
      %v2091 = vpack.c.b16 %v2037, %v2035
      %v2092 = vpack.c.b16 %v2040, %v2038
      %v2093 = vpack.c.b16 %v2041, %v2039
      %v2094 = vpack.c.b16 %v2044, %v2042
      %v2095 = vpack.c.b16 %v2045, %v2043
      %v2096 = vpack.c.b16 %v2048, %v2046
      %v2097 = vpack.c.b16 %v2049, %v2047
      %v2098 = vpack.c.b16 %v2052, %v2050
      %v2099 = vpack.c.b16 %v2053, %v2051
      %v2100 = vpack.c.b16 %v2056, %v2054
      %v2101 = vpack.c.b16 %v2057, %v2055
      %v2102 = vpack.c.b16 %v2060, %v2058
      %v2103 = vpack.c.b16 %v2061, %v2059
      %v2104 = vpack.c.b16 %v2064, %v2062
      %v2105 = vpack.c.b16 %v2065, %v2063
      %v2106 = vpack.c.b16 %v2068, %v2066
      %v2107 = vpack.c.b16 %v2069, %v2067
      %v2108 = vpack.c.b16 %v2072, %v2070
      %v2109 = vpack.c.b16 %v2073, %v2071
      %v2110 = vpack.c.b16 %v2076, %v2074
      %v2111 = vpack.c.b16 %v2077, %v2075
      %v2112 = vpack.c.b16 %v2080, %v2078
      %v2113 = vpack.c.b16 %v2081, %v2079
      %2146 = vmatprep.subr.bf16.mxu0 %v2083
      %2147 = vmatpush1.bf16.msra.mxu0 %v2082
      %2148 = vmatprep.subr.bf16.mxu0 %v2085
      %2149 = vmatpush1.bf16.msra.mxu0 %v2084
      %2150 = vmatprep.subr.bf16.mxu0 %v2087
      %2151 = vmatpush1.bf16.msra.mxu0 %v2086
      %2152 = vmatprep.subr.bf16.mxu0 %v2089
      %2153 = vmatpush1.bf16.msra.mxu0 %v2088
      %2154 = vmatprep.subr.bf16.mxu0 %v2091
      %2155 = vmatpush1.bf16.msra.mxu0 %v2090
      %2156 = vmatprep.subr.bf16.mxu0 %v2093
      %2157 = vmatpush1.bf16.msra.mxu0 %v2092
      %2158 = vmatprep.subr.bf16.mxu0 %v2095
      %2159 = vmatpush1.bf16.msra.mxu0 %v2094
      %2160 = vmatprep.subr.bf16.mxu0 %v2097
      %2161 = vmatpush1.bf16.msra.mxu0 %v2096
      %2162 = vmatprep.subr.bf16.mxu0 %v2099
      %2163 = vmatpush1.bf16.msra.mxu0 %v2098
      %2164 = vmatprep.subr.bf16.mxu0 %v2101
      %2165 = vmatpush1.bf16.msra.mxu0 %v2100
      %2166 = vmatprep.subr.bf16.mxu0 %v2103
      %2167 = vmatpush1.bf16.msra.mxu0 %v2102
      %2168 = vmatprep.subr.bf16.mxu0 %v2105
      %2169 = vmatpush1.bf16.msra.mxu0 %v2104
      %2170 = vmatprep.subr.bf16.mxu0 %v2107
      %2171 = vmatpush1.bf16.msra.mxu0 %v2106
      %2172 = vmatprep.subr.bf16.mxu0 %v2109
      %2173 = vmatpush1.bf16.msra.mxu0 %v2108
      %2174 = vmatprep.subr.bf16.mxu0 %v2111
      %2175 = vmatpush1.bf16.msra.mxu0 %v2110
      %2176 = vmatprep.subr.bf16.mxu0 %v2113
      %2177 = vmatpush1.bf16.msra.mxu0 %v2112
      %2178 = vmatprep.mubr.bf16.mxu0 %v1985
      %2179 = vmatmul.mubr.bf16.gmra.mrb[0].mxu0 %v1984
      %v2180 = vpop.f32.mrb[0].mxu0
      %v2181 = vadd.f32 0.0, %v2180
      %v2182 = vpop.f32.mrb[0].mxu0
      %v2183 = vadd.f32 0.0, %v2182
      %v2184 = vpop.f32.mrb[0].mxu0
      %v2185 = vadd.f32 0.0, %v2184
      %v2186 = vpop.f32.mrb[0].mxu0
      %v2187 = vadd.f32 0.0, %v2186
      %2188 = vdwg.mxu0
      %v2189 = vadd.f32 %v781, %v2181
      %v2190 = vadd.f32 %v782, %v2183
      %v2191 = vadd.f32 %v783, %v2185
      %v2192 = vadd.f32 %v784, %v2187
      %v2193 = vld [vmem:[%s676] sm:$0x3]
      %v2195 = vlaneseq
      %v2196 = vshrl.u32 %v2195, 7
      %v2197 = vsub.s32 0, %v2196
      %v2198 = vrot.slane %v2193, %v2197
      %v2199 = vlaneseq
      %v2200 = vshrl.u32 %v2199, 7
      %v2201 = vsub.s32 1, %v2200
      %v2202 = vrot.slane %v2193, %v2201
      %v2205 = vadd.f32 %v2189, %v2198
      %v2206 = vadd.f32 %v2190, %v2202
      %v2207 = vadd.f32 %v2191, %v2198
      %v2208 = vadd.f32 %v2192, %v2202
      %v2209 = vld [vmem:[%s654] sm:$0x3]
      %v2210 = vld [vmem:[%s658] sm:$0x3]
      %v2211 = vadd.f32 %v2205, %v2206
      %2212 = vadd.xlane.f32.xlu0 %v2211
      %v2213 = vpop.xlane.xlu0 %2212
      %v2214 = vadd.f32 %v2207, %v2208
      %2215 = vadd.xlane.f32.xlu0 %v2214
      %v2216 = vpop.xlane.xlu0 %2215
      %v2217 = vrcp.pop 256.0
      %v2218 = vmul.f32 %v2213, %v2217
      %v2219 = vmul.f32 %v2216, %v2217
      %v2220 = vsub.f32 %v2205, %v2218
      %v2221 = vsub.f32 %v2206, %v2218
      %v2222 = vsub.f32 %v2207, %v2219
      %v2223 = vsub.f32 %v2208, %v2219
      %v2224 = vmul.f32 %v2220, %v2220
      %v2225 = vmul.f32 %v2221, %v2221
      %v2226 = vmul.f32 %v2222, %v2222
      %v2227 = vmul.f32 %v2223, %v2223
      %v2228 = vadd.f32 %v2224, %v2225
      %2229 = vadd.xlane.f32.xlu0 %v2228
      %v2230 = vpop.xlane.xlu0 %2229
      %v2231 = vadd.f32 %v2226, %v2227
      %2232 = vadd.xlane.f32.xlu0 %v2231
      %v2233 = vpop.xlane.xlu0 %2232
      %v2234 = vmul.f32 %v2230, %v2217
      %v2235 = vmul.f32 %v2233, %v2217
      %v2236 = vadd.f32 %v2234, 1e-12
      %v2237 = vadd.f32 %v2235, 1e-12
      %v2238 = vrsqrt.pop %v2236
      %v2239 = vrsqrt.pop %v2237
      %v2240 = vmul.f32 %v2220, %v2238
      %v2241 = vmul.f32 %v2221, %v2238
      %v2242 = vmul.f32 %v2222, %v2239
      %v2243 = vmul.f32 %v2223, %v2239
      %v2245 = vlaneseq
      %v2246 = vshrl.u32 %v2245, 7
      %v2247 = vsub.s32 0, %v2246
      %v2248 = vrot.slane %v2209, %v2247
      %v2249 = vlaneseq
      %v2250 = vshrl.u32 %v2249, 7
      %v2251 = vsub.s32 1, %v2250
      %v2252 = vrot.slane %v2209, %v2251
      %v2255 = vmul.f32 %v2240, %v2248
      %v2256 = vmul.f32 %v2241, %v2252
      %v2257 = vmul.f32 %v2242, %v2248
      %v2258 = vmul.f32 %v2243, %v2252
      %v2260 = vlaneseq
      %v2261 = vshrl.u32 %v2260, 7
      %v2262 = vsub.s32 0, %v2261
      %v2263 = vrot.slane %v2210, %v2262
      %v2264 = vlaneseq
      %v2265 = vshrl.u32 %v2264, 7
      %v2266 = vsub.s32 1, %v2265
      %v2267 = vrot.slane %v2210, %v2266
      %v2270 = vadd.f32 %v2255, %v2263
      %v2271 = vadd.f32 %v2256, %v2267
      %v2272 = vadd.f32 %v2257, %v2263
      %v2273 = vadd.f32 %v2258, %v2267
      %v2274 = vld [vmem:[%s689] sm:$0xff]
      %v2275 = vld [vmem:[%s689 + $0x8] sm:$0xff]
      %v2276 = vld [vmem:[%s689 + $0x10] sm:$0xff]
      %v2277 = vld [vmem:[%s689 + $0x18] sm:$0xff]
      %v2278 = vld [vmem:[%s689 + $0x20] sm:$0xff]
      %v2279 = vld [vmem:[%s689 + $0x28] sm:$0xff]
      %v2280 = vld [vmem:[%s689 + $0x30] sm:$0xff]
      %v2281 = vld [vmem:[%s689 + $0x38] sm:$0xff]
      %v2282 = vld [vmem:[%s689 + $0x40] sm:$0xff]
      %v2283 = vld [vmem:[%s689 + $0x48] sm:$0xff]
      %v2284 = vld [vmem:[%s689 + $0x50] sm:$0xff]
      %v2285 = vld [vmem:[%s689 + $0x58] sm:$0xff]
      %v2286 = vld [vmem:[%s689 + $0x60] sm:$0xff]
      %v2287 = vld [vmem:[%s689 + $0x68] sm:$0xff]
      %v2288 = vld [vmem:[%s689 + $0x70] sm:$0xff]
      %v2289 = vld [vmem:[%s689 + $0x78] sm:$0xff]
      %v2290 = vld [vmem:[%s689 + $0x80] sm:$0xff]
      %v2291 = vld [vmem:[%s689 + $0x88] sm:$0xff]
      %v2292 = vld [vmem:[%s689 + $0x90] sm:$0xff]
      %v2293 = vld [vmem:[%s689 + $0x98] sm:$0xff]
      %v2294 = vld [vmem:[%s689 + $0xa0] sm:$0xff]
      %v2295 = vld [vmem:[%s689 + $0xa8] sm:$0xff]
      %v2296 = vld [vmem:[%s689 + $0xb0] sm:$0xff]
      %v2297 = vld [vmem:[%s689 + $0xb8] sm:$0xff]
      %v2298 = vld [vmem:[%s689 + $0xc0] sm:$0xff]
      %v2299 = vld [vmem:[%s689 + $0xc8] sm:$0xff]
      %v2300 = vld [vmem:[%s689 + $0xd0] sm:$0xff]
      %v2301 = vld [vmem:[%s689 + $0xd8] sm:$0xff]
      %v2302 = vld [vmem:[%s689 + $0xe0] sm:$0xff]
      %v2303 = vld [vmem:[%s689 + $0xe8] sm:$0xff]
      %v2304 = vld [vmem:[%s689 + $0xf0] sm:$0xff]
      %v2305 = vld [vmem:[%s689 + $0xf8] sm:$0xff]
      %v2306 = vld [vmem:[%s689 + $0x100] sm:$0xff]
      %v2307 = vld [vmem:[%s689 + $0x108] sm:$0xff]
      %v2308 = vld [vmem:[%s689 + $0x110] sm:$0xff]
      %v2309 = vld [vmem:[%s689 + $0x118] sm:$0xff]
      %v2310 = vld [vmem:[%s689 + $0x120] sm:$0xff]
      %v2311 = vld [vmem:[%s689 + $0x128] sm:$0xff]
      %v2312 = vld [vmem:[%s689 + $0x130] sm:$0xff]
      %v2313 = vld [vmem:[%s689 + $0x138] sm:$0xff]
      %v2314 = vld [vmem:[%s689 + $0x140] sm:$0xff]
      %v2315 = vld [vmem:[%s689 + $0x148] sm:$0xff]
      %v2316 = vld [vmem:[%s689 + $0x150] sm:$0xff]
      %v2317 = vld [vmem:[%s689 + $0x158] sm:$0xff]
      %v2318 = vld [vmem:[%s689 + $0x160] sm:$0xff]
      %v2319 = vld [vmem:[%s689 + $0x168] sm:$0xff]
      %v2320 = vld [vmem:[%s689 + $0x170] sm:$0xff]
      %v2321 = vld [vmem:[%s689 + $0x178] sm:$0xff]
      %v2322 = vld [vmem:[%s689 + $0x180] sm:$0xff]
      %v2323 = vld [vmem:[%s689 + $0x188] sm:$0xff]
      %v2324 = vld [vmem:[%s689 + $0x190] sm:$0xff]
      %v2325 = vld [vmem:[%s689 + $0x198] sm:$0xff]
      %v2326 = vld [vmem:[%s689 + $0x1a0] sm:$0xff]
      %v2327 = vld [vmem:[%s689 + $0x1a8] sm:$0xff]
      %v2328 = vld [vmem:[%s689 + $0x1b0] sm:$0xff]
      %v2329 = vld [vmem:[%s689 + $0x1b8] sm:$0xff]
      %v2330 = vld [vmem:[%s689 + $0x1c0] sm:$0xff]
      %v2331 = vld [vmem:[%s689 + $0x1c8] sm:$0xff]
      %v2332 = vld [vmem:[%s689 + $0x1d0] sm:$0xff]
      %v2333 = vld [vmem:[%s689 + $0x1d8] sm:$0xff]
      %v2334 = vld [vmem:[%s689 + $0x1e0] sm:$0xff]
      %v2335 = vld [vmem:[%s689 + $0x1e8] sm:$0xff]
      %v2336 = vld [vmem:[%s689 + $0x1f0] sm:$0xff]
      %v2337 = vld [vmem:[%s689 + $0x1f8] sm:$0xff]
      %v2338 = vpack.c.bf16 %v2272, %v2270
      %v2339 = vpack.c.bf16 %v2273, %v2271
      %v2340 = vld [vmem:[%s693] sm:$0xf]
      %v2342 = vlaneseq
      %v2343 = vshrl.u32 %v2342, 7
      %v2344 = vsub.s32 0, %v2343
      %v2345 = vrot.slane %v2340, %v2344
      %v2346 = vlaneseq
      %v2347 = vshrl.u32 %v2346, 7
      %v2348 = vsub.s32 1, %v2347
      %v2349 = vrot.slane %v2340, %v2348
      %v2350 = vlaneseq
      %v2351 = vshrl.u32 %v2350, 7
      %v2352 = vsub.s32 2, %v2351
      %v2353 = vrot.slane %v2340, %v2352
      %v2354 = vlaneseq
      %v2355 = vshrl.u32 %v2354, 7
      %v2356 = vsub.s32 3, %v2355
      %v2357 = vrot.slane %v2340, %v2356
      %v2426 = vunpack.c.l.b16 %v2274
      %v2427 = vunpack.c.h.b16 %v2274
      %v2428 = vunpack.c.l.b16 %v2275
      %v2429 = vunpack.c.h.b16 %v2275
      %v2430 = vunpack.c.l.b16 %v2276
      %v2431 = vunpack.c.h.b16 %v2276
      %v2432 = vunpack.c.l.b16 %v2277
      %v2433 = vunpack.c.h.b16 %v2277
      %v2434 = vunpack.c.l.b16 %v2278
      %v2435 = vunpack.c.h.b16 %v2278
      %v2436 = vunpack.c.l.b16 %v2279
      %v2437 = vunpack.c.h.b16 %v2279
      %v2438 = vunpack.c.l.b16 %v2280
      %v2439 = vunpack.c.h.b16 %v2280
      %v2440 = vunpack.c.l.b16 %v2281
      %v2441 = vunpack.c.h.b16 %v2281
      %v2442 = vunpack.c.l.b16 %v2282
      %v2443 = vunpack.c.h.b16 %v2282
      %v2444 = vunpack.c.l.b16 %v2283
      %v2445 = vunpack.c.h.b16 %v2283
      %v2446 = vunpack.c.l.b16 %v2284
      %v2447 = vunpack.c.h.b16 %v2284
      %v2448 = vunpack.c.l.b16 %v2285
      %v2449 = vunpack.c.h.b16 %v2285
      %v2450 = vunpack.c.l.b16 %v2286
      %v2451 = vunpack.c.h.b16 %v2286
      %v2452 = vunpack.c.l.b16 %v2287
      %v2453 = vunpack.c.h.b16 %v2287
      %v2454 = vunpack.c.l.b16 %v2288
      %v2455 = vunpack.c.h.b16 %v2288
      %v2456 = vunpack.c.l.b16 %v2289
      %v2457 = vunpack.c.h.b16 %v2289
      %v2458 = vunpack.c.l.b16 %v2290
      %v2459 = vunpack.c.h.b16 %v2290
      %v2460 = vunpack.c.l.b16 %v2291
      %v2461 = vunpack.c.h.b16 %v2291
      %v2462 = vunpack.c.l.b16 %v2292
      %v2463 = vunpack.c.h.b16 %v2292
      %v2464 = vunpack.c.l.b16 %v2293
      %v2465 = vunpack.c.h.b16 %v2293
      %v2466 = vunpack.c.l.b16 %v2294
      %v2467 = vunpack.c.h.b16 %v2294
      %v2468 = vunpack.c.l.b16 %v2295
      %v2469 = vunpack.c.h.b16 %v2295
      %v2470 = vunpack.c.l.b16 %v2296
      %v2471 = vunpack.c.h.b16 %v2296
      %v2472 = vunpack.c.l.b16 %v2297
      %v2473 = vunpack.c.h.b16 %v2297
      %v2474 = vunpack.c.l.b16 %v2298
      %v2475 = vunpack.c.h.b16 %v2298
      %v2476 = vunpack.c.l.b16 %v2299
      %v2477 = vunpack.c.h.b16 %v2299
      %v2478 = vunpack.c.l.b16 %v2300
      %v2479 = vunpack.c.h.b16 %v2300
      %v2480 = vunpack.c.l.b16 %v2301
      %v2481 = vunpack.c.h.b16 %v2301
      %v2482 = vunpack.c.l.b16 %v2302
      %v2483 = vunpack.c.h.b16 %v2302
      %v2484 = vunpack.c.l.b16 %v2303
      %v2485 = vunpack.c.h.b16 %v2303
      %v2486 = vunpack.c.l.b16 %v2304
      %v2487 = vunpack.c.h.b16 %v2304
      %v2488 = vunpack.c.l.b16 %v2305
      %v2489 = vunpack.c.h.b16 %v2305
      %v2490 = vunpack.c.l.b16 %v2306
      %v2491 = vunpack.c.h.b16 %v2306
      %v2492 = vunpack.c.l.b16 %v2307
      %v2493 = vunpack.c.h.b16 %v2307
      %v2494 = vunpack.c.l.b16 %v2308
      %v2495 = vunpack.c.h.b16 %v2308
      %v2496 = vunpack.c.l.b16 %v2309
      %v2497 = vunpack.c.h.b16 %v2309
      %v2498 = vunpack.c.l.b16 %v2310
      %v2499 = vunpack.c.h.b16 %v2310
      %v2500 = vunpack.c.l.b16 %v2311
      %v2501 = vunpack.c.h.b16 %v2311
      %v2502 = vunpack.c.l.b16 %v2312
      %v2503 = vunpack.c.h.b16 %v2312
      %v2504 = vunpack.c.l.b16 %v2313
      %v2505 = vunpack.c.h.b16 %v2313
      %v2506 = vunpack.c.l.b16 %v2314
      %v2507 = vunpack.c.h.b16 %v2314
      %v2508 = vunpack.c.l.b16 %v2315
      %v2509 = vunpack.c.h.b16 %v2315
      %v2510 = vunpack.c.l.b16 %v2316
      %v2511 = vunpack.c.h.b16 %v2316
      %v2512 = vunpack.c.l.b16 %v2317
      %v2513 = vunpack.c.h.b16 %v2317
      %v2514 = vunpack.c.l.b16 %v2318
      %v2515 = vunpack.c.h.b16 %v2318
      %v2516 = vunpack.c.l.b16 %v2319
      %v2517 = vunpack.c.h.b16 %v2319
      %v2518 = vunpack.c.l.b16 %v2320
      %v2519 = vunpack.c.h.b16 %v2320
      %v2520 = vunpack.c.l.b16 %v2321
      %v2521 = vunpack.c.h.b16 %v2321
      %v2522 = vunpack.c.l.b16 %v2322
      %v2523 = vunpack.c.h.b16 %v2322
      %v2524 = vunpack.c.l.b16 %v2323
      %v2525 = vunpack.c.h.b16 %v2323
      %v2526 = vunpack.c.l.b16 %v2324
      %v2527 = vunpack.c.h.b16 %v2324
      %v2528 = vunpack.c.l.b16 %v2325
      %v2529 = vunpack.c.h.b16 %v2325
      %v2530 = vunpack.c.l.b16 %v2326
      %v2531 = vunpack.c.h.b16 %v2326
      %v2532 = vunpack.c.l.b16 %v2327
      %v2533 = vunpack.c.h.b16 %v2327
      %v2534 = vunpack.c.l.b16 %v2328
      %v2535 = vunpack.c.h.b16 %v2328
      %v2536 = vunpack.c.l.b16 %v2329
      %v2537 = vunpack.c.h.b16 %v2329
      %v2538 = vunpack.c.l.b16 %v2330
      %v2539 = vunpack.c.h.b16 %v2330
      %v2540 = vunpack.c.l.b16 %v2331
      %v2541 = vunpack.c.h.b16 %v2331
      %v2542 = vunpack.c.l.b16 %v2332
      %v2543 = vunpack.c.h.b16 %v2332
      %v2544 = vunpack.c.l.b16 %v2333
      %v2545 = vunpack.c.h.b16 %v2333
      %v2546 = vunpack.c.l.b16 %v2334
      %v2547 = vunpack.c.h.b16 %v2334
      %v2548 = vunpack.c.l.b16 %v2335
      %v2549 = vunpack.c.h.b16 %v2335
      %v2550 = vunpack.c.l.b16 %v2336
      %v2551 = vunpack.c.h.b16 %v2336
      %v2552 = vunpack.c.l.b16 %v2337
      %v2553 = vunpack.c.h.b16 %v2337
      %v2554 = vpack.c.b16 %v2430, %v2426
      %v2555 = vpack.c.b16 %v2431, %v2427
      %v2556 = vpack.c.b16 %v2432, %v2428
      %v2557 = vpack.c.b16 %v2433, %v2429
      %v2558 = vpack.c.b16 %v2438, %v2434
      %v2559 = vpack.c.b16 %v2439, %v2435
      %v2560 = vpack.c.b16 %v2440, %v2436
      %v2561 = vpack.c.b16 %v2441, %v2437
      %v2562 = vpack.c.b16 %v2446, %v2442
      %v2563 = vpack.c.b16 %v2447, %v2443
      %v2564 = vpack.c.b16 %v2448, %v2444
      %v2565 = vpack.c.b16 %v2449, %v2445
      %v2566 = vpack.c.b16 %v2454, %v2450
      %v2567 = vpack.c.b16 %v2455, %v2451
      %v2568 = vpack.c.b16 %v2456, %v2452
      %v2569 = vpack.c.b16 %v2457, %v2453
      %v2570 = vpack.c.b16 %v2462, %v2458
      %v2571 = vpack.c.b16 %v2463, %v2459
      %v2572 = vpack.c.b16 %v2464, %v2460
      %v2573 = vpack.c.b16 %v2465, %v2461
      %v2574 = vpack.c.b16 %v2470, %v2466
      %v2575 = vpack.c.b16 %v2471, %v2467
      %v2576 = vpack.c.b16 %v2472, %v2468
      %v2577 = vpack.c.b16 %v2473, %v2469
      %v2578 = vpack.c.b16 %v2478, %v2474
      %v2579 = vpack.c.b16 %v2479, %v2475
      %v2580 = vpack.c.b16 %v2480, %v2476
      %v2581 = vpack.c.b16 %v2481, %v2477
      %v2582 = vpack.c.b16 %v2486, %v2482
      %v2583 = vpack.c.b16 %v2487, %v2483
      %v2584 = vpack.c.b16 %v2488, %v2484
      %v2585 = vpack.c.b16 %v2489, %v2485
      %v2586 = vpack.c.b16 %v2494, %v2490
      %v2587 = vpack.c.b16 %v2495, %v2491
      %v2588 = vpack.c.b16 %v2496, %v2492
      %v2589 = vpack.c.b16 %v2497, %v2493
      %v2590 = vpack.c.b16 %v2502, %v2498
      %v2591 = vpack.c.b16 %v2503, %v2499
      %v2592 = vpack.c.b16 %v2504, %v2500
      %v2593 = vpack.c.b16 %v2505, %v2501
      %v2594 = vpack.c.b16 %v2510, %v2506
      %v2595 = vpack.c.b16 %v2511, %v2507
      %v2596 = vpack.c.b16 %v2512, %v2508
      %v2597 = vpack.c.b16 %v2513, %v2509
      %v2598 = vpack.c.b16 %v2518, %v2514
      %v2599 = vpack.c.b16 %v2519, %v2515
      %v2600 = vpack.c.b16 %v2520, %v2516
      %v2601 = vpack.c.b16 %v2521, %v2517
      %v2602 = vpack.c.b16 %v2526, %v2522
      %v2603 = vpack.c.b16 %v2527, %v2523
      %v2604 = vpack.c.b16 %v2528, %v2524
      %v2605 = vpack.c.b16 %v2529, %v2525
      %v2606 = vpack.c.b16 %v2534, %v2530
      %v2607 = vpack.c.b16 %v2535, %v2531
      %v2608 = vpack.c.b16 %v2536, %v2532
      %v2609 = vpack.c.b16 %v2537, %v2533
      %v2610 = vpack.c.b16 %v2542, %v2538
      %v2611 = vpack.c.b16 %v2543, %v2539
      %v2612 = vpack.c.b16 %v2544, %v2540
      %v2613 = vpack.c.b16 %v2545, %v2541
      %v2614 = vpack.c.b16 %v2550, %v2546
      %v2615 = vpack.c.b16 %v2551, %v2547
      %v2616 = vpack.c.b16 %v2552, %v2548
      %v2617 = vpack.c.b16 %v2553, %v2549
      %2682 = vmatprep.subr.bf16.mxu0 %v2555
      %2683 = vmatpush1.bf16.msra.mxu0 %v2554
      %2684 = vmatprep.subr.bf16.mxu0 %v2559
      %2685 = vmatpush1.bf16.msra.mxu0 %v2558
      %2686 = vmatprep.subr.bf16.mxu0 %v2563
      %2687 = vmatpush1.bf16.msra.mxu0 %v2562
      %2688 = vmatprep.subr.bf16.mxu0 %v2567
      %2689 = vmatpush1.bf16.msra.mxu0 %v2566
      %2690 = vmatprep.subr.bf16.mxu0 %v2571
      %2691 = vmatpush1.bf16.msra.mxu0 %v2570
      %2692 = vmatprep.subr.bf16.mxu0 %v2575
      %2693 = vmatpush1.bf16.msra.mxu0 %v2574
      %2694 = vmatprep.subr.bf16.mxu0 %v2579
      %2695 = vmatpush1.bf16.msra.mxu0 %v2578
      %2696 = vmatprep.subr.bf16.mxu0 %v2583
      %2697 = vmatpush1.bf16.msra.mxu0 %v2582
      %2698 = vmatprep.subr.bf16.mxu0 %v2587
      %2699 = vmatpush1.bf16.msra.mxu0 %v2586
      %2700 = vmatprep.subr.bf16.mxu0 %v2591
      %2701 = vmatpush1.bf16.msra.mxu0 %v2590
      %2702 = vmatprep.subr.bf16.mxu0 %v2595
      %2703 = vmatpush1.bf16.msra.mxu0 %v2594
      %2704 = vmatprep.subr.bf16.mxu0 %v2599
      %2705 = vmatpush1.bf16.msra.mxu0 %v2598
      %2706 = vmatprep.subr.bf16.mxu0 %v2603
      %2707 = vmatpush1.bf16.msra.mxu0 %v2602
      %2708 = vmatprep.subr.bf16.mxu0 %v2607
      %2709 = vmatpush1.bf16.msra.mxu0 %v2606
      %2710 = vmatprep.subr.bf16.mxu0 %v2611
      %2711 = vmatpush1.bf16.msra.mxu0 %v2610
      %2712 = vmatprep.subr.bf16.mxu0 %v2615
      %2713 = vmatpush1.bf16.msra.mxu0 %v2614
      %2714 = vmatprep.mubr.bf16.mxu0 %v2339
      %2715 = vmatmul.mubr.bf16.gmra.mrb[0].mxu0 %v2338
      %v2716 = vpop.f32.mrb[0].mxu0
      %v2717 = vadd.f32 %v2345, %v2716
      %v2718 = vpop.f32.mrb[0].mxu0
      %v2719 = vadd.f32 %v2349, %v2718
      %v2720 = vpop.f32.mrb[0].mxu0
      %v2721 = vadd.f32 %v2345, %v2720
      %v2722 = vpop.f32.mrb[0].mxu0
      %v2723 = vadd.f32 %v2349, %v2722
      %2724 = vdwg.mxu0
      %2725 = vmatprep.subr.bf16.mxu0 %v2557
      %2726 = vmatpush1.bf16.msra.mxu0 %v2556
      %2727 = vmatprep.subr.bf16.mxu0 %v2561
      %2728 = vmatpush1.bf16.msra.mxu0 %v2560
      %2729 = vmatprep.subr.bf16.mxu0 %v2565
      %2730 = vmatpush1.bf16.msra.mxu0 %v2564
      %2731 = vmatprep.subr.bf16.mxu0 %v2569
      %2732 = vmatpush1.bf16.msra.mxu0 %v2568
      %2733 = vmatprep.subr.bf16.mxu0 %v2573
      %2734 = vmatpush1.bf16.msra.mxu0 %v2572
      %2735 = vmatprep.subr.bf16.mxu0 %v2577
      %2736 = vmatpush1.bf16.msra.mxu0 %v2576
      %2737 = vmatprep.subr.bf16.mxu0 %v2581
      %2738 = vmatpush1.bf16.msra.mxu0 %v2580
      %2739 = vmatprep.subr.bf16.mxu0 %v2585
      %2740 = vmatpush1.bf16.msra.mxu0 %v2584
      %2741 = vmatprep.subr.bf16.mxu0 %v2589
      %2742 = vmatpush1.bf16.msra.mxu0 %v2588
      %2743 = vmatprep.subr.bf16.mxu0 %v2593
      %2744 = vmatpush1.bf16.msra.mxu0 %v2592
      %2745 = vmatprep.subr.bf16.mxu0 %v2597
      %2746 = vmatpush1.bf16.msra.mxu0 %v2596
      %2747 = vmatprep.subr.bf16.mxu0 %v2601
      %2748 = vmatpush1.bf16.msra.mxu0 %v2600
      %2749 = vmatprep.subr.bf16.mxu0 %v2605
      %2750 = vmatpush1.bf16.msra.mxu0 %v2604
      %2751 = vmatprep.subr.bf16.mxu0 %v2609
      %2752 = vmatpush1.bf16.msra.mxu0 %v2608
      %2753 = vmatprep.subr.bf16.mxu0 %v2613
      %2754 = vmatpush1.bf16.msra.mxu0 %v2612
      %2755 = vmatprep.subr.bf16.mxu0 %v2617
      %2756 = vmatpush1.bf16.msra.mxu0 %v2616
      %2757 = vmatprep.mubr.bf16.mxu0 %v2339
      %2758 = vmatmul.mubr.bf16.gmra.mrb[0].mxu0 %v2338
      %v2759 = vpop.f32.mrb[0].mxu0
      %v2760 = vadd.f32 %v2353, %v2759
      %v2761 = vpop.f32.mrb[0].mxu0
      %v2762 = vadd.f32 %v2357, %v2761
      %v2763 = vpop.f32.mrb[0].mxu0
      %v2764 = vadd.f32 %v2353, %v2763
      %v2765 = vpop.f32.mrb[0].mxu0
      %v2766 = vadd.f32 %v2357, %v2765
      %2767 = vdwg.mxu0
      %v2768 = vmul.f32 %v2717, 0.5
      %v2769 = vmul.f32 %v2719, 0.5
      %v2770 = vmul.f32 %v2760, 0.5
      %v2771 = vmul.f32 %v2762, 0.5
      %v2772 = vmul.f32 %v2721, 0.5
      %v2773 = vmul.f32 %v2723, 0.5
      %v2774 = vmul.f32 %v2764, 0.5
      %v2775 = vmul.f32 %v2766, 0.5
      %v2776 = vmul.f32 %v2717, 0.044715
      %v2777 = vmul.f32 %v2719, 0.044715
      %v2778 = vmul.f32 %v2760, 0.044715
      %v2779 = vmul.f32 %v2762, 0.044715
      %v2780 = vmul.f32 %v2721, 0.044715
      %v2781 = vmul.f32 %v2723, 0.044715
      %v2782 = vmul.f32 %v2764, 0.044715
      %v2783 = vmul.f32 %v2766, 0.044715
      %v2784 = vmul.f32 %v2776, %v2717
      %v2785 = vmul.f32 %v2777, %v2719
      %v2786 = vmul.f32 %v2778, %v2760
      %v2787 = vmul.f32 %v2779, %v2762
      %v2788 = vmul.f32 %v2780, %v2721
      %v2789 = vmul.f32 %v2781, %v2723
      %v2790 = vmul.f32 %v2782, %v2764
      %v2791 = vmul.f32 %v2783, %v2766
      %v2792 = vmul.f32 %v2784, %v2717
      %v2793 = vmul.f32 %v2785, %v2719
      %v2794 = vmul.f32 %v2786, %v2760
      %v2795 = vmul.f32 %v2787, %v2762
      %v2796 = vmul.f32 %v2788, %v2721
      %v2797 = vmul.f32 %v2789, %v2723
      %v2798 = vmul.f32 %v2790, %v2764
      %v2799 = vmul.f32 %v2791, %v2766
      %v2800 = vadd.f32 %v2717, %v2792
      %v2801 = vadd.f32 %v2719, %v2793
      %v2802 = vadd.f32 %v2760, %v2794
      %v2803 = vadd.f32 %v2762, %v2795
      %v2804 = vadd.f32 %v2721, %v2796
      %v2805 = vadd.f32 %v2723, %v2797
      %v2806 = vadd.f32 %v2764, %v2798
      %v2807 = vadd.f32 %v2766, %v2799
      %v2808 = vmul.f32 %v2800, 0.7978846
      %v2809 = vmul.f32 %v2801, 0.7978846
      %v2810 = vmul.f32 %v2802, 0.7978846
      %v2811 = vmul.f32 %v2803, 0.7978846
      %v2812 = vmul.f32 %v2804, 0.7978846
      %v2813 = vmul.f32 %v2805, 0.7978846
      %v2814 = vmul.f32 %v2806, 0.7978846
      %v2815 = vmul.f32 %v2807, 0.7978846
      %v2816 = vtanh.pop %v2808
      %v2817 = vtanh.pop %v2809
      %v2818 = vtanh.pop %v2810
      %v2819 = vtanh.pop %v2811
      %v2820 = vtanh.pop %v2812
      %v2821 = vtanh.pop %v2813
      %v2822 = vtanh.pop %v2814
      %v2823 = vtanh.pop %v2815
      %v2824 = vadd.f32 %v2816, 1.0
      %v2825 = vadd.f32 %v2817, 1.0
      %v2826 = vadd.f32 %v2818, 1.0
      %v2827 = vadd.f32 %v2819, 1.0
      %v2828 = vadd.f32 %v2820, 1.0
      %v2829 = vadd.f32 %v2821, 1.0
      %v2830 = vadd.f32 %v2822, 1.0
      %v2831 = vadd.f32 %v2823, 1.0
      %v2832 = vmul.f32 %v2768, %v2824
      %v2833 = vmul.f32 %v2769, %v2825
      %v2834 = vmul.f32 %v2770, %v2826
      %v2835 = vmul.f32 %v2771, %v2827
      %v2836 = vmul.f32 %v2772, %v2828
      %v2837 = vmul.f32 %v2773, %v2829
      %v2838 = vmul.f32 %v2774, %v2830
      %v2839 = vmul.f32 %v2775, %v2831
      %v2840 = vld [vmem:[%s698] sm:$0xff]
      %v2841 = vld [vmem:[%s698 + $0x8] sm:$0xff]
      %v2842 = vld [vmem:[%s698 + $0x10] sm:$0xff]
      %v2843 = vld [vmem:[%s698 + $0x18] sm:$0xff]
      %v2844 = vld [vmem:[%s698 + $0x20] sm:$0xff]
      %v2845 = vld [vmem:[%s698 + $0x28] sm:$0xff]
      %v2846 = vld [vmem:[%s698 + $0x30] sm:$0xff]
      %v2847 = vld [vmem:[%s698 + $0x38] sm:$0xff]
      %v2848 = vld [vmem:[%s698 + $0x40] sm:$0xff]
      %v2849 = vld [vmem:[%s698 + $0x48] sm:$0xff]
      %v2850 = vld [vmem:[%s698 + $0x50] sm:$0xff]
      %v2851 = vld [vmem:[%s698 + $0x58] sm:$0xff]
      %v2852 = vld [vmem:[%s698 + $0x60] sm:$0xff]
      %v2853 = vld [vmem:[%s698 + $0x68] sm:$0xff]
      %v2854 = vld [vmem:[%s698 + $0x70] sm:$0xff]
      %v2855 = vld [vmem:[%s698 + $0x78] sm:$0xff]
      %v2856 = vld [vmem:[%s698 + $0x80] sm:$0xff]
      %v2857 = vld [vmem:[%s698 + $0x88] sm:$0xff]
      %v2858 = vld [vmem:[%s698 + $0x90] sm:$0xff]
      %v2859 = vld [vmem:[%s698 + $0x98] sm:$0xff]
      %v2860 = vld [vmem:[%s698 + $0xa0] sm:$0xff]
      %v2861 = vld [vmem:[%s698 + $0xa8] sm:$0xff]
      %v2862 = vld [vmem:[%s698 + $0xb0] sm:$0xff]
      %v2863 = vld [vmem:[%s698 + $0xb8] sm:$0xff]
      %v2864 = vld [vmem:[%s698 + $0xc0] sm:$0xff]
      %v2865 = vld [vmem:[%s698 + $0xc8] sm:$0xff]
      %v2866 = vld [vmem:[%s698 + $0xd0] sm:$0xff]
      %v2867 = vld [vmem:[%s698 + $0xd8] sm:$0xff]
      %v2868 = vld [vmem:[%s698 + $0xe0] sm:$0xff]
      %v2869 = vld [vmem:[%s698 + $0xe8] sm:$0xff]
      %v2870 = vld [vmem:[%s698 + $0xf0] sm:$0xff]
      %v2871 = vld [vmem:[%s698 + $0xf8] sm:$0xff]
      %v2872 = vld [vmem:[%s698 + $0x100] sm:$0xff]
      %v2873 = vld [vmem:[%s698 + $0x108] sm:$0xff]
      %v2874 = vld [vmem:[%s698 + $0x110] sm:$0xff]
      %v2875 = vld [vmem:[%s698 + $0x118] sm:$0xff]
      %v2876 = vld [vmem:[%s698 + $0x120] sm:$0xff]
      %v2877 = vld [vmem:[%s698 + $0x128] sm:$0xff]
      %v2878 = vld [vmem:[%s698 + $0x130] sm:$0xff]
      %v2879 = vld [vmem:[%s698 + $0x138] sm:$0xff]
      %v2880 = vld [vmem:[%s698 + $0x140] sm:$0xff]
      %v2881 = vld [vmem:[%s698 + $0x148] sm:$0xff]
      %v2882 = vld [vmem:[%s698 + $0x150] sm:$0xff]
      %v2883 = vld [vmem:[%s698 + $0x158] sm:$0xff]
      %v2884 = vld [vmem:[%s698 + $0x160] sm:$0xff]
      %v2885 = vld [vmem:[%s698 + $0x168] sm:$0xff]
      %v2886 = vld [vmem:[%s698 + $0x170] sm:$0xff]
      %v2887 = vld [vmem:[%s698 + $0x178] sm:$0xff]
      %v2888 = vld [vmem:[%s698 + $0x180] sm:$0xff]
      %v2889 = vld [vmem:[%s698 + $0x188] sm:$0xff]
      %v2890 = vld [vmem:[%s698 + $0x190] sm:$0xff]
      %v2891 = vld [vmem:[%s698 + $0x198] sm:$0xff]
      %v2892 = vld [vmem:[%s698 + $0x1a0] sm:$0xff]
      %v2893 = vld [vmem:[%s698 + $0x1a8] sm:$0xff]
      %v2894 = vld [vmem:[%s698 + $0x1b0] sm:$0xff]
      %v2895 = vld [vmem:[%s698 + $0x1b8] sm:$0xff]
      %v2896 = vld [vmem:[%s698 + $0x1c0] sm:$0xff]
      %v2897 = vld [vmem:[%s698 + $0x1c8] sm:$0xff]
      %v2898 = vld [vmem:[%s698 + $0x1d0] sm:$0xff]
      %v2899 = vld [vmem:[%s698 + $0x1d8] sm:$0xff]
      %v2900 = vld [vmem:[%s698 + $0x1e0] sm:$0xff]
      %v2901 = vld [vmem:[%s698 + $0x1e8] sm:$0xff]
      %v2902 = vld [vmem:[%s698 + $0x1f0] sm:$0xff]
      %v2903 = vld [vmem:[%s698 + $0x1f8] sm:$0xff]
      %v2904 = vpack.c.bf16 %v2836, %v2832
      %v2905 = vpack.c.bf16 %v2837, %v2833
      %v2906 = vpack.c.bf16 %v2838, %v2834
      %v2907 = vpack.c.bf16 %v2839, %v2835
      %v2908 = vld [vmem:[%s702] sm:$0x3]
      %v2910 = vlaneseq
      %v2911 = vshrl.u32 %v2910, 7
      %v2912 = vsub.s32 0, %v2911
      %v2913 = vrot.slane %v2908, %v2912
      %v2914 = vlaneseq
      %v2915 = vshrl.u32 %v2914, 7
      %v2916 = vsub.s32 1, %v2915
      %v2917 = vrot.slane %v2908, %v2916
      %v2984 = vunpack.c.l.b16 %v2840
      %v2985 = vunpack.c.h.b16 %v2840
      %v2986 = vunpack.c.l.b16 %v2841
      %v2987 = vunpack.c.h.b16 %v2841
      %v2988 = vunpack.c.l.b16 %v2842
      %v2989 = vunpack.c.h.b16 %v2842
      %v2990 = vunpack.c.l.b16 %v2843
      %v2991 = vunpack.c.h.b16 %v2843
      %v2992 = vunpack.c.l.b16 %v2844
      %v2993 = vunpack.c.h.b16 %v2844
      %v2994 = vunpack.c.l.b16 %v2845
      %v2995 = vunpack.c.h.b16 %v2845
      %v2996 = vunpack.c.l.b16 %v2846
      %v2997 = vunpack.c.h.b16 %v2846
      %v2998 = vunpack.c.l.b16 %v2847
      %v2999 = vunpack.c.h.b16 %v2847
      %v3000 = vunpack.c.l.b16 %v2848
      %v3001 = vunpack.c.h.b16 %v2848
      %v3002 = vunpack.c.l.b16 %v2849
      %v3003 = vunpack.c.h.b16 %v2849
      %v3004 = vunpack.c.l.b16 %v2850
      %v3005 = vunpack.c.h.b16 %v2850
      %v3006 = vunpack.c.l.b16 %v2851
      %v3007 = vunpack.c.h.b16 %v2851
      %v3008 = vunpack.c.l.b16 %v2852
      %v3009 = vunpack.c.h.b16 %v2852
      %v3010 = vunpack.c.l.b16 %v2853
      %v3011 = vunpack.c.h.b16 %v2853
      %v3012 = vunpack.c.l.b16 %v2854
      %v3013 = vunpack.c.h.b16 %v2854
      %v3014 = vunpack.c.l.b16 %v2855
      %v3015 = vunpack.c.h.b16 %v2855
      %v3016 = vunpack.c.l.b16 %v2856
      %v3017 = vunpack.c.h.b16 %v2856
      %v3018 = vunpack.c.l.b16 %v2857
      %v3019 = vunpack.c.h.b16 %v2857
      %v3020 = vunpack.c.l.b16 %v2858
      %v3021 = vunpack.c.h.b16 %v2858
      %v3022 = vunpack.c.l.b16 %v2859
      %v3023 = vunpack.c.h.b16 %v2859
      %v3024 = vunpack.c.l.b16 %v2860
      %v3025 = vunpack.c.h.b16 %v2860
      %v3026 = vunpack.c.l.b16 %v2861
      %v3027 = vunpack.c.h.b16 %v2861
      %v3028 = vunpack.c.l.b16 %v2862
      %v3029 = vunpack.c.h.b16 %v2862
      %v3030 = vunpack.c.l.b16 %v2863
      %v3031 = vunpack.c.h.b16 %v2863
      %v3032 = vunpack.c.l.b16 %v2864
      %v3033 = vunpack.c.h.b16 %v2864
      %v3034 = vunpack.c.l.b16 %v2865
      %v3035 = vunpack.c.h.b16 %v2865
      %v3036 = vunpack.c.l.b16 %v2866
      %v3037 = vunpack.c.h.b16 %v2866
      %v3038 = vunpack.c.l.b16 %v2867
      %v3039 = vunpack.c.h.b16 %v2867
      %v3040 = vunpack.c.l.b16 %v2868
      %v3041 = vunpack.c.h.b16 %v2868
      %v3042 = vunpack.c.l.b16 %v2869
      %v3043 = vunpack.c.h.b16 %v2869
      %v3044 = vunpack.c.l.b16 %v2870
      %v3045 = vunpack.c.h.b16 %v2870
      %v3046 = vunpack.c.l.b16 %v2871
      %v3047 = vunpack.c.h.b16 %v2871
      %v3048 = vunpack.c.l.b16 %v2872
      %v3049 = vunpack.c.h.b16 %v2872
      %v3050 = vunpack.c.l.b16 %v2873
      %v3051 = vunpack.c.h.b16 %v2873
      %v3052 = vunpack.c.l.b16 %v2874
      %v3053 = vunpack.c.h.b16 %v2874
      %v3054 = vunpack.c.l.b16 %v2875
      %v3055 = vunpack.c.h.b16 %v2875
      %v3056 = vunpack.c.l.b16 %v2876
      %v3057 = vunpack.c.h.b16 %v2876
      %v3058 = vunpack.c.l.b16 %v2877
      %v3059 = vunpack.c.h.b16 %v2877
      %v3060 = vunpack.c.l.b16 %v2878
      %v3061 = vunpack.c.h.b16 %v2878
      %v3062 = vunpack.c.l.b16 %v2879
      %v3063 = vunpack.c.h.b16 %v2879
      %v3064 = vunpack.c.l.b16 %v2880
      %v3065 = vunpack.c.h.b16 %v2880
      %v3066 = vunpack.c.l.b16 %v2881
      %v3067 = vunpack.c.h.b16 %v2881
      %v3068 = vunpack.c.l.b16 %v2882
      %v3069 = vunpack.c.h.b16 %v2882
      %v3070 = vunpack.c.l.b16 %v2883
      %v3071 = vunpack.c.h.b16 %v2883
      %v3072 = vunpack.c.l.b16 %v2884
      %v3073 = vunpack.c.h.b16 %v2884
      %v3074 = vunpack.c.l.b16 %v2885
      %v3075 = vunpack.c.h.b16 %v2885
      %v3076 = vunpack.c.l.b16 %v2886
      %v3077 = vunpack.c.h.b16 %v2886
      %v3078 = vunpack.c.l.b16 %v2887
      %v3079 = vunpack.c.h.b16 %v2887
      %v3080 = vunpack.c.l.b16 %v2888
      %v3081 = vunpack.c.h.b16 %v2888
      %v3082 = vunpack.c.l.b16 %v2889
      %v3083 = vunpack.c.h.b16 %v2889
      %v3084 = vunpack.c.l.b16 %v2890
      %v3085 = vunpack.c.h.b16 %v2890
      %v3086 = vunpack.c.l.b16 %v2891
      %v3087 = vunpack.c.h.b16 %v2891
      %v3088 = vunpack.c.l.b16 %v2892
      %v3089 = vunpack.c.h.b16 %v2892
      %v3090 = vunpack.c.l.b16 %v2893
      %v3091 = vunpack.c.h.b16 %v2893
      %v3092 = vunpack.c.l.b16 %v2894
      %v3093 = vunpack.c.h.b16 %v2894
      %v3094 = vunpack.c.l.b16 %v2895
      %v3095 = vunpack.c.h.b16 %v2895
      %v3096 = vunpack.c.l.b16 %v2896
      %v3097 = vunpack.c.h.b16 %v2896
      %v3098 = vunpack.c.l.b16 %v2897
      %v3099 = vunpack.c.h.b16 %v2897
      %v3100 = vunpack.c.l.b16 %v2898
      %v3101 = vunpack.c.h.b16 %v2898
      %v3102 = vunpack.c.l.b16 %v2899
      %v3103 = vunpack.c.h.b16 %v2899
      %v3104 = vunpack.c.l.b16 %v2900
      %v3105 = vunpack.c.h.b16 %v2900
      %v3106 = vunpack.c.l.b16 %v2901
      %v3107 = vunpack.c.h.b16 %v2901
      %v3108 = vunpack.c.l.b16 %v2902
      %v3109 = vunpack.c.h.b16 %v2902
      %v3110 = vunpack.c.l.b16 %v2903
      %v3111 = vunpack.c.h.b16 %v2903
      %v3112 = vpack.c.b16 %v2986, %v2984
      %v3113 = vpack.c.b16 %v2987, %v2985
      %v3114 = vpack.c.b16 %v2990, %v2988
      %v3115 = vpack.c.b16 %v2991, %v2989
      %v3116 = vpack.c.b16 %v2994, %v2992
      %v3117 = vpack.c.b16 %v2995, %v2993
      %v3118 = vpack.c.b16 %v2998, %v2996
      %v3119 = vpack.c.b16 %v2999, %v2997
      %v3120 = vpack.c.b16 %v3002, %v3000
      %v3121 = vpack.c.b16 %v3003, %v3001
      %v3122 = vpack.c.b16 %v3006, %v3004
      %v3123 = vpack.c.b16 %v3007, %v3005
      %v3124 = vpack.c.b16 %v3010, %v3008
      %v3125 = vpack.c.b16 %v3011, %v3009
      %v3126 = vpack.c.b16 %v3014, %v3012
      %v3127 = vpack.c.b16 %v3015, %v3013
      %v3128 = vpack.c.b16 %v3018, %v3016
      %v3129 = vpack.c.b16 %v3019, %v3017
      %v3130 = vpack.c.b16 %v3022, %v3020
      %v3131 = vpack.c.b16 %v3023, %v3021
      %v3132 = vpack.c.b16 %v3026, %v3024
      %v3133 = vpack.c.b16 %v3027, %v3025
      %v3134 = vpack.c.b16 %v3030, %v3028
      %v3135 = vpack.c.b16 %v3031, %v3029
      %v3136 = vpack.c.b16 %v3034, %v3032
      %v3137 = vpack.c.b16 %v3035, %v3033
      %v3138 = vpack.c.b16 %v3038, %v3036
      %v3139 = vpack.c.b16 %v3039, %v3037
      %v3140 = vpack.c.b16 %v3042, %v3040
      %v3141 = vpack.c.b16 %v3043, %v3041
      %v3142 = vpack.c.b16 %v3046, %v3044
      %v3143 = vpack.c.b16 %v3047, %v3045
      %v3144 = vpack.c.b16 %v3050, %v3048
      %v3145 = vpack.c.b16 %v3051, %v3049
      %v3146 = vpack.c.b16 %v3054, %v3052
      %v3147 = vpack.c.b16 %v3055, %v3053
      %v3148 = vpack.c.b16 %v3058, %v3056
      %v3149 = vpack.c.b16 %v3059, %v3057
      %v3150 = vpack.c.b16 %v3062, %v3060
      %v3151 = vpack.c.b16 %v3063, %v3061
      %v3152 = vpack.c.b16 %v3066, %v3064
      %v3153 = vpack.c.b16 %v3067, %v3065
      %v3154 = vpack.c.b16 %v3070, %v3068
      %v3155 = vpack.c.b16 %v3071, %v3069
      %v3156 = vpack.c.b16 %v3074, %v3072
      %v3157 = vpack.c.b16 %v3075, %v3073
      %v3158 = vpack.c.b16 %v3078, %v3076
      %v3159 = vpack.c.b16 %v3079, %v3077
      %v3160 = vpack.c.b16 %v3082, %v3080
      %v3161 = vpack.c.b16 %v3083, %v3081
      %v3162 = vpack.c.b16 %v3086, %v3084
      %v3163 = vpack.c.b16 %v3087, %v3085
      %v3164 = vpack.c.b16 %v3090, %v3088
      %v3165 = vpack.c.b16 %v3091, %v3089
      %v3166 = vpack.c.b16 %v3094, %v3092
      %v3167 = vpack.c.b16 %v3095, %v3093
      %v3168 = vpack.c.b16 %v3098, %v3096
      %v3169 = vpack.c.b16 %v3099, %v3097
      %v3170 = vpack.c.b16 %v3102, %v3100
      %v3171 = vpack.c.b16 %v3103, %v3101
      %v3172 = vpack.c.b16 %v3106, %v3104
      %v3173 = vpack.c.b16 %v3107, %v3105
      %v3174 = vpack.c.b16 %v3110, %v3108
      %v3175 = vpack.c.b16 %v3111, %v3109
      %3240 = vmatprep.subr.bf16.mxu0 %v3113
      %3241 = vmatpush1.bf16.msra.mxu0 %v3112
      %3242 = vmatprep.subr.bf16.mxu0 %v3115
      %3243 = vmatpush1.bf16.msra.mxu0 %v3114
      %3244 = vmatprep.subr.bf16.mxu0 %v3117
      %3245 = vmatpush1.bf16.msra.mxu0 %v3116
      %3246 = vmatprep.subr.bf16.mxu0 %v3119
      %3247 = vmatpush1.bf16.msra.mxu0 %v3118
      %3248 = vmatprep.subr.bf16.mxu0 %v3121
      %3249 = vmatpush1.bf16.msra.mxu0 %v3120
      %3250 = vmatprep.subr.bf16.mxu0 %v3123
      %3251 = vmatpush1.bf16.msra.mxu0 %v3122
      %3252 = vmatprep.subr.bf16.mxu0 %v3125
      %3253 = vmatpush1.bf16.msra.mxu0 %v3124
      %3254 = vmatprep.subr.bf16.mxu0 %v3127
      %3255 = vmatpush1.bf16.msra.mxu0 %v3126
      %3256 = vmatprep.subr.bf16.mxu0 %v3129
      %3257 = vmatpush1.bf16.msra.mxu0 %v3128
      %3258 = vmatprep.subr.bf16.mxu0 %v3131
      %3259 = vmatpush1.bf16.msra.mxu0 %v3130
      %3260 = vmatprep.subr.bf16.mxu0 %v3133
      %3261 = vmatpush1.bf16.msra.mxu0 %v3132
      %3262 = vmatprep.subr.bf16.mxu0 %v3135
      %3263 = vmatpush1.bf16.msra.mxu0 %v3134
      %3264 = vmatprep.subr.bf16.mxu0 %v3137
      %3265 = vmatpush1.bf16.msra.mxu0 %v3136
      %3266 = vmatprep.subr.bf16.mxu0 %v3139
      %3267 = vmatpush1.bf16.msra.mxu0 %v3138
      %3268 = vmatprep.subr.bf16.mxu0 %v3141
      %3269 = vmatpush1.bf16.msra.mxu0 %v3140
      %3270 = vmatprep.subr.bf16.mxu0 %v3143
      %3271 = vmatpush1.bf16.msra.mxu0 %v3142
      %3272 = vmatprep.mubr.bf16.mxu0 %v2905
      %3273 = vmatmul.mubr.bf16.gmra.mrb[0].mxu0 %v2904
      %v3274 = vpop.f32.mrb[0].mxu0
      %v3275 = vadd.f32 %v2913, %v3274
      %v3276 = vpop.f32.mrb[0].mxu0
      %v3277 = vadd.f32 %v2917, %v3276
      %v3278 = vpop.f32.mrb[0].mxu0
      %v3279 = vadd.f32 %v2913, %v3278
      %v3280 = vpop.f32.mrb[0].mxu0
      %v3281 = vadd.f32 %v2917, %v3280
      %3282 = vdwg.mxu0
      %3283 = vmatprep.subr.bf16.mxu0 %v3145
      %3284 = vmatpush1.bf16.msra.mxu0 %v3144
      %3285 = vmatprep.subr.bf16.mxu0 %v3147
      %3286 = vmatpush1.bf16.msra.mxu0 %v3146
      %3287 = vmatprep.subr.bf16.mxu0 %v3149
      %3288 = vmatpush1.bf16.msra.mxu0 %v3148
      %3289 = vmatprep.subr.bf16.mxu0 %v3151
      %3290 = vmatpush1.bf16.msra.mxu0 %v3150
      %3291 = vmatprep.subr.bf16.mxu0 %v3153
      %3292 = vmatpush1.bf16.msra.mxu0 %v3152
      %3293 = vmatprep.subr.bf16.mxu0 %v3155
      %3294 = vmatpush1.bf16.msra.mxu0 %v3154
      %3295 = vmatprep.subr.bf16.mxu0 %v3157
      %3296 = vmatpush1.bf16.msra.mxu0 %v3156
      %3297 = vmatprep.subr.bf16.mxu0 %v3159
      %3298 = vmatpush1.bf16.msra.mxu0 %v3158
      %3299 = vmatprep.subr.bf16.mxu0 %v3161
      %3300 = vmatpush1.bf16.msra.mxu0 %v3160
      %3301 = vmatprep.subr.bf16.mxu0 %v3163
      %3302 = vmatpush1.bf16.msra.mxu0 %v3162
      %3303 = vmatprep.subr.bf16.mxu0 %v3165
      %3304 = vmatpush1.bf16.msra.mxu0 %v3164
      %3305 = vmatprep.subr.bf16.mxu0 %v3167
      %3306 = vmatpush1.bf16.msra.mxu0 %v3166
      %3307 = vmatprep.subr.bf16.mxu0 %v3169
      %3308 = vmatpush1.bf16.msra.mxu0 %v3168
      %3309 = vmatprep.subr.bf16.mxu0 %v3171
      %3310 = vmatpush1.bf16.msra.mxu0 %v3170
      %3311 = vmatprep.subr.bf16.mxu0 %v3173
      %3312 = vmatpush1.bf16.msra.mxu0 %v3172
      %3313 = vmatprep.subr.bf16.mxu0 %v3175
      %3314 = vmatpush1.bf16.msra.mxu0 %v3174
      %3315 = vmatprep.mubr.bf16.mxu0 %v2907
      %3316 = vmatmul.mubr.bf16.gmra.mrb[0].mxu0 %v2906
      %v3317 = vpop.f32.mrb[0].mxu0
      %v3318 = vadd.f32 %v3275, %v3317
      %v3319 = vpop.f32.mrb[0].mxu0
      %v3320 = vadd.f32 %v3277, %v3319
      %v3321 = vpop.f32.mrb[0].mxu0
      %v3322 = vadd.f32 %v3279, %v3321
      %v3323 = vpop.f32.mrb[0].mxu0
      %v3324 = vadd.f32 %v3281, %v3323
      %3325 = vdwg.mxu0
      %v3326 = vadd.f32 %v2270, %v3318
      %v3327 = vadd.f32 %v2271, %v3320
      %v3328 = vadd.f32 %v2272, %v3322
      %v3329 = vadd.f32 %v2273, %v3324
      %v3330 = vld [vmem:[%s680] sm:$0x3]
      %v3331 = vld [vmem:[%s684] sm:$0x3]
      %v3332 = vadd.f32 %v3326, %v3327
      %3333 = vadd.xlane.f32.xlu0 %v3332
      %v3334 = vpop.xlane.xlu0 %3333
      %v3335 = vadd.f32 %v3328, %v3329
      %3336 = vadd.xlane.f32.xlu0 %v3335
      %v3337 = vpop.xlane.xlu0 %3336
      %v3338 = vmul.f32 %v3334, %v2217
      %v3339 = vmul.f32 %v3337, %v2217
      %v3340 = vsub.f32 %v3326, %v3338
      %v3341 = vsub.f32 %v3327, %v3338
      %v3342 = vsub.f32 %v3328, %v3339
      %v3343 = vsub.f32 %v3329, %v3339
      %v3344 = vmul.f32 %v3340, %v3340
      %v3345 = vmul.f32 %v3341, %v3341
      %v3346 = vmul.f32 %v3342, %v3342
      %v3347 = vmul.f32 %v3343, %v3343
      %v3348 = vadd.f32 %v3344, %v3345
      %3349 = vadd.xlane.f32.xlu0 %v3348
      %v3350 = vpop.xlane.xlu0 %3349
      %v3351 = vadd.f32 %v3346, %v3347
      %3352 = vadd.xlane.f32.xlu0 %v3351
      %v3353 = vpop.xlane.xlu0 %3352
      %v3354 = vmul.f32 %v3350, %v2217
      %v3355 = vmul.f32 %v3353, %v2217
      %v3356 = vadd.f32 %v3354, 1e-12
      %v3357 = vadd.f32 %v3355, 1e-12
      %v3358 = vrsqrt.pop %v3356
      %v3359 = vrsqrt.pop %v3357
      %v3360 = vmul.f32 %v3340, %v3358
      %v3361 = vmul.f32 %v3341, %v3358
      %v3362 = vmul.f32 %v3342, %v3359
      %v3363 = vmul.f32 %v3343, %v3359
      %v3365 = vlaneseq
      %v3366 = vshrl.u32 %v3365, 7
      %v3367 = vsub.s32 0, %v3366
      %v3368 = vrot.slane %v3330, %v3367
      %v3369 = vlaneseq
      %v3370 = vshrl.u32 %v3369, 7
      %v3371 = vsub.s32 1, %v3370
      %v3372 = vrot.slane %v3330, %v3371
      %v3375 = vmul.f32 %v3360, %v3368
      %v3376 = vmul.f32 %v3361, %v3372
      %v3377 = vmul.f32 %v3362, %v3368
      %v3378 = vmul.f32 %v3363, %v3372
      %v3380 = vlaneseq
      %v3381 = vshrl.u32 %v3380, 7
      %v3382 = vsub.s32 0, %v3381
      %v3383 = vrot.slane %v3331, %v3382
      %v3384 = vlaneseq
      %v3385 = vshrl.u32 %v3384, 7
      %v3386 = vsub.s32 1, %v3385
      %v3387 = vrot.slane %v3331, %v3386
      %v3390 = vadd.f32 %v3375, %v3383
      %v3391 = vadd.f32 %v3376, %v3387
      %v3392 = vadd.f32 %v3377, %v3383
      %v3393 = vadd.f32 %v3378, %v3387
      %3394 = vst [vmem:[%s16] sm:$0xff] %v3390
      %3395 = vst [vmem:[%s16 + $0x8] sm:$0xff] %v3391
      %3396 = vst [vmem:[%s16 + $0x10] sm:$0xff] %v3392
      %3397 = vst [vmem:[%s16 + $0x18] sm:$0xff] %v3393
      // Predicated region
      $region89: #{shopee_forward.4} parent=83 // pred_check
        %p3398 = pneg %p436
      $region90: #{shopee_forward.4} parent=83 // pred_check_branch
        %3400 = sbr.rel (%p3398) target = $region92
      $region91: #{shopee_forward.4} parent=83 // pred_region
        _
      $region92: #{shopee_forward.4} parent=83 // pred_fallthru
        _
      // Predicated region
      $region93: #{shopee_forward.4} parent=83 // pred_check
        %p3401 = pneg %p436
      $region94: #{shopee_forward.4} parent=83 // pred_check_branch
        %3403 = sbr.rel (%p3401) target = $region96
      $region95: #{shopee_forward.4} parent=83 // pred_region
        _
      $region96: #{shopee_forward.4} parent=83 // pred_fallthru
        _
    $region84: #{shopee_forward.4} parent=5 // pred_fallthru
      _
    %p3404 = scmp.le.s32.totalorder 2, %s22
    // Predicated region
    $region97: #{shopee_forward.4} parent=5 // pred_check
      %p3405 = pneg %p3404
    $region98: #{shopee_forward.4} parent=5 // pred_check_branch
      %3407 = sbr.rel (%p3405) target = $region100
    $region99: #{shopee_forward.4} parent=5 // pred_region
      %s3408 = ssub.s32 %s22, 2
    $region100: #{shopee_forward.4} parent=5 // pred_fallthru
      _
  $region6: #{shopee_forward.4} parent=0 // loop_footer
    %s26 = sadd.s32 1, %s22
  $region7: #{shopee_forward.4} parent=0 // loop_footer_branch
    %21 = sbr.rel target = $region3
  $region8: #{shopee_forward.4} parent=0 // loop_exit
    _

</llo_original>
